<compile_context>
chip_gen: v7x
topology: tpu7x:2x2x1
jax: 0.10.0
libtpu: 0.0.40
codegen_flags: <defaults>
</compile_context>

<pallas_src>
import jax
import jax.numpy as jnp
from jax.experimental import pallas as pl
from jax.experimental.pallas import tpu as pltpu

LANE = 128
SUBLANE = 8


def _round_up(a, b):
    return (a + b - 1) // b * b


def _bn_relu_conv3x3_kernel(x_ref, scale_ref, shift_ref, w_ref,
                            o_ref, stat_ref, pad_ref):
    """One batch element: y = relu(x*scale + shift); o = conv3x3(y, w), pad=1.

    x_ref:     (1, H, W, C)        VMEM  bf16 (live-channel prefix; dead tail
                                          channels have scale=shift=0 and zero
                                          weight rows, so they contribute 0)
    scale_ref: (1, C)              VMEM  f32  gamma / sqrt(var + eps)
    shift_ref: (1, C)              VMEM  f32  beta - mean * scale
    w_ref:     (9, C, COUT_PAD)    VMEM  bf16, tap-major (k = 3*ky + kx)
    o_ref:     (1, H, W, COUT_PAD) VMEM  bf16, lane-dense (COUT_PAD % 128 == 0)
    stat_ref:  (1, 2, COUT_PAD)    VMEM  f32  per-channel [sum, sum_of_squares]
    pad_ref:   (H+2, W+2, C)       VMEM  f32 scratch (zero-padded activation)
    """
    _, H, W, C = x_ref.shape
    HW = H * W
    COUT = o_ref.shape[-1]

    # Zero only the 1-pixel halo border; the interior is fully overwritten
    # below.  Re-done every grid step so correctness does not depend on which
    # TensorCore ran step 0 when the batch axis is split across cores.
    pad_ref[0:1, :, :] = jnp.zeros((1, W + 2, C), jnp.float32)
    pad_ref[H + 1:H + 2, :, :] = jnp.zeros((1, W + 2, C), jnp.float32)
    pad_ref[1:H + 1, 0:1, :] = jnp.zeros((H, 1, C), jnp.float32)
    pad_ref[1:H + 1, W + 1:W + 2, :] = jnp.zeros((H, 1, C), jnp.float32)

    # Fused BatchNorm (pre-folded scale/shift, f32 math) + ReLU into the padded
    # scratch.
    x = x_ref[0].astype(jnp.float32)                      # (H, W, C)
    scale = scale_ref[0][None, None, :]
    shift = shift_ref[0][None, None, :]
    pad_ref[1:H + 1, 1:W + 1, :] = jnp.maximum(x * scale + shift, 0.0)

    # 3x3 conv as 9 shifted-window matmuls accumulated in f32 (bf16 operands).
    # No (HW, 9*C) im2col operand is ever materialized.
    acc = jnp.zeros((HW, COUT), jnp.float32)
    for k in range(9):
        ky, kx = k // 3, k % 3
        slab = pad_ref[ky:ky + H, kx:kx + W, :].reshape(HW, C)
        acc = acc + jnp.dot(slab.astype(jnp.bfloat16), w_ref[k],
                            preferred_element_type=jnp.float32)

    o_ref[0] = acc.reshape(H, W, COUT).astype(o_ref.dtype)

    # Epilogue: per-channel sum / sum-of-squares of the new features so the
    # next layer's train-mode BatchNorm stats need no extra full-tensor pass.
    stat_ref[0] = jnp.concatenate(
        [jnp.sum(acc, axis=0, keepdims=True),
         jnp.sum(acc * acc, axis=0, keepdims=True)], axis=0)


def _padded_tile_bytes(shape, dtype):
    """Rough VMEM footprint of one block, padded to (8, 128) tiling."""
    s = list(shape)
    s[-1] = _round_up(s[-1], LANE)
    if len(s) >= 2:
        s[-2] = _round_up(s[-2], SUBLANE)
    n = 1
    for d in s:
        n *= d
    return n * jnp.dtype(dtype).itemsize


def dense_layer_pallas(feats, scale, shift, w3):
    """feats: (N,H,W,C) bf16; scale/shift: (1,C) f32; w3: (9,C,COUT_PAD) bf16.

    Returns (new_features (N,H,W,COUT_PAD) bf16, stats (N,2,COUT_PAD) f32).
    """
    N, H, W, C = feats.shape
    _, _, COUT = w3.shape

    # Explicit scoped-VMEM limit from the actual block + scratch bytes
    # (double-buffered in/out blocks) instead of the generation-dependent default.
    vmem = (2 * (_padded_tile_bytes((1, H, W, C), feats.dtype)
                 + _padded_tile_bytes((1, H, W, COUT), jnp.bfloat16)
                 + _padded_tile_bytes((1, 2, COUT), jnp.float32)
                 + _padded_tile_bytes((9, C, COUT), w3.dtype)
                 + 2 * _padded_tile_bytes((1, C), jnp.float32))
            + _padded_tile_bytes((H + 2, W + 2, C), jnp.float32)
            + (4 << 20))
    vmem = int(max(16 << 20, min(vmem, 100 << 20)))

    cost = pl.CostEstimate(
        flops=2 * N * H * W * 9 * C * COUT,
        transcendentals=0,
        bytes_accessed=(N * H * W * C * 2 + 9 * C * COUT * 2
                        + N * H * W * COUT * 2 + N * 2 * COUT * 4))

    return pl.pallas_call(
        _bn_relu_conv3x3_kernel,
        out_shape=(jax.ShapeDtypeStruct((N, H, W, COUT), jnp.bfloat16),
                   jax.ShapeDtypeStruct((N, 2, COUT), jnp.float32)),
        grid_spec=pltpu.PrefetchScalarGridSpec(
            num_scalar_prefetch=0,
            grid=(N,),
            in_specs=[
                pl.BlockSpec((1, H, W, C), lambda n: (n, 0, 0, 0)),
                pl.BlockSpec((1, C), lambda n: (0, 0)),
                pl.BlockSpec((1, C), lambda n: (0, 0)),
                pl.BlockSpec((9, C, COUT), lambda n: (0, 0, 0)),
            ],
            out_specs=(
                pl.BlockSpec((1, H, W, COUT), lambda n: (n, 0, 0, 0)),
                pl.BlockSpec((1, 2, COUT), lambda n: (n, 0, 0)),
            ),
            scratch_shapes=[pltpu.VMEM((H + 2, W + 2, C), jnp.float32)],
        ),
        compiler_params=pltpu.CompilerParams(
            dimension_semantics=("parallel",),
            vmem_limit_bytes=vmem),
        cost_estimate=cost,
    )(feats, scale, shift, w3)


def make_params(num_layers, num_input_features, growth_rate, key):
    """Deterministic parameters matching the PyTorch module's shapes."""
    params = []
    for i in range(num_layers):
        cin = num_input_features + i * growth_rate
        key, wk = jax.random.split(key)
        # PyTorch conv weight shape (Cout, Cin, 3, 3) -> HWIO (3, 3, Cin, Cout).
        w_oihw = jax.random.normal(wk, (growth_rate, cin, 3, 3),
                                   dtype=jnp.float32) * 0.1
        w_hwio = jnp.transpose(w_oihw, (2, 3, 1, 0))
        gamma = jnp.ones((cin,), jnp.float32)     # BatchNorm2d default init
        beta = jnp.zeros((cin,), jnp.float32)
        params.append((gamma, beta, w_hwio))
    return params


def prepare_layer_params(params, num_input_features):
    """One-time weight prep, hoisted out of the per-call forward.

    Each layer's conv weights become (9, cin_eff, COUT_PAD) bf16, tap-major,
    with zero rows for the dead channel tail and zero lane-padding columns.
    cin_eff = min(round_up(live_channels, 128), C_total).
    """
    growths = tuple(int(p[2].shape[-1]) for p in params)
    c_total = num_input_features + sum(growths)
    prepped = []
    cur = num_input_features
    for (gamma, beta, w_hwio), growth in zip(params, growths):
        cin_eff = min(_round_up(cur, LANE), c_total)
        cout_pad = _round_up(growth, LANE)
        wp = jnp.zeros((3, 3, cin_eff, cout_pad), jnp.bfloat16)
        wp = wp.at[:, :, :cur, :growth].set(w_hwio.astype(jnp.bfloat16))
        prepped.append((gamma, beta, wp.reshape(9, cin_eff, cout_pad)))
        cur += growth
    return prepped, growths


def model_forward(x_nchw, layer_params, growths, eps=1e-5):
    """Forward pass matching ModelNew.forward. Input/output are NCHW f32.

    Dropout(p=0.0) is the identity, so it is omitted.  Feature storage and
    matmul operands are bf16 (f32 accumulation) -- a documented precision
    choice vs. the f32 PyTorch reference.
    """
    N, C0, H, W = x_nchw.shape
    C_total = C0 + sum(growths)
    count = float(N * H * W)

    x_nhwc = jnp.transpose(x_nchw, (0, 2, 3, 1))          # NCHW -> NHWC

    # Preallocated bf16 feature buffer (replaces per-layer concatenation and
    # halves the dominant recurring HBM read of previously-computed features).
    buf = jnp.zeros((N, H, W, C_total), jnp.bfloat16)
    buf = jax.lax.dynamic_update_slice(
        buf, x_nhwc.astype(jnp.bfloat16), (0, 0, 0, 0))

    # Cached per-channel running sums for training-mode BatchNorm statistics.
    csum = jnp.zeros((C_total,), jnp.float32).at[:C0].set(
        jnp.sum(x_nhwc, axis=(0, 1, 2)))
    csumsq = jnp.zeros((C_total,), jnp.float32).at[:C0].set(
        jnp.sum(x_nhwc * x_nhwc, axis=(0, 1, 2)))

    cur = C0
    for (gamma, beta, w3), growth in zip(layer_params, growths):
        cin_eff = int(w3.shape[1])       # min(round_up(cur, 128), C_total)
        cout_pad = int(w3.shape[2])

        # Only the live (lane-rounded) channel prefix is handed to the kernel.
        feats_in = buf if cin_eff == C_total else jax.lax.slice_in_dim(
            buf, 0, cin_eff, axis=3)

        # BatchNorm(batch stats) folded into per-channel scale/shift; channels
        # >= cur get scale = shift = 0 (their weight rows are zero as well).
        mean = csum[:cin_eff] / count
        var = csumsq[:cin_eff] / count - mean * mean
        valid = jnp.arange(cin_eff) < cur
        gamma_p = jnp.pad(gamma.astype(jnp.float32), (0, cin_eff - cur))
        beta_p = jnp.pad(beta.astype(jnp.float32), (0, cin_eff - cur))
        inv = jnp.where(valid, gamma_p * jax.lax.rsqrt(var + eps), 0.0)
        shift = jnp.where(valid, beta_p - mean * inv, 0.0)

        newf, stats = dense_layer_pallas(
            feats_in, inv.reshape(1, cin_eff), shift.reshape(1, cin_eff), w3)

        # Insert the new features into their channel slice (in-place under jit).
        buf = jax.lax.dynamic_update_slice(
            buf, newf[..., :growth], (0, 0, 0, cur))

        # Update cached BN statistics from the kernel's epilogue sums.
        s = jnp.sum(stats, axis=0)                        # (2, COUT_PAD)
        csum = csum.at[cur:cur + growth].set(s[0, :growth])
        csumsq = csumsq.at[cur:cur + growth].set(s[1, :growth])
        cur += growth

    # Pass the original input channels through exactly (as PyTorch does).
    out_nhwc = buf.astype(jnp.float32)
    out_nhwc = jax.lax.dynamic_update_slice(
        out_nhwc, x_nhwc.astype(jnp.float32), (0, 0, 0, 0))
    return jnp.transpose(out_nhwc, (0, 3, 1, 2)).astype(x_nchw.dtype)


def reference_forward(x_nchw, params, eps=1e-5):
    """Pure-JAX reference (lax.conv, f32) for correctness checking."""
    feats = x_nchw
    for gamma, beta, w_hwio in params:
        mean = jnp.mean(feats, axis=(0, 2, 3), keepdims=True)
        var = jnp.var(feats, axis=(0, 2, 3), keepdims=True)
        y = (feats - mean) / jnp.sqrt(var + eps)
        y = y * gamma[None, :, None, None] + beta[None, :, None, None]
        y = jnp.maximum(y, 0.0)
        w_oihw = jnp.transpose(w_hwio, (3, 2, 0, 1))
        new = jax.lax.conv_general_dilated(
            y, w_oihw, window_strides=(1, 1), padding="SAME",
            dimension_numbers=("NCHW", "OIHW", "NCHW"))
        feats = jnp.concatenate([feats, new], axis=1)
    return feats


if __name__ == "__main__":
    num_layers = 3
    num_input_features = 4
    growth_rate = 4
    batch, height, width = 2, 16, 16

    key = jax.random.PRNGKey(0)
    key, xk, pk = jax.random.split(key, 3)
    x = jax.random.normal(
        xk, (batch, num_input_features, height, width), dtype=jnp.float32)
    params = make_params(num_layers, num_input_features, growth_rate, pk)

    # One-time parameter prep (hoisted out of the jitted forward).
    layer_params, growths = prepare_layer_params(params, num_input_features)

    fwd = jax.jit(model_forward, static_argnums=(2,))
    out = jax.block_until_ready(fwd(x, layer_params, growths))

    expected_channels = num_input_features + num_layers * growth_rate
    assert out.shape == (batch, expected_channels, height, width), out.shape

    ref = jax.block_until_ready(reference_forward(x, params))
    max_err = float(jnp.max(jnp.abs(out - ref)))
    mean_err = float(jnp.mean(jnp.abs(out - ref)))
    # bf16 feature storage + bf16 matmul operands (f32 accumulation) vs. a pure
    # f32 reference -> loosened tolerances.  This is a precision choice, not a
    # bug; conceptual errors would show up as O(1) discrepancies.
    assert max_err < 1e-1, (max_err, mean_err)
    assert mean_err < 5e-3, (max_err, mean_err)

    print("KERNEL_OK")
</pallas_src>

<mosaic_0001>
module attributes {stable_mosaic.version = 11 : i64} {
  func.func @_bn_relu_conv3x3_kernel(%arg0: i32, %arg1: memref<1x16x16x16xbf16, #tpu.memory_space<vmem>>, %arg2: memref<1x16xf32, #tpu.memory_space<vmem>>, %arg3: memref<1x16xf32, #tpu.memory_space<vmem>>, %arg4: memref<9x16x128xbf16, #tpu.memory_space<vmem>>, %arg5: memref<1x16x16x128xbf16, #tpu.memory_space<vmem>>, %arg6: memref<1x2x128xf32, #tpu.memory_space<vmem>>, %arg7: memref<18x18x16xf32, #tpu.memory_space<vmem>>) attributes {dimension_semantics = [#tpu.dimension_semantics<parallel>], iteration_bounds = array<i64: 2>, scalar_prefetch = 0 : i64, scratch_operands = 1 : i64, tpu.core_type = #tpu.core_type<tc>, window_params = [{transform_indices = @transform_0, window_bounds = array<i64: 1, 16, 16, 16>}, {pipeline_mode = #tpu.pipeline_mode<synchronous>, transform_indices = @transform_1, window_bounds = array<i64: 1, 16>}, {pipeline_mode = #tpu.pipeline_mode<synchronous>, transform_indices = @transform_2, window_bounds = array<i64: 1, 16>}, {pipeline_mode = #tpu.pipeline_mode<synchronous>, transform_indices = @transform_3, window_bounds = array<i64: 9, 16, 128>}, {transform_indices = @transform_4, window_bounds = array<i64: 1, 16, 16, 128>}, {transform_indices = @transform_5, window_bounds = array<i64: 1, 2, 128>}]} {
    %cst = arith.constant 0.000000e+00 : f32
    %0 = vector.broadcast %cst : f32 to vector<1x18x16xf32>
    %c0 = arith.constant 0 : index
    %c0_0 = arith.constant 0 : index
    %c0_1 = arith.constant 0 : index
    %1 = vector.load %arg7[%c0, %c0_0, %c0_1] : memref<18x18x16xf32, #tpu.memory_space<vmem>>, vector<1x18x16xf32>
    tpu.vector_store %arg7[%c0, %c0_0, %c0_1], %0 {strides = array<i32>} : memref<18x18x16xf32, #tpu.memory_space<vmem>>, vector<1x18x16xf32>,
    %cst_2 = arith.constant 0.000000e+00 : f32
    %2 = vector.broadcast %cst_2 : f32 to vector<1x18x16xf32>
    %c17 = arith.constant 17 : index
    %c0_3 = arith.constant 0 : index
    %c0_4 = arith.constant 0 : index
    %3 = vector.load %arg7[%c17, %c0_3, %c0_4] : memref<18x18x16xf32, #tpu.memory_space<vmem>>, vector<1x18x16xf32>
    tpu.vector_store %arg7[%c17, %c0_3, %c0_4], %2 {strides = array<i32>} : memref<18x18x16xf32, #tpu.memory_space<vmem>>, vector<1x18x16xf32>,
    %cst_5 = arith.constant 0.000000e+00 : f32
    %4 = vector.broadcast %cst_5 : f32 to vector<16x1x16xf32>
    %c1 = arith.constant 1 : index
    %c0_6 = arith.constant 0 : index
    %c0_7 = arith.constant 0 : index
    %5 = vector.load %arg7[%c1, %c0_6, %c0_7] : memref<18x18x16xf32, #tpu.memory_space<vmem>>, vector<16x1x16xf32>
    tpu.vector_store %arg7[%c1, %c0_6, %c0_7], %4 {strides = array<i32>} : memref<18x18x16xf32, #tpu.memory_space<vmem>>, vector<16x1x16xf32>,
    %cst_8 = arith.constant 0.000000e+00 : f32
    %6 = vector.broadcast %cst_8 : f32 to vector<16x1x16xf32>
    %c1_9 = arith.constant 1 : index
    %c17_10 = arith.constant 17 : index
    %c0_11 = arith.constant 0 : index
    %7 = vector.load %arg7[%c1_9, %c17_10, %c0_11] : memref<18x18x16xf32, #tpu.memory_space<vmem>>, vector<16x1x16xf32>
    tpu.vector_store %arg7[%c1_9, %c17_10, %c0_11], %6 {strides = array<i32>} : memref<18x18x16xf32, #tpu.memory_space<vmem>>, vector<16x1x16xf32>,
    %c0_12 = arith.constant 0 : index
    %c0_13 = arith.constant 0 : index
    %c0_14 = arith.constant 0 : index
    %c0_15 = arith.constant 0 : index
    %8 = vector.load %arg1[%c0_12, %c0_13, %c0_14, %c0_15] : memref<1x16x16x16xbf16, #tpu.memory_space<vmem>>, vector<1x16x16x16xbf16>
    %9 = vector.shape_cast %8 : vector<1x16x16x16xbf16> to vector<16x16x16xbf16>
    %10 = arith.extf %9 : vector<16x16x16xbf16> to vector<16x16x16xf32>
    %c0_16 = arith.constant 0 : index
    %c0_17 = arith.constant 0 : index
    %11 = vector.load %arg2[%c0_16, %c0_17] : memref<1x16xf32, #tpu.memory_space<vmem>>, vector<1x16xf32>
    %12 = vector.shape_cast %11 : vector<1x16xf32> to vector<16xf32>
    %13 = vector.shape_cast %12 : vector<16xf32> to vector<1x1x16xf32>
    %c0_18 = arith.constant 0 : index
    %c0_19 = arith.constant 0 : index
    %14 = vector.load %arg3[%c0_18, %c0_19] : memref<1x16xf32, #tpu.memory_space<vmem>>, vector<1x16xf32>
    %15 = vector.shape_cast %14 : vector<1x16xf32> to vector<16xf32>
    %16 = vector.shape_cast %15 : vector<16xf32> to vector<1x1x16xf32>
    %17 = vector.broadcast %13 : vector<1x1x16xf32> to vector<16x16x16xf32>
    %18 = arith.mulf %10, %17 : vector<16x16x16xf32>
    %19 = vector.broadcast %16 : vector<1x1x16xf32> to vector<16x16x16xf32>
    %20 = arith.addf %18, %19 : vector<16x16x16xf32>
    %cst_20 = arith.constant 0.000000e+00 : f32
    %21 = vector.broadcast %cst_20 : f32 to vector<16x16x16xf32>
    %22 = arith.maximumf %20, %21 : vector<16x16x16xf32>
    %c1_21 = arith.constant 1 : index
    %c1_22 = arith.constant 1 : index
    %c0_23 = arith.constant 0 : index
    %23 = vector.load %arg7[%c1_21, %c1_22, %c0_23] : memref<18x18x16xf32, #tpu.memory_space<vmem>>, vector<16x16x16xf32>
    tpu.vector_store %arg7[%c1_21, %c1_22, %c0_23], %22 {strides = array<i32>} : memref<18x18x16xf32, #tpu.memory_space<vmem>>, vector<16x16x16xf32>,
    %cst_24 = arith.constant 0.000000e+00 : f32
    %24 = vector.broadcast %cst_24 : f32 to vector<256x128xf32>
    %c0_25 = arith.constant 0 : index
    %c0_26 = arith.constant 0 : index
    %c0_27 = arith.constant 0 : index
    %25 = vector.load %arg7[%c0_25, %c0_26, %c0_27] : memref<18x18x16xf32, #tpu.memory_space<vmem>>, vector<16x16x16xf32>
    %26 = vector.shape_cast %25 : vector<16x16x16xf32> to vector<256x16xf32>
    %27 = arith.truncf %26 : vector<256x16xf32> to vector<256x16xbf16>
    %c0_28 = arith.constant 0 : index
    %c0_29 = arith.constant 0 : index
    %c0_30 = arith.constant 0 : index
    %28 = vector.load %arg4[%c0_28, %c0_29, %c0_30] : memref<9x16x128xbf16, #tpu.memory_space<vmem>>, vector<1x16x128xbf16>
    %29 = vector.shape_cast %28 : vector<1x16x128xbf16> to vector<16x128xbf16>
    %cst_31 = arith.constant dense<0.000000e+00> : vector<256x128xf32>
    %30 = tpu.matmul %27, %29, %cst_31 {dimension_numbers = #tpu.dot_dimension_numbers<[1], [0], [0], [1], [0, 0, 1, 1], [], []>} : vector<256x16xbf16>, vector<16x128xbf16>, vector<256x128xf32> -> vector<256x128xf32>
    %31 = arith.addf %24, %30 : vector<256x128xf32>
    %c0_32 = arith.constant 0 : index
    %c1_33 = arith.constant 1 : index
    %c0_34 = arith.constant 0 : index
    %32 = vector.load %arg7[%c0_32, %c1_33, %c0_34] : memref<18x18x16xf32, #tpu.memory_space<vmem>>, vector<16x16x16xf32>
    %33 = vector.shape_cast %32 : vector<16x16x16xf32> to vector<256x16xf32>
    %34 = arith.truncf %33 : vector<256x16xf32> to vector<256x16xbf16>
    %c1_35 = arith.constant 1 : index
    %c0_36 = arith.constant 0 : index
    %c0_37 = arith.constant 0 : index
    %35 = vector.load %arg4[%c1_35, %c0_36, %c0_37] : memref<9x16x128xbf16, #tpu.memory_space<vmem>>, vector<1x16x128xbf16>
    %36 = vector.shape_cast %35 : vector<1x16x128xbf16> to vector<16x128xbf16>
    %cst_38 = arith.constant dense<0.000000e+00> : vector<256x128xf32>
    %37 = tpu.matmul %34, %36, %cst_38 {dimension_numbers = #tpu.dot_dimension_numbers<[1], [0], [0], [1], [0, 0, 1, 1], [], []>} : vector<256x16xbf16>, vector<16x128xbf16>, vector<256x128xf32> -> vector<256x128xf32>
    %38 = arith.addf %31, %37 : vector<256x128xf32>
    %c0_39 = arith.constant 0 : index
    %c2 = arith.constant 2 : index
    %c0_40 = arith.constant 0 : index
    %39 = vector.load %arg7[%c0_39, %c2, %c0_40] : memref<18x18x16xf32, #tpu.memory_space<vmem>>, vector<16x16x16xf32>
    %40 = vector.shape_cast %39 : vector<16x16x16xf32> to vector<256x16xf32>
    %41 = arith.truncf %40 : vector<256x16xf32> to vector<256x16xbf16>
    %c2_41 = arith.constant 2 : index
    %c0_42 = arith.constant 0 : index
    %c0_43 = arith.constant 0 : index
    %42 = vector.load %arg4[%c2_41, %c0_42, %c0_43] : memref<9x16x128xbf16, #tpu.memory_space<vmem>>, vector<1x16x128xbf16>
    %43 = vector.shape_cast %42 : vector<1x16x128xbf16> to vector<16x128xbf16>
    %cst_44 = arith.constant dense<0.000000e+00> : vector<256x128xf32>
    %44 = tpu.matmul %41, %43, %cst_44 {dimension_numbers = #tpu.dot_dimension_numbers<[1], [0], [0], [1], [0, 0, 1, 1], [], []>} : vector<256x16xbf16>, vector<16x128xbf16>, vector<256x128xf32> -> vector<256x128xf32>
    %45 = arith.addf %38, %44 : vector<256x128xf32>
    %c1_45 = arith.constant 1 : index
    %c0_46 = arith.constant 0 : index
    %c0_47 = arith.constant 0 : index
    %46 = vector.load %arg7[%c1_45, %c0_46, %c0_47] : memref<18x18x16xf32, #tpu.memory_space<vmem>>, vector<16x16x16xf32>
    %47 = vector.shape_cast %46 : vector<16x16x16xf32> to vector<256x16xf32>
    %48 = arith.truncf %47 : vector<256x16xf32> to vector<256x16xbf16>
    %c3 = arith.constant 3 : index
    %c0_48 = arith.constant 0 : index
    %c0_49 = arith.constant 0 : index
    %49 = vector.load %arg4[%c3, %c0_48, %c0_49] : memref<9x16x128xbf16, #tpu.memory_space<vmem>>, vector<1x16x128xbf16>
    %50 = vector.shape_cast %49 : vector<1x16x128xbf16> to vector<16x128xbf16>
    %cst_50 = arith.constant dense<0.000000e+00> : vector<256x128xf32>
    %51 = tpu.matmul %48, %50, %cst_50 {dimension_numbers = #tpu.dot_dimension_numbers<[1], [0], [0], [1], [0, 0, 1, 1], [], []>} : vector<256x16xbf16>, vector<16x128xbf16>, vector<256x128xf32> -> vector<256x128xf32>
    %52 = arith.addf %45, %51 : vector<256x128xf32>
    %c1_51 = arith.constant 1 : index
    %c1_52 = arith.constant 1 : index
    %c0_53 = arith.constant 0 : index
    %53 = vector.load %arg7[%c1_51, %c1_52, %c0_53] : memref<18x18x16xf32, #tpu.memory_space<vmem>>, vector<16x16x16xf32>
    %54 = vector.shape_cast %53 : vector<16x16x16xf32> to vector<256x16xf32>
    %55 = arith.truncf %54 : vector<256x16xf32> to vector<256x16xbf16>
    %c4 = arith.constant 4 : index
    %c0_54 = arith.constant 0 : index
    %c0_55 = arith.constant 0 : index
    %56 = vector.load %arg4[%c4, %c0_54, %c0_55] : memref<9x16x128xbf16, #tpu.memory_space<vmem>>, vector<1x16x128xbf16>
    %57 = vector.shape_cast %56 : vector<1x16x128xbf16> to vector<16x128xbf16>
    %cst_56 = arith.constant dense<0.000000e+00> : vector<256x128xf32>
    %58 = tpu.matmul %55, %57, %cst_56 {dimension_numbers = #tpu.dot_dimension_numbers<[1], [0], [0], [1], [0, 0, 1, 1], [], []>} : vector<256x16xbf16>, vector<16x128xbf16>, vector<256x128xf32> -> vector<256x128xf32>
    %59 = arith.addf %52, %58 : vector<256x128xf32>
    %c1_57 = arith.constant 1 : index
    %c2_58 = arith.constant 2 : index
    %c0_59 = arith.constant 0 : index
    %60 = vector.load %arg7[%c1_57, %c2_58, %c0_59] : memref<18x18x16xf32, #tpu.memory_space<vmem>>, vector<16x16x16xf32>
    %61 = vector.shape_cast %60 : vector<16x16x16xf32> to vector<256x16xf32>
    %62 = arith.truncf %61 : vector<256x16xf32> to vector<256x16xbf16>
    %c5 = arith.constant 5 : index
    %c0_60 = arith.constant 0 : index
    %c0_61 = arith.constant 0 : index
    %63 = vector.load %arg4[%c5, %c0_60, %c0_61] : memref<9x16x128xbf16, #tpu.memory_space<vmem>>, vector<1x16x128xbf16>
    %64 = vector.shape_cast %63 : vector<1x16x128xbf16> to vector<16x128xbf16>
    %cst_62 = arith.constant dense<0.000000e+00> : vector<256x128xf32>
    %65 = tpu.matmul %62, %64, %cst_62 {dimension_numbers = #tpu.dot_dimension_numbers<[1], [0], [0], [1], [0, 0, 1, 1], [], []>} : vector<256x16xbf16>, vector<16x128xbf16>, vector<256x128xf32> -> vector<256x128xf32>
    %66 = arith.addf %59, %65 : vector<256x128xf32>
    %c2_63 = arith.constant 2 : index
    %c0_64 = arith.constant 0 : index
    %c0_65 = arith.constant 0 : index
    %67 = vector.load %arg7[%c2_63, %c0_64, %c0_65] : memref<18x18x16xf32, #tpu.memory_space<vmem>>, vector<16x16x16xf32>
    %68 = vector.shape_cast %67 : vector<16x16x16xf32> to vector<256x16xf32>
    %69 = arith.truncf %68 : vector<256x16xf32> to vector<256x16xbf16>
    %c6 = arith.constant 6 : index
    %c0_66 = arith.constant 0 : index
    %c0_67 = arith.constant 0 : index
    %70 = vector.load %arg4[%c6, %c0_66, %c0_67] : memref<9x16x128xbf16, #tpu.memory_space<vmem>>, vector<1x16x128xbf16>
    %71 = vector.shape_cast %70 : vector<1x16x128xbf16> to vector<16x128xbf16>
    %cst_68 = arith.constant dense<0.000000e+00> : vector<256x128xf32>
    %72 = tpu.matmul %69, %71, %cst_68 {dimension_numbers = #tpu.dot_dimension_numbers<[1], [0], [0], [1], [0, 0, 1, 1], [], []>} : vector<256x16xbf16>, vector<16x128xbf16>, vector<256x128xf32> -> vector<256x128xf32>
    %73 = arith.addf %66, %72 : vector<256x128xf32>
    %c2_69 = arith.constant 2 : index
    %c1_70 = arith.constant 1 : index
    %c0_71 = arith.constant 0 : index
    %74 = vector.load %arg7[%c2_69, %c1_70, %c0_71] : memref<18x18x16xf32, #tpu.memory_space<vmem>>, vector<16x16x16xf32>
    %75 = vector.shape_cast %74 : vector<16x16x16xf32> to vector<256x16xf32>
    %76 = arith.truncf %75 : vector<256x16xf32> to vector<256x16xbf16>
    %c7 = arith.constant 7 : index
    %c0_72 = arith.constant 0 : index
    %c0_73 = arith.constant 0 : index
    %77 = vector.load %arg4[%c7, %c0_72, %c0_73] : memref<9x16x128xbf16, #tpu.memory_space<vmem>>, vector<1x16x128xbf16>
    %78 = vector.shape_cast %77 : vector<1x16x128xbf16> to vector<16x128xbf16>
    %cst_74 = arith.constant dense<0.000000e+00> : vector<256x128xf32>
    %79 = tpu.matmul %76, %78, %cst_74 {dimension_numbers = #tpu.dot_dimension_numbers<[1], [0], [0], [1], [0, 0, 1, 1], [], []>} : vector<256x16xbf16>, vector<16x128xbf16>, vector<256x128xf32> -> vector<256x128xf32>
    %80 = arith.addf %73, %79 : vector<256x128xf32>
    %c2_75 = arith.constant 2 : index
    %c2_76 = arith.constant 2 : index
    %c0_77 = arith.constant 0 : index
    %81 = vector.load %arg7[%c2_75, %c2_76, %c0_77] : memref<18x18x16xf32, #tpu.memory_space<vmem>>, vector<16x16x16xf32>
    %82 = vector.shape_cast %81 : vector<16x16x16xf32> to vector<256x16xf32>
    %83 = arith.truncf %82 : vector<256x16xf32> to vector<256x16xbf16>
    %c8 = arith.constant 8 : index
    %c0_78 = arith.constant 0 : index
    %c0_79 = arith.constant 0 : index
    %84 = vector.load %arg4[%c8, %c0_78, %c0_79] : memref<9x16x128xbf16, #tpu.memory_space<vmem>>, vector<1x16x128xbf16>
    %85 = vector.shape_cast %84 : vector<1x16x128xbf16> to vector<16x128xbf16>
    %cst_80 = arith.constant dense<0.000000e+00> : vector<256x128xf32>
    %86 = tpu.matmul %83, %85, %cst_80 {dimension_numbers = #tpu.dot_dimension_numbers<[1], [0], [0], [1], [0, 0, 1, 1], [], []>} : vector<256x16xbf16>, vector<16x128xbf16>, vector<256x128xf32> -> vector<256x128xf32>
    %87 = arith.addf %80, %86 : vector<256x128xf32>
    %88 = vector.shape_cast %87 : vector<256x128xf32> to vector<16x16x128xf32>
    %89 = arith.truncf %88 : vector<16x16x128xf32> to vector<16x16x128xbf16>
    %c0_81 = arith.constant 0 : index
    %c0_82 = arith.constant 0 : index
    %c0_83 = arith.constant 0 : index
    %c0_84 = arith.constant 0 : index
    %90 = vector.load %arg5[%c0_81, %c0_82, %c0_83, %c0_84] : memref<1x16x16x128xbf16, #tpu.memory_space<vmem>>, vector<1x16x16x128xbf16>
    %91 = vector.shape_cast %90 : vector<1x16x16x128xbf16> to vector<16x16x128xbf16>
    %92 = vector.shape_cast %89 : vector<16x16x128xbf16> to vector<1x16x16x128xbf16>
    tpu.vector_store %arg5[%c0_81, %c0_82, %c0_83, %c0_84], %92 {strides = array<i32>} : memref<1x16x16x128xbf16, #tpu.memory_space<vmem>>, vector<1x16x16x128xbf16>,
    %cst_85 = arith.constant dense<0.000000e+00> : vector<128xf32>
    %93 = vector.multi_reduction <add>, %87, %cst_85 [0] : vector<256x128xf32> to vector<128xf32>
    %94 = vector.shape_cast %93 : vector<128xf32> to vector<1x128xf32>
    %95 = arith.mulf %87, %87 : vector<256x128xf32>
    %cst_86 = arith.constant dense<0.000000e+00> : vector<128xf32>
    %96 = vector.multi_reduction <add>, %95, %cst_86 [0] : vector<256x128xf32> to vector<128xf32>
    %97 = vector.shape_cast %96 : vector<128xf32> to vector<1x128xf32>
    %98 = tpu.concatenate %94, %97 in 0 : vector<1x128xf32>, vector<1x128xf32> -> vector<2x128xf32>
    %c0_87 = arith.constant 0 : index
    %c0_88 = arith.constant 0 : index
    %c0_89 = arith.constant 0 : index
    %99 = vector.load %arg6[%c0_87, %c0_88, %c0_89] : memref<1x2x128xf32, #tpu.memory_space<vmem>>, vector<1x2x128xf32>
    %100 = vector.shape_cast %99 : vector<1x2x128xf32> to vector<2x128xf32>
    %101 = vector.shape_cast %98 : vector<2x128xf32> to vector<1x2x128xf32>
    tpu.vector_store %arg6[%c0_87, %c0_88, %c0_89], %101 {strides = array<i32>} : memref<1x2x128xf32, #tpu.memory_space<vmem>>, vector<1x2x128xf32>,
    return
  }
  func.func @transform_0(%arg0: i32) -> (i32, i32, i32, i32) {
    %c0_i32 = arith.constant 0 : i32
    %c0_i32_0 = arith.constant 0 : i32
    %c0_i32_1 = arith.constant 0 : i32
    %c0_i32_2 = arith.constant 0 : i32
    return %arg0, %c0_i32, %c0_i32_0, %c0_i32_1 : i32, i32, i32, i32
  }
  func.func @transform_1(%arg0: i32) -> (i32, i32) {
    %c0_i32 = arith.constant 0 : i32
    %c0_i32_0 = arith.constant 0 : i32
    %c0_i32_1 = arith.constant 0 : i32
    return %c0_i32, %c0_i32_0 : i32, i32
  }
  func.func @transform_2(%arg0: i32) -> (i32, i32) {
    %c0_i32 = arith.constant 0 : i32
    %c0_i32_0 = arith.constant 0 : i32
    %c0_i32_1 = arith.constant 0 : i32
    return %c0_i32, %c0_i32_0 : i32, i32
  }
  func.func @transform_3(%arg0: i32) -> (i32, i32, i32) {
    %c0_i32 = arith.constant 0 : i32
    %c0_i32_0 = arith.constant 0 : i32
    %c0_i32_1 = arith.constant 0 : i32
    %c0_i32_2 = arith.constant 0 : i32
    return %c0_i32, %c0_i32_0, %c0_i32_1 : i32, i32, i32
  }
  func.func @transform_4(%arg0: i32) -> (i32, i32, i32, i32) {
    %c0_i32 = arith.constant 0 : i32
    %c0_i32_0 = arith.constant 0 : i32
    %c0_i32_1 = arith.constant 0 : i32
    %c0_i32_2 = arith.constant 0 : i32
    return %arg0, %c0_i32, %c0_i32_0, %c0_i32_1 : i32, i32, i32, i32
  }
  func.func @transform_5(%arg0: i32) -> (i32, i32, i32) {
    %c0_i32 = arith.constant 0 : i32
    %c0_i32_0 = arith.constant 0 : i32
    %c0_i32_1 = arith.constant 0 : i32
    return %arg0, %c0_i32, %c0_i32_0 : i32, i32, i32
  }
}

module attributes {stable_mosaic.version = 11 : i64} {
  func.func @_bn_relu_conv3x3_kernel(%arg0: i32, %arg1: memref<1x16x16x16xbf16, #tpu.memory_space<vmem>>, %arg2: memref<1x16xf32, #tpu.memory_space<vmem>>, %arg3: memref<1x16xf32, #tpu.memory_space<vmem>>, %arg4: memref<9x16x128xbf16, #tpu.memory_space<vmem>>, %arg5: memref<1x16x16x128xbf16, #tpu.memory_space<vmem>>, %arg6: memref<1x2x128xf32, #tpu.memory_space<vmem>>, %arg7: memref<18x18x16xf32, #tpu.memory_space<vmem>>) attributes {dimension_semantics = [#tpu.dimension_semantics<parallel>], iteration_bounds = array<i64: 2>, scalar_prefetch = 0 : i64, scratch_operands = 1 : i64, tpu.core_type = #tpu.core_type<tc>, window_params = [{transform_indices = @transform_0, window_bounds = array<i64: 1, 16, 16, 16>}, {pipeline_mode = #tpu.pipeline_mode<synchronous>, transform_indices = @transform_1, window_bounds = array<i64: 1, 16>}, {pipeline_mode = #tpu.pipeline_mode<synchronous>, transform_indices = @transform_2, window_bounds = array<i64: 1, 16>}, {pipeline_mode = #tpu.pipeline_mode<synchronous>, transform_indices = @transform_3, window_bounds = array<i64: 9, 16, 128>}, {transform_indices = @transform_4, window_bounds = array<i64: 1, 16, 16, 128>}, {transform_indices = @transform_5, window_bounds = array<i64: 1, 2, 128>}]} {
    %cst = arith.constant 0.000000e+00 : f32
    %0 = vector.broadcast %cst : f32 to vector<1x18x16xf32>
    %c0 = arith.constant 0 : index
    %c0_0 = arith.constant 0 : index
    %c0_1 = arith.constant 0 : index
    %1 = vector.load %arg7[%c0, %c0_0, %c0_1] : memref<18x18x16xf32, #tpu.memory_space<vmem>>, vector<1x18x16xf32>
    tpu.vector_store %arg7[%c0, %c0_0, %c0_1], %0 {strides = array<i32>} : memref<18x18x16xf32, #tpu.memory_space<vmem>>, vector<1x18x16xf32>,
    %cst_2 = arith.constant 0.000000e+00 : f32
    %2 = vector.broadcast %cst_2 : f32 to vector<1x18x16xf32>
    %c17 = arith.constant 17 : index
    %c0_3 = arith.constant 0 : index
    %c0_4 = arith.constant 0 : index
    %3 = vector.load %arg7[%c17, %c0_3, %c0_4] : memref<18x18x16xf32, #tpu.memory_space<vmem>>, vector<1x18x16xf32>
    tpu.vector_store %arg7[%c17, %c0_3, %c0_4], %2 {strides = array<i32>} : memref<18x18x16xf32, #tpu.memory_space<vmem>>, vector<1x18x16xf32>,
    %cst_5 = arith.constant 0.000000e+00 : f32
    %4 = vector.broadcast %cst_5 : f32 to vector<16x1x16xf32>
    %c1 = arith.constant 1 : index
    %c0_6 = arith.constant 0 : index
    %c0_7 = arith.constant 0 : index
    %5 = vector.load %arg7[%c1, %c0_6, %c0_7] : memref<18x18x16xf32, #tpu.memory_space<vmem>>, vector<16x1x16xf32>
    tpu.vector_store %arg7[%c1, %c0_6, %c0_7], %4 {strides = array<i32>} : memref<18x18x16xf32, #tpu.memory_space<vmem>>, vector<16x1x16xf32>,
    %cst_8 = arith.constant 0.000000e+00 : f32
    %6 = vector.broadcast %cst_8 : f32 to vector<16x1x16xf32>
    %c1_9 = arith.constant 1 : index
    %c17_10 = arith.constant 17 : index
    %c0_11 = arith.constant 0 : index
    %7 = vector.load %arg7[%c1_9, %c17_10, %c0_11] : memref<18x18x16xf32, #tpu.memory_space<vmem>>, vector<16x1x16xf32>
    tpu.vector_store %arg7[%c1_9, %c17_10, %c0_11], %6 {strides = array<i32>} : memref<18x18x16xf32, #tpu.memory_space<vmem>>, vector<16x1x16xf32>,
    %c0_12 = arith.constant 0 : index
    %c0_13 = arith.constant 0 : index
    %c0_14 = arith.constant 0 : index
    %c0_15 = arith.constant 0 : index
    %8 = vector.load %arg1[%c0_12, %c0_13, %c0_14, %c0_15] : memref<1x16x16x16xbf16, #tpu.memory_space<vmem>>, vector<1x16x16x16xbf16>
    %9 = vector.shape_cast %8 : vector<1x16x16x16xbf16> to vector<16x16x16xbf16>
    %10 = arith.extf %9 : vector<16x16x16xbf16> to vector<16x16x16xf32>
    %c0_16 = arith.constant 0 : index
    %c0_17 = arith.constant 0 : index
    %11 = vector.load %arg2[%c0_16, %c0_17] : memref<1x16xf32, #tpu.memory_space<vmem>>, vector<1x16xf32>
    %12 = vector.shape_cast %11 : vector<1x16xf32> to vector<16xf32>
    %13 = vector.shape_cast %12 : vector<16xf32> to vector<1x1x16xf32>
    %c0_18 = arith.constant 0 : index
    %c0_19 = arith.constant 0 : index
    %14 = vector.load %arg3[%c0_18, %c0_19] : memref<1x16xf32, #tpu.memory_space<vmem>>, vector<1x16xf32>
    %15 = vector.shape_cast %14 : vector<1x16xf32> to vector<16xf32>
    %16 = vector.shape_cast %15 : vector<16xf32> to vector<1x1x16xf32>
    %17 = vector.broadcast %13 : vector<1x1x16xf32> to vector<16x16x16xf32>
    %18 = arith.mulf %10, %17 : vector<16x16x16xf32>
    %19 = vector.broadcast %16 : vector<1x1x16xf32> to vector<16x16x16xf32>
    %20 = arith.addf %18, %19 : vector<16x16x16xf32>
    %cst_20 = arith.constant 0.000000e+00 : f32
    %21 = vector.broadcast %cst_20 : f32 to vector<16x16x16xf32>
    %22 = arith.maximumf %20, %21 : vector<16x16x16xf32>
    %c1_21 = arith.constant 1 : index
    %c1_22 = arith.constant 1 : index
    %c0_23 = arith.constant 0 : index
    %23 = vector.load %arg7[%c1_21, %c1_22, %c0_23] : memref<18x18x16xf32, #tpu.memory_space<vmem>>, vector<16x16x16xf32>
    tpu.vector_store %arg7[%c1_21, %c1_22, %c0_23], %22 {strides = array<i32>} : memref<18x18x16xf32, #tpu.memory_space<vmem>>, vector<16x16x16xf32>,
    %cst_24 = arith.constant 0.000000e+00 : f32
    %24 = vector.broadcast %cst_24 : f32 to vector<256x128xf32>
    %c0_25 = arith.constant 0 : index
    %c0_26 = arith.constant 0 : index
    %c0_27 = arith.constant 0 : index
    %25 = vector.load %arg7[%c0_25, %c0_26, %c0_27] : memref<18x18x16xf32, #tpu.memory_space<vmem>>, vector<16x16x16xf32>
    %26 = vector.shape_cast %25 : vector<16x16x16xf32> to vector<256x16xf32>
    %27 = arith.truncf %26 : vector<256x16xf32> to vector<256x16xbf16>
    %c0_28 = arith.constant 0 : index
    %c0_29 = arith.constant 0 : index
    %c0_30 = arith.constant 0 : index
    %28 = vector.load %arg4[%c0_28, %c0_29, %c0_30] : memref<9x16x128xbf16, #tpu.memory_space<vmem>>, vector<1x16x128xbf16>
    %29 = vector.shape_cast %28 : vector<1x16x128xbf16> to vector<16x128xbf16>
    %cst_31 = arith.constant dense<0.000000e+00> : vector<256x128xf32>
    %30 = tpu.matmul %27, %29, %cst_31 {dimension_numbers = #tpu.dot_dimension_numbers<[1], [0], [0], [1], [0, 0, 1, 1], [], []>} : vector<256x16xbf16>, vector<16x128xbf16>, vector<256x128xf32> -> vector<256x128xf32>
    %31 = arith.addf %24, %30 : vector<256x128xf32>
    %c0_32 = arith.constant 0 : index
    %c1_33 = arith.constant 1 : index
    %c0_34 = arith.constant 0 : index
    %32 = vector.load %arg7[%c0_32, %c1_33, %c0_34] : memref<18x18x16xf32, #tpu.memory_space<vmem>>, vector<16x16x16xf32>
    %33 = vector.shape_cast %32 : vector<16x16x16xf32> to vector<256x16xf32>
    %34 = arith.truncf %33 : vector<256x16xf32> to vector<256x16xbf16>
    %c1_35 = arith.constant 1 : index
    %c0_36 = arith.constant 0 : index
    %c0_37 = arith.constant 0 : index
    %35 = vector.load %arg4[%c1_35, %c0_36, %c0_37] : memref<9x16x128xbf16, #tpu.memory_space<vmem>>, vector<1x16x128xbf16>
    %36 = vector.shape_cast %35 : vector<1x16x128xbf16> to vector<16x128xbf16>
    %cst_38 = arith.constant dense<0.000000e+00> : vector<256x128xf32>
    %37 = tpu.matmul %34, %36, %cst_38 {dimension_numbers = #tpu.dot_dimension_numbers<[1], [0], [0], [1], [0, 0, 1, 1], [], []>} : vector<256x16xbf16>, vector<16x128xbf16>, vector<256x128xf32> -> vector<256x128xf32>
    %38 = arith.addf %31, %37 : vector<256x128xf32>
    %c0_39 = arith.constant 0 : index
    %c2 = arith.constant 2 : index
    %c0_40 = arith.constant 0 : index
    %39 = vector.load %arg7[%c0_39, %c2, %c0_40] : memref<18x18x16xf32, #tpu.memory_space<vmem>>, vector<16x16x16xf32>
    %40 = vector.shape_cast %39 : vector<16x16x16xf32> to vector<256x16xf32>
    %41 = arith.truncf %40 : vector<256x16xf32> to vector<256x16xbf16>
    %c2_41 = arith.constant 2 : index
    %c0_42 = arith.constant 0 : index
    %c0_43 = arith.constant 0 : index
    %42 = vector.load %arg4[%c2_41, %c0_42, %c0_43] : memref<9x16x128xbf16, #tpu.memory_space<vmem>>, vector<1x16x128xbf16>
    %43 = vector.shape_cast %42 : vector<1x16x128xbf16> to vector<16x128xbf16>
    %cst_44 = arith.constant dense<0.000000e+00> : vector<256x128xf32>
    %44 = tpu.matmul %41, %43, %cst_44 {dimension_numbers = #tpu.dot_dimension_numbers<[1], [0], [0], [1], [0, 0, 1, 1], [], []>} : vector<256x16xbf16>, vector<16x128xbf16>, vector<256x128xf32> -> vector<256x128xf32>
    %45 = arith.addf %38, %44 : vector<256x128xf32>
    %c1_45 = arith.constant 1 : index
    %c0_46 = arith.constant 0 : index
    %c0_47 = arith.constant 0 : index
    %46 = vector.load %arg7[%c1_45, %c0_46, %c0_47] : memref<18x18x16xf32, #tpu.memory_space<vmem>>, vector<16x16x16xf32>
    %47 = vector.shape_cast %46 : vector<16x16x16xf32> to vector<256x16xf32>
    %48 = arith.truncf %47 : vector<256x16xf32> to vector<256x16xbf16>
    %c3 = arith.constant 3 : index
    %c0_48 = arith.constant 0 : index
    %c0_49 = arith.constant 0 : index
    %49 = vector.load %arg4[%c3, %c0_48, %c0_49] : memref<9x16x128xbf16, #tpu.memory_space<vmem>>, vector<1x16x128xbf16>
    %50 = vector.shape_cast %49 : vector<1x16x128xbf16> to vector<16x128xbf16>
    %cst_50 = arith.constant dense<0.000000e+00> : vector<256x128xf32>
    %51 = tpu.matmul %48, %50, %cst_50 {dimension_numbers = #tpu.dot_dimension_numbers<[1], [0], [0], [1], [0, 0, 1, 1], [], []>} : vector<256x16xbf16>, vector<16x128xbf16>, vector<256x128xf32> -> vector<256x128xf32>
    %52 = arith.addf %45, %51 : vector<256x128xf32>
    %c1_51 = arith.constant 1 : index
    %c1_52 = arith.constant 1 : index
    %c0_53 = arith.constant 0 : index
    %53 = vector.load %arg7[%c1_51, %c1_52, %c0_53] : memref<18x18x16xf32, #tpu.memory_space<vmem>>, vector<16x16x16xf32>
    %54 = vector.shape_cast %53 : vector<16x16x16xf32> to vector<256x16xf32>
    %55 = arith.truncf %54 : vector<256x16xf32> to vector<256x16xbf16>
    %c4 = arith.constant 4 : index
    %c0_54 = arith.constant 0 : index
    %c0_55 = arith.constant 0 : index
    %56 = vector.load %arg4[%c4, %c0_54, %c0_55] : memref<9x16x128xbf16, #tpu.memory_space<vmem>>, vector<1x16x128xbf16>
    %57 = vector.shape_cast %56 : vector<1x16x128xbf16> to vector<16x128xbf16>
    %cst_56 = arith.constant dense<0.000000e+00> : vector<256x128xf32>
    %58 = tpu.matmul %55, %57, %cst_56 {dimension_numbers = #tpu.dot_dimension_numbers<[1], [0], [0], [1], [0, 0, 1, 1], [], []>} : vector<256x16xbf16>, vector<16x128xbf16>, vector<256x128xf32> -> vector<256x128xf32>
    %59 = arith.addf %52, %58 : vector<256x128xf32>
    %c1_57 = arith.constant 1 : index
    %c2_58 = arith.constant 2 : index
    %c0_59 = arith.constant 0 : index
    %60 = vector.load %arg7[%c1_57, %c2_58, %c0_59] : memref<18x18x16xf32, #tpu.memory_space<vmem>>, vector<16x16x16xf32>
    %61 = vector.shape_cast %60 : vector<16x16x16xf32> to vector<256x16xf32>
    %62 = arith.truncf %61 : vector<256x16xf32> to vector<256x16xbf16>
    %c5 = arith.constant 5 : index
    %c0_60 = arith.constant 0 : index
    %c0_61 = arith.constant 0 : index
    %63 = vector.load %arg4[%c5, %c0_60, %c0_61] : memref<9x16x128xbf16, #tpu.memory_space<vmem>>, vector<1x16x128xbf16>
    %64 = vector.shape_cast %63 : vector<1x16x128xbf16> to vector<16x128xbf16>
    %cst_62 = arith.constant dense<0.000000e+00> : vector<256x128xf32>
    %65 = tpu.matmul %62, %64, %cst_62 {dimension_numbers = #tpu.dot_dimension_numbers<[1], [0], [0], [1], [0, 0, 1, 1], [], []>} : vector<256x16xbf16>, vector<16x128xbf16>, vector<256x128xf32> -> vector<256x128xf32>
    %66 = arith.addf %59, %65 : vector<256x128xf32>
    %c2_63 = arith.constant 2 : index
    %c0_64 = arith.constant 0 : index
    %c0_65 = arith.constant 0 : index
    %67 = vector.load %arg7[%c2_63, %c0_64, %c0_65] : memref<18x18x16xf32, #tpu.memory_space<vmem>>, vector<16x16x16xf32>
    %68 = vector.shape_cast %67 : vector<16x16x16xf32> to vector<256x16xf32>
    %69 = arith.truncf %68 : vector<256x16xf32> to vector<256x16xbf16>
    %c6 = arith.constant 6 : index
    %c0_66 = arith.constant 0 : index
    %c0_67 = arith.constant 0 : index
    %70 = vector.load %arg4[%c6, %c0_66, %c0_67] : memref<9x16x128xbf16, #tpu.memory_space<vmem>>, vector<1x16x128xbf16>
    %71 = vector.shape_cast %70 : vector<1x16x128xbf16> to vector<16x128xbf16>
    %cst_68 = arith.constant dense<0.000000e+00> : vector<256x128xf32>
    %72 = tpu.matmul %69, %71, %cst_68 {dimension_numbers = #tpu.dot_dimension_numbers<[1], [0], [0], [1], [0, 0, 1, 1], [], []>} : vector<256x16xbf16>, vector<16x128xbf16>, vector<256x128xf32> -> vector<256x128xf32>
    %73 = arith.addf %66, %72 : vector<256x128xf32>
    %c2_69 = arith.constant 2 : index
    %c1_70 = arith.constant 1 : index
    %c0_71 = arith.constant 0 : index
    %74 = vector.load %arg7[%c2_69, %c1_70, %c0_71] : memref<18x18x16xf32, #tpu.memory_space<vmem>>, vector<16x16x16xf32>
    %75 = vector.shape_cast %74 : vector<16x16x16xf32> to vector<256x16xf32>
    %76 = arith.truncf %75 : vector<256x16xf32> to vector<256x16xbf16>
    %c7 = arith.constant 7 : index
    %c0_72 = arith.constant 0 : index
    %c0_73 = arith.constant 0 : index
    %77 = vector.load %arg4[%c7, %c0_72, %c0_73] : memref<9x16x128xbf16, #tpu.memory_space<vmem>>, vector<1x16x128xbf16>
    %78 = vector.shape_cast %77 : vector<1x16x128xbf16> to vector<16x128xbf16>
    %cst_74 = arith.constant dense<0.000000e+00> : vector<256x128xf32>
    %79 = tpu.matmul %76, %78, %cst_74 {dimension_numbers = #tpu.dot_dimension_numbers<[1], [0], [0], [1], [0, 0, 1, 1], [], []>} : vector<256x16xbf16>, vector<16x128xbf16>, vector<256x128xf32> -> vector<256x128xf32>
    %80 = arith.addf %73, %79 : vector<256x128xf32>
    %c2_75 = arith.constant 2 : index
    %c2_76 = arith.constant 2 : index
    %c0_77 = arith.constant 0 : index
    %81 = vector.load %arg7[%c2_75, %c2_76, %c0_77] : memref<18x18x16xf32, #tpu.memory_space<vmem>>, vector<16x16x16xf32>
    %82 = vector.shape_cast %81 : vector<16x16x16xf32> to vector<256x16xf32>
    %83 = arith.truncf %82 : vector<256x16xf32> to vector<256x16xbf16>
    %c8 = arith.constant 8 : index
    %c0_78 = arith.constant 0 : index
    %c0_79 = arith.constant 0 : index
    %84 = vector.load %arg4[%c8, %c0_78, %c0_79] : memref<9x16x128xbf16, #tpu.memory_space<vmem>>, vector<1x16x128xbf16>
    %85 = vector.shape_cast %84 : vector<1x16x128xbf16> to vector<16x128xbf16>
    %cst_80 = arith.constant dense<0.000000e+00> : vector<256x128xf32>
    %86 = tpu.matmul %83, %85, %cst_80 {dimension_numbers = #tpu.dot_dimension_numbers<[1], [0], [0], [1], [0, 0, 1, 1], [], []>} : vector<256x16xbf16>, vector<16x128xbf16>, vector<256x128xf32> -> vector<256x128xf32>
    %87 = arith.addf %80, %86 : vector<256x128xf32>
    %88 = vector.shape_cast %87 : vector<256x128xf32> to vector<16x16x128xf32>
    %89 = arith.truncf %88 : vector<16x16x128xf32> to vector<16x16x128xbf16>
    %c0_81 = arith.constant 0 : index
    %c0_82 = arith.constant 0 : index
    %c0_83 = arith.constant 0 : index
    %c0_84 = arith.constant 0 : index
    %90 = vector.load %arg5[%c0_81, %c0_82, %c0_83, %c0_84] : memref<1x16x16x128xbf16, #tpu.memory_space<vmem>>, vector<1x16x16x128xbf16>
    %91 = vector.shape_cast %90 : vector<1x16x16x128xbf16> to vector<16x16x128xbf16>
    %92 = vector.shape_cast %89 : vector<16x16x128xbf16> to vector<1x16x16x128xbf16>
    tpu.vector_store %arg5[%c0_81, %c0_82, %c0_83, %c0_84], %92 {strides = array<i32>} : memref<1x16x16x128xbf16, #tpu.memory_space<vmem>>, vector<1x16x16x128xbf16>,
    %cst_85 = arith.constant dense<0.000000e+00> : vector<128xf32>
    %93 = vector.multi_reduction <add>, %87, %cst_85 [0] : vector<256x128xf32> to vector<128xf32>
    %94 = vector.shape_cast %93 : vector<128xf32> to vector<1x128xf32>
    %95 = arith.mulf %87, %87 : vector<256x128xf32>
    %cst_86 = arith.constant dense<0.000000e+00> : vector<128xf32>
    %96 = vector.multi_reduction <add>, %95, %cst_86 [0] : vector<256x128xf32> to vector<128xf32>
    %97 = vector.shape_cast %96 : vector<128xf32> to vector<1x128xf32>
    %98 = tpu.concatenate %94, %97 in 0 : vector<1x128xf32>, vector<1x128xf32> -> vector<2x128xf32>
    %c0_87 = arith.constant 0 : index
    %c0_88 = arith.constant 0 : index
    %c0_89 = arith.constant 0 : index
    %99 = vector.load %arg6[%c0_87, %c0_88, %c0_89] : memref<1x2x128xf32, #tpu.memory_space<vmem>>, vector<1x2x128xf32>
    %100 = vector.shape_cast %99 : vector<1x2x128xf32> to vector<2x128xf32>
    %101 = vector.shape_cast %98 : vector<2x128xf32> to vector<1x2x128xf32>
    tpu.vector_store %arg6[%c0_87, %c0_88, %c0_89], %101 {strides = array<i32>} : memref<1x2x128xf32, #tpu.memory_space<vmem>>, vector<1x2x128xf32>,
    return
  }
  func.func @transform_0(%arg0: i32) -> (i32, i32, i32, i32) {
    %c0_i32 = arith.constant 0 : i32
    %c0_i32_0 = arith.constant 0 : i32
    %c0_i32_1 = arith.constant 0 : i32
    %c0_i32_2 = arith.constant 0 : i32
    return %arg0, %c0_i32, %c0_i32_0, %c0_i32_1 : i32, i32, i32, i32
  }
  func.func @transform_1(%arg0: i32) -> (i32, i32) {
    %c0_i32 = arith.constant 0 : i32
    %c0_i32_0 = arith.constant 0 : i32
    %c0_i32_1 = arith.constant 0 : i32
    return %c0_i32, %c0_i32_0 : i32, i32
  }
  func.func @transform_2(%arg0: i32) -> (i32, i32) {
    %c0_i32 = arith.constant 0 : i32
    %c0_i32_0 = arith.constant 0 : i32
    %c0_i32_1 = arith.constant 0 : i32
    return %c0_i32, %c0_i32_0 : i32, i32
  }
  func.func @transform_3(%arg0: i32) -> (i32, i32, i32) {
    %c0_i32 = arith.constant 0 : i32
    %c0_i32_0 = arith.constant 0 : i32
    %c0_i32_1 = arith.constant 0 : i32
    %c0_i32_2 = arith.constant 0 : i32
    return %c0_i32, %c0_i32_0, %c0_i32_1 : i32, i32, i32
  }
  func.func @transform_4(%arg0: i32) -> (i32, i32, i32, i32) {
    %c0_i32 = arith.constant 0 : i32
    %c0_i32_0 = arith.constant 0 : i32
    %c0_i32_1 = arith.constant 0 : i32
    %c0_i32_2 = arith.constant 0 : i32
    return %arg0, %c0_i32, %c0_i32_0, %c0_i32_1 : i32, i32, i32, i32
  }
  func.func @transform_5(%arg0: i32) -> (i32, i32, i32) {
    %c0_i32 = arith.constant 0 : i32
    %c0_i32_0 = arith.constant 0 : i32
    %c0_i32_1 = arith.constant 0 : i32
    return %arg0, %c0_i32, %c0_i32_0 : i32, i32, i32
  }
}

</mosaic_0001>

<llo_original>
// kernel: model_forward.3
$region0: #{model_forward.3}
  #allocation0 [shape = 'u32[]', space=smem, size = 0x4, offset = 0x4, fixed_abs, tag = 'smem constant byte address 0x4 - core index']
  #allocation1 [shape = 'u32[144,128]{1,0:T(1,128)}', space=vmem, size = 0x12000, scoped, tag = 'internal scratch']
  #allocation2 [shape = 'f32[18,18,16]{2,1,0:T(8,128)}', space=vmem, size = 0x36000, scoped, tag = 'scratch operand']
  %s0 = inlined_call_operand.vmem [shape: bf16[2,16,16,16], index: 0, kind: input, shape index: {}]
  %s1 = inlined_call_operand.vmem [shape: f32[1,16], index: 1, kind: input, shape index: {}]
  %s2 = inlined_call_operand.vmem [shape: f32[1,16], index: 2, kind: input, shape index: {}]
  %s3 = inlined_call_operand.vmem [shape: bf16[9,16,128], index: 3, kind: input, shape index: {}]
  %s4 = inlined_call_operand.vmem [shape: bf16[2,16,16,128], index: 4, kind: output, shape index: {0}]
  %s5 = inlined_call_operand.vmem [shape: f32[2,2,128], index: 5, kind: output, shape index: {1}]
  %6 = xla_tuple %s4, %s5
  %s7 = sld [smem:[#allocation0]]
  $region57: #{model_forward.3} parent=0
    _
  %s9 = ssub.s32 1, %s7
  %s10 = scalar_select 0, %s9, %s7
  loop: start=0, step=1, limit=4
  $region2: #{model_forward.3} parent=0 // loop_pre_header
    _
  $region3: #{model_forward.3} parent=0 // loop_header
    %s12 = sphi 0, %s16
    %p13 = scmp.ge.s32.totalorder %s12, 4
    %s22 = sphi 0, %s24
    %s25 = sphi 0, %s22
    %s26 = sphi 0, %s25
    %s42 = sphi 0, %s26
    %s46 = sphi 0, %s46
    %s48 = sphi 0, %s46
    %s49 = sphi 0, %s48
    %s63 = sphi 0, %s49
    %s67 = sphi 0, %s67
    %s69 = sphi 0, %s67
    %s70 = sphi 0, %s69
    %s84 = sphi 0, %s70
    %s88 = sphi 0, %s88
    %s90 = sphi 0, %s88
    %s91 = sphi 0, %s90
    %s105 = sphi 0, %s91
    %s111 = sphi 0, %s113
    %s114 = sphi 0, %s111
    %s115 = sphi 0, %s114
    %s131 = sphi 0, %s115
    %s137 = sphi 0, %s139
    %s140 = sphi 0, %s137
    %s141 = sphi 0, %s140
    %s157 = sphi 0, %s141
  $region4: #{model_forward.3} parent=0 // loop_header_branch
    %15 = sbr.rel (%p13) target = $region8
  $region5: #{model_forward.3} parent=0 // loop_body
    %s17 = ssub.s32 %s12, 1
    %s18 = ssub.s32 %s12, 2
    %s19 = sadd.s32 %s12, 1
    %s20 = ssub.s32 %s12, %s19
    %p21 = scmp.eq.s32.totalorder %s20, 0
    %s23 = sadd.s32 %s22, 1
    %s24 = scalar_select %p21, %s22, %s23
    %p27 = pneg %p21
    %p28 = scmp.eq.s32.totalorder %s12, 1
    %p29 = por %p27, %p28
    %p30 = scmp.ne.s32.totalorder %s22, %s25
    %p31 = scmp.eq.s32.totalorder %s12, 0
    %p32 = por %p30, %p31
    %p33 = scmp.ne.s32.totalorder %s22, %s25
    %p34 = scmp.eq.s32.totalorder %s17, 1
    %p35 = por %p33, %p34
    %p36 = scmp.ne.s32.totalorder %s25, %s26
    %p37 = scmp.eq.s32.totalorder %s17, 0
    %p38 = por %p36, %p37
    %p39 = scmp.ne.s32.totalorder %s25, %s26
    %p40 = scmp.eq.s32.totalorder %s18, 1
    %p41 = por %p39, %p40
    %p43 = scmp.ne.s32.totalorder %s26, %s42
    %p44 = scmp.eq.s32.totalorder %s18, 0
    %p45 = por %p43, %p44
    %s47 = sadd.s32 %s46, 1
    %p50 = scmp.eq.s32.totalorder %s12, 1
    %p51 = scmp.ne.s32.totalorder %s46, %s48
    %p52 = scmp.eq.s32.totalorder %s12, 0
    %p53 = por %p51, %p52
    %p54 = scmp.ne.s32.totalorder %s46, %s48
    %p55 = scmp.eq.s32.totalorder %s17, 1
    %p56 = por %p54, %p55
    %p57 = scmp.ne.s32.totalorder %s48, %s49
    %p58 = scmp.eq.s32.totalorder %s17, 0
    %p59 = por %p57, %p58
    %p60 = scmp.ne.s32.totalorder %s48, %s49
    %p61 = scmp.eq.s32.totalorder %s18, 1
    %p62 = por %p60, %p61
    %p64 = scmp.ne.s32.totalorder %s49, %s63
    %p65 = scmp.eq.s32.totalorder %s18, 0
    %p66 = por %p64, %p65
    %s68 = sadd.s32 %s67, 1
    %p71 = scmp.eq.s32.totalorder %s12, 1
    %p72 = scmp.ne.s32.totalorder %s67, %s69
    %p73 = scmp.eq.s32.totalorder %s12, 0
    %p74 = por %p72, %p73
    %p75 = scmp.ne.s32.totalorder %s67, %s69
    %p76 = scmp.eq.s32.totalorder %s17, 1
    %p77 = por %p75, %p76
    %p78 = scmp.ne.s32.totalorder %s69, %s70
    %p79 = scmp.eq.s32.totalorder %s17, 0
    %p80 = por %p78, %p79
    %p81 = scmp.ne.s32.totalorder %s69, %s70
    %p82 = scmp.eq.s32.totalorder %s18, 1
    %p83 = por %p81, %p82
    %p85 = scmp.ne.s32.totalorder %s70, %s84
    %p86 = scmp.eq.s32.totalorder %s18, 0
    %p87 = por %p85, %p86
    %s89 = sadd.s32 %s88, 1
    %p92 = scmp.eq.s32.totalorder %s12, 1
    %p93 = scmp.ne.s32.totalorder %s88, %s90
    %p94 = scmp.eq.s32.totalorder %s12, 0
    %p95 = por %p93, %p94
    %p96 = scmp.ne.s32.totalorder %s88, %s90
    %p97 = scmp.eq.s32.totalorder %s17, 1
    %p98 = por %p96, %p97
    %p99 = scmp.ne.s32.totalorder %s90, %s91
    %p100 = scmp.eq.s32.totalorder %s17, 0
    %p101 = por %p99, %p100
    %p102 = scmp.ne.s32.totalorder %s90, %s91
    %p103 = scmp.eq.s32.totalorder %s18, 1
    %p104 = por %p102, %p103
    %p106 = scmp.ne.s32.totalorder %s91, %s105
    %p107 = scmp.eq.s32.totalorder %s18, 0
    %p108 = por %p106, %p107
    %s109 = ssub.s32 %s12, %s19
    %p110 = scmp.eq.s32.totalorder %s109, 0
    %s112 = sadd.s32 %s111, 1
    %s113 = scalar_select %p110, %s111, %s112
    %p116 = pneg %p110
    %p117 = scmp.eq.s32.totalorder %s12, 1
    %p118 = por %p116, %p117
    %p119 = scmp.ne.s32.totalorder %s111, %s114
    %p120 = scmp.eq.s32.totalorder %s12, 0
    %p121 = por %p119, %p120
    %p122 = scmp.ne.s32.totalorder %s111, %s114
    %p123 = scmp.eq.s32.totalorder %s17, 1
    %p124 = por %p122, %p123
    %p125 = scmp.ne.s32.totalorder %s114, %s115
    %p126 = scmp.eq.s32.totalorder %s17, 0
    %p127 = por %p125, %p126
    %p128 = scmp.ne.s32.totalorder %s114, %s115
    %p129 = scmp.eq.s32.totalorder %s18, 1
    %p130 = por %p128, %p129
    %p132 = scmp.ne.s32.totalorder %s115, %s131
    %p133 = scmp.eq.s32.totalorder %s18, 0
    %p134 = por %p132, %p133
    %s135 = ssub.s32 %s12, %s19
    %p136 = scmp.eq.s32.totalorder %s135, 0
    %s138 = sadd.s32 %s137, 1
    %s139 = scalar_select %p136, %s137, %s138
    %p142 = pneg %p136
    %p143 = scmp.eq.s32.totalorder %s12, 1
    %p144 = por %p142, %p143
    %p145 = scmp.ne.s32.totalorder %s137, %s140
    %p146 = scmp.eq.s32.totalorder %s12, 0
    %p147 = por %p145, %p146
    %p148 = scmp.ne.s32.totalorder %s137, %s140
    %p149 = scmp.eq.s32.totalorder %s17, 1
    %p150 = por %p148, %p149
    %p151 = scmp.ne.s32.totalorder %s140, %s141
    %p152 = scmp.eq.s32.totalorder %s17, 0
    %p153 = por %p151, %p152
    %p154 = scmp.ne.s32.totalorder %s140, %s141
    %p155 = scmp.eq.s32.totalorder %s18, 1
    %p156 = por %p154, %p155
    %p158 = scmp.ne.s32.totalorder %s141, %s157
    %p159 = scmp.eq.s32.totalorder %s18, 0
    %p160 = por %p158, %p159
    %p161 = scmp.le.s32.totalorder 1, %s12
    %p162 = scmp.lt.s32.totalorder %s12, 3
    %p163 = pnand %p161, %p162
    %p164 = pneg %p163
    // Predicated region
    $region9: #{model_forward.3} parent=5 // pred_check
      _
    $region10: #{model_forward.3} parent=5 // pred_check_branch
      %166 = sbr.rel (%p163) target = $region12
    $region11: #{model_forward.3} parent=5 // pred_region
      %s167 = ssub.s32 %s12, 1
      // Predicated region
      $region13: #{model_forward.3} parent=11 // pred_check
        %p168 = pneg %p59
      $region14: #{model_forward.3} parent=11 // pred_check_branch
        %170 = sbr.rel (%p168) target = $region16
      $region15: #{model_forward.3} parent=11 // pred_region
        _
      $region16: #{model_forward.3} parent=11 // pred_fallthru
        _
      // Predicated region
      $region17: #{model_forward.3} parent=11 // pred_check
        %p171 = pneg %p80
      $region18: #{model_forward.3} parent=11 // pred_check_branch
        %173 = sbr.rel (%p171) target = $region20
      $region19: #{model_forward.3} parent=11 // pred_region
        _
      $region20: #{model_forward.3} parent=11 // pred_fallthru
        _
      // Predicated region
      $region21: #{model_forward.3} parent=11 // pred_check
        %p174 = pneg %p101
      $region22: #{model_forward.3} parent=11 // pred_check_branch
        %176 = sbr.rel (%p174) target = $region24
      $region23: #{model_forward.3} parent=11 // pred_region
        _
      $region24: #{model_forward.3} parent=11 // pred_fallthru
        _
    $region12: #{model_forward.3} parent=5 // pred_fallthru
      _
    %p177 = scmp.lt.s32.totalorder %s12, 2
    // Predicated region
    $region25: #{model_forward.3} parent=5 // pred_check
      %p178 = pneg %p177
    $region26: #{model_forward.3} parent=5 // pred_check_branch
      %180 = sbr.rel (%p178) target = $region28
    $region27: #{model_forward.3} parent=5 // pred_region
      // Predicated region
      $region29: #{model_forward.3} parent=27 // pred_check
        %p181 = pneg %p32
      $region30: #{model_forward.3} parent=27 // pred_check_branch
        %183 = sbr.rel (%p181) target = $region32
      $region31: #{model_forward.3} parent=27 // pred_region
        %p184 = scmp.lt.s32.totalorder %s12, 1
        %s185 = scalar_select %p184, %s12, 1
        %s186 = smul.addr %s185, 32
        %s187 = smul.addr %s186, 4
        %s188 = scalar_lea.vmem %s0, %s187
      $region32: #{model_forward.3} parent=27 // pred_fallthru
        _
    $region28: #{model_forward.3} parent=5 // pred_fallthru
      _
    %p189 = scmp.le.s32.totalorder 1, %s12
    %p190 = scmp.lt.s32.totalorder %s12, 3
    %p191 = pnand %p189, %p190
    %p192 = pneg %p191
    // Predicated region
    $region33: #{model_forward.3} parent=5 // pred_check
      _
    $region34: #{model_forward.3} parent=5 // pred_check_branch
      %194 = sbr.rel (%p191) target = $region36
    $region35: #{model_forward.3} parent=5 // pred_region
      %s195 = ssub.s32 %s12, 1
      %p196 = scmp.lt.s32.totalorder %s17, 1
      %s197 = scalar_select %p196, %s17, 1
      %s198 = smul.addr %s197, 32
      %s199 = smul.addr %s198, 4
      %s200 = scalar_lea.vmem %s0, %s199
      %p201 = pneg %p38
      %p202 = pneg %p35
      %p203 = pneg %p59
      %p204 = pneg %p56
      %p205 = pneg %p80
      %p206 = pneg %p77
      %p207 = pneg %p101
      %p208 = pneg %p98
      %p209 = pneg %p127
      %p210 = pneg %p124
      %p211 = scmp.lt.s32.totalorder %s17, 1
      %s212 = scalar_select %p211, %s17, 1
      %s213 = smul.addr %s212, 32
      %s214 = smul.addr %s213, 4
      %s215 = scalar_lea.vmem %s4, %s214
      %p216 = pneg %p153
      %p217 = pneg %p150
      %p218 = scmp.lt.s32.totalorder %s17, 1
      %s219 = scalar_select %p218, %s17, 1
      %s220 = smul.addr %s219, 2
      %s221 = scalar_lea.vmem %s5, %s220
      %p222 = scmp.lt.s32.totalorder %s17, 1
      %s223 = scalar_select %p222, %s17, 1
      %s224 = smul.addr %s223, 32
      %s225 = smul.addr %s224, 4
      %s226 = scalar_lea.vmem %s0, %s225
      %p227 = scmp.lt.s32.totalorder %s17, 1
      %s228 = scalar_select %p227, %s17, 1
      %s229 = smul.addr %s228, 32
      %s230 = smul.addr %s229, 4
      %s231 = scalar_lea.vmem %s4, %s230
      %p232 = scmp.lt.s32.totalorder %s17, 1
      %s233 = scalar_select %p232, %s17, 1
      %s234 = smul.addr %s233, 2
      %s235 = scalar_lea.vmem %s5, %s234
      %vm237 = vcmask 130048
      %238 = vst.msk [vmem:[#allocation2] sm:$0xff] %vm237, 0.0
      %239 = vst.msk [vmem:[#allocation2 + $0x8] sm:$0xff] %vm237, 0.0
      %vm240 = vcmask 123904
      %241 = vst.msk [vmem:[#allocation2 + $0x10] sm:$0x3] %vm240, 0.0
      %s242 = scalar_lea.vmem [#allocation2], 408
      %243 = vst.msk [vmem:[%s242] sm:$0xff] %vm237, 0.0
      %244 = vst.msk [vmem:[%s242 + $0x8] sm:$0xff] %vm237, 0.0
      %245 = vst.msk [vmem:[%s242 + $0x10] sm:$0x3] %vm240, 0.0
      %s246 = scalar_lea.vmem [#allocation2], 24
      %vm247 = vcmask 122880
      %248 = vst.msk [vmem:[%s246] sm:$0x1] %vm247, 0.0
      %249 = vst.msk [vmem:[%s246 + $0x18] sm:$0x1] %vm247, 0.0
      %250 = vst.msk [vmem:[%s246 + $0x30] sm:$0x1] %vm247, 0.0
      %251 = vst.msk [vmem:[%s246 + $0x48] sm:$0x1] %vm247, 0.0
      %252 = vst.msk [vmem:[%s246 + $0x60] sm:$0x1] %vm247, 0.0
      %253 = vst.msk [vmem:[%s246 + $0x78] sm:$0x1] %vm247, 0.0
      %254 = vst.msk [vmem:[%s246 + $0x90] sm:$0x1] %vm247, 0.0
      %255 = vst.msk [vmem:[%s246 + $0xa8] sm:$0x1] %vm247, 0.0
      %256 = vst.msk [vmem:[%s246 + $0xc0] sm:$0x1] %vm247, 0.0
      %257 = vst.msk [vmem:[%s246 + $0xd8] sm:$0x1] %vm247, 0.0
      %258 = vst.msk [vmem:[%s246 + $0xf0] sm:$0x1] %vm247, 0.0
      %259 = vst.msk [vmem:[%s246 + $0x108] sm:$0x1] %vm247, 0.0
      %260 = vst.msk [vmem:[%s246 + $0x120] sm:$0x1] %vm247, 0.0
      %261 = vst.msk [vmem:[%s246 + $0x138] sm:$0x1] %vm247, 0.0
      %262 = vst.msk [vmem:[%s246 + $0x150] sm:$0x1] %vm247, 0.0
      %263 = vst.msk [vmem:[%s246 + $0x168] sm:$0x1] %vm247, 0.0
      %264 = vst.msk [vmem:[%s246 + $0x11] sm:$0x1] %vm247, 0.0
      %265 = vst.msk [vmem:[%s246 + $0x29] sm:$0x1] %vm247, 0.0
      %266 = vst.msk [vmem:[%s246 + $0x41] sm:$0x1] %vm247, 0.0
      %267 = vst.msk [vmem:[%s246 + $0x59] sm:$0x1] %vm247, 0.0
      %268 = vst.msk [vmem:[%s246 + $0x71] sm:$0x1] %vm247, 0.0
      %269 = vst.msk [vmem:[%s246 + $0x89] sm:$0x1] %vm247, 0.0
      %270 = vst.msk [vmem:[%s246 + $0xa1] sm:$0x1] %vm247, 0.0
      %271 = vst.msk [vmem:[%s246 + $0xb9] sm:$0x1] %vm247, 0.0
      %272 = vst.msk [vmem:[%s246 + $0xd1] sm:$0x1] %vm247, 0.0
      %273 = vst.msk [vmem:[%s246 + $0xe9] sm:$0x1] %vm247, 0.0
      %274 = vst.msk [vmem:[%s246 + $0x101] sm:$0x1] %vm247, 0.0
      %275 = vst.msk [vmem:[%s246 + $0x119] sm:$0x1] %vm247, 0.0
      %276 = vst.msk [vmem:[%s246 + $0x131] sm:$0x1] %vm247, 0.0
      %277 = vst.msk [vmem:[%s246 + $0x149] sm:$0x1] %vm247, 0.0
      %278 = vst.msk [vmem:[%s246 + $0x161] sm:$0x1] %vm247, 0.0
      %279 = vst.msk [vmem:[%s246 + $0x179] sm:$0x1] %vm247, 0.0
      %v280 = vld [vmem:[%s226] sm:$0xf]
      %v281 = vld [vmem:[%s226 + $0x4] sm:$0xf]
      %v282 = vld [vmem:[%s226 + $0x8] sm:$0xf]
      %v283 = vld [vmem:[%s226 + $0xc] sm:$0xf]
      %v284 = vld [vmem:[%s226 + $0x10] sm:$0xf]
      %v285 = vld [vmem:[%s226 + $0x14] sm:$0xf]
      %v286 = vld [vmem:[%s226 + $0x18] sm:$0xf]
      %v287 = vld [vmem:[%s226 + $0x1c] sm:$0xf]
      %v288 = vld [vmem:[%s226 + $0x20] sm:$0xf]
      %v289 = vld [vmem:[%s226 + $0x24] sm:$0xf]
      %v290 = vld [vmem:[%s226 + $0x28] sm:$0xf]
      %v291 = vld [vmem:[%s226 + $0x2c] sm:$0xf]
      %v292 = vld [vmem:[%s226 + $0x30] sm:$0xf]
      %v293 = vld [vmem:[%s226 + $0x34] sm:$0xf]
      %v294 = vld [vmem:[%s226 + $0x38] sm:$0xf]
      %v295 = vld [vmem:[%s226 + $0x3c] sm:$0xf]
      %v296 = vld [vmem:[%s226 + $0x40] sm:$0xf]
      %v297 = vld [vmem:[%s226 + $0x44] sm:$0xf]
      %v298 = vld [vmem:[%s226 + $0x48] sm:$0xf]
      %v299 = vld [vmem:[%s226 + $0x4c] sm:$0xf]
      %v300 = vld [vmem:[%s226 + $0x50] sm:$0xf]
      %v301 = vld [vmem:[%s226 + $0x54] sm:$0xf]
      %v302 = vld [vmem:[%s226 + $0x58] sm:$0xf]
      %v303 = vld [vmem:[%s226 + $0x5c] sm:$0xf]
      %v304 = vld [vmem:[%s226 + $0x60] sm:$0xf]
      %v305 = vld [vmem:[%s226 + $0x64] sm:$0xf]
      %v306 = vld [vmem:[%s226 + $0x68] sm:$0xf]
      %v307 = vld [vmem:[%s226 + $0x6c] sm:$0xf]
      %v308 = vld [vmem:[%s226 + $0x70] sm:$0xf]
      %v309 = vld [vmem:[%s226 + $0x74] sm:$0xf]
      %v310 = vld [vmem:[%s226 + $0x78] sm:$0xf]
      %v311 = vld [vmem:[%s226 + $0x7c] sm:$0xf]
      %v312 = vunpack.c.l.bf16 %v280
      %v313 = vunpack.c.l.bf16 %v281
      %v314 = vunpack.c.l.bf16 %v282
      %v315 = vunpack.c.l.bf16 %v283
      %v316 = vunpack.c.l.bf16 %v284
      %v317 = vunpack.c.l.bf16 %v285
      %v318 = vunpack.c.l.bf16 %v286
      %v319 = vunpack.c.l.bf16 %v287
      %v320 = vunpack.c.l.bf16 %v288
      %v321 = vunpack.c.l.bf16 %v289
      %v322 = vunpack.c.l.bf16 %v290
      %v323 = vunpack.c.l.bf16 %v291
      %v324 = vunpack.c.l.bf16 %v292
      %v325 = vunpack.c.l.bf16 %v293
      %v326 = vunpack.c.l.bf16 %v294
      %v327 = vunpack.c.l.bf16 %v295
      %v328 = vunpack.c.l.bf16 %v296
      %v329 = vunpack.c.l.bf16 %v297
      %v330 = vunpack.c.l.bf16 %v298
      %v331 = vunpack.c.l.bf16 %v299
      %v332 = vunpack.c.l.bf16 %v300
      %v333 = vunpack.c.l.bf16 %v301
      %v334 = vunpack.c.l.bf16 %v302
      %v335 = vunpack.c.l.bf16 %v303
      %v336 = vunpack.c.l.bf16 %v304
      %v337 = vunpack.c.l.bf16 %v305
      %v338 = vunpack.c.l.bf16 %v306
      %v339 = vunpack.c.l.bf16 %v307
      %v340 = vunpack.c.l.bf16 %v308
      %v341 = vunpack.c.l.bf16 %v309
      %v342 = vunpack.c.l.bf16 %v310
      %v343 = vunpack.c.l.bf16 %v311
      %v344 = vld [vmem:[%s1] sm:$0x1]
      %v345 = vld [vmem:[%s2] sm:$0x1]
      %v347 = vlaneseq
      %v348 = vshrl.u32 %v347, 7
      %v349 = vsub.s32 0, %v348
      %v350 = vrot.slane %v344, %v349
      %v352 = vmul.f32 %v312, %v350
      %v353 = vmul.f32 %v313, %v350
      %v354 = vmul.f32 %v314, %v350
      %v355 = vmul.f32 %v315, %v350
      %v356 = vmul.f32 %v316, %v350
      %v357 = vmul.f32 %v317, %v350
      %v358 = vmul.f32 %v318, %v350
      %v359 = vmul.f32 %v319, %v350
      %v360 = vmul.f32 %v320, %v350
      %v361 = vmul.f32 %v321, %v350
      %v362 = vmul.f32 %v322, %v350
      %v363 = vmul.f32 %v323, %v350
      %v364 = vmul.f32 %v324, %v350
      %v365 = vmul.f32 %v325, %v350
      %v366 = vmul.f32 %v326, %v350
      %v367 = vmul.f32 %v327, %v350
      %v368 = vmul.f32 %v328, %v350
      %v369 = vmul.f32 %v329, %v350
      %v370 = vmul.f32 %v330, %v350
      %v371 = vmul.f32 %v331, %v350
      %v372 = vmul.f32 %v332, %v350
      %v373 = vmul.f32 %v333, %v350
      %v374 = vmul.f32 %v334, %v350
      %v375 = vmul.f32 %v335, %v350
      %v376 = vmul.f32 %v336, %v350
      %v377 = vmul.f32 %v337, %v350
      %v378 = vmul.f32 %v338, %v350
      %v379 = vmul.f32 %v339, %v350
      %v380 = vmul.f32 %v340, %v350
      %v381 = vmul.f32 %v341, %v350
      %v382 = vmul.f32 %v342, %v350
      %v383 = vmul.f32 %v343, %v350
      %v385 = vlaneseq
      %v386 = vshrl.u32 %v385, 7
      %v387 = vsub.s32 0, %v386
      %v388 = vrot.slane %v345, %v387
      %v390 = vadd.f32 %v352, %v388
      %v391 = vadd.f32 %v353, %v388
      %v392 = vadd.f32 %v354, %v388
      %v393 = vadd.f32 %v355, %v388
      %v394 = vadd.f32 %v356, %v388
      %v395 = vadd.f32 %v357, %v388
      %v396 = vadd.f32 %v358, %v388
      %v397 = vadd.f32 %v359, %v388
      %v398 = vadd.f32 %v360, %v388
      %v399 = vadd.f32 %v361, %v388
      %v400 = vadd.f32 %v362, %v388
      %v401 = vadd.f32 %v363, %v388
      %v402 = vadd.f32 %v364, %v388
      %v403 = vadd.f32 %v365, %v388
      %v404 = vadd.f32 %v366, %v388
      %v405 = vadd.f32 %v367, %v388
      %v406 = vadd.f32 %v368, %v388
      %v407 = vadd.f32 %v369, %v388
      %v408 = vadd.f32 %v370, %v388
      %v409 = vadd.f32 %v371, %v388
      %v410 = vadd.f32 %v372, %v388
      %v411 = vadd.f32 %v373, %v388
      %v412 = vadd.f32 %v374, %v388
      %v413 = vadd.f32 %v375, %v388
      %v414 = vadd.f32 %v376, %v388
      %v415 = vadd.f32 %v377, %v388
      %v416 = vadd.f32 %v378, %v388
      %v417 = vadd.f32 %v379, %v388
      %v418 = vadd.f32 %v380, %v388
      %v419 = vadd.f32 %v381, %v388
      %v420 = vadd.f32 %v382, %v388
      %v421 = vadd.f32 %v383, %v388
      %v422 = vmax.f32 %v390, 0.0
      %v423 = vmax.f32 %v391, 0.0
      %v424 = vmax.f32 %v392, 0.0
      %v425 = vmax.f32 %v393, 0.0
      %v426 = vmax.f32 %v394, 0.0
      %v427 = vmax.f32 %v395, 0.0
      %v428 = vmax.f32 %v396, 0.0
      %v429 = vmax.f32 %v397, 0.0
      %v430 = vmax.f32 %v398, 0.0
      %v431 = vmax.f32 %v399, 0.0
      %v432 = vmax.f32 %v400, 0.0
      %v433 = vmax.f32 %v401, 0.0
      %v434 = vmax.f32 %v402, 0.0
      %v435 = vmax.f32 %v403, 0.0
      %v436 = vmax.f32 %v404, 0.0
      %v437 = vmax.f32 %v405, 0.0
      %v438 = vmax.f32 %v406, 0.0
      %v439 = vmax.f32 %v407, 0.0
      %v440 = vmax.f32 %v408, 0.0
      %v441 = vmax.f32 %v409, 0.0
      %v442 = vmax.f32 %v410, 0.0
      %v443 = vmax.f32 %v411, 0.0
      %v444 = vmax.f32 %v412, 0.0
      %v445 = vmax.f32 %v413, 0.0
      %v446 = vmax.f32 %v414, 0.0
      %v447 = vmax.f32 %v415, 0.0
      %v448 = vmax.f32 %v416, 0.0
      %v449 = vmax.f32 %v417, 0.0
      %v450 = vmax.f32 %v418, 0.0
      %v451 = vmax.f32 %v419, 0.0
      %v452 = vmax.f32 %v420, 0.0
      %v453 = vmax.f32 %v421, 0.0
      %454 = vst.msk [vmem:[%s246 + $0x1] sm:$0xff] %vm237, %v422
      %455 = vst.msk [vmem:[%s246 + $0x9] sm:$0xff] %vm237, %v423
      %456 = vst.msk [vmem:[%s246 + $0x19] sm:$0xff] %vm237, %v424
      %457 = vst.msk [vmem:[%s246 + $0x21] sm:$0xff] %vm237, %v425
      %458 = vst.msk [vmem:[%s246 + $0x31] sm:$0xff] %vm237, %v426
      %459 = vst.msk [vmem:[%s246 + $0x39] sm:$0xff] %vm237, %v427
      %460 = vst.msk [vmem:[%s246 + $0x49] sm:$0xff] %vm237, %v428
      %461 = vst.msk [vmem:[%s246 + $0x51] sm:$0xff] %vm237, %v429
      %462 = vst.msk [vmem:[%s246 + $0x61] sm:$0xff] %vm237, %v430
      %463 = vst.msk [vmem:[%s246 + $0x69] sm:$0xff] %vm237, %v431
      %464 = vst.msk [vmem:[%s246 + $0x79] sm:$0xff] %vm237, %v432
      %465 = vst.msk [vmem:[%s246 + $0x81] sm:$0xff] %vm237, %v433
      %466 = vst.msk [vmem:[%s246 + $0x91] sm:$0xff] %vm237, %v434
      %467 = vst.msk [vmem:[%s246 + $0x99] sm:$0xff] %vm237, %v435
      %468 = vst.msk [vmem:[%s246 + $0xa9] sm:$0xff] %vm237, %v436
      %469 = vst.msk [vmem:[%s246 + $0xb1] sm:$0xff] %vm237, %v437
      %470 = vst.msk [vmem:[%s246 + $0xc1] sm:$0xff] %vm237, %v438
      %471 = vst.msk [vmem:[%s246 + $0xc9] sm:$0xff] %vm237, %v439
      %472 = vst.msk [vmem:[%s246 + $0xd9] sm:$0xff] %vm237, %v440
      %473 = vst.msk [vmem:[%s246 + $0xe1] sm:$0xff] %vm237, %v441
      %474 = vst.msk [vmem:[%s246 + $0xf1] sm:$0xff] %vm237, %v442
      %475 = vst.msk [vmem:[%s246 + $0xf9] sm:$0xff] %vm237, %v443
      %476 = vst.msk [vmem:[%s246 + $0x109] sm:$0xff] %vm237, %v444
      %477 = vst.msk [vmem:[%s246 + $0x111] sm:$0xff] %vm237, %v445
      %478 = vst.msk [vmem:[%s246 + $0x121] sm:$0xff] %vm237, %v446
      %479 = vst.msk [vmem:[%s246 + $0x129] sm:$0xff] %vm237, %v447
      %480 = vst.msk [vmem:[%s246 + $0x139] sm:$0xff] %vm237, %v448
      %481 = vst.msk [vmem:[%s246 + $0x141] sm:$0xff] %vm237, %v449
      %482 = vst.msk [vmem:[%s246 + $0x151] sm:$0xff] %vm237, %v450
      %483 = vst.msk [vmem:[%s246 + $0x159] sm:$0xff] %vm237, %v451
      %484 = vst.msk [vmem:[%s246 + $0x169] sm:$0xff] %vm237, %v452
      %485 = vst.msk [vmem:[%s246 + $0x171] sm:$0xff] %vm237, %v453
      %v486 = vld [vmem:[#allocation2] sm:$0xff]
      %v487 = vld [vmem:[#allocation2 + $0x8] sm:$0xff]
      %v488 = vld [vmem:[#allocation2 + $0x18] sm:$0xff]
      %v489 = vld [vmem:[#allocation2 + $0x20] sm:$0xff]
      %v490 = vld [vmem:[#allocation2 + $0x30] sm:$0xff]
      %v491 = vld [vmem:[#allocation2 + $0x38] sm:$0xff]
      %v492 = vld [vmem:[#allocation2 + $0x48] sm:$0xff]
      %v493 = vld [vmem:[#allocation2 + $0x50] sm:$0xff]
      %v494 = vld [vmem:[#allocation2 + $0x60] sm:$0xff]
      %v495 = vld [vmem:[#allocation2 + $0x68] sm:$0xff]
      %v496 = vld [vmem:[#allocation2 + $0x78] sm:$0xff]
      %v497 = vld [vmem:[#allocation2 + $0x80] sm:$0xff]
      %v498 = vld [vmem:[#allocation2 + $0x90] sm:$0xff]
      %v499 = vld [vmem:[#allocation2 + $0x98] sm:$0xff]
      %v500 = vld [vmem:[#allocation2 + $0xa8] sm:$0xff]
      %v501 = vld [vmem:[#allocation2 + $0xb0] sm:$0xff]
      %v502 = vld [vmem:[#allocation2 + $0xc0] sm:$0xff]
      %v503 = vld [vmem:[#allocation2 + $0xc8] sm:$0xff]
      %v504 = vld [vmem:[#allocation2 + $0xd8] sm:$0xff]
      %v505 = vld [vmem:[#allocation2 + $0xe0] sm:$0xff]
      %v506 = vld [vmem:[#allocation2 + $0xf0] sm:$0xff]
      %v507 = vld [vmem:[#allocation2 + $0xf8] sm:$0xff]
      %v508 = vld [vmem:[#allocation2 + $0x108] sm:$0xff]
      %v509 = vld [vmem:[#allocation2 + $0x110] sm:$0xff]
      %v510 = vld [vmem:[#allocation2 + $0x120] sm:$0xff]
      %v511 = vld [vmem:[#allocation2 + $0x128] sm:$0xff]
      %v512 = vld [vmem:[#allocation2 + $0x138] sm:$0xff]
      %v513 = vld [vmem:[#allocation2 + $0x140] sm:$0xff]
      %v514 = vld [vmem:[#allocation2 + $0x150] sm:$0xff]
      %v515 = vld [vmem:[#allocation2 + $0x158] sm:$0xff]
      %v516 = vld [vmem:[#allocation2 + $0x168] sm:$0xff]
      %v517 = vld [vmem:[#allocation2 + $0x170] sm:$0xff]
      %v518 = vpack.c.bf16 %v487, %v486
      %v519 = vpack.c.bf16 %v489, %v488
      %v520 = vpack.c.bf16 %v491, %v490
      %v521 = vpack.c.bf16 %v493, %v492
      %v522 = vpack.c.bf16 %v495, %v494
      %v523 = vpack.c.bf16 %v497, %v496
      %v524 = vpack.c.bf16 %v499, %v498
      %v525 = vpack.c.bf16 %v501, %v500
      %v526 = vpack.c.bf16 %v503, %v502
      %v527 = vpack.c.bf16 %v505, %v504
      %v528 = vpack.c.bf16 %v507, %v506
      %v529 = vpack.c.bf16 %v509, %v508
      %v530 = vpack.c.bf16 %v511, %v510
      %v531 = vpack.c.bf16 %v513, %v512
      %v532 = vpack.c.bf16 %v515, %v514
      %v533 = vpack.c.bf16 %v517, %v516
      %v534 = vld [vmem:[%s3] sm:$0xf]
      %v535 = vld [vmem:[%s3 + $0x4] sm:$0xf]
      %v536 = vld [vmem:[#allocation2 + $0x1] sm:$0xff]
      %v537 = vld [vmem:[#allocation2 + $0x9] sm:$0xff]
      %v538 = vld [vmem:[#allocation2 + $0x19] sm:$0xff]
      %v539 = vld [vmem:[#allocation2 + $0x21] sm:$0xff]
      %v540 = vld [vmem:[#allocation2 + $0x31] sm:$0xff]
      %v541 = vld [vmem:[#allocation2 + $0x39] sm:$0xff]
      %v542 = vld [vmem:[#allocation2 + $0x49] sm:$0xff]
      %v543 = vld [vmem:[#allocation2 + $0x51] sm:$0xff]
      %v544 = vld [vmem:[#allocation2 + $0x61] sm:$0xff]
      %v545 = vld [vmem:[#allocation2 + $0x69] sm:$0xff]
      %v546 = vld [vmem:[#allocation2 + $0x79] sm:$0xff]
      %v547 = vld [vmem:[#allocation2 + $0x81] sm:$0xff]
      %v548 = vld [vmem:[#allocation2 + $0x91] sm:$0xff]
      %v549 = vld [vmem:[#allocation2 + $0x99] sm:$0xff]
      %v550 = vld [vmem:[#allocation2 + $0xa9] sm:$0xff]
      %v551 = vld [vmem:[#allocation2 + $0xb1] sm:$0xff]
      %v552 = vld [vmem:[#allocation2 + $0xc1] sm:$0xff]
      %v553 = vld [vmem:[#allocation2 + $0xc9] sm:$0xff]
      %v554 = vld [vmem:[#allocation2 + $0xd9] sm:$0xff]
      %v555 = vld [vmem:[#allocation2 + $0xe1] sm:$0xff]
      %v556 = vld [vmem:[#allocation2 + $0xf1] sm:$0xff]
      %v557 = vld [vmem:[#allocation2 + $0xf9] sm:$0xff]
      %v558 = vld [vmem:[#allocation2 + $0x109] sm:$0xff]
      %v559 = vld [vmem:[#allocation2 + $0x111] sm:$0xff]
      %v560 = vld [vmem:[#allocation2 + $0x121] sm:$0xff]
      %v561 = vld [vmem:[#allocation2 + $0x129] sm:$0xff]
      %v562 = vld [vmem:[#allocation2 + $0x139] sm:$0xff]
      %v563 = vld [vmem:[#allocation2 + $0x141] sm:$0xff]
      %v564 = vld [vmem:[#allocation2 + $0x151] sm:$0xff]
      %v565 = vld [vmem:[#allocation2 + $0x159] sm:$0xff]
      %v566 = vld [vmem:[#allocation2 + $0x169] sm:$0xff]
      %v567 = vld [vmem:[#allocation2 + $0x171] sm:$0xff]
      %v568 = vpack.c.bf16 %v537, %v536
      %v569 = vpack.c.bf16 %v539, %v538
      %v570 = vpack.c.bf16 %v541, %v540
      %v571 = vpack.c.bf16 %v543, %v542
      %v572 = vpack.c.bf16 %v545, %v544
      %v573 = vpack.c.bf16 %v547, %v546
      %v574 = vpack.c.bf16 %v549, %v548
      %v575 = vpack.c.bf16 %v551, %v550
      %v576 = vpack.c.bf16 %v553, %v552
      %v577 = vpack.c.bf16 %v555, %v554
      %v578 = vpack.c.bf16 %v557, %v556
      %v579 = vpack.c.bf16 %v559, %v558
      %v580 = vpack.c.bf16 %v561, %v560
      %v581 = vpack.c.bf16 %v563, %v562
      %v582 = vpack.c.bf16 %v565, %v564
      %v583 = vpack.c.bf16 %v567, %v566
      %s584 = scalar_lea.vmem %s3, 8
      %v585 = vld [vmem:[%s584] sm:$0xf]
      %v586 = vld [vmem:[%s584 + $0x4] sm:$0xf]
      %v589 = vunpack.c.l.b16 %v585
      %v590 = vunpack.c.l.b16 %v586
      %v591 = vpack.c.b16 %v590, %v589
      %v594 = vsel %vm237, %v568, 0
      %v597 = vsel %vm237, %v569, 0
      %v600 = vsel %vm237, %v570, 0
      %v603 = vsel %vm237, %v571, 0
      %v606 = vsel %vm237, %v572, 0
      %v609 = vsel %vm237, %v573, 0
      %v612 = vsel %vm237, %v574, 0
      %v615 = vsel %vm237, %v575, 0
      %v618 = vsel %vm237, %v576, 0
      %v621 = vsel %vm237, %v577, 0
      %v624 = vsel %vm237, %v578, 0
      %v627 = vsel %vm237, %v579, 0
      %v630 = vsel %vm237, %v580, 0
      %v633 = vsel %vm237, %v581, 0
      %v636 = vsel %vm237, %v582, 0
      %v639 = vsel %vm237, %v583, 0
      %641 = vmatprep.subr.bf16.mxu0 0
      %642 = vmatpush1.bf16.msra.mxu0 %v591
      %643 = vmatprep.subr.bf16.mxu0 0
      %644 = vmatpush1.bf16.msra.mxu0 0
      %645 = vmatprep.subr.bf16.mxu0 0
      %646 = vmatpush1.bf16.msra.mxu0 0
      %647 = vmatprep.subr.bf16.mxu0 0
      %648 = vmatpush1.bf16.msra.mxu0 0
      %649 = vmatprep.subr.bf16.mxu0 0
      %650 = vmatpush1.bf16.msra.mxu0 0
      %651 = vmatprep.subr.bf16.mxu0 0
      %652 = vmatpush1.bf16.msra.mxu0 0
      %653 = vmatprep.subr.bf16.mxu0 0
      %654 = vmatpush1.bf16.msra.mxu0 0
      %655 = vmatprep.subr.bf16.mxu0 0
      %656 = vmatpush1.bf16.msra.mxu0 0
      %657 = vmatprep.subr.bf16.mxu0 0
      %658 = vmatpush1.bf16.msra.mxu0 0
      %659 = vmatprep.subr.bf16.mxu0 0
      %660 = vmatpush1.bf16.msra.mxu0 0
      %661 = vmatprep.subr.bf16.mxu0 0
      %662 = vmatpush1.bf16.msra.mxu0 0
      %663 = vmatprep.subr.bf16.mxu0 0
      %664 = vmatpush1.bf16.msra.mxu0 0
      %665 = vmatprep.subr.bf16.mxu0 0
      %666 = vmatpush1.bf16.msra.mxu0 0
      %667 = vmatprep.subr.bf16.mxu0 0
      %668 = vmatpush1.bf16.msra.mxu0 0
      %669 = vmatprep.subr.bf16.mxu0 0
      %670 = vmatpush1.bf16.msra.mxu0 0
      %671 = vmatprep.subr.bf16.mxu0 0
      %672 = vmatpush1.bf16.msra.mxu0 0
      %673 = vmatprep.mubr.bf16.mxu0 0
      %674 = vmatmul.mubr.bf16.gmra.mrb[0].mxu0 %v594
      %v675 = vpop.f32.mrb[0].mxu0
      %v676 = vadd.f32 0.0, %v675
      %v677 = vpop.f32.mrb[0].mxu0
      %v678 = vpop.f32.mrb[0].mxu0
      %v679 = vadd.f32 0.0, %v678
      %v680 = vpop.f32.mrb[0].mxu0
      %681 = vmatprep.mubr.bf16.mxu0 0
      %682 = vmatmul.mubr.bf16.gmra.mrb[0].mxu0 %v597
      %v683 = vpop.f32.mrb[0].mxu0
      %v684 = vadd.f32 0.0, %v683
      %v685 = vpop.f32.mrb[0].mxu0
      %v686 = vpop.f32.mrb[0].mxu0
      %v687 = vadd.f32 0.0, %v686
      %v688 = vpop.f32.mrb[0].mxu0
      %689 = vmatprep.mubr.bf16.mxu0 0
      %690 = vmatmul.mubr.bf16.gmra.mrb[0].mxu0 %v600
      %v691 = vpop.f32.mrb[0].mxu0
      %v692 = vadd.f32 0.0, %v691
      %v693 = vpop.f32.mrb[0].mxu0
      %v694 = vpop.f32.mrb[0].mxu0
      %v695 = vadd.f32 0.0, %v694
      %v696 = vpop.f32.mrb[0].mxu0
      %697 = vmatprep.mubr.bf16.mxu0 0
      %698 = vmatmul.mubr.bf16.gmra.mrb[0].mxu0 %v603
      %v699 = vpop.f32.mrb[0].mxu0
      %v700 = vadd.f32 0.0, %v699
      %v701 = vpop.f32.mrb[0].mxu0
      %v702 = vpop.f32.mrb[0].mxu0
      %v703 = vadd.f32 0.0, %v702
      %v704 = vpop.f32.mrb[0].mxu0
      %705 = vmatprep.mubr.bf16.mxu0 0
      %706 = vmatmul.mubr.bf16.gmra.mrb[0].mxu0 %v606
      %v707 = vpop.f32.mrb[0].mxu0
      %v708 = vadd.f32 0.0, %v707
      %v709 = vpop.f32.mrb[0].mxu0
      %v710 = vpop.f32.mrb[0].mxu0
      %v711 = vadd.f32 0.0, %v710
      %v712 = vpop.f32.mrb[0].mxu0
      %713 = vmatprep.mubr.bf16.mxu0 0
      %714 = vmatmul.mubr.bf16.gmra.mrb[0].mxu0 %v609
      %v715 = vpop.f32.mrb[0].mxu0
      %v716 = vadd.f32 0.0, %v715
      %v717 = vpop.f32.mrb[0].mxu0
      %v718 = vpop.f32.mrb[0].mxu0
      %v719 = vadd.f32 0.0, %v718
      %v720 = vpop.f32.mrb[0].mxu0
      %721 = vmatprep.mubr.bf16.mxu0 0
      %722 = vmatmul.mubr.bf16.gmra.mrb[0].mxu0 %v612
      %v723 = vpop.f32.mrb[0].mxu0
      %v724 = vadd.f32 0.0, %v723
      %v725 = vpop.f32.mrb[0].mxu0
      %v726 = vpop.f32.mrb[0].mxu0
      %v727 = vadd.f32 0.0, %v726
      %v728 = vpop.f32.mrb[0].mxu0
      %729 = vmatprep.mubr.bf16.mxu0 0
      %730 = vmatmul.mubr.bf16.gmra.mrb[0].mxu0 %v615
      %v731 = vpop.f32.mrb[0].mxu0
      %v732 = vadd.f32 0.0, %v731
      %v733 = vpop.f32.mrb[0].mxu0
      %v734 = vpop.f32.mrb[0].mxu0
      %v735 = vadd.f32 0.0, %v734
      %v736 = vpop.f32.mrb[0].mxu0
      %737 = vmatprep.mubr.bf16.mxu0 0
      %738 = vmatmul.mubr.bf16.gmra.mrb[0].mxu0 %v618
      %v739 = vpop.f32.mrb[0].mxu0
      %v740 = vadd.f32 0.0, %v739
      %v741 = vpop.f32.mrb[0].mxu0
      %v742 = vpop.f32.mrb[0].mxu0
      %v743 = vadd.f32 0.0, %v742
      %v744 = vpop.f32.mrb[0].mxu0
      %745 = vmatprep.mubr.bf16.mxu0 0
      %746 = vmatmul.mubr.bf16.gmra.mrb[0].mxu0 %v621
      %v747 = vpop.f32.mrb[0].mxu0
      %v748 = vadd.f32 0.0, %v747
      %v749 = vpop.f32.mrb[0].mxu0
      %v750 = vpop.f32.mrb[0].mxu0
      %v751 = vadd.f32 0.0, %v750
      %v752 = vpop.f32.mrb[0].mxu0
      %753 = vmatprep.mubr.bf16.mxu0 0
      %754 = vmatmul.mubr.bf16.gmra.mrb[0].mxu0 %v624
      %v755 = vpop.f32.mrb[0].mxu0
      %v756 = vadd.f32 0.0, %v755
      %v757 = vpop.f32.mrb[0].mxu0
      %v758 = vpop.f32.mrb[0].mxu0
      %v759 = vadd.f32 0.0, %v758
      %v760 = vpop.f32.mrb[0].mxu0
      %761 = vmatprep.mubr.bf16.mxu0 0
      %762 = vmatmul.mubr.bf16.gmra.mrb[0].mxu0 %v627
      %v763 = vpop.f32.mrb[0].mxu0
      %v764 = vadd.f32 0.0, %v763
      %v765 = vpop.f32.mrb[0].mxu0
      %v766 = vpop.f32.mrb[0].mxu0
      %v767 = vadd.f32 0.0, %v766
      %v768 = vpop.f32.mrb[0].mxu0
      %769 = vmatprep.mubr.bf16.mxu0 0
      %770 = vmatmul.mubr.bf16.gmra.mrb[0].mxu0 %v630
      %v771 = vpop.f32.mrb[0].mxu0
      %v772 = vadd.f32 0.0, %v771
      %v773 = vpop.f32.mrb[0].mxu0
      %v774 = vpop.f32.mrb[0].mxu0
      %v775 = vadd.f32 0.0, %v774
      %v776 = vpop.f32.mrb[0].mxu0
      %777 = vmatprep.mubr.bf16.mxu0 0
      %778 = vmatmul.mubr.bf16.gmra.mrb[0].mxu0 %v633
      %v779 = vpop.f32.mrb[0].mxu0
      %v780 = vadd.f32 0.0, %v779
      %v781 = vpop.f32.mrb[0].mxu0
      %v782 = vpop.f32.mrb[0].mxu0
      %v783 = vadd.f32 0.0, %v782
      %v784 = vpop.f32.mrb[0].mxu0
      %785 = vmatprep.mubr.bf16.mxu0 0
      %786 = vmatmul.mubr.bf16.gmra.mrb[0].mxu0 %v636
      %v787 = vpop.f32.mrb[0].mxu0
      %v788 = vadd.f32 0.0, %v787
      %v789 = vpop.f32.mrb[0].mxu0
      %v790 = vpop.f32.mrb[0].mxu0
      %v791 = vadd.f32 0.0, %v790
      %v792 = vpop.f32.mrb[0].mxu0
      %793 = vmatprep.mubr.bf16.mxu0 0
      %794 = vmatmul.mubr.bf16.gmra.mrb[0].mxu0 %v639
      %v795 = vpop.f32.mrb[0].mxu0
      %v796 = vadd.f32 0.0, %v795
      %v797 = vpop.f32.mrb[0].mxu0
      %v798 = vpop.f32.mrb[0].mxu0
      %v799 = vadd.f32 0.0, %v798
      %v800 = vpop.f32.mrb[0].mxu0
      %801 = vdwg.mxu0
      %v804 = vunpack.c.l.b16 %v534
      %v805 = vunpack.c.l.b16 %v535
      %v806 = vpack.c.b16 %v805, %v804
      %v809 = vsel %vm237, %v518, 0
      %v812 = vsel %vm237, %v519, 0
      %v815 = vsel %vm237, %v520, 0
      %v818 = vsel %vm237, %v521, 0
      %v821 = vsel %vm237, %v522, 0
      %v824 = vsel %vm237, %v523, 0
      %v827 = vsel %vm237, %v524, 0
      %v830 = vsel %vm237, %v525, 0
      %v833 = vsel %vm237, %v526, 0
      %v836 = vsel %vm237, %v527, 0
      %v839 = vsel %vm237, %v528, 0
      %v842 = vsel %vm237, %v529, 0
      %v845 = vsel %vm237, %v530, 0
      %v848 = vsel %vm237, %v531, 0
      %v851 = vsel %vm237, %v532, 0
      %v854 = vsel %vm237, %v533, 0
      %856 = vmatprep.subr.bf16.mxu0 0
      %857 = vmatpush1.bf16.msra.mxu0 %v806
      %858 = vmatprep.subr.bf16.mxu0 0
      %859 = vmatpush1.bf16.msra.mxu0 0
      %860 = vmatprep.subr.bf16.mxu0 0
      %861 = vmatpush1.bf16.msra.mxu0 0
      %862 = vmatprep.subr.bf16.mxu0 0
      %863 = vmatpush1.bf16.msra.mxu0 0
      %864 = vmatprep.subr.bf16.mxu0 0
      %865 = vmatpush1.bf16.msra.mxu0 0
      %866 = vmatprep.subr.bf16.mxu0 0
      %867 = vmatpush1.bf16.msra.mxu0 0
      %868 = vmatprep.subr.bf16.mxu0 0
      %869 = vmatpush1.bf16.msra.mxu0 0
      %870 = vmatprep.subr.bf16.mxu0 0
      %871 = vmatpush1.bf16.msra.mxu0 0
      %872 = vmatprep.subr.bf16.mxu0 0
      %873 = vmatpush1.bf16.msra.mxu0 0
      %874 = vmatprep.subr.bf16.mxu0 0
      %875 = vmatpush1.bf16.msra.mxu0 0
      %876 = vmatprep.subr.bf16.mxu0 0
      %877 = vmatpush1.bf16.msra.mxu0 0
      %878 = vmatprep.subr.bf16.mxu0 0
      %879 = vmatpush1.bf16.msra.mxu0 0
      %880 = vmatprep.subr.bf16.mxu0 0
      %881 = vmatpush1.bf16.msra.mxu0 0
      %882 = vmatprep.subr.bf16.mxu0 0
      %883 = vmatpush1.bf16.msra.mxu0 0
      %884 = vmatprep.subr.bf16.mxu0 0
      %885 = vmatpush1.bf16.msra.mxu0 0
      %886 = vmatprep.subr.bf16.mxu0 0
      %887 = vmatpush1.bf16.msra.mxu0 0
      %888 = vmatprep.mubr.bf16.mxu0 0
      %889 = vmatmul.mubr.bf16.gmra.mrb[0].mxu0 %v809
      %v890 = vpop.f32.mrb[0].mxu0
      %v891 = vadd.f32 %v676, %v890
      %v892 = vpop.f32.mrb[0].mxu0
      %v893 = vpop.f32.mrb[0].mxu0
      %v894 = vadd.f32 %v679, %v893
      %v895 = vpop.f32.mrb[0].mxu0
      %896 = vmatprep.mubr.bf16.mxu0 0
      %897 = vmatmul.mubr.bf16.gmra.mrb[0].mxu0 %v812
      %v898 = vpop.f32.mrb[0].mxu0
      %v899 = vadd.f32 %v684, %v898
      %v900 = vpop.f32.mrb[0].mxu0
      %v901 = vpop.f32.mrb[0].mxu0
      %v902 = vadd.f32 %v687, %v901
      %v903 = vpop.f32.mrb[0].mxu0
      %904 = vmatprep.mubr.bf16.mxu0 0
      %905 = vmatmul.mubr.bf16.gmra.mrb[0].mxu0 %v815
      %v906 = vpop.f32.mrb[0].mxu0
      %v907 = vadd.f32 %v692, %v906
      %v908 = vpop.f32.mrb[0].mxu0
      %v909 = vpop.f32.mrb[0].mxu0
      %v910 = vadd.f32 %v695, %v909
      %v911 = vpop.f32.mrb[0].mxu0
      %912 = vmatprep.mubr.bf16.mxu0 0
      %913 = vmatmul.mubr.bf16.gmra.mrb[0].mxu0 %v818
      %v914 = vpop.f32.mrb[0].mxu0
      %v915 = vadd.f32 %v700, %v914
      %v916 = vpop.f32.mrb[0].mxu0
      %v917 = vpop.f32.mrb[0].mxu0
      %v918 = vadd.f32 %v703, %v917
      %v919 = vpop.f32.mrb[0].mxu0
      %920 = vmatprep.mubr.bf16.mxu0 0
      %921 = vmatmul.mubr.bf16.gmra.mrb[0].mxu0 %v821
      %v922 = vpop.f32.mrb[0].mxu0
      %v923 = vadd.f32 %v708, %v922
      %v924 = vpop.f32.mrb[0].mxu0
      %v925 = vpop.f32.mrb[0].mxu0
      %v926 = vadd.f32 %v711, %v925
      %v927 = vpop.f32.mrb[0].mxu0
      %928 = vmatprep.mubr.bf16.mxu0 0
      %929 = vmatmul.mubr.bf16.gmra.mrb[0].mxu0 %v824
      %v930 = vpop.f32.mrb[0].mxu0
      %v931 = vadd.f32 %v716, %v930
      %v932 = vpop.f32.mrb[0].mxu0
      %v933 = vpop.f32.mrb[0].mxu0
      %v934 = vadd.f32 %v719, %v933
      %v935 = vpop.f32.mrb[0].mxu0
      %936 = vmatprep.mubr.bf16.mxu0 0
      %937 = vmatmul.mubr.bf16.gmra.mrb[0].mxu0 %v827
      %v938 = vpop.f32.mrb[0].mxu0
      %v939 = vadd.f32 %v724, %v938
      %v940 = vpop.f32.mrb[0].mxu0
      %v941 = vpop.f32.mrb[0].mxu0
      %v942 = vadd.f32 %v727, %v941
      %v943 = vpop.f32.mrb[0].mxu0
      %944 = vmatprep.mubr.bf16.mxu0 0
      %945 = vmatmul.mubr.bf16.gmra.mrb[0].mxu0 %v830
      %v946 = vpop.f32.mrb[0].mxu0
      %v947 = vadd.f32 %v732, %v946
      %v948 = vpop.f32.mrb[0].mxu0
      %v949 = vpop.f32.mrb[0].mxu0
      %v950 = vadd.f32 %v735, %v949
      %v951 = vpop.f32.mrb[0].mxu0
      %952 = vmatprep.mubr.bf16.mxu0 0
      %953 = vmatmul.mubr.bf16.gmra.mrb[0].mxu0 %v833
      %v954 = vpop.f32.mrb[0].mxu0
      %v955 = vadd.f32 %v740, %v954
      %v956 = vpop.f32.mrb[0].mxu0
      %v957 = vpop.f32.mrb[0].mxu0
      %v958 = vadd.f32 %v743, %v957
      %v959 = vpop.f32.mrb[0].mxu0
      %960 = vmatprep.mubr.bf16.mxu0 0
      %961 = vmatmul.mubr.bf16.gmra.mrb[0].mxu0 %v836
      %v962 = vpop.f32.mrb[0].mxu0
      %v963 = vadd.f32 %v748, %v962
      %v964 = vpop.f32.mrb[0].mxu0
      %v965 = vpop.f32.mrb[0].mxu0
      %v966 = vadd.f32 %v751, %v965
      %v967 = vpop.f32.mrb[0].mxu0
      %968 = vmatprep.mubr.bf16.mxu0 0
      %969 = vmatmul.mubr.bf16.gmra.mrb[0].mxu0 %v839
      %v970 = vpop.f32.mrb[0].mxu0
      %v971 = vadd.f32 %v756, %v970
      %v972 = vpop.f32.mrb[0].mxu0
      %v973 = vpop.f32.mrb[0].mxu0
      %v974 = vadd.f32 %v759, %v973
      %v975 = vpop.f32.mrb[0].mxu0
      %976 = vmatprep.mubr.bf16.mxu0 0
      %977 = vmatmul.mubr.bf16.gmra.mrb[0].mxu0 %v842
      %v978 = vpop.f32.mrb[0].mxu0
      %v979 = vadd.f32 %v764, %v978
      %v980 = vpop.f32.mrb[0].mxu0
      %v981 = vpop.f32.mrb[0].mxu0
      %v982 = vadd.f32 %v767, %v981
      %v983 = vpop.f32.mrb[0].mxu0
      %984 = vmatprep.mubr.bf16.mxu0 0
      %985 = vmatmul.mubr.bf16.gmra.mrb[0].mxu0 %v845
      %v986 = vpop.f32.mrb[0].mxu0
      %v987 = vadd.f32 %v772, %v986
      %v988 = vpop.f32.mrb[0].mxu0
      %v989 = vpop.f32.mrb[0].mxu0
      %v990 = vadd.f32 %v775, %v989
      %v991 = vpop.f32.mrb[0].mxu0
      %992 = vmatprep.mubr.bf16.mxu0 0
      %993 = vmatmul.mubr.bf16.gmra.mrb[0].mxu0 %v848
      %v994 = vpop.f32.mrb[0].mxu0
      %v995 = vadd.f32 %v780, %v994
      %v996 = vpop.f32.mrb[0].mxu0
      %v997 = vpop.f32.mrb[0].mxu0
      %v998 = vadd.f32 %v783, %v997
      %v999 = vpop.f32.mrb[0].mxu0
      %1000 = vmatprep.mubr.bf16.mxu0 0
      %1001 = vmatmul.mubr.bf16.gmra.mrb[0].mxu0 %v851
      %v1002 = vpop.f32.mrb[0].mxu0
      %v1003 = vadd.f32 %v788, %v1002
      %v1004 = vpop.f32.mrb[0].mxu0
      %v1005 = vpop.f32.mrb[0].mxu0
      %v1006 = vadd.f32 %v791, %v1005
      %v1007 = vpop.f32.mrb[0].mxu0
      %1008 = vmatprep.mubr.bf16.mxu0 0
      %1009 = vmatmul.mubr.bf16.gmra.mrb[0].mxu0 %v854
      %v1010 = vpop.f32.mrb[0].mxu0
      %v1011 = vadd.f32 %v796, %v1010
      %v1012 = vpop.f32.mrb[0].mxu0
      %v1013 = vpop.f32.mrb[0].mxu0
      %v1014 = vadd.f32 %v799, %v1013
      %v1015 = vpop.f32.mrb[0].mxu0
      %1016 = vdwg.mxu0
      %v1017 = vld [vmem:[#allocation2 + $0x2] sm:$0xff]
      %v1018 = vld [vmem:[#allocation2 + $0xa] sm:$0xff]
      %v1019 = vld [vmem:[#allocation2 + $0x1a] sm:$0xff]
      %v1020 = vld [vmem:[#allocation2 + $0x22] sm:$0xff]
      %v1021 = vld [vmem:[#allocation2 + $0x32] sm:$0xff]
      %v1022 = vld [vmem:[#allocation2 + $0x3a] sm:$0xff]
      %v1023 = vld [vmem:[#allocation2 + $0x4a] sm:$0xff]
      %v1024 = vld [vmem:[#allocation2 + $0x52] sm:$0xff]
      %v1025 = vld [vmem:[#allocation2 + $0x62] sm:$0xff]
      %v1026 = vld [vmem:[#allocation2 + $0x6a] sm:$0xff]
      %v1027 = vld [vmem:[#allocation2 + $0x7a] sm:$0xff]
      %v1028 = vld [vmem:[#allocation2 + $0x82] sm:$0xff]
      %v1029 = vld [vmem:[#allocation2 + $0x92] sm:$0xff]
      %v1030 = vld [vmem:[#allocation2 + $0x9a] sm:$0xff]
      %v1031 = vld [vmem:[#allocation2 + $0xaa] sm:$0xff]
      %v1032 = vld [vmem:[#allocation2 + $0xb2] sm:$0xff]
      %v1033 = vld [vmem:[#allocation2 + $0xc2] sm:$0xff]
      %v1034 = vld [vmem:[#allocation2 + $0xca] sm:$0xff]
      %v1035 = vld [vmem:[#allocation2 + $0xda] sm:$0xff]
      %v1036 = vld [vmem:[#allocation2 + $0xe2] sm:$0xff]
      %v1037 = vld [vmem:[#allocation2 + $0xf2] sm:$0xff]
      %v1038 = vld [vmem:[#allocation2 + $0xfa] sm:$0xff]
      %v1039 = vld [vmem:[#allocation2 + $0x10a] sm:$0xff]
      %v1040 = vld [vmem:[#allocation2 + $0x112] sm:$0xff]
      %v1041 = vld [vmem:[#allocation2 + $0x122] sm:$0xff]
      %v1042 = vld [vmem:[#allocation2 + $0x12a] sm:$0xff]
      %v1043 = vld [vmem:[#allocation2 + $0x13a] sm:$0xff]
      %v1044 = vld [vmem:[#allocation2 + $0x142] sm:$0xff]
      %v1045 = vld [vmem:[#allocation2 + $0x152] sm:$0xff]
      %v1046 = vld [vmem:[#allocation2 + $0x15a] sm:$0xff]
      %v1047 = vld [vmem:[#allocation2 + $0x16a] sm:$0xff]
      %v1048 = vld [vmem:[#allocation2 + $0x172] sm:$0xff]
      %v1049 = vpack.c.bf16 %v1018, %v1017
      %v1050 = vpack.c.bf16 %v1020, %v1019
      %v1051 = vpack.c.bf16 %v1022, %v1021
      %v1052 = vpack.c.bf16 %v1024, %v1023
      %v1053 = vpack.c.bf16 %v1026, %v1025
      %v1054 = vpack.c.bf16 %v1028, %v1027
      %v1055 = vpack.c.bf16 %v1030, %v1029
      %v1056 = vpack.c.bf16 %v1032, %v1031
      %v1057 = vpack.c.bf16 %v1034, %v1033
      %v1058 = vpack.c.bf16 %v1036, %v1035
      %v1059 = vpack.c.bf16 %v1038, %v1037
      %v1060 = vpack.c.bf16 %v1040, %v1039
      %v1061 = vpack.c.bf16 %v1042, %v1041
      %v1062 = vpack.c.bf16 %v1044, %v1043
      %v1063 = vpack.c.bf16 %v1046, %v1045
      %v1064 = vpack.c.bf16 %v1048, %v1047
      %s1065 = scalar_lea.vmem %s3, 16
      %v1066 = vld [vmem:[%s1065] sm:$0xf]
      %v1067 = vld [vmem:[%s1065 + $0x4] sm:$0xf]
      %v1070 = vunpack.c.l.b16 %v1066
      %v1071 = vunpack.c.l.b16 %v1067
      %v1072 = vpack.c.b16 %v1071, %v1070
      %v1075 = vsel %vm237, %v1049, 0
      %v1078 = vsel %vm237, %v1050, 0
      %v1081 = vsel %vm237, %v1051, 0
      %v1084 = vsel %vm237, %v1052, 0
      %v1087 = vsel %vm237, %v1053, 0
      %v1090 = vsel %vm237, %v1054, 0
      %v1093 = vsel %vm237, %v1055, 0
      %v1096 = vsel %vm237, %v1056, 0
      %v1099 = vsel %vm237, %v1057, 0
      %v1102 = vsel %vm237, %v1058, 0
      %v1105 = vsel %vm237, %v1059, 0
      %v1108 = vsel %vm237, %v1060, 0
      %v1111 = vsel %vm237, %v1061, 0
      %v1114 = vsel %vm237, %v1062, 0
      %v1117 = vsel %vm237, %v1063, 0
      %v1120 = vsel %vm237, %v1064, 0
      %1122 = vmatprep.subr.bf16.mxu0 0
      %1123 = vmatpush1.bf16.msra.mxu0 %v1072
      %1124 = vmatprep.subr.bf16.mxu0 0
      %1125 = vmatpush1.bf16.msra.mxu0 0
      %1126 = vmatprep.subr.bf16.mxu0 0
      %1127 = vmatpush1.bf16.msra.mxu0 0
      %1128 = vmatprep.subr.bf16.mxu0 0
      %1129 = vmatpush1.bf16.msra.mxu0 0
      %1130 = vmatprep.subr.bf16.mxu0 0
      %1131 = vmatpush1.bf16.msra.mxu0 0
      %1132 = vmatprep.subr.bf16.mxu0 0
      %1133 = vmatpush1.bf16.msra.mxu0 0
      %1134 = vmatprep.subr.bf16.mxu0 0
      %1135 = vmatpush1.bf16.msra.mxu0 0
      %1136 = vmatprep.subr.bf16.mxu0 0
      %1137 = vmatpush1.bf16.msra.mxu0 0
      %1138 = vmatprep.subr.bf16.mxu0 0
      %1139 = vmatpush1.bf16.msra.mxu0 0
      %1140 = vmatprep.subr.bf16.mxu0 0
      %1141 = vmatpush1.bf16.msra.mxu0 0
      %1142 = vmatprep.subr.bf16.mxu0 0
      %1143 = vmatpush1.bf16.msra.mxu0 0
      %1144 = vmatprep.subr.bf16.mxu0 0
      %1145 = vmatpush1.bf16.msra.mxu0 0
      %1146 = vmatprep.subr.bf16.mxu0 0
      %1147 = vmatpush1.bf16.msra.mxu0 0
      %1148 = vmatprep.subr.bf16.mxu0 0
      %1149 = vmatpush1.bf16.msra.mxu0 0
      %1150 = vmatprep.subr.bf16.mxu0 0
      %1151 = vmatpush1.bf16.msra.mxu0 0
      %1152 = vmatprep.subr.bf16.mxu0 0
      %1153 = vmatpush1.bf16.msra.mxu0 0
      %1154 = vmatprep.mubr.bf16.mxu0 0
      %1155 = vmatmul.mubr.bf16.gmra.mrb[0].mxu0 %v1075
      %v1156 = vpop.f32.mrb[0].mxu0
      %v1157 = vadd.f32 0.0, %v1156
      %v1158 = vpop.f32.mrb[0].mxu0
      %v1159 = vpop.f32.mrb[0].mxu0
      %v1160 = vadd.f32 0.0, %v1159
      %v1161 = vpop.f32.mrb[0].mxu0
      %1162 = vmatprep.mubr.bf16.mxu0 0
      %1163 = vmatmul.mubr.bf16.gmra.mrb[0].mxu0 %v1078
      %v1164 = vpop.f32.mrb[0].mxu0
      %v1165 = vadd.f32 0.0, %v1164
      %v1166 = vpop.f32.mrb[0].mxu0
      %v1167 = vpop.f32.mrb[0].mxu0
      %v1168 = vadd.f32 0.0, %v1167
      %v1169 = vpop.f32.mrb[0].mxu0
      %1170 = vmatprep.mubr.bf16.mxu0 0
      %1171 = vmatmul.mubr.bf16.gmra.mrb[0].mxu0 %v1081
      %v1172 = vpop.f32.mrb[0].mxu0
      %v1173 = vadd.f32 0.0, %v1172
      %v1174 = vpop.f32.mrb[0].mxu0
      %v1175 = vpop.f32.mrb[0].mxu0
      %v1176 = vadd.f32 0.0, %v1175
      %v1177 = vpop.f32.mrb[0].mxu0
      %1178 = vmatprep.mubr.bf16.mxu0 0
      %1179 = vmatmul.mubr.bf16.gmra.mrb[0].mxu0 %v1084
      %v1180 = vpop.f32.mrb[0].mxu0
      %v1181 = vadd.f32 0.0, %v1180
      %v1182 = vpop.f32.mrb[0].mxu0
      %v1183 = vpop.f32.mrb[0].mxu0
      %v1184 = vadd.f32 0.0, %v1183
      %v1185 = vpop.f32.mrb[0].mxu0
      %1186 = vmatprep.mubr.bf16.mxu0 0
      %1187 = vmatmul.mubr.bf16.gmra.mrb[0].mxu0 %v1087
      %v1188 = vpop.f32.mrb[0].mxu0
      %v1189 = vadd.f32 0.0, %v1188
      %v1190 = vpop.f32.mrb[0].mxu0
      %v1191 = vpop.f32.mrb[0].mxu0
      %v1192 = vadd.f32 0.0, %v1191
      %v1193 = vpop.f32.mrb[0].mxu0
      %1194 = vmatprep.mubr.bf16.mxu0 0
      %1195 = vmatmul.mubr.bf16.gmra.mrb[0].mxu0 %v1090
      %v1196 = vpop.f32.mrb[0].mxu0
      %v1197 = vadd.f32 0.0, %v1196
      %v1198 = vpop.f32.mrb[0].mxu0
      %v1199 = vpop.f32.mrb[0].mxu0
      %v1200 = vadd.f32 0.0, %v1199
      %v1201 = vpop.f32.mrb[0].mxu0
      %1202 = vmatprep.mubr.bf16.mxu0 0
      %1203 = vmatmul.mubr.bf16.gmra.mrb[0].mxu0 %v1093
      %v1204 = vpop.f32.mrb[0].mxu0
      %v1205 = vadd.f32 0.0, %v1204
      %v1206 = vpop.f32.mrb[0].mxu0
      %v1207 = vpop.f32.mrb[0].mxu0
      %v1208 = vadd.f32 0.0, %v1207
      %v1209 = vpop.f32.mrb[0].mxu0
      %1210 = vmatprep.mubr.bf16.mxu0 0
      %1211 = vmatmul.mubr.bf16.gmra.mrb[0].mxu0 %v1096
      %v1212 = vpop.f32.mrb[0].mxu0
      %v1213 = vadd.f32 0.0, %v1212
      %v1214 = vpop.f32.mrb[0].mxu0
      %v1215 = vpop.f32.mrb[0].mxu0
      %v1216 = vadd.f32 0.0, %v1215
      %v1217 = vpop.f32.mrb[0].mxu0
      %1218 = vmatprep.mubr.bf16.mxu0 0
      %1219 = vmatmul.mubr.bf16.gmra.mrb[0].mxu0 %v1099
      %v1220 = vpop.f32.mrb[0].mxu0
      %v1221 = vadd.f32 0.0, %v1220
      %v1222 = vpop.f32.mrb[0].mxu0
      %v1223 = vpop.f32.mrb[0].mxu0
      %v1224 = vadd.f32 0.0, %v1223
      %v1225 = vpop.f32.mrb[0].mxu0
      %1226 = vmatprep.mubr.bf16.mxu0 0
      %1227 = vmatmul.mubr.bf16.gmra.mrb[0].mxu0 %v1102
      %v1228 = vpop.f32.mrb[0].mxu0
      %v1229 = vadd.f32 0.0, %v1228
      %v1230 = vpop.f32.mrb[0].mxu0
      %v1231 = vpop.f32.mrb[0].mxu0
      %v1232 = vadd.f32 0.0, %v1231
      %v1233 = vpop.f32.mrb[0].mxu0
      %1234 = vmatprep.mubr.bf16.mxu0 0
      %1235 = vmatmul.mubr.bf16.gmra.mrb[0].mxu0 %v1105
      %v1236 = vpop.f32.mrb[0].mxu0
      %v1237 = vadd.f32 0.0, %v1236
      %v1238 = vpop.f32.mrb[0].mxu0
      %v1239 = vpop.f32.mrb[0].mxu0
      %v1240 = vadd.f32 0.0, %v1239
      %v1241 = vpop.f32.mrb[0].mxu0
      %1242 = vmatprep.mubr.bf16.mxu0 0
      %1243 = vmatmul.mubr.bf16.gmra.mrb[0].mxu0 %v1108
      %v1244 = vpop.f32.mrb[0].mxu0
      %v1245 = vadd.f32 0.0, %v1244
      %v1246 = vpop.f32.mrb[0].mxu0
      %v1247 = vpop.f32.mrb[0].mxu0
      %v1248 = vadd.f32 0.0, %v1247
      %v1249 = vpop.f32.mrb[0].mxu0
      %1250 = vmatprep.mubr.bf16.mxu0 0
      %1251 = vmatmul.mubr.bf16.gmra.mrb[0].mxu0 %v1111
      %v1252 = vpop.f32.mrb[0].mxu0
      %v1253 = vadd.f32 0.0, %v1252
      %v1254 = vpop.f32.mrb[0].mxu0
      %v1255 = vpop.f32.mrb[0].mxu0
      %v1256 = vadd.f32 0.0, %v1255
      %v1257 = vpop.f32.mrb[0].mxu0
      %1258 = vmatprep.mubr.bf16.mxu0 0
      %1259 = vmatmul.mubr.bf16.gmra.mrb[0].mxu0 %v1114
      %v1260 = vpop.f32.mrb[0].mxu0
      %v1261 = vadd.f32 0.0, %v1260
      %v1262 = vpop.f32.mrb[0].mxu0
      %v1263 = vpop.f32.mrb[0].mxu0
      %v1264 = vadd.f32 0.0, %v1263
      %v1265 = vpop.f32.mrb[0].mxu0
      %1266 = vmatprep.mubr.bf16.mxu0 0
      %1267 = vmatmul.mubr.bf16.gmra.mrb[0].mxu0 %v1117
      %v1268 = vpop.f32.mrb[0].mxu0
      %v1269 = vadd.f32 0.0, %v1268
      %v1270 = vpop.f32.mrb[0].mxu0
      %v1271 = vpop.f32.mrb[0].mxu0
      %v1272 = vadd.f32 0.0, %v1271
      %v1273 = vpop.f32.mrb[0].mxu0
      %1274 = vmatprep.mubr.bf16.mxu0 0
      %1275 = vmatmul.mubr.bf16.gmra.mrb[0].mxu0 %v1120
      %v1276 = vpop.f32.mrb[0].mxu0
      %v1277 = vadd.f32 0.0, %v1276
      %v1278 = vpop.f32.mrb[0].mxu0
      %v1279 = vpop.f32.mrb[0].mxu0
      %v1280 = vadd.f32 0.0, %v1279
      %v1281 = vpop.f32.mrb[0].mxu0
      %1282 = vdwg.mxu0
      %v1283 = vadd.f32 %v891, %v1157
      %v1284 = vadd.f32 %v894, %v1160
      %v1285 = vadd.f32 %v899, %v1165
      %v1286 = vadd.f32 %v902, %v1168
      %v1287 = vadd.f32 %v907, %v1173
      %v1288 = vadd.f32 %v910, %v1176
      %v1289 = vadd.f32 %v915, %v1181
      %v1290 = vadd.f32 %v918, %v1184
      %v1291 = vadd.f32 %v923, %v1189
      %v1292 = vadd.f32 %v926, %v1192
      %v1293 = vadd.f32 %v931, %v1197
      %v1294 = vadd.f32 %v934, %v1200
      %v1295 = vadd.f32 %v939, %v1205
      %v1296 = vadd.f32 %v942, %v1208
      %v1297 = vadd.f32 %v947, %v1213
      %v1298 = vadd.f32 %v950, %v1216
      %v1299 = vadd.f32 %v955, %v1221
      %v1300 = vadd.f32 %v958, %v1224
      %v1301 = vadd.f32 %v963, %v1229
      %v1302 = vadd.f32 %v966, %v1232
      %v1303 = vadd.f32 %v971, %v1237
      %v1304 = vadd.f32 %v974, %v1240
      %v1305 = vadd.f32 %v979, %v1245
      %v1306 = vadd.f32 %v982, %v1248
      %v1307 = vadd.f32 %v987, %v1253
      %v1308 = vadd.f32 %v990, %v1256
      %v1309 = vadd.f32 %v995, %v1261
      %v1310 = vadd.f32 %v998, %v1264
      %v1311 = vadd.f32 %v1003, %v1269
      %v1312 = vadd.f32 %v1006, %v1272
      %v1313 = vadd.f32 %v1011, %v1277
      %v1314 = vadd.f32 %v1014, %v1280
      %v1315 = vld [vmem:[%s246] sm:$0xff]
      %v1316 = vld [vmem:[%s246 + $0x8] sm:$0xff]
      %v1317 = vld [vmem:[%s246 + $0x18] sm:$0xff]
      %v1318 = vld [vmem:[%s246 + $0x20] sm:$0xff]
      %v1319 = vld [vmem:[%s246 + $0x30] sm:$0xff]
      %v1320 = vld [vmem:[%s246 + $0x38] sm:$0xff]
      %v1321 = vld [vmem:[%s246 + $0x48] sm:$0xff]
      %v1322 = vld [vmem:[%s246 + $0x50] sm:$0xff]
      %v1323 = vld [vmem:[%s246 + $0x60] sm:$0xff]
      %v1324 = vld [vmem:[%s246 + $0x68] sm:$0xff]
      %v1325 = vld [vmem:[%s246 + $0x78] sm:$0xff]
      %v1326 = vld [vmem:[%s246 + $0x80] sm:$0xff]
      %v1327 = vld [vmem:[%s246 + $0x90] sm:$0xff]
      %v1328 = vld [vmem:[%s246 + $0x98] sm:$0xff]
      %v1329 = vld [vmem:[%s246 + $0xa8] sm:$0xff]
      %v1330 = vld [vmem:[%s246 + $0xb0] sm:$0xff]
      %v1331 = vld [vmem:[%s246 + $0xc0] sm:$0xff]
      %v1332 = vld [vmem:[%s246 + $0xc8] sm:$0xff]
      %v1333 = vld [vmem:[%s246 + $0xd8] sm:$0xff]
      %v1334 = vld [vmem:[%s246 + $0xe0] sm:$0xff]
      %v1335 = vld [vmem:[%s246 + $0xf0] sm:$0xff]
      %v1336 = vld [vmem:[%s246 + $0xf8] sm:$0xff]
      %v1337 = vld [vmem:[%s246 + $0x108] sm:$0xff]
      %v1338 = vld [vmem:[%s246 + $0x110] sm:$0xff]
      %v1339 = vld [vmem:[%s246 + $0x120] sm:$0xff]
      %v1340 = vld [vmem:[%s246 + $0x128] sm:$0xff]
      %v1341 = vld [vmem:[%s246 + $0x138] sm:$0xff]
      %v1342 = vld [vmem:[%s246 + $0x140] sm:$0xff]
      %v1343 = vld [vmem:[%s246 + $0x150] sm:$0xff]
      %v1344 = vld [vmem:[%s246 + $0x158] sm:$0xff]
      %v1345 = vld [vmem:[%s246 + $0x168] sm:$0xff]
      %v1346 = vld [vmem:[%s246 + $0x170] sm:$0xff]
      %v1347 = vpack.c.bf16 %v1316, %v1315
      %v1348 = vpack.c.bf16 %v1318, %v1317
      %v1349 = vpack.c.bf16 %v1320, %v1319
      %v1350 = vpack.c.bf16 %v1322, %v1321
      %v1351 = vpack.c.bf16 %v1324, %v1323
      %v1352 = vpack.c.bf16 %v1326, %v1325
      %v1353 = vpack.c.bf16 %v1328, %v1327
      %v1354 = vpack.c.bf16 %v1330, %v1329
      %v1355 = vpack.c.bf16 %v1332, %v1331
      %v1356 = vpack.c.bf16 %v1334, %v1333
      %v1357 = vpack.c.bf16 %v1336, %v1335
      %v1358 = vpack.c.bf16 %v1338, %v1337
      %v1359 = vpack.c.bf16 %v1340, %v1339
      %v1360 = vpack.c.bf16 %v1342, %v1341
      %v1361 = vpack.c.bf16 %v1344, %v1343
      %v1362 = vpack.c.bf16 %v1346, %v1345
      %s1363 = scalar_lea.vmem %s3, 24
      %v1364 = vld [vmem:[%s1363] sm:$0xf]
      %v1365 = vld [vmem:[%s1363 + $0x4] sm:$0xf]
      %v1368 = vunpack.c.l.b16 %v1364
      %v1369 = vunpack.c.l.b16 %v1365
      %v1370 = vpack.c.b16 %v1369, %v1368
      %v1373 = vsel %vm237, %v1347, 0
      %v1376 = vsel %vm237, %v1348, 0
      %v1379 = vsel %vm237, %v1349, 0
      %v1382 = vsel %vm237, %v1350, 0
      %v1385 = vsel %vm237, %v1351, 0
      %v1388 = vsel %vm237, %v1352, 0
      %v1391 = vsel %vm237, %v1353, 0
      %v1394 = vsel %vm237, %v1354, 0
      %v1397 = vsel %vm237, %v1355, 0
      %v1400 = vsel %vm237, %v1356, 0
      %v1403 = vsel %vm237, %v1357, 0
      %v1406 = vsel %vm237, %v1358, 0
      %v1409 = vsel %vm237, %v1359, 0
      %v1412 = vsel %vm237, %v1360, 0
      %v1415 = vsel %vm237, %v1361, 0
      %v1418 = vsel %vm237, %v1362, 0
      %1420 = vmatprep.subr.bf16.mxu0 0
      %1421 = vmatpush1.bf16.msra.mxu0 %v1370
      %1422 = vmatprep.subr.bf16.mxu0 0
      %1423 = vmatpush1.bf16.msra.mxu0 0
      %1424 = vmatprep.subr.bf16.mxu0 0
      %1425 = vmatpush1.bf16.msra.mxu0 0
      %1426 = vmatprep.subr.bf16.mxu0 0
      %1427 = vmatpush1.bf16.msra.mxu0 0
      %1428 = vmatprep.subr.bf16.mxu0 0
      %1429 = vmatpush1.bf16.msra.mxu0 0
      %1430 = vmatprep.subr.bf16.mxu0 0
      %1431 = vmatpush1.bf16.msra.mxu0 0
      %1432 = vmatprep.subr.bf16.mxu0 0
      %1433 = vmatpush1.bf16.msra.mxu0 0
      %1434 = vmatprep.subr.bf16.mxu0 0
      %1435 = vmatpush1.bf16.msra.mxu0 0
      %1436 = vmatprep.subr.bf16.mxu0 0
      %1437 = vmatpush1.bf16.msra.mxu0 0
      %1438 = vmatprep.subr.bf16.mxu0 0
      %1439 = vmatpush1.bf16.msra.mxu0 0
      %1440 = vmatprep.subr.bf16.mxu0 0
      %1441 = vmatpush1.bf16.msra.mxu0 0
      %1442 = vmatprep.subr.bf16.mxu0 0
      %1443 = vmatpush1.bf16.msra.mxu0 0
      %1444 = vmatprep.subr.bf16.mxu0 0
      %1445 = vmatpush1.bf16.msra.mxu0 0
      %1446 = vmatprep.subr.bf16.mxu0 0
      %1447 = vmatpush1.bf16.msra.mxu0 0
      %1448 = vmatprep.subr.bf16.mxu0 0
      %1449 = vmatpush1.bf16.msra.mxu0 0
      %1450 = vmatprep.subr.bf16.mxu0 0
      %1451 = vmatpush1.bf16.msra.mxu0 0
      %1452 = vmatprep.mubr.bf16.mxu0 0
      %1453 = vmatmul.mubr.bf16.gmra.mrb[0].mxu0 %v1373
      %v1454 = vpop.f32.mrb[0].mxu0
      %v1455 = vadd.f32 0.0, %v1454
      %v1456 = vpop.f32.mrb[0].mxu0
      %v1457 = vpop.f32.mrb[0].mxu0
      %v1458 = vadd.f32 0.0, %v1457
      %v1459 = vpop.f32.mrb[0].mxu0
      %1460 = vmatprep.mubr.bf16.mxu0 0
      %1461 = vmatmul.mubr.bf16.gmra.mrb[0].mxu0 %v1376
      %v1462 = vpop.f32.mrb[0].mxu0
      %v1463 = vadd.f32 0.0, %v1462
      %v1464 = vpop.f32.mrb[0].mxu0
      %v1465 = vpop.f32.mrb[0].mxu0
      %v1466 = vadd.f32 0.0, %v1465
      %v1467 = vpop.f32.mrb[0].mxu0
      %1468 = vmatprep.mubr.bf16.mxu0 0
      %1469 = vmatmul.mubr.bf16.gmra.mrb[0].mxu0 %v1379
      %v1470 = vpop.f32.mrb[0].mxu0
      %v1471 = vadd.f32 0.0, %v1470
      %v1472 = vpop.f32.mrb[0].mxu0
      %v1473 = vpop.f32.mrb[0].mxu0
      %v1474 = vadd.f32 0.0, %v1473
      %v1475 = vpop.f32.mrb[0].mxu0
      %1476 = vmatprep.mubr.bf16.mxu0 0
      %1477 = vmatmul.mubr.bf16.gmra.mrb[0].mxu0 %v1382
      %v1478 = vpop.f32.mrb[0].mxu0
      %v1479 = vadd.f32 0.0, %v1478
      %v1480 = vpop.f32.mrb[0].mxu0
      %v1481 = vpop.f32.mrb[0].mxu0
      %v1482 = vadd.f32 0.0, %v1481
      %v1483 = vpop.f32.mrb[0].mxu0
      %1484 = vmatprep.mubr.bf16.mxu0 0
      %1485 = vmatmul.mubr.bf16.gmra.mrb[0].mxu0 %v1385
      %v1486 = vpop.f32.mrb[0].mxu0
      %v1487 = vadd.f32 0.0, %v1486
      %v1488 = vpop.f32.mrb[0].mxu0
      %v1489 = vpop.f32.mrb[0].mxu0
      %v1490 = vadd.f32 0.0, %v1489
      %v1491 = vpop.f32.mrb[0].mxu0
      %1492 = vmatprep.mubr.bf16.mxu0 0
      %1493 = vmatmul.mubr.bf16.gmra.mrb[0].mxu0 %v1388
      %v1494 = vpop.f32.mrb[0].mxu0
      %v1495 = vadd.f32 0.0, %v1494
      %v1496 = vpop.f32.mrb[0].mxu0
      %v1497 = vpop.f32.mrb[0].mxu0
      %v1498 = vadd.f32 0.0, %v1497
      %v1499 = vpop.f32.mrb[0].mxu0
      %1500 = vmatprep.mubr.bf16.mxu0 0
      %1501 = vmatmul.mubr.bf16.gmra.mrb[0].mxu0 %v1391
      %v1502 = vpop.f32.mrb[0].mxu0
      %v1503 = vadd.f32 0.0, %v1502
      %v1504 = vpop.f32.mrb[0].mxu0
      %v1505 = vpop.f32.mrb[0].mxu0
      %v1506 = vadd.f32 0.0, %v1505
      %v1507 = vpop.f32.mrb[0].mxu0
      %1508 = vmatprep.mubr.bf16.mxu0 0
      %1509 = vmatmul.mubr.bf16.gmra.mrb[0].mxu0 %v1394
      %v1510 = vpop.f32.mrb[0].mxu0
      %v1511 = vadd.f32 0.0, %v1510
      %v1512 = vpop.f32.mrb[0].mxu0
      %v1513 = vpop.f32.mrb[0].mxu0
      %v1514 = vadd.f32 0.0, %v1513
      %v1515 = vpop.f32.mrb[0].mxu0
      %1516 = vmatprep.mubr.bf16.mxu0 0
      %1517 = vmatmul.mubr.bf16.gmra.mrb[0].mxu0 %v1397
      %v1518 = vpop.f32.mrb[0].mxu0
      %v1519 = vadd.f32 0.0, %v1518
      %v1520 = vpop.f32.mrb[0].mxu0
      %v1521 = vpop.f32.mrb[0].mxu0
      %v1522 = vadd.f32 0.0, %v1521
      %v1523 = vpop.f32.mrb[0].mxu0
      %1524 = vmatprep.mubr.bf16.mxu0 0
      %1525 = vmatmul.mubr.bf16.gmra.mrb[0].mxu0 %v1400
      %v1526 = vpop.f32.mrb[0].mxu0
      %v1527 = vadd.f32 0.0, %v1526
      %v1528 = vpop.f32.mrb[0].mxu0
      %v1529 = vpop.f32.mrb[0].mxu0
      %v1530 = vadd.f32 0.0, %v1529
      %v1531 = vpop.f32.mrb[0].mxu0
      %1532 = vmatprep.mubr.bf16.mxu0 0
      %1533 = vmatmul.mubr.bf16.gmra.mrb[0].mxu0 %v1403
      %v1534 = vpop.f32.mrb[0].mxu0
      %v1535 = vadd.f32 0.0, %v1534
      %v1536 = vpop.f32.mrb[0].mxu0
      %v1537 = vpop.f32.mrb[0].mxu0
      %v1538 = vadd.f32 0.0, %v1537
      %v1539 = vpop.f32.mrb[0].mxu0
      %1540 = vmatprep.mubr.bf16.mxu0 0
      %1541 = vmatmul.mubr.bf16.gmra.mrb[0].mxu0 %v1406
      %v1542 = vpop.f32.mrb[0].mxu0
      %v1543 = vadd.f32 0.0, %v1542
      %v1544 = vpop.f32.mrb[0].mxu0
      %v1545 = vpop.f32.mrb[0].mxu0
      %v1546 = vadd.f32 0.0, %v1545
      %v1547 = vpop.f32.mrb[0].mxu0
      %1548 = vmatprep.mubr.bf16.mxu0 0
      %1549 = vmatmul.mubr.bf16.gmra.mrb[0].mxu0 %v1409
      %v1550 = vpop.f32.mrb[0].mxu0
      %v1551 = vadd.f32 0.0, %v1550
      %v1552 = vpop.f32.mrb[0].mxu0
      %v1553 = vpop.f32.mrb[0].mxu0
      %v1554 = vadd.f32 0.0, %v1553
      %v1555 = vpop.f32.mrb[0].mxu0
      %1556 = vmatprep.mubr.bf16.mxu0 0
      %1557 = vmatmul.mubr.bf16.gmra.mrb[0].mxu0 %v1412
      %v1558 = vpop.f32.mrb[0].mxu0
      %v1559 = vadd.f32 0.0, %v1558
      %v1560 = vpop.f32.mrb[0].mxu0
      %v1561 = vpop.f32.mrb[0].mxu0
      %v1562 = vadd.f32 0.0, %v1561
      %v1563 = vpop.f32.mrb[0].mxu0
      %1564 = vmatprep.mubr.bf16.mxu0 0
      %1565 = vmatmul.mubr.bf16.gmra.mrb[0].mxu0 %v1415
      %v1566 = vpop.f32.mrb[0].mxu0
      %v1567 = vadd.f32 0.0, %v1566
      %v1568 = vpop.f32.mrb[0].mxu0
      %v1569 = vpop.f32.mrb[0].mxu0
      %v1570 = vadd.f32 0.0, %v1569
      %v1571 = vpop.f32.mrb[0].mxu0
      %1572 = vmatprep.mubr.bf16.mxu0 0
      %1573 = vmatmul.mubr.bf16.gmra.mrb[0].mxu0 %v1418
      %v1574 = vpop.f32.mrb[0].mxu0
      %v1575 = vadd.f32 0.0, %v1574
      %v1576 = vpop.f32.mrb[0].mxu0
      %v1577 = vpop.f32.mrb[0].mxu0
      %v1578 = vadd.f32 0.0, %v1577
      %v1579 = vpop.f32.mrb[0].mxu0
      %1580 = vdwg.mxu0
      %v1581 = vadd.f32 %v1283, %v1455
      %v1582 = vadd.f32 %v1284, %v1458
      %v1583 = vadd.f32 %v1285, %v1463
      %v1584 = vadd.f32 %v1286, %v1466
      %v1585 = vadd.f32 %v1287, %v1471
      %v1586 = vadd.f32 %v1288, %v1474
      %v1587 = vadd.f32 %v1289, %v1479
      %v1588 = vadd.f32 %v1290, %v1482
      %v1589 = vadd.f32 %v1291, %v1487
      %v1590 = vadd.f32 %v1292, %v1490
      %v1591 = vadd.f32 %v1293, %v1495
      %v1592 = vadd.f32 %v1294, %v1498
      %v1593 = vadd.f32 %v1295, %v1503
      %v1594 = vadd.f32 %v1296, %v1506
      %v1595 = vadd.f32 %v1297, %v1511
      %v1596 = vadd.f32 %v1298, %v1514
      %v1597 = vadd.f32 %v1299, %v1519
      %v1598 = vadd.f32 %v1300, %v1522
      %v1599 = vadd.f32 %v1301, %v1527
      %v1600 = vadd.f32 %v1302, %v1530
      %v1601 = vadd.f32 %v1303, %v1535
      %v1602 = vadd.f32 %v1304, %v1538
      %v1603 = vadd.f32 %v1305, %v1543
      %v1604 = vadd.f32 %v1306, %v1546
      %v1605 = vadd.f32 %v1307, %v1551
      %v1606 = vadd.f32 %v1308, %v1554
      %v1607 = vadd.f32 %v1309, %v1559
      %v1608 = vadd.f32 %v1310, %v1562
      %v1609 = vadd.f32 %v1311, %v1567
      %v1610 = vadd.f32 %v1312, %v1570
      %v1611 = vadd.f32 %v1313, %v1575
      %v1612 = vadd.f32 %v1314, %v1578
      %v1613 = vld [vmem:[%s246 + $0x1] sm:$0xff]
      %v1614 = vld [vmem:[%s246 + $0x9] sm:$0xff]
      %v1615 = vld [vmem:[%s246 + $0x19] sm:$0xff]
      %v1616 = vld [vmem:[%s246 + $0x21] sm:$0xff]
      %v1617 = vld [vmem:[%s246 + $0x31] sm:$0xff]
      %v1618 = vld [vmem:[%s246 + $0x39] sm:$0xff]
      %v1619 = vld [vmem:[%s246 + $0x49] sm:$0xff]
      %v1620 = vld [vmem:[%s246 + $0x51] sm:$0xff]
      %v1621 = vld [vmem:[%s246 + $0x61] sm:$0xff]
      %v1622 = vld [vmem:[%s246 + $0x69] sm:$0xff]
      %v1623 = vld [vmem:[%s246 + $0x79] sm:$0xff]
      %v1624 = vld [vmem:[%s246 + $0x81] sm:$0xff]
      %v1625 = vld [vmem:[%s246 + $0x91] sm:$0xff]
      %v1626 = vld [vmem:[%s246 + $0x99] sm:$0xff]
      %v1627 = vld [vmem:[%s246 + $0xa9] sm:$0xff]
      %v1628 = vld [vmem:[%s246 + $0xb1] sm:$0xff]
      %v1629 = vld [vmem:[%s246 + $0xc1] sm:$0xff]
      %v1630 = vld [vmem:[%s246 + $0xc9] sm:$0xff]
      %v1631 = vld [vmem:[%s246 + $0xd9] sm:$0xff]
      %v1632 = vld [vmem:[%s246 + $0xe1] sm:$0xff]
      %v1633 = vld [vmem:[%s246 + $0xf1] sm:$0xff]
      %v1634 = vld [vmem:[%s246 + $0xf9] sm:$0xff]
      %v1635 = vld [vmem:[%s246 + $0x109] sm:$0xff]
      %v1636 = vld [vmem:[%s246 + $0x111] sm:$0xff]
      %v1637 = vld [vmem:[%s246 + $0x121] sm:$0xff]
      %v1638 = vld [vmem:[%s246 + $0x129] sm:$0xff]
      %v1639 = vld [vmem:[%s246 + $0x139] sm:$0xff]
      %v1640 = vld [vmem:[%s246 + $0x141] sm:$0xff]
      %v1641 = vld [vmem:[%s246 + $0x151] sm:$0xff]
      %v1642 = vld [vmem:[%s246 + $0x159] sm:$0xff]
      %v1643 = vld [vmem:[%s246 + $0x169] sm:$0xff]
      %v1644 = vld [vmem:[%s246 + $0x171] sm:$0xff]
      %v1645 = vpack.c.bf16 %v1614, %v1613
      %v1646 = vpack.c.bf16 %v1616, %v1615
      %v1647 = vpack.c.bf16 %v1618, %v1617
      %v1648 = vpack.c.bf16 %v1620, %v1619
      %v1649 = vpack.c.bf16 %v1622, %v1621
      %v1650 = vpack.c.bf16 %v1624, %v1623
      %v1651 = vpack.c.bf16 %v1626, %v1625
      %v1652 = vpack.c.bf16 %v1628, %v1627
      %v1653 = vpack.c.bf16 %v1630, %v1629
      %v1654 = vpack.c.bf16 %v1632, %v1631
      %v1655 = vpack.c.bf16 %v1634, %v1633
      %v1656 = vpack.c.bf16 %v1636, %v1635
      %v1657 = vpack.c.bf16 %v1638, %v1637
      %v1658 = vpack.c.bf16 %v1640, %v1639
      %v1659 = vpack.c.bf16 %v1642, %v1641
      %v1660 = vpack.c.bf16 %v1644, %v1643
      %s1661 = scalar_lea.vmem %s3, 32
      %v1662 = vld [vmem:[%s1661] sm:$0xf]
      %v1663 = vld [vmem:[%s1661 + $0x4] sm:$0xf]
      %v1666 = vunpack.c.l.b16 %v1662
      %v1667 = vunpack.c.l.b16 %v1663
      %v1668 = vpack.c.b16 %v1667, %v1666
      %v1671 = vsel %vm237, %v1645, 0
      %v1674 = vsel %vm237, %v1646, 0
      %v1677 = vsel %vm237, %v1647, 0
      %v1680 = vsel %vm237, %v1648, 0
      %v1683 = vsel %vm237, %v1649, 0
      %v1686 = vsel %vm237, %v1650, 0
      %v1689 = vsel %vm237, %v1651, 0
      %v1692 = vsel %vm237, %v1652, 0
      %v1695 = vsel %vm237, %v1653, 0
      %v1698 = vsel %vm237, %v1654, 0
      %v1701 = vsel %vm237, %v1655, 0
      %v1704 = vsel %vm237, %v1656, 0
      %v1707 = vsel %vm237, %v1657, 0
      %v1710 = vsel %vm237, %v1658, 0
      %v1713 = vsel %vm237, %v1659, 0
      %v1716 = vsel %vm237, %v1660, 0
      %1718 = vmatprep.subr.bf16.mxu0 0
      %1719 = vmatpush1.bf16.msra.mxu0 %v1668
      %1720 = vmatprep.subr.bf16.mxu0 0
      %1721 = vmatpush1.bf16.msra.mxu0 0
      %1722 = vmatprep.subr.bf16.mxu0 0
      %1723 = vmatpush1.bf16.msra.mxu0 0
      %1724 = vmatprep.subr.bf16.mxu0 0
      %1725 = vmatpush1.bf16.msra.mxu0 0
      %1726 = vmatprep.subr.bf16.mxu0 0
      %1727 = vmatpush1.bf16.msra.mxu0 0
      %1728 = vmatprep.subr.bf16.mxu0 0
      %1729 = vmatpush1.bf16.msra.mxu0 0
      %1730 = vmatprep.subr.bf16.mxu0 0
      %1731 = vmatpush1.bf16.msra.mxu0 0
      %1732 = vmatprep.subr.bf16.mxu0 0
      %1733 = vmatpush1.bf16.msra.mxu0 0
      %1734 = vmatprep.subr.bf16.mxu0 0
      %1735 = vmatpush1.bf16.msra.mxu0 0
      %1736 = vmatprep.subr.bf16.mxu0 0
      %1737 = vmatpush1.bf16.msra.mxu0 0
      %1738 = vmatprep.subr.bf16.mxu0 0
      %1739 = vmatpush1.bf16.msra.mxu0 0
      %1740 = vmatprep.subr.bf16.mxu0 0
      %1741 = vmatpush1.bf16.msra.mxu0 0
      %1742 = vmatprep.subr.bf16.mxu0 0
      %1743 = vmatpush1.bf16.msra.mxu0 0
      %1744 = vmatprep.subr.bf16.mxu0 0
      %1745 = vmatpush1.bf16.msra.mxu0 0
      %1746 = vmatprep.subr.bf16.mxu0 0
      %1747 = vmatpush1.bf16.msra.mxu0 0
      %1748 = vmatprep.subr.bf16.mxu0 0
      %1749 = vmatpush1.bf16.msra.mxu0 0
      %1750 = vmatprep.mubr.bf16.mxu0 0
      %1751 = vmatmul.mubr.bf16.gmra.mrb[0].mxu0 %v1671
      %v1752 = vpop.f32.mrb[0].mxu0
      %v1753 = vadd.f32 0.0, %v1752
      %v1754 = vpop.f32.mrb[0].mxu0
      %v1755 = vpop.f32.mrb[0].mxu0
      %v1756 = vadd.f32 0.0, %v1755
      %v1757 = vpop.f32.mrb[0].mxu0
      %1758 = vmatprep.mubr.bf16.mxu0 0
      %1759 = vmatmul.mubr.bf16.gmra.mrb[0].mxu0 %v1674
      %v1760 = vpop.f32.mrb[0].mxu0
      %v1761 = vadd.f32 0.0, %v1760
      %v1762 = vpop.f32.mrb[0].mxu0
      %v1763 = vpop.f32.mrb[0].mxu0
      %v1764 = vadd.f32 0.0, %v1763
      %v1765 = vpop.f32.mrb[0].mxu0
      %1766 = vmatprep.mubr.bf16.mxu0 0
      %1767 = vmatmul.mubr.bf16.gmra.mrb[0].mxu0 %v1677
      %v1768 = vpop.f32.mrb[0].mxu0
      %v1769 = vadd.f32 0.0, %v1768
      %v1770 = vpop.f32.mrb[0].mxu0
      %v1771 = vpop.f32.mrb[0].mxu0
      %v1772 = vadd.f32 0.0, %v1771
      %v1773 = vpop.f32.mrb[0].mxu0
      %1774 = vmatprep.mubr.bf16.mxu0 0
      %1775 = vmatmul.mubr.bf16.gmra.mrb[0].mxu0 %v1680
      %v1776 = vpop.f32.mrb[0].mxu0
      %v1777 = vadd.f32 0.0, %v1776
      %v1778 = vpop.f32.mrb[0].mxu0
      %v1779 = vpop.f32.mrb[0].mxu0
      %v1780 = vadd.f32 0.0, %v1779
      %v1781 = vpop.f32.mrb[0].mxu0
      %1782 = vmatprep.mubr.bf16.mxu0 0
      %1783 = vmatmul.mubr.bf16.gmra.mrb[0].mxu0 %v1683
      %v1784 = vpop.f32.mrb[0].mxu0
      %v1785 = vadd.f32 0.0, %v1784
      %v1786 = vpop.f32.mrb[0].mxu0
      %v1787 = vpop.f32.mrb[0].mxu0
      %v1788 = vadd.f32 0.0, %v1787
      %v1789 = vpop.f32.mrb[0].mxu0
      %1790 = vmatprep.mubr.bf16.mxu0 0
      %1791 = vmatmul.mubr.bf16.gmra.mrb[0].mxu0 %v1686
      %v1792 = vpop.f32.mrb[0].mxu0
      %v1793 = vadd.f32 0.0, %v1792
      %v1794 = vpop.f32.mrb[0].mxu0
      %v1795 = vpop.f32.mrb[0].mxu0
      %v1796 = vadd.f32 0.0, %v1795
      %v1797 = vpop.f32.mrb[0].mxu0
      %1798 = vmatprep.mubr.bf16.mxu0 0
      %1799 = vmatmul.mubr.bf16.gmra.mrb[0].mxu0 %v1689
      %v1800 = vpop.f32.mrb[0].mxu0
      %v1801 = vadd.f32 0.0, %v1800
      %v1802 = vpop.f32.mrb[0].mxu0
      %v1803 = vpop.f32.mrb[0].mxu0
      %v1804 = vadd.f32 0.0, %v1803
      %v1805 = vpop.f32.mrb[0].mxu0
      %1806 = vmatprep.mubr.bf16.mxu0 0
      %1807 = vmatmul.mubr.bf16.gmra.mrb[0].mxu0 %v1692
      %v1808 = vpop.f32.mrb[0].mxu0
      %v1809 = vadd.f32 0.0, %v1808
      %v1810 = vpop.f32.mrb[0].mxu0
      %v1811 = vpop.f32.mrb[0].mxu0
      %v1812 = vadd.f32 0.0, %v1811
      %v1813 = vpop.f32.mrb[0].mxu0
      %1814 = vmatprep.mubr.bf16.mxu0 0
      %1815 = vmatmul.mubr.bf16.gmra.mrb[0].mxu0 %v1695
      %v1816 = vpop.f32.mrb[0].mxu0
      %v1817 = vadd.f32 0.0, %v1816
      %v1818 = vpop.f32.mrb[0].mxu0
      %v1819 = vpop.f32.mrb[0].mxu0
      %v1820 = vadd.f32 0.0, %v1819
      %v1821 = vpop.f32.mrb[0].mxu0
      %1822 = vmatprep.mubr.bf16.mxu0 0
      %1823 = vmatmul.mubr.bf16.gmra.mrb[0].mxu0 %v1698
      %v1824 = vpop.f32.mrb[0].mxu0
      %v1825 = vadd.f32 0.0, %v1824
      %v1826 = vpop.f32.mrb[0].mxu0
      %v1827 = vpop.f32.mrb[0].mxu0
      %v1828 = vadd.f32 0.0, %v1827
      %v1829 = vpop.f32.mrb[0].mxu0
      %1830 = vmatprep.mubr.bf16.mxu0 0
      %1831 = vmatmul.mubr.bf16.gmra.mrb[0].mxu0 %v1701
      %v1832 = vpop.f32.mrb[0].mxu0
      %v1833 = vadd.f32 0.0, %v1832
      %v1834 = vpop.f32.mrb[0].mxu0
      %v1835 = vpop.f32.mrb[0].mxu0
      %v1836 = vadd.f32 0.0, %v1835
      %v1837 = vpop.f32.mrb[0].mxu0
      %1838 = vmatprep.mubr.bf16.mxu0 0
      %1839 = vmatmul.mubr.bf16.gmra.mrb[0].mxu0 %v1704
      %v1840 = vpop.f32.mrb[0].mxu0
      %v1841 = vadd.f32 0.0, %v1840
      %v1842 = vpop.f32.mrb[0].mxu0
      %v1843 = vpop.f32.mrb[0].mxu0
      %v1844 = vadd.f32 0.0, %v1843
      %v1845 = vpop.f32.mrb[0].mxu0
      %1846 = vmatprep.mubr.bf16.mxu0 0
      %1847 = vmatmul.mubr.bf16.gmra.mrb[0].mxu0 %v1707
      %v1848 = vpop.f32.mrb[0].mxu0
      %v1849 = vadd.f32 0.0, %v1848
      %v1850 = vpop.f32.mrb[0].mxu0
      %v1851 = vpop.f32.mrb[0].mxu0
      %v1852 = vadd.f32 0.0, %v1851
      %v1853 = vpop.f32.mrb[0].mxu0
      %1854 = vmatprep.mubr.bf16.mxu0 0
      %1855 = vmatmul.mubr.bf16.gmra.mrb[0].mxu0 %v1710
      %v1856 = vpop.f32.mrb[0].mxu0
      %v1857 = vadd.f32 0.0, %v1856
      %v1858 = vpop.f32.mrb[0].mxu0
      %v1859 = vpop.f32.mrb[0].mxu0
      %v1860 = vadd.f32 0.0, %v1859
      %v1861 = vpop.f32.mrb[0].mxu0
      %1862 = vmatprep.mubr.bf16.mxu0 0
      %1863 = vmatmul.mubr.bf16.gmra.mrb[0].mxu0 %v1713
      %v1864 = vpop.f32.mrb[0].mxu0
      %v1865 = vadd.f32 0.0, %v1864
      %v1866 = vpop.f32.mrb[0].mxu0
      %v1867 = vpop.f32.mrb[0].mxu0
      %v1868 = vadd.f32 0.0, %v1867
      %v1869 = vpop.f32.mrb[0].mxu0
      %1870 = vmatprep.mubr.bf16.mxu0 0
      %1871 = vmatmul.mubr.bf16.gmra.mrb[0].mxu0 %v1716
      %v1872 = vpop.f32.mrb[0].mxu0
      %v1873 = vadd.f32 0.0, %v1872
      %v1874 = vpop.f32.mrb[0].mxu0
      %v1875 = vpop.f32.mrb[0].mxu0
      %v1876 = vadd.f32 0.0, %v1875
      %v1877 = vpop.f32.mrb[0].mxu0
      %1878 = vdwg.mxu0
      %v1879 = vadd.f32 %v1581, %v1753
      %v1880 = vadd.f32 %v1582, %v1756
      %v1881 = vadd.f32 %v1583, %v1761
      %v1882 = vadd.f32 %v1584, %v1764
      %v1883 = vadd.f32 %v1585, %v1769
      %v1884 = vadd.f32 %v1586, %v1772
      %v1885 = vadd.f32 %v1587, %v1777
      %v1886 = vadd.f32 %v1588, %v1780
      %v1887 = vadd.f32 %v1589, %v1785
      %v1888 = vadd.f32 %v1590, %v1788
      %v1889 = vadd.f32 %v1591, %v1793
      %v1890 = vadd.f32 %v1592, %v1796
      %v1891 = vadd.f32 %v1593, %v1801
      %v1892 = vadd.f32 %v1594, %v1804
      %v1893 = vadd.f32 %v1595, %v1809
      %v1894 = vadd.f32 %v1596, %v1812
      %v1895 = vadd.f32 %v1597, %v1817
      %v1896 = vadd.f32 %v1598, %v1820
      %v1897 = vadd.f32 %v1599, %v1825
      %v1898 = vadd.f32 %v1600, %v1828
      %v1899 = vadd.f32 %v1601, %v1833
      %v1900 = vadd.f32 %v1602, %v1836
      %v1901 = vadd.f32 %v1603, %v1841
      %v1902 = vadd.f32 %v1604, %v1844
      %v1903 = vadd.f32 %v1605, %v1849
      %v1904 = vadd.f32 %v1606, %v1852
      %v1905 = vadd.f32 %v1607, %v1857
      %v1906 = vadd.f32 %v1608, %v1860
      %v1907 = vadd.f32 %v1609, %v1865
      %v1908 = vadd.f32 %v1610, %v1868
      %v1909 = vadd.f32 %v1611, %v1873
      %v1910 = vadd.f32 %v1612, %v1876
      %v1911 = vld [vmem:[%s246 + $0x2] sm:$0xff]
      %v1912 = vld [vmem:[%s246 + $0xa] sm:$0xff]
      %v1913 = vld [vmem:[%s246 + $0x1a] sm:$0xff]
      %v1914 = vld [vmem:[%s246 + $0x22] sm:$0xff]
      %v1915 = vld [vmem:[%s246 + $0x32] sm:$0xff]
      %v1916 = vld [vmem:[%s246 + $0x3a] sm:$0xff]
      %v1917 = vld [vmem:[%s246 + $0x4a] sm:$0xff]
      %v1918 = vld [vmem:[%s246 + $0x52] sm:$0xff]
      %v1919 = vld [vmem:[%s246 + $0x62] sm:$0xff]
      %v1920 = vld [vmem:[%s246 + $0x6a] sm:$0xff]
      %v1921 = vld [vmem:[%s246 + $0x7a] sm:$0xff]
      %v1922 = vld [vmem:[%s246 + $0x82] sm:$0xff]
      %v1923 = vld [vmem:[%s246 + $0x92] sm:$0xff]
      %v1924 = vld [vmem:[%s246 + $0x9a] sm:$0xff]
      %v1925 = vld [vmem:[%s246 + $0xaa] sm:$0xff]
      %v1926 = vld [vmem:[%s246 + $0xb2] sm:$0xff]
      %v1927 = vld [vmem:[%s246 + $0xc2] sm:$0xff]
      %v1928 = vld [vmem:[%s246 + $0xca] sm:$0xff]
      %v1929 = vld [vmem:[%s246 + $0xda] sm:$0xff]
      %v1930 = vld [vmem:[%s246 + $0xe2] sm:$0xff]
      %v1931 = vld [vmem:[%s246 + $0xf2] sm:$0xff]
      %v1932 = vld [vmem:[%s246 + $0xfa] sm:$0xff]
      %v1933 = vld [vmem:[%s246 + $0x10a] sm:$0xff]
      %v1934 = vld [vmem:[%s246 + $0x112] sm:$0xff]
      %v1935 = vld [vmem:[%s246 + $0x122] sm:$0xff]
      %v1936 = vld [vmem:[%s246 + $0x12a] sm:$0xff]
      %v1937 = vld [vmem:[%s246 + $0x13a] sm:$0xff]
      %v1938 = vld [vmem:[%s246 + $0x142] sm:$0xff]
      %v1939 = vld [vmem:[%s246 + $0x152] sm:$0xff]
      %v1940 = vld [vmem:[%s246 + $0x15a] sm:$0xff]
      %v1941 = vld [vmem:[%s246 + $0x16a] sm:$0xff]
      %v1942 = vld [vmem:[%s246 + $0x172] sm:$0xff]
      %v1943 = vpack.c.bf16 %v1912, %v1911
      %v1944 = vpack.c.bf16 %v1914, %v1913
      %v1945 = vpack.c.bf16 %v1916, %v1915
      %v1946 = vpack.c.bf16 %v1918, %v1917
      %v1947 = vpack.c.bf16 %v1920, %v1919
      %v1948 = vpack.c.bf16 %v1922, %v1921
      %v1949 = vpack.c.bf16 %v1924, %v1923
      %v1950 = vpack.c.bf16 %v1926, %v1925
      %v1951 = vpack.c.bf16 %v1928, %v1927
      %v1952 = vpack.c.bf16 %v1930, %v1929
      %v1953 = vpack.c.bf16 %v1932, %v1931
      %v1954 = vpack.c.bf16 %v1934, %v1933
      %v1955 = vpack.c.bf16 %v1936, %v1935
      %v1956 = vpack.c.bf16 %v1938, %v1937
      %v1957 = vpack.c.bf16 %v1940, %v1939
      %v1958 = vpack.c.bf16 %v1942, %v1941
      %s1959 = scalar_lea.vmem %s3, 40
      %v1960 = vld [vmem:[%s1959] sm:$0xf]
      %v1961 = vld [vmem:[%s1959 + $0x4] sm:$0xf]
      %v1964 = vunpack.c.l.b16 %v1960
      %v1965 = vunpack.c.l.b16 %v1961
      %v1966 = vpack.c.b16 %v1965, %v1964
      %v1969 = vsel %vm237, %v1943, 0
      %v1972 = vsel %vm237, %v1944, 0
      %v1975 = vsel %vm237, %v1945, 0
      %v1978 = vsel %vm237, %v1946, 0
      %v1981 = vsel %vm237, %v1947, 0
      %v1984 = vsel %vm237, %v1948, 0
      %v1987 = vsel %vm237, %v1949, 0
      %v1990 = vsel %vm237, %v1950, 0
      %v1993 = vsel %vm237, %v1951, 0
      %v1996 = vsel %vm237, %v1952, 0
      %v1999 = vsel %vm237, %v1953, 0
      %v2002 = vsel %vm237, %v1954, 0
      %v2005 = vsel %vm237, %v1955, 0
      %v2008 = vsel %vm237, %v1956, 0
      %v2011 = vsel %vm237, %v1957, 0
      %v2014 = vsel %vm237, %v1958, 0
      %2016 = vmatprep.subr.bf16.mxu0 0
      %2017 = vmatpush1.bf16.msra.mxu0 %v1966
      %2018 = vmatprep.subr.bf16.mxu0 0
      %2019 = vmatpush1.bf16.msra.mxu0 0
      %2020 = vmatprep.subr.bf16.mxu0 0
      %2021 = vmatpush1.bf16.msra.mxu0 0
      %2022 = vmatprep.subr.bf16.mxu0 0
      %2023 = vmatpush1.bf16.msra.mxu0 0
      %2024 = vmatprep.subr.bf16.mxu0 0
      %2025 = vmatpush1.bf16.msra.mxu0 0
      %2026 = vmatprep.subr.bf16.mxu0 0
      %2027 = vmatpush1.bf16.msra.mxu0 0
      %2028 = vmatprep.subr.bf16.mxu0 0
      %2029 = vmatpush1.bf16.msra.mxu0 0
      %2030 = vmatprep.subr.bf16.mxu0 0
      %2031 = vmatpush1.bf16.msra.mxu0 0
      %2032 = vmatprep.subr.bf16.mxu0 0
      %2033 = vmatpush1.bf16.msra.mxu0 0
      %2034 = vmatprep.subr.bf16.mxu0 0
      %2035 = vmatpush1.bf16.msra.mxu0 0
      %2036 = vmatprep.subr.bf16.mxu0 0
      %2037 = vmatpush1.bf16.msra.mxu0 0
      %2038 = vmatprep.subr.bf16.mxu0 0
      %2039 = vmatpush1.bf16.msra.mxu0 0
      %2040 = vmatprep.subr.bf16.mxu0 0
      %2041 = vmatpush1.bf16.msra.mxu0 0
      %2042 = vmatprep.subr.bf16.mxu0 0
      %2043 = vmatpush1.bf16.msra.mxu0 0
      %2044 = vmatprep.subr.bf16.mxu0 0
      %2045 = vmatpush1.bf16.msra.mxu0 0
      %2046 = vmatprep.subr.bf16.mxu0 0
      %2047 = vmatpush1.bf16.msra.mxu0 0
      %2048 = vmatprep.mubr.bf16.mxu0 0
      %2049 = vmatmul.mubr.bf16.gmra.mrb[0].mxu0 %v1969
      %v2050 = vpop.f32.mrb[0].mxu0
      %v2051 = vadd.f32 0.0, %v2050
      %v2052 = vpop.f32.mrb[0].mxu0
      %v2053 = vpop.f32.mrb[0].mxu0
      %v2054 = vadd.f32 0.0, %v2053
      %v2055 = vpop.f32.mrb[0].mxu0
      %2056 = vmatprep.mubr.bf16.mxu0 0
      %2057 = vmatmul.mubr.bf16.gmra.mrb[0].mxu0 %v1972
      %v2058 = vpop.f32.mrb[0].mxu0
      %v2059 = vadd.f32 0.0, %v2058
      %v2060 = vpop.f32.mrb[0].mxu0
      %v2061 = vpop.f32.mrb[0].mxu0
      %v2062 = vadd.f32 0.0, %v2061
      %v2063 = vpop.f32.mrb[0].mxu0
      %2064 = vmatprep.mubr.bf16.mxu0 0
      %2065 = vmatmul.mubr.bf16.gmra.mrb[0].mxu0 %v1975
      %v2066 = vpop.f32.mrb[0].mxu0
      %v2067 = vadd.f32 0.0, %v2066
      %v2068 = vpop.f32.mrb[0].mxu0
      %v2069 = vpop.f32.mrb[0].mxu0
      %v2070 = vadd.f32 0.0, %v2069
      %v2071 = vpop.f32.mrb[0].mxu0
      %2072 = vmatprep.mubr.bf16.mxu0 0
      %2073 = vmatmul.mubr.bf16.gmra.mrb[0].mxu0 %v1978
      %v2074 = vpop.f32.mrb[0].mxu0
      %v2075 = vadd.f32 0.0, %v2074
      %v2076 = vpop.f32.mrb[0].mxu0
      %v2077 = vpop.f32.mrb[0].mxu0
      %v2078 = vadd.f32 0.0, %v2077
      %v2079 = vpop.f32.mrb[0].mxu0
      %2080 = vmatprep.mubr.bf16.mxu0 0
      %2081 = vmatmul.mubr.bf16.gmra.mrb[0].mxu0 %v1981
      %v2082 = vpop.f32.mrb[0].mxu0
      %v2083 = vadd.f32 0.0, %v2082
      %v2084 = vpop.f32.mrb[0].mxu0
      %v2085 = vpop.f32.mrb[0].mxu0
      %v2086 = vadd.f32 0.0, %v2085
      %v2087 = vpop.f32.mrb[0].mxu0
      %2088 = vmatprep.mubr.bf16.mxu0 0
      %2089 = vmatmul.mubr.bf16.gmra.mrb[0].mxu0 %v1984
      %v2090 = vpop.f32.mrb[0].mxu0
      %v2091 = vadd.f32 0.0, %v2090
      %v2092 = vpop.f32.mrb[0].mxu0
      %v2093 = vpop.f32.mrb[0].mxu0
      %v2094 = vadd.f32 0.0, %v2093
      %v2095 = vpop.f32.mrb[0].mxu0
      %2096 = vmatprep.mubr.bf16.mxu0 0
      %2097 = vmatmul.mubr.bf16.gmra.mrb[0].mxu0 %v1987
      %v2098 = vpop.f32.mrb[0].mxu0
      %v2099 = vadd.f32 0.0, %v2098
      %v2100 = vpop.f32.mrb[0].mxu0
      %v2101 = vpop.f32.mrb[0].mxu0
      %v2102 = vadd.f32 0.0, %v2101
      %v2103 = vpop.f32.mrb[0].mxu0
      %2104 = vmatprep.mubr.bf16.mxu0 0
      %2105 = vmatmul.mubr.bf16.gmra.mrb[0].mxu0 %v1990
      %v2106 = vpop.f32.mrb[0].mxu0
      %v2107 = vadd.f32 0.0, %v2106
      %v2108 = vpop.f32.mrb[0].mxu0
      %v2109 = vpop.f32.mrb[0].mxu0
      %v2110 = vadd.f32 0.0, %v2109
      %v2111 = vpop.f32.mrb[0].mxu0
      %2112 = vmatprep.mubr.bf16.mxu0 0
      %2113 = vmatmul.mubr.bf16.gmra.mrb[0].mxu0 %v1993
      %v2114 = vpop.f32.mrb[0].mxu0
      %v2115 = vadd.f32 0.0, %v2114
      %v2116 = vpop.f32.mrb[0].mxu0
      %v2117 = vpop.f32.mrb[0].mxu0
      %v2118 = vadd.f32 0.0, %v2117
      %v2119 = vpop.f32.mrb[0].mxu0
      %2120 = vmatprep.mubr.bf16.mxu0 0
      %2121 = vmatmul.mubr.bf16.gmra.mrb[0].mxu0 %v1996
      %v2122 = vpop.f32.mrb[0].mxu0
      %v2123 = vadd.f32 0.0, %v2122
      %v2124 = vpop.f32.mrb[0].mxu0
      %v2125 = vpop.f32.mrb[0].mxu0
      %v2126 = vadd.f32 0.0, %v2125
      %v2127 = vpop.f32.mrb[0].mxu0
      %2128 = vmatprep.mubr.bf16.mxu0 0
      %2129 = vmatmul.mubr.bf16.gmra.mrb[0].mxu0 %v1999
      %v2130 = vpop.f32.mrb[0].mxu0
      %v2131 = vadd.f32 0.0, %v2130
      %v2132 = vpop.f32.mrb[0].mxu0
      %v2133 = vpop.f32.mrb[0].mxu0
      %v2134 = vadd.f32 0.0, %v2133
      %v2135 = vpop.f32.mrb[0].mxu0
      %2136 = vmatprep.mubr.bf16.mxu0 0
      %2137 = vmatmul.mubr.bf16.gmra.mrb[0].mxu0 %v2002
      %v2138 = vpop.f32.mrb[0].mxu0
      %v2139 = vadd.f32 0.0, %v2138
      %v2140 = vpop.f32.mrb[0].mxu0
      %v2141 = vpop.f32.mrb[0].mxu0
      %v2142 = vadd.f32 0.0, %v2141
      %v2143 = vpop.f32.mrb[0].mxu0
      %2144 = vmatprep.mubr.bf16.mxu0 0
      %2145 = vmatmul.mubr.bf16.gmra.mrb[0].mxu0 %v2005
      %v2146 = vpop.f32.mrb[0].mxu0
      %v2147 = vadd.f32 0.0, %v2146
      %v2148 = vpop.f32.mrb[0].mxu0
      %v2149 = vpop.f32.mrb[0].mxu0
      %v2150 = vadd.f32 0.0, %v2149
      %v2151 = vpop.f32.mrb[0].mxu0
      %2152 = vmatprep.mubr.bf16.mxu0 0
      %2153 = vmatmul.mubr.bf16.gmra.mrb[0].mxu0 %v2008
      %v2154 = vpop.f32.mrb[0].mxu0
      %v2155 = vadd.f32 0.0, %v2154
      %v2156 = vpop.f32.mrb[0].mxu0
      %v2157 = vpop.f32.mrb[0].mxu0
      %v2158 = vadd.f32 0.0, %v2157
      %v2159 = vpop.f32.mrb[0].mxu0
      %2160 = vmatprep.mubr.bf16.mxu0 0
      %2161 = vmatmul.mubr.bf16.gmra.mrb[0].mxu0 %v2011
      %v2162 = vpop.f32.mrb[0].mxu0
      %v2163 = vadd.f32 0.0, %v2162
      %v2164 = vpop.f32.mrb[0].mxu0
      %v2165 = vpop.f32.mrb[0].mxu0
      %v2166 = vadd.f32 0.0, %v2165
      %v2167 = vpop.f32.mrb[0].mxu0
      %2168 = vmatprep.mubr.bf16.mxu0 0
      %2169 = vmatmul.mubr.bf16.gmra.mrb[0].mxu0 %v2014
      %v2170 = vpop.f32.mrb[0].mxu0
      %v2171 = vadd.f32 0.0, %v2170
      %v2172 = vpop.f32.mrb[0].mxu0
      %v2173 = vpop.f32.mrb[0].mxu0
      %v2174 = vadd.f32 0.0, %v2173
      %v2175 = vpop.f32.mrb[0].mxu0
      %2176 = vdwg.mxu0
      %v2177 = vadd.f32 %v1879, %v2051
      %v2178 = vadd.f32 %v1880, %v2054
      %v2179 = vadd.f32 %v1881, %v2059
      %v2180 = vadd.f32 %v1882, %v2062
      %v2181 = vadd.f32 %v1883, %v2067
      %v2182 = vadd.f32 %v1884, %v2070
      %v2183 = vadd.f32 %v1885, %v2075
      %v2184 = vadd.f32 %v1886, %v2078
      %v2185 = vadd.f32 %v1887, %v2083
      %v2186 = vadd.f32 %v1888, %v2086
      %v2187 = vadd.f32 %v1889, %v2091
      %v2188 = vadd.f32 %v1890, %v2094
      %v2189 = vadd.f32 %v1891, %v2099
      %v2190 = vadd.f32 %v1892, %v2102
      %v2191 = vadd.f32 %v1893, %v2107
      %v2192 = vadd.f32 %v1894, %v2110
      %v2193 = vadd.f32 %v1895, %v2115
      %v2194 = vadd.f32 %v1896, %v2118
      %v2195 = vadd.f32 %v1897, %v2123
      %v2196 = vadd.f32 %v1898, %v2126
      %v2197 = vadd.f32 %v1899, %v2131
      %v2198 = vadd.f32 %v1900, %v2134
      %v2199 = vadd.f32 %v1901, %v2139
      %v2200 = vadd.f32 %v1902, %v2142
      %v2201 = vadd.f32 %v1903, %v2147
      %v2202 = vadd.f32 %v1904, %v2150
      %v2203 = vadd.f32 %v1905, %v2155
      %v2204 = vadd.f32 %v1906, %v2158
      %v2205 = vadd.f32 %v1907, %v2163
      %v2206 = vadd.f32 %v1908, %v2166
      %v2207 = vadd.f32 %v1909, %v2171
      %v2208 = vadd.f32 %v1910, %v2174
      %s2209 = scalar_lea.vmem [#allocation2], 48
      %v2210 = vld [vmem:[%s2209] sm:$0xff]
      %v2211 = vld [vmem:[%s2209 + $0x8] sm:$0xff]
      %v2212 = vld [vmem:[%s2209 + $0x18] sm:$0xff]
      %v2213 = vld [vmem:[%s2209 + $0x20] sm:$0xff]
      %v2214 = vld [vmem:[%s2209 + $0x30] sm:$0xff]
      %v2215 = vld [vmem:[%s2209 + $0x38] sm:$0xff]
      %v2216 = vld [vmem:[%s2209 + $0x48] sm:$0xff]
      %v2217 = vld [vmem:[%s2209 + $0x50] sm:$0xff]
      %v2218 = vld [vmem:[%s2209 + $0x60] sm:$0xff]
      %v2219 = vld [vmem:[%s2209 + $0x68] sm:$0xff]
      %v2220 = vld [vmem:[%s2209 + $0x78] sm:$0xff]
      %v2221 = vld [vmem:[%s2209 + $0x80] sm:$0xff]
      %v2222 = vld [vmem:[%s2209 + $0x90] sm:$0xff]
      %v2223 = vld [vmem:[%s2209 + $0x98] sm:$0xff]
      %v2224 = vld [vmem:[%s2209 + $0xa8] sm:$0xff]
      %v2225 = vld [vmem:[%s2209 + $0xb0] sm:$0xff]
      %v2226 = vld [vmem:[%s2209 + $0xc0] sm:$0xff]
      %v2227 = vld [vmem:[%s2209 + $0xc8] sm:$0xff]
      %v2228 = vld [vmem:[%s2209 + $0xd8] sm:$0xff]
      %v2229 = vld [vmem:[%s2209 + $0xe0] sm:$0xff]
      %v2230 = vld [vmem:[%s2209 + $0xf0] sm:$0xff]
      %v2231 = vld [vmem:[%s2209 + $0xf8] sm:$0xff]
      %v2232 = vld [vmem:[%s2209 + $0x108] sm:$0xff]
      %v2233 = vld [vmem:[%s2209 + $0x110] sm:$0xff]
      %v2234 = vld [vmem:[%s2209 + $0x120] sm:$0xff]
      %v2235 = vld [vmem:[%s2209 + $0x128] sm:$0xff]
      %v2236 = vld [vmem:[%s2209 + $0x138] sm:$0xff]
      %v2237 = vld [vmem:[%s2209 + $0x140] sm:$0xff]
      %v2238 = vld [vmem:[%s2209 + $0x150] sm:$0xff]
      %v2239 = vld [vmem:[%s2209 + $0x158] sm:$0xff]
      %v2240 = vld [vmem:[%s2209 + $0x168] sm:$0xff]
      %v2241 = vld [vmem:[%s2209 + $0x170] sm:$0xff]
      %v2242 = vpack.c.bf16 %v2211, %v2210
      %v2243 = vpack.c.bf16 %v2213, %v2212
      %v2244 = vpack.c.bf16 %v2215, %v2214
      %v2245 = vpack.c.bf16 %v2217, %v2216
      %v2246 = vpack.c.bf16 %v2219, %v2218
      %v2247 = vpack.c.bf16 %v2221, %v2220
      %v2248 = vpack.c.bf16 %v2223, %v2222
      %v2249 = vpack.c.bf16 %v2225, %v2224
      %v2250 = vpack.c.bf16 %v2227, %v2226
      %v2251 = vpack.c.bf16 %v2229, %v2228
      %v2252 = vpack.c.bf16 %v2231, %v2230
      %v2253 = vpack.c.bf16 %v2233, %v2232
      %v2254 = vpack.c.bf16 %v2235, %v2234
      %v2255 = vpack.c.bf16 %v2237, %v2236
      %v2256 = vpack.c.bf16 %v2239, %v2238
      %v2257 = vpack.c.bf16 %v2241, %v2240
      %s2258 = scalar_lea.vmem %s3, 48
      %v2259 = vld [vmem:[%s2258] sm:$0xf]
      %v2260 = vld [vmem:[%s2258 + $0x4] sm:$0xf]
      %v2263 = vunpack.c.l.b16 %v2259
      %v2264 = vunpack.c.l.b16 %v2260
      %v2265 = vpack.c.b16 %v2264, %v2263
      %v2268 = vsel %vm237, %v2242, 0
      %v2271 = vsel %vm237, %v2243, 0
      %v2274 = vsel %vm237, %v2244, 0
      %v2277 = vsel %vm237, %v2245, 0
      %v2280 = vsel %vm237, %v2246, 0
      %v2283 = vsel %vm237, %v2247, 0
      %v2286 = vsel %vm237, %v2248, 0
      %v2289 = vsel %vm237, %v2249, 0
      %v2292 = vsel %vm237, %v2250, 0
      %v2295 = vsel %vm237, %v2251, 0
      %v2298 = vsel %vm237, %v2252, 0
      %v2301 = vsel %vm237, %v2253, 0
      %v2304 = vsel %vm237, %v2254, 0
      %v2307 = vsel %vm237, %v2255, 0
      %v2310 = vsel %vm237, %v2256, 0
      %v2313 = vsel %vm237, %v2257, 0
      %2315 = vmatprep.subr.bf16.mxu0 0
      %2316 = vmatpush1.bf16.msra.mxu0 %v2265
      %2317 = vmatprep.subr.bf16.mxu0 0
      %2318 = vmatpush1.bf16.msra.mxu0 0
      %2319 = vmatprep.subr.bf16.mxu0 0
      %2320 = vmatpush1.bf16.msra.mxu0 0
      %2321 = vmatprep.subr.bf16.mxu0 0
      %2322 = vmatpush1.bf16.msra.mxu0 0
      %2323 = vmatprep.subr.bf16.mxu0 0
      %2324 = vmatpush1.bf16.msra.mxu0 0
      %2325 = vmatprep.subr.bf16.mxu0 0
      %2326 = vmatpush1.bf16.msra.mxu0 0
      %2327 = vmatprep.subr.bf16.mxu0 0
      %2328 = vmatpush1.bf16.msra.mxu0 0
      %2329 = vmatprep.subr.bf16.mxu0 0
      %2330 = vmatpush1.bf16.msra.mxu0 0
      %2331 = vmatprep.subr.bf16.mxu0 0
      %2332 = vmatpush1.bf16.msra.mxu0 0
      %2333 = vmatprep.subr.bf16.mxu0 0
      %2334 = vmatpush1.bf16.msra.mxu0 0
      %2335 = vmatprep.subr.bf16.mxu0 0
      %2336 = vmatpush1.bf16.msra.mxu0 0
      %2337 = vmatprep.subr.bf16.mxu0 0
      %2338 = vmatpush1.bf16.msra.mxu0 0
      %2339 = vmatprep.subr.bf16.mxu0 0
      %2340 = vmatpush1.bf16.msra.mxu0 0
      %2341 = vmatprep.subr.bf16.mxu0 0
      %2342 = vmatpush1.bf16.msra.mxu0 0
      %2343 = vmatprep.subr.bf16.mxu0 0
      %2344 = vmatpush1.bf16.msra.mxu0 0
      %2345 = vmatprep.subr.bf16.mxu0 0
      %2346 = vmatpush1.bf16.msra.mxu0 0
      %2347 = vmatprep.mubr.bf16.mxu0 0
      %2348 = vmatmul.mubr.bf16.gmra.mrb[0].mxu0 %v2268
      %v2349 = vpop.f32.mrb[0].mxu0
      %v2350 = vadd.f32 0.0, %v2349
      %v2351 = vpop.f32.mrb[0].mxu0
      %v2352 = vpop.f32.mrb[0].mxu0
      %v2353 = vadd.f32 0.0, %v2352
      %v2354 = vpop.f32.mrb[0].mxu0
      %2355 = vmatprep.mubr.bf16.mxu0 0
      %2356 = vmatmul.mubr.bf16.gmra.mrb[0].mxu0 %v2271
      %v2357 = vpop.f32.mrb[0].mxu0
      %v2358 = vadd.f32 0.0, %v2357
      %v2359 = vpop.f32.mrb[0].mxu0
      %v2360 = vpop.f32.mrb[0].mxu0
      %v2361 = vadd.f32 0.0, %v2360
      %v2362 = vpop.f32.mrb[0].mxu0
      %2363 = vmatprep.mubr.bf16.mxu0 0
      %2364 = vmatmul.mubr.bf16.gmra.mrb[0].mxu0 %v2274
      %v2365 = vpop.f32.mrb[0].mxu0
      %v2366 = vadd.f32 0.0, %v2365
      %v2367 = vpop.f32.mrb[0].mxu0
      %v2368 = vpop.f32.mrb[0].mxu0
      %v2369 = vadd.f32 0.0, %v2368
      %v2370 = vpop.f32.mrb[0].mxu0
      %2371 = vmatprep.mubr.bf16.mxu0 0
      %2372 = vmatmul.mubr.bf16.gmra.mrb[0].mxu0 %v2277
      %v2373 = vpop.f32.mrb[0].mxu0
      %v2374 = vadd.f32 0.0, %v2373
      %v2375 = vpop.f32.mrb[0].mxu0
      %v2376 = vpop.f32.mrb[0].mxu0
      %v2377 = vadd.f32 0.0, %v2376
      %v2378 = vpop.f32.mrb[0].mxu0
      %2379 = vmatprep.mubr.bf16.mxu0 0
      %2380 = vmatmul.mubr.bf16.gmra.mrb[0].mxu0 %v2280
      %v2381 = vpop.f32.mrb[0].mxu0
      %v2382 = vadd.f32 0.0, %v2381
      %v2383 = vpop.f32.mrb[0].mxu0
      %v2384 = vpop.f32.mrb[0].mxu0
      %v2385 = vadd.f32 0.0, %v2384
      %v2386 = vpop.f32.mrb[0].mxu0
      %2387 = vmatprep.mubr.bf16.mxu0 0
      %2388 = vmatmul.mubr.bf16.gmra.mrb[0].mxu0 %v2283
      %v2389 = vpop.f32.mrb[0].mxu0
      %v2390 = vadd.f32 0.0, %v2389
      %v2391 = vpop.f32.mrb[0].mxu0
      %v2392 = vpop.f32.mrb[0].mxu0
      %v2393 = vadd.f32 0.0, %v2392
      %v2394 = vpop.f32.mrb[0].mxu0
      %2395 = vmatprep.mubr.bf16.mxu0 0
      %2396 = vmatmul.mubr.bf16.gmra.mrb[0].mxu0 %v2286
      %v2397 = vpop.f32.mrb[0].mxu0
      %v2398 = vadd.f32 0.0, %v2397
      %v2399 = vpop.f32.mrb[0].mxu0
      %v2400 = vpop.f32.mrb[0].mxu0
      %v2401 = vadd.f32 0.0, %v2400
      %v2402 = vpop.f32.mrb[0].mxu0
      %2403 = vmatprep.mubr.bf16.mxu0 0
      %2404 = vmatmul.mubr.bf16.gmra.mrb[0].mxu0 %v2289
      %v2405 = vpop.f32.mrb[0].mxu0
      %v2406 = vadd.f32 0.0, %v2405
      %v2407 = vpop.f32.mrb[0].mxu0
      %v2408 = vpop.f32.mrb[0].mxu0
      %v2409 = vadd.f32 0.0, %v2408
      %v2410 = vpop.f32.mrb[0].mxu0
      %2411 = vmatprep.mubr.bf16.mxu0 0
      %2412 = vmatmul.mubr.bf16.gmra.mrb[0].mxu0 %v2292
      %v2413 = vpop.f32.mrb[0].mxu0
      %v2414 = vadd.f32 0.0, %v2413
      %v2415 = vpop.f32.mrb[0].mxu0
      %v2416 = vpop.f32.mrb[0].mxu0
      %v2417 = vadd.f32 0.0, %v2416
      %v2418 = vpop.f32.mrb[0].mxu0
      %2419 = vmatprep.mubr.bf16.mxu0 0
      %2420 = vmatmul.mubr.bf16.gmra.mrb[0].mxu0 %v2295
      %v2421 = vpop.f32.mrb[0].mxu0
      %v2422 = vadd.f32 0.0, %v2421
      %v2423 = vpop.f32.mrb[0].mxu0
      %v2424 = vpop.f32.mrb[0].mxu0
      %v2425 = vadd.f32 0.0, %v2424
      %v2426 = vpop.f32.mrb[0].mxu0
      %2427 = vmatprep.mubr.bf16.mxu0 0
      %2428 = vmatmul.mubr.bf16.gmra.mrb[0].mxu0 %v2298
      %v2429 = vpop.f32.mrb[0].mxu0
      %v2430 = vadd.f32 0.0, %v2429
      %v2431 = vpop.f32.mrb[0].mxu0
      %v2432 = vpop.f32.mrb[0].mxu0
      %v2433 = vadd.f32 0.0, %v2432
      %v2434 = vpop.f32.mrb[0].mxu0
      %2435 = vmatprep.mubr.bf16.mxu0 0
      %2436 = vmatmul.mubr.bf16.gmra.mrb[0].mxu0 %v2301
      %v2437 = vpop.f32.mrb[0].mxu0
      %v2438 = vadd.f32 0.0, %v2437
      %v2439 = vpop.f32.mrb[0].mxu0
      %v2440 = vpop.f32.mrb[0].mxu0
      %v2441 = vadd.f32 0.0, %v2440
      %v2442 = vpop.f32.mrb[0].mxu0
      %2443 = vmatprep.mubr.bf16.mxu0 0
      %2444 = vmatmul.mubr.bf16.gmra.mrb[0].mxu0 %v2304
      %v2445 = vpop.f32.mrb[0].mxu0
      %v2446 = vadd.f32 0.0, %v2445
      %v2447 = vpop.f32.mrb[0].mxu0
      %v2448 = vpop.f32.mrb[0].mxu0
      %v2449 = vadd.f32 0.0, %v2448
      %v2450 = vpop.f32.mrb[0].mxu0
      %2451 = vmatprep.mubr.bf16.mxu0 0
      %2452 = vmatmul.mubr.bf16.gmra.mrb[0].mxu0 %v2307
      %v2453 = vpop.f32.mrb[0].mxu0
      %v2454 = vadd.f32 0.0, %v2453
      %v2455 = vpop.f32.mrb[0].mxu0
      %v2456 = vpop.f32.mrb[0].mxu0
      %v2457 = vadd.f32 0.0, %v2456
      %v2458 = vpop.f32.mrb[0].mxu0
      %2459 = vmatprep.mubr.bf16.mxu0 0
      %2460 = vmatmul.mubr.bf16.gmra.mrb[0].mxu0 %v2310
      %v2461 = vpop.f32.mrb[0].mxu0
      %v2462 = vadd.f32 0.0, %v2461
      %v2463 = vpop.f32.mrb[0].mxu0
      %v2464 = vpop.f32.mrb[0].mxu0
      %v2465 = vadd.f32 0.0, %v2464
      %v2466 = vpop.f32.mrb[0].mxu0
      %2467 = vmatprep.mubr.bf16.mxu0 0
      %2468 = vmatmul.mubr.bf16.gmra.mrb[0].mxu0 %v2313
      %v2469 = vpop.f32.mrb[0].mxu0
      %v2470 = vadd.f32 0.0, %v2469
      %v2471 = vpop.f32.mrb[0].mxu0
      %v2472 = vpop.f32.mrb[0].mxu0
      %v2473 = vadd.f32 0.0, %v2472
      %v2474 = vpop.f32.mrb[0].mxu0
      %2475 = vdwg.mxu0
      %v2476 = vadd.f32 %v2177, %v2350
      %v2477 = vadd.f32 %v2178, %v2353
      %v2478 = vadd.f32 %v2179, %v2358
      %v2479 = vadd.f32 %v2180, %v2361
      %v2480 = vadd.f32 %v2181, %v2366
      %v2481 = vadd.f32 %v2182, %v2369
      %v2482 = vadd.f32 %v2183, %v2374
      %v2483 = vadd.f32 %v2184, %v2377
      %v2484 = vadd.f32 %v2185, %v2382
      %v2485 = vadd.f32 %v2186, %v2385
      %v2486 = vadd.f32 %v2187, %v2390
      %v2487 = vadd.f32 %v2188, %v2393
      %v2488 = vadd.f32 %v2189, %v2398
      %v2489 = vadd.f32 %v2190, %v2401
      %v2490 = vadd.f32 %v2191, %v2406
      %v2491 = vadd.f32 %v2192, %v2409
      %v2492 = vadd.f32 %v2193, %v2414
      %v2493 = vadd.f32 %v2194, %v2417
      %v2494 = vadd.f32 %v2195, %v2422
      %v2495 = vadd.f32 %v2196, %v2425
      %v2496 = vadd.f32 %v2197, %v2430
      %v2497 = vadd.f32 %v2198, %v2433
      %v2498 = vadd.f32 %v2199, %v2438
      %v2499 = vadd.f32 %v2200, %v2441
      %v2500 = vadd.f32 %v2201, %v2446
      %v2501 = vadd.f32 %v2202, %v2449
      %v2502 = vadd.f32 %v2203, %v2454
      %v2503 = vadd.f32 %v2204, %v2457
      %v2504 = vadd.f32 %v2205, %v2462
      %v2505 = vadd.f32 %v2206, %v2465
      %v2506 = vadd.f32 %v2207, %v2470
      %v2507 = vadd.f32 %v2208, %v2473
      %v2508 = vld [vmem:[%s2209 + $0x1] sm:$0xff]
      %v2509 = vld [vmem:[%s2209 + $0x9] sm:$0xff]
      %v2510 = vld [vmem:[%s2209 + $0x19] sm:$0xff]
      %v2511 = vld [vmem:[%s2209 + $0x21] sm:$0xff]
      %v2512 = vld [vmem:[%s2209 + $0x31] sm:$0xff]
      %v2513 = vld [vmem:[%s2209 + $0x39] sm:$0xff]
      %v2514 = vld [vmem:[%s2209 + $0x49] sm:$0xff]
      %v2515 = vld [vmem:[%s2209 + $0x51] sm:$0xff]
      %v2516 = vld [vmem:[%s2209 + $0x61] sm:$0xff]
      %v2517 = vld [vmem:[%s2209 + $0x69] sm:$0xff]
      %v2518 = vld [vmem:[%s2209 + $0x79] sm:$0xff]
      %v2519 = vld [vmem:[%s2209 + $0x81] sm:$0xff]
      %v2520 = vld [vmem:[%s2209 + $0x91] sm:$0xff]
      %v2521 = vld [vmem:[%s2209 + $0x99] sm:$0xff]
      %v2522 = vld [vmem:[%s2209 + $0xa9] sm:$0xff]
      %v2523 = vld [vmem:[%s2209 + $0xb1] sm:$0xff]
      %v2524 = vld [vmem:[%s2209 + $0xc1] sm:$0xff]
      %v2525 = vld [vmem:[%s2209 + $0xc9] sm:$0xff]
      %v2526 = vld [vmem:[%s2209 + $0xd9] sm:$0xff]
      %v2527 = vld [vmem:[%s2209 + $0xe1] sm:$0xff]
      %v2528 = vld [vmem:[%s2209 + $0xf1] sm:$0xff]
      %v2529 = vld [vmem:[%s2209 + $0xf9] sm:$0xff]
      %v2530 = vld [vmem:[%s2209 + $0x109] sm:$0xff]
      %v2531 = vld [vmem:[%s2209 + $0x111] sm:$0xff]
      %v2532 = vld [vmem:[%s2209 + $0x121] sm:$0xff]
      %v2533 = vld [vmem:[%s2209 + $0x129] sm:$0xff]
      %v2534 = vld [vmem:[%s2209 + $0x139] sm:$0xff]
      %v2535 = vld [vmem:[%s2209 + $0x141] sm:$0xff]
      %v2536 = vld [vmem:[%s2209 + $0x151] sm:$0xff]
      %v2537 = vld [vmem:[%s2209 + $0x159] sm:$0xff]
      %v2538 = vld [vmem:[%s2209 + $0x169] sm:$0xff]
      %v2539 = vld [vmem:[%s2209 + $0x171] sm:$0xff]
      %v2540 = vpack.c.bf16 %v2509, %v2508
      %v2541 = vpack.c.bf16 %v2511, %v2510
      %v2542 = vpack.c.bf16 %v2513, %v2512
      %v2543 = vpack.c.bf16 %v2515, %v2514
      %v2544 = vpack.c.bf16 %v2517, %v2516
      %v2545 = vpack.c.bf16 %v2519, %v2518
      %v2546 = vpack.c.bf16 %v2521, %v2520
      %v2547 = vpack.c.bf16 %v2523, %v2522
      %v2548 = vpack.c.bf16 %v2525, %v2524
      %v2549 = vpack.c.bf16 %v2527, %v2526
      %v2550 = vpack.c.bf16 %v2529, %v2528
      %v2551 = vpack.c.bf16 %v2531, %v2530
      %v2552 = vpack.c.bf16 %v2533, %v2532
      %v2553 = vpack.c.bf16 %v2535, %v2534
      %v2554 = vpack.c.bf16 %v2537, %v2536
      %v2555 = vpack.c.bf16 %v2539, %v2538
      %s2556 = scalar_lea.vmem %s3, 56
      %v2557 = vld [vmem:[%s2556] sm:$0xf]
      %v2558 = vld [vmem:[%s2556 + $0x4] sm:$0xf]
      %v2561 = vunpack.c.l.b16 %v2557
      %v2562 = vunpack.c.l.b16 %v2558
      %v2563 = vpack.c.b16 %v2562, %v2561
      %v2566 = vsel %vm237, %v2540, 0
      %v2569 = vsel %vm237, %v2541, 0
      %v2572 = vsel %vm237, %v2542, 0
      %v2575 = vsel %vm237, %v2543, 0
      %v2578 = vsel %vm237, %v2544, 0
      %v2581 = vsel %vm237, %v2545, 0
      %v2584 = vsel %vm237, %v2546, 0
      %v2587 = vsel %vm237, %v2547, 0
      %v2590 = vsel %vm237, %v2548, 0
      %v2593 = vsel %vm237, %v2549, 0
      %v2596 = vsel %vm237, %v2550, 0
      %v2599 = vsel %vm237, %v2551, 0
      %v2602 = vsel %vm237, %v2552, 0
      %v2605 = vsel %vm237, %v2553, 0
      %v2608 = vsel %vm237, %v2554, 0
      %v2611 = vsel %vm237, %v2555, 0
      %2613 = vmatprep.subr.bf16.mxu0 0
      %2614 = vmatpush1.bf16.msra.mxu0 %v2563
      %2615 = vmatprep.subr.bf16.mxu0 0
      %2616 = vmatpush1.bf16.msra.mxu0 0
      %2617 = vmatprep.subr.bf16.mxu0 0
      %2618 = vmatpush1.bf16.msra.mxu0 0
      %2619 = vmatprep.subr.bf16.mxu0 0
      %2620 = vmatpush1.bf16.msra.mxu0 0
      %2621 = vmatprep.subr.bf16.mxu0 0
      %2622 = vmatpush1.bf16.msra.mxu0 0
      %2623 = vmatprep.subr.bf16.mxu0 0
      %2624 = vmatpush1.bf16.msra.mxu0 0
      %2625 = vmatprep.subr.bf16.mxu0 0
      %2626 = vmatpush1.bf16.msra.mxu0 0
      %2627 = vmatprep.subr.bf16.mxu0 0
      %2628 = vmatpush1.bf16.msra.mxu0 0
      %2629 = vmatprep.subr.bf16.mxu0 0
      %2630 = vmatpush1.bf16.msra.mxu0 0
      %2631 = vmatprep.subr.bf16.mxu0 0
      %2632 = vmatpush1.bf16.msra.mxu0 0
      %2633 = vmatprep.subr.bf16.mxu0 0
      %2634 = vmatpush1.bf16.msra.mxu0 0
      %2635 = vmatprep.subr.bf16.mxu0 0
      %2636 = vmatpush1.bf16.msra.mxu0 0
      %2637 = vmatprep.subr.bf16.mxu0 0
      %2638 = vmatpush1.bf16.msra.mxu0 0
      %2639 = vmatprep.subr.bf16.mxu0 0
      %2640 = vmatpush1.bf16.msra.mxu0 0
      %2641 = vmatprep.subr.bf16.mxu0 0
      %2642 = vmatpush1.bf16.msra.mxu0 0
      %2643 = vmatprep.subr.bf16.mxu0 0
      %2644 = vmatpush1.bf16.msra.mxu0 0
      %2645 = vmatprep.mubr.bf16.mxu0 0
      %2646 = vmatmul.mubr.bf16.gmra.mrb[0].mxu0 %v2566
      %v2647 = vpop.f32.mrb[0].mxu0
      %v2648 = vadd.f32 0.0, %v2647
      %v2649 = vpop.f32.mrb[0].mxu0
      %v2650 = vpop.f32.mrb[0].mxu0
      %v2651 = vadd.f32 0.0, %v2650
      %v2652 = vpop.f32.mrb[0].mxu0
      %2653 = vmatprep.mubr.bf16.mxu0 0
      %2654 = vmatmul.mubr.bf16.gmra.mrb[0].mxu0 %v2569
      %v2655 = vpop.f32.mrb[0].mxu0
      %v2656 = vadd.f32 0.0, %v2655
      %v2657 = vpop.f32.mrb[0].mxu0
      %v2658 = vpop.f32.mrb[0].mxu0
      %v2659 = vadd.f32 0.0, %v2658
      %v2660 = vpop.f32.mrb[0].mxu0
      %2661 = vmatprep.mubr.bf16.mxu0 0
      %2662 = vmatmul.mubr.bf16.gmra.mrb[0].mxu0 %v2572
      %v2663 = vpop.f32.mrb[0].mxu0
      %v2664 = vadd.f32 0.0, %v2663
      %v2665 = vpop.f32.mrb[0].mxu0
      %v2666 = vpop.f32.mrb[0].mxu0
      %v2667 = vadd.f32 0.0, %v2666
      %v2668 = vpop.f32.mrb[0].mxu0
      %2669 = vmatprep.mubr.bf16.mxu0 0
      %2670 = vmatmul.mubr.bf16.gmra.mrb[0].mxu0 %v2575
      %v2671 = vpop.f32.mrb[0].mxu0
      %v2672 = vadd.f32 0.0, %v2671
      %v2673 = vpop.f32.mrb[0].mxu0
      %v2674 = vpop.f32.mrb[0].mxu0
      %v2675 = vadd.f32 0.0, %v2674
      %v2676 = vpop.f32.mrb[0].mxu0
      %2677 = vmatprep.mubr.bf16.mxu0 0
      %2678 = vmatmul.mubr.bf16.gmra.mrb[0].mxu0 %v2578
      %v2679 = vpop.f32.mrb[0].mxu0
      %v2680 = vadd.f32 0.0, %v2679
      %v2681 = vpop.f32.mrb[0].mxu0
      %v2682 = vpop.f32.mrb[0].mxu0
      %v2683 = vadd.f32 0.0, %v2682
      %v2684 = vpop.f32.mrb[0].mxu0
      %2685 = vmatprep.mubr.bf16.mxu0 0
      %2686 = vmatmul.mubr.bf16.gmra.mrb[0].mxu0 %v2581
      %v2687 = vpop.f32.mrb[0].mxu0
      %v2688 = vadd.f32 0.0, %v2687
      %v2689 = vpop.f32.mrb[0].mxu0
      %v2690 = vpop.f32.mrb[0].mxu0
      %v2691 = vadd.f32 0.0, %v2690
      %v2692 = vpop.f32.mrb[0].mxu0
      %2693 = vmatprep.mubr.bf16.mxu0 0
      %2694 = vmatmul.mubr.bf16.gmra.mrb[0].mxu0 %v2584
      %v2695 = vpop.f32.mrb[0].mxu0
      %v2696 = vadd.f32 0.0, %v2695
      %v2697 = vpop.f32.mrb[0].mxu0
      %v2698 = vpop.f32.mrb[0].mxu0
      %v2699 = vadd.f32 0.0, %v2698
      %v2700 = vpop.f32.mrb[0].mxu0
      %2701 = vmatprep.mubr.bf16.mxu0 0
      %2702 = vmatmul.mubr.bf16.gmra.mrb[0].mxu0 %v2587
      %v2703 = vpop.f32.mrb[0].mxu0
      %v2704 = vadd.f32 0.0, %v2703
      %v2705 = vpop.f32.mrb[0].mxu0
      %v2706 = vpop.f32.mrb[0].mxu0
      %v2707 = vadd.f32 0.0, %v2706
      %v2708 = vpop.f32.mrb[0].mxu0
      %2709 = vmatprep.mubr.bf16.mxu0 0
      %2710 = vmatmul.mubr.bf16.gmra.mrb[0].mxu0 %v2590
      %v2711 = vpop.f32.mrb[0].mxu0
      %v2712 = vadd.f32 0.0, %v2711
      %v2713 = vpop.f32.mrb[0].mxu0
      %v2714 = vpop.f32.mrb[0].mxu0
      %v2715 = vadd.f32 0.0, %v2714
      %v2716 = vpop.f32.mrb[0].mxu0
      %2717 = vmatprep.mubr.bf16.mxu0 0
      %2718 = vmatmul.mubr.bf16.gmra.mrb[0].mxu0 %v2593
      %v2719 = vpop.f32.mrb[0].mxu0
      %v2720 = vadd.f32 0.0, %v2719
      %v2721 = vpop.f32.mrb[0].mxu0
      %v2722 = vpop.f32.mrb[0].mxu0
      %v2723 = vadd.f32 0.0, %v2722
      %v2724 = vpop.f32.mrb[0].mxu0
      %2725 = vmatprep.mubr.bf16.mxu0 0
      %2726 = vmatmul.mubr.bf16.gmra.mrb[0].mxu0 %v2596
      %v2727 = vpop.f32.mrb[0].mxu0
      %v2728 = vadd.f32 0.0, %v2727
      %v2729 = vpop.f32.mrb[0].mxu0
      %v2730 = vpop.f32.mrb[0].mxu0
      %v2731 = vadd.f32 0.0, %v2730
      %v2732 = vpop.f32.mrb[0].mxu0
      %2733 = vmatprep.mubr.bf16.mxu0 0
      %2734 = vmatmul.mubr.bf16.gmra.mrb[0].mxu0 %v2599
      %v2735 = vpop.f32.mrb[0].mxu0
      %v2736 = vadd.f32 0.0, %v2735
      %v2737 = vpop.f32.mrb[0].mxu0
      %v2738 = vpop.f32.mrb[0].mxu0
      %v2739 = vadd.f32 0.0, %v2738
      %v2740 = vpop.f32.mrb[0].mxu0
      %2741 = vmatprep.mubr.bf16.mxu0 0
      %2742 = vmatmul.mubr.bf16.gmra.mrb[0].mxu0 %v2602
      %v2743 = vpop.f32.mrb[0].mxu0
      %v2744 = vadd.f32 0.0, %v2743
      %v2745 = vpop.f32.mrb[0].mxu0
      %v2746 = vpop.f32.mrb[0].mxu0
      %v2747 = vadd.f32 0.0, %v2746
      %v2748 = vpop.f32.mrb[0].mxu0
      %2749 = vmatprep.mubr.bf16.mxu0 0
      %2750 = vmatmul.mubr.bf16.gmra.mrb[0].mxu0 %v2605
      %v2751 = vpop.f32.mrb[0].mxu0
      %v2752 = vadd.f32 0.0, %v2751
      %v2753 = vpop.f32.mrb[0].mxu0
      %v2754 = vpop.f32.mrb[0].mxu0
      %v2755 = vadd.f32 0.0, %v2754
      %v2756 = vpop.f32.mrb[0].mxu0
      %2757 = vmatprep.mubr.bf16.mxu0 0
      %2758 = vmatmul.mubr.bf16.gmra.mrb[0].mxu0 %v2608
      %v2759 = vpop.f32.mrb[0].mxu0
      %v2760 = vadd.f32 0.0, %v2759
      %v2761 = vpop.f32.mrb[0].mxu0
      %v2762 = vpop.f32.mrb[0].mxu0
      %v2763 = vadd.f32 0.0, %v2762
      %v2764 = vpop.f32.mrb[0].mxu0
      %2765 = vmatprep.mubr.bf16.mxu0 0
      %2766 = vmatmul.mubr.bf16.gmra.mrb[0].mxu0 %v2611
      %v2767 = vpop.f32.mrb[0].mxu0
      %v2768 = vadd.f32 0.0, %v2767
      %v2769 = vpop.f32.mrb[0].mxu0
      %v2770 = vpop.f32.mrb[0].mxu0
      %v2771 = vadd.f32 0.0, %v2770
      %v2772 = vpop.f32.mrb[0].mxu0
      %2773 = vdwg.mxu0
      %v2774 = vadd.f32 %v2476, %v2648
      %v2775 = vadd.f32 %v2477, %v2651
      %v2776 = vadd.f32 %v2478, %v2656
      %v2777 = vadd.f32 %v2479, %v2659
      %v2778 = vadd.f32 %v2480, %v2664
      %v2779 = vadd.f32 %v2481, %v2667
      %v2780 = vadd.f32 %v2482, %v2672
      %v2781 = vadd.f32 %v2483, %v2675
      %v2782 = vadd.f32 %v2484, %v2680
      %v2783 = vadd.f32 %v2485, %v2683
      %v2784 = vadd.f32 %v2486, %v2688
      %v2785 = vadd.f32 %v2487, %v2691
      %v2786 = vadd.f32 %v2488, %v2696
      %v2787 = vadd.f32 %v2489, %v2699
      %v2788 = vadd.f32 %v2490, %v2704
      %v2789 = vadd.f32 %v2491, %v2707
      %v2790 = vadd.f32 %v2492, %v2712
      %v2791 = vadd.f32 %v2493, %v2715
      %v2792 = vadd.f32 %v2494, %v2720
      %v2793 = vadd.f32 %v2495, %v2723
      %v2794 = vadd.f32 %v2496, %v2728
      %v2795 = vadd.f32 %v2497, %v2731
      %v2796 = vadd.f32 %v2498, %v2736
      %v2797 = vadd.f32 %v2499, %v2739
      %v2798 = vadd.f32 %v2500, %v2744
      %v2799 = vadd.f32 %v2501, %v2747
      %v2800 = vadd.f32 %v2502, %v2752
      %v2801 = vadd.f32 %v2503, %v2755
      %v2802 = vadd.f32 %v2504, %v2760
      %v2803 = vadd.f32 %v2505, %v2763
      %v2804 = vadd.f32 %v2506, %v2768
      %v2805 = vadd.f32 %v2507, %v2771
      %v2806 = vld [vmem:[%s2209 + $0x2] sm:$0xff]
      %v2807 = vld [vmem:[%s2209 + $0xa] sm:$0xff]
      %v2808 = vld [vmem:[%s2209 + $0x1a] sm:$0xff]
      %v2809 = vld [vmem:[%s2209 + $0x22] sm:$0xff]
      %v2810 = vld [vmem:[%s2209 + $0x32] sm:$0xff]
      %v2811 = vld [vmem:[%s2209 + $0x3a] sm:$0xff]
      %v2812 = vld [vmem:[%s2209 + $0x4a] sm:$0xff]
      %v2813 = vld [vmem:[%s2209 + $0x52] sm:$0xff]
      %v2814 = vld [vmem:[%s2209 + $0x62] sm:$0xff]
      %v2815 = vld [vmem:[%s2209 + $0x6a] sm:$0xff]
      %v2816 = vld [vmem:[%s2209 + $0x7a] sm:$0xff]
      %v2817 = vld [vmem:[%s2209 + $0x82] sm:$0xff]
      %v2818 = vld [vmem:[%s2209 + $0x92] sm:$0xff]
      %v2819 = vld [vmem:[%s2209 + $0x9a] sm:$0xff]
      %v2820 = vld [vmem:[%s2209 + $0xaa] sm:$0xff]
      %v2821 = vld [vmem:[%s2209 + $0xb2] sm:$0xff]
      %v2822 = vld [vmem:[%s2209 + $0xc2] sm:$0xff]
      %v2823 = vld [vmem:[%s2209 + $0xca] sm:$0xff]
      %v2824 = vld [vmem:[%s2209 + $0xda] sm:$0xff]
      %v2825 = vld [vmem:[%s2209 + $0xe2] sm:$0xff]
      %v2826 = vld [vmem:[%s2209 + $0xf2] sm:$0xff]
      %v2827 = vld [vmem:[%s2209 + $0xfa] sm:$0xff]
      %v2828 = vld [vmem:[%s2209 + $0x10a] sm:$0xff]
      %v2829 = vld [vmem:[%s2209 + $0x112] sm:$0xff]
      %v2830 = vld [vmem:[%s2209 + $0x122] sm:$0xff]
      %v2831 = vld [vmem:[%s2209 + $0x12a] sm:$0xff]
      %v2832 = vld [vmem:[%s2209 + $0x13a] sm:$0xff]
      %v2833 = vld [vmem:[%s2209 + $0x142] sm:$0xff]
      %v2834 = vld [vmem:[%s2209 + $0x152] sm:$0xff]
      %v2835 = vld [vmem:[%s2209 + $0x15a] sm:$0xff]
      %v2836 = vld [vmem:[%s2209 + $0x16a] sm:$0xff]
      %v2837 = vld [vmem:[%s2209 + $0x172] sm:$0xff]
      %v2838 = vpack.c.bf16 %v2807, %v2806
      %v2839 = vpack.c.bf16 %v2809, %v2808
      %v2840 = vpack.c.bf16 %v2811, %v2810
      %v2841 = vpack.c.bf16 %v2813, %v2812
      %v2842 = vpack.c.bf16 %v2815, %v2814
      %v2843 = vpack.c.bf16 %v2817, %v2816
      %v2844 = vpack.c.bf16 %v2819, %v2818
      %v2845 = vpack.c.bf16 %v2821, %v2820
      %v2846 = vpack.c.bf16 %v2823, %v2822
      %v2847 = vpack.c.bf16 %v2825, %v2824
      %v2848 = vpack.c.bf16 %v2827, %v2826
      %v2849 = vpack.c.bf16 %v2829, %v2828
      %v2850 = vpack.c.bf16 %v2831, %v2830
      %v2851 = vpack.c.bf16 %v2833, %v2832
      %v2852 = vpack.c.bf16 %v2835, %v2834
      %v2853 = vpack.c.bf16 %v2837, %v2836
      %s2854 = scalar_lea.vmem %s3, 64
      %v2855 = vld [vmem:[%s2854] sm:$0xf]
      %v2856 = vld [vmem:[%s2854 + $0x4] sm:$0xf]
      %v2859 = vunpack.c.l.b16 %v2855
      %v2860 = vunpack.c.l.b16 %v2856
      %v2861 = vpack.c.b16 %v2860, %v2859
      %v2864 = vsel %vm237, %v2838, 0
      %v2867 = vsel %vm237, %v2839, 0
      %v2870 = vsel %vm237, %v2840, 0
      %v2873 = vsel %vm237, %v2841, 0
      %v2876 = vsel %vm237, %v2842, 0
      %v2879 = vsel %vm237, %v2843, 0
      %v2882 = vsel %vm237, %v2844, 0
      %v2885 = vsel %vm237, %v2845, 0
      %v2888 = vsel %vm237, %v2846, 0
      %v2891 = vsel %vm237, %v2847, 0
      %v2894 = vsel %vm237, %v2848, 0
      %v2897 = vsel %vm237, %v2849, 0
      %v2900 = vsel %vm237, %v2850, 0
      %v2903 = vsel %vm237, %v2851, 0
      %v2906 = vsel %vm237, %v2852, 0
      %v2909 = vsel %vm237, %v2853, 0
      %2911 = vmatprep.subr.bf16.mxu0 0
      %2912 = vmatpush1.bf16.msra.mxu0 %v2861
      %2913 = vmatprep.subr.bf16.mxu0 0
      %2914 = vmatpush1.bf16.msra.mxu0 0
      %2915 = vmatprep.subr.bf16.mxu0 0
      %2916 = vmatpush1.bf16.msra.mxu0 0
      %2917 = vmatprep.subr.bf16.mxu0 0
      %2918 = vmatpush1.bf16.msra.mxu0 0
      %2919 = vmatprep.subr.bf16.mxu0 0
      %2920 = vmatpush1.bf16.msra.mxu0 0
      %2921 = vmatprep.subr.bf16.mxu0 0
      %2922 = vmatpush1.bf16.msra.mxu0 0
      %2923 = vmatprep.subr.bf16.mxu0 0
      %2924 = vmatpush1.bf16.msra.mxu0 0
      %2925 = vmatprep.subr.bf16.mxu0 0
      %2926 = vmatpush1.bf16.msra.mxu0 0
      %2927 = vmatprep.subr.bf16.mxu0 0
      %2928 = vmatpush1.bf16.msra.mxu0 0
      %2929 = vmatprep.subr.bf16.mxu0 0
      %2930 = vmatpush1.bf16.msra.mxu0 0
      %2931 = vmatprep.subr.bf16.mxu0 0
      %2932 = vmatpush1.bf16.msra.mxu0 0
      %2933 = vmatprep.subr.bf16.mxu0 0
      %2934 = vmatpush1.bf16.msra.mxu0 0
      %2935 = vmatprep.subr.bf16.mxu0 0
      %2936 = vmatpush1.bf16.msra.mxu0 0
      %2937 = vmatprep.subr.bf16.mxu0 0
      %2938 = vmatpush1.bf16.msra.mxu0 0
      %2939 = vmatprep.subr.bf16.mxu0 0
      %2940 = vmatpush1.bf16.msra.mxu0 0
      %2941 = vmatprep.subr.bf16.mxu0 0
      %2942 = vmatpush1.bf16.msra.mxu0 0
      %2943 = vmatprep.mubr.bf16.mxu0 0
      %2944 = vmatmul.mubr.bf16.gmra.mrb[0].mxu0 %v2864
      %v2945 = vpop.f32.mrb[0].mxu0
      %v2946 = vadd.f32 0.0, %v2945
      %v2947 = vpop.f32.mrb[0].mxu0
      %v2948 = vpop.f32.mrb[0].mxu0
      %v2949 = vadd.f32 0.0, %v2948
      %v2950 = vpop.f32.mrb[0].mxu0
      %2951 = vmatprep.mubr.bf16.mxu0 0
      %2952 = vmatmul.mubr.bf16.gmra.mrb[0].mxu0 %v2867
      %v2953 = vpop.f32.mrb[0].mxu0
      %v2954 = vadd.f32 0.0, %v2953
      %v2955 = vpop.f32.mrb[0].mxu0
      %v2956 = vpop.f32.mrb[0].mxu0
      %v2957 = vadd.f32 0.0, %v2956
      %v2958 = vpop.f32.mrb[0].mxu0
      %2959 = vmatprep.mubr.bf16.mxu0 0
      %2960 = vmatmul.mubr.bf16.gmra.mrb[0].mxu0 %v2870
      %v2961 = vpop.f32.mrb[0].mxu0
      %v2962 = vadd.f32 0.0, %v2961
      %v2963 = vpop.f32.mrb[0].mxu0
      %v2964 = vpop.f32.mrb[0].mxu0
      %v2965 = vadd.f32 0.0, %v2964
      %v2966 = vpop.f32.mrb[0].mxu0
      %2967 = vmatprep.mubr.bf16.mxu0 0
      %2968 = vmatmul.mubr.bf16.gmra.mrb[0].mxu0 %v2873
      %v2969 = vpop.f32.mrb[0].mxu0
      %v2970 = vadd.f32 0.0, %v2969
      %v2971 = vpop.f32.mrb[0].mxu0
      %v2972 = vpop.f32.mrb[0].mxu0
      %v2973 = vadd.f32 0.0, %v2972
      %v2974 = vpop.f32.mrb[0].mxu0
      %2975 = vmatprep.mubr.bf16.mxu0 0
      %2976 = vmatmul.mubr.bf16.gmra.mrb[0].mxu0 %v2876
      %v2977 = vpop.f32.mrb[0].mxu0
      %v2978 = vadd.f32 0.0, %v2977
      %v2979 = vpop.f32.mrb[0].mxu0
      %v2980 = vpop.f32.mrb[0].mxu0
      %v2981 = vadd.f32 0.0, %v2980
      %v2982 = vpop.f32.mrb[0].mxu0
      %2983 = vmatprep.mubr.bf16.mxu0 0
      %2984 = vmatmul.mubr.bf16.gmra.mrb[0].mxu0 %v2879
      %v2985 = vpop.f32.mrb[0].mxu0
      %v2986 = vadd.f32 0.0, %v2985
      %v2987 = vpop.f32.mrb[0].mxu0
      %v2988 = vpop.f32.mrb[0].mxu0
      %v2989 = vadd.f32 0.0, %v2988
      %v2990 = vpop.f32.mrb[0].mxu0
      %2991 = vmatprep.mubr.bf16.mxu0 0
      %2992 = vmatmul.mubr.bf16.gmra.mrb[0].mxu0 %v2882
      %v2993 = vpop.f32.mrb[0].mxu0
      %v2994 = vadd.f32 0.0, %v2993
      %v2995 = vpop.f32.mrb[0].mxu0
      %v2996 = vpop.f32.mrb[0].mxu0
      %v2997 = vadd.f32 0.0, %v2996
      %v2998 = vpop.f32.mrb[0].mxu0
      %2999 = vmatprep.mubr.bf16.mxu0 0
      %3000 = vmatmul.mubr.bf16.gmra.mrb[0].mxu0 %v2885
      %v3001 = vpop.f32.mrb[0].mxu0
      %v3002 = vadd.f32 0.0, %v3001
      %v3003 = vpop.f32.mrb[0].mxu0
      %v3004 = vpop.f32.mrb[0].mxu0
      %v3005 = vadd.f32 0.0, %v3004
      %v3006 = vpop.f32.mrb[0].mxu0
      %3007 = vmatprep.mubr.bf16.mxu0 0
      %3008 = vmatmul.mubr.bf16.gmra.mrb[0].mxu0 %v2888
      %v3009 = vpop.f32.mrb[0].mxu0
      %v3010 = vadd.f32 0.0, %v3009
      %v3011 = vpop.f32.mrb[0].mxu0
      %v3012 = vpop.f32.mrb[0].mxu0
      %v3013 = vadd.f32 0.0, %v3012
      %v3014 = vpop.f32.mrb[0].mxu0
      %3015 = vmatprep.mubr.bf16.mxu0 0
      %3016 = vmatmul.mubr.bf16.gmra.mrb[0].mxu0 %v2891
      %v3017 = vpop.f32.mrb[0].mxu0
      %v3018 = vadd.f32 0.0, %v3017
      %v3019 = vpop.f32.mrb[0].mxu0
      %v3020 = vpop.f32.mrb[0].mxu0
      %v3021 = vadd.f32 0.0, %v3020
      %v3022 = vpop.f32.mrb[0].mxu0
      %3023 = vmatprep.mubr.bf16.mxu0 0
      %3024 = vmatmul.mubr.bf16.gmra.mrb[0].mxu0 %v2894
      %v3025 = vpop.f32.mrb[0].mxu0
      %v3026 = vadd.f32 0.0, %v3025
      %v3027 = vpop.f32.mrb[0].mxu0
      %v3028 = vpop.f32.mrb[0].mxu0
      %v3029 = vadd.f32 0.0, %v3028
      %v3030 = vpop.f32.mrb[0].mxu0
      %3031 = vmatprep.mubr.bf16.mxu0 0
      %3032 = vmatmul.mubr.bf16.gmra.mrb[0].mxu0 %v2897
      %v3033 = vpop.f32.mrb[0].mxu0
      %v3034 = vadd.f32 0.0, %v3033
      %v3035 = vpop.f32.mrb[0].mxu0
      %v3036 = vpop.f32.mrb[0].mxu0
      %v3037 = vadd.f32 0.0, %v3036
      %v3038 = vpop.f32.mrb[0].mxu0
      %3039 = vmatprep.mubr.bf16.mxu0 0
      %3040 = vmatmul.mubr.bf16.gmra.mrb[0].mxu0 %v2900
      %v3041 = vpop.f32.mrb[0].mxu0
      %v3042 = vadd.f32 0.0, %v3041
      %v3043 = vpop.f32.mrb[0].mxu0
      %v3044 = vpop.f32.mrb[0].mxu0
      %v3045 = vadd.f32 0.0, %v3044
      %v3046 = vpop.f32.mrb[0].mxu0
      %3047 = vmatprep.mubr.bf16.mxu0 0
      %3048 = vmatmul.mubr.bf16.gmra.mrb[0].mxu0 %v2903
      %v3049 = vpop.f32.mrb[0].mxu0
      %v3050 = vadd.f32 0.0, %v3049
      %v3051 = vpop.f32.mrb[0].mxu0
      %v3052 = vpop.f32.mrb[0].mxu0
      %v3053 = vadd.f32 0.0, %v3052
      %v3054 = vpop.f32.mrb[0].mxu0
      %3055 = vmatprep.mubr.bf16.mxu0 0
      %3056 = vmatmul.mubr.bf16.gmra.mrb[0].mxu0 %v2906
      %v3057 = vpop.f32.mrb[0].mxu0
      %v3058 = vadd.f32 0.0, %v3057
      %v3059 = vpop.f32.mrb[0].mxu0
      %v3060 = vpop.f32.mrb[0].mxu0
      %v3061 = vadd.f32 0.0, %v3060
      %v3062 = vpop.f32.mrb[0].mxu0
      %3063 = vmatprep.mubr.bf16.mxu0 0
      %3064 = vmatmul.mubr.bf16.gmra.mrb[0].mxu0 %v2909
      %v3065 = vpop.f32.mrb[0].mxu0
      %v3066 = vadd.f32 0.0, %v3065
      %v3067 = vpop.f32.mrb[0].mxu0
      %v3068 = vpop.f32.mrb[0].mxu0
      %v3069 = vadd.f32 0.0, %v3068
      %v3070 = vpop.f32.mrb[0].mxu0
      %3071 = vdwg.mxu0
      %v3072 = vadd.f32 %v2774, %v2946
      %v3073 = vadd.f32 %v2775, %v2949
      %v3074 = vadd.f32 %v2776, %v2954
      %v3075 = vadd.f32 %v2777, %v2957
      %v3076 = vadd.f32 %v2778, %v2962
      %v3077 = vadd.f32 %v2779, %v2965
      %v3078 = vadd.f32 %v2780, %v2970
      %v3079 = vadd.f32 %v2781, %v2973
      %v3080 = vadd.f32 %v2782, %v2978
      %v3081 = vadd.f32 %v2783, %v2981
      %v3082 = vadd.f32 %v2784, %v2986
      %v3083 = vadd.f32 %v2785, %v2989
      %v3084 = vadd.f32 %v2786, %v2994
      %v3085 = vadd.f32 %v2787, %v2997
      %v3086 = vadd.f32 %v2788, %v3002
      %v3087 = vadd.f32 %v2789, %v3005
      %v3088 = vadd.f32 %v2790, %v3010
      %v3089 = vadd.f32 %v2791, %v3013
      %v3090 = vadd.f32 %v2792, %v3018
      %v3091 = vadd.f32 %v2793, %v3021
      %v3092 = vadd.f32 %v2794, %v3026
      %v3093 = vadd.f32 %v2795, %v3029
      %v3094 = vadd.f32 %v2796, %v3034
      %v3095 = vadd.f32 %v2797, %v3037
      %v3096 = vadd.f32 %v2798, %v3042
      %v3097 = vadd.f32 %v2799, %v3045
      %v3098 = vadd.f32 %v2800, %v3050
      %v3099 = vadd.f32 %v2801, %v3053
      %v3100 = vadd.f32 %v2802, %v3058
      %v3101 = vadd.f32 %v2803, %v3061
      %v3102 = vadd.f32 %v2804, %v3066
      %v3103 = vadd.f32 %v2805, %v3069
      %v3104 = vpack.c.bf16 %v3073, %v3072
      %v3105 = vpack.c.bf16 %v3075, %v3074
      %v3106 = vpack.c.bf16 %v3077, %v3076
      %v3107 = vpack.c.bf16 %v3079, %v3078
      %v3108 = vpack.c.bf16 %v3081, %v3080
      %v3109 = vpack.c.bf16 %v3083, %v3082
      %v3110 = vpack.c.bf16 %v3085, %v3084
      %v3111 = vpack.c.bf16 %v3087, %v3086
      %v3112 = vpack.c.bf16 %v3089, %v3088
      %v3113 = vpack.c.bf16 %v3091, %v3090
      %v3114 = vpack.c.bf16 %v3093, %v3092
      %v3115 = vpack.c.bf16 %v3095, %v3094
      %v3116 = vpack.c.bf16 %v3097, %v3096
      %v3117 = vpack.c.bf16 %v3099, %v3098
      %v3118 = vpack.c.bf16 %v3101, %v3100
      %v3119 = vpack.c.bf16 %v3103, %v3102
      %v3136 = vunpack.c.l.b16 %v3104
      %v3137 = vunpack.c.h.b16 %v3104
      %v3138 = vunpack.c.l.b16 %v3105
      %v3139 = vunpack.c.h.b16 %v3105
      %v3140 = vunpack.c.l.b16 %v3106
      %v3141 = vunpack.c.h.b16 %v3106
      %v3142 = vunpack.c.l.b16 %v3107
      %v3143 = vunpack.c.h.b16 %v3107
      %v3144 = vunpack.c.l.b16 %v3108
      %v3145 = vunpack.c.h.b16 %v3108
      %v3146 = vunpack.c.l.b16 %v3109
      %v3147 = vunpack.c.h.b16 %v3109
      %v3148 = vunpack.c.l.b16 %v3110
      %v3149 = vunpack.c.h.b16 %v3110
      %v3150 = vunpack.c.l.b16 %v3111
      %v3151 = vunpack.c.h.b16 %v3111
      %v3152 = vunpack.c.l.b16 %v3112
      %v3153 = vunpack.c.h.b16 %v3112
      %v3154 = vunpack.c.l.b16 %v3113
      %v3155 = vunpack.c.h.b16 %v3113
      %v3156 = vunpack.c.l.b16 %v3114
      %v3157 = vunpack.c.h.b16 %v3114
      %v3158 = vunpack.c.l.b16 %v3115
      %v3159 = vunpack.c.h.b16 %v3115
      %v3160 = vunpack.c.l.b16 %v3116
      %v3161 = vunpack.c.h.b16 %v3116
      %v3162 = vunpack.c.l.b16 %v3117
      %v3163 = vunpack.c.h.b16 %v3117
      %v3164 = vunpack.c.l.b16 %v3118
      %v3165 = vunpack.c.h.b16 %v3118
      %v3166 = vunpack.c.l.b16 %v3119
      %v3167 = vunpack.c.h.b16 %v3119
      %v3168 = vpack.c.b16 %v3136, %v3136
      %v3169 = vpack.c.b16 %v3137, %v3137
      %v3170 = vpack.c.b16 %v3138, %v3138
      %v3171 = vpack.c.b16 %v3139, %v3139
      %v3172 = vpack.c.b16 %v3140, %v3140
      %v3173 = vpack.c.b16 %v3141, %v3141
      %v3174 = vpack.c.b16 %v3142, %v3142
      %v3175 = vpack.c.b16 %v3143, %v3143
      %v3176 = vpack.c.b16 %v3144, %v3144
      %v3177 = vpack.c.b16 %v3145, %v3145
      %v3178 = vpack.c.b16 %v3146, %v3146
      %v3179 = vpack.c.b16 %v3147, %v3147
      %v3180 = vpack.c.b16 %v3148, %v3148
      %v3181 = vpack.c.b16 %v3149, %v3149
      %v3182 = vpack.c.b16 %v3150, %v3150
      %v3183 = vpack.c.b16 %v3151, %v3151
      %v3184 = vpack.c.b16 %v3152, %v3152
      %v3185 = vpack.c.b16 %v3153, %v3153
      %v3186 = vpack.c.b16 %v3154, %v3154
      %v3187 = vpack.c.b16 %v3155, %v3155
      %v3188 = vpack.c.b16 %v3156, %v3156
      %v3189 = vpack.c.b16 %v3157, %v3157
      %v3190 = vpack.c.b16 %v3158, %v3158
      %v3191 = vpack.c.b16 %v3159, %v3159
      %v3192 = vpack.c.b16 %v3160, %v3160
      %v3193 = vpack.c.b16 %v3161, %v3161
      %v3194 = vpack.c.b16 %v3162, %v3162
      %v3195 = vpack.c.b16 %v3163, %v3163
      %v3196 = vpack.c.b16 %v3164, %v3164
      %v3197 = vpack.c.b16 %v3165, %v3165
      %v3198 = vpack.c.b16 %v3166, %v3166
      %v3199 = vpack.c.b16 %v3167, %v3167
      %3232 = vst [vmem:[%s231] sm:$0xf] %v3168
      %3233 = vst [vmem:[%s231 + $0x4] sm:$0xf] %v3169
      %3234 = vst [vmem:[%s231 + $0x8] sm:$0xf] %v3170
      %3235 = vst [vmem:[%s231 + $0xc] sm:$0xf] %v3171
      %3236 = vst [vmem:[%s231 + $0x10] sm:$0xf] %v3172
      %3237 = vst [vmem:[%s231 + $0x14] sm:$0xf] %v3173
      %3238 = vst [vmem:[%s231 + $0x18] sm:$0xf] %v3174
      %3239 = vst [vmem:[%s231 + $0x1c] sm:$0xf] %v3175
      %3240 = vst [vmem:[%s231 + $0x20] sm:$0xf] %v3176
      %3241 = vst [vmem:[%s231 + $0x24] sm:$0xf] %v3177
      %3242 = vst [vmem:[%s231 + $0x28] sm:$0xf] %v3178
      %3243 = vst [vmem:[%s231 + $0x2c] sm:$0xf] %v3179
      %3244 = vst [vmem:[%s231 + $0x30] sm:$0xf] %v3180
      %3245 = vst [vmem:[%s231 + $0x34] sm:$0xf] %v3181
      %3246 = vst [vmem:[%s231 + $0x38] sm:$0xf] %v3182
      %3247 = vst [vmem:[%s231 + $0x3c] sm:$0xf] %v3183
      %3248 = vst [vmem:[%s231 + $0x40] sm:$0xf] %v3184
      %3249 = vst [vmem:[%s231 + $0x44] sm:$0xf] %v3185
      %3250 = vst [vmem:[%s231 + $0x48] sm:$0xf] %v3186
      %3251 = vst [vmem:[%s231 + $0x4c] sm:$0xf] %v3187
      %3252 = vst [vmem:[%s231 + $0x50] sm:$0xf] %v3188
      %3253 = vst [vmem:[%s231 + $0x54] sm:$0xf] %v3189
      %3254 = vst [vmem:[%s231 + $0x58] sm:$0xf] %v3190
      %3255 = vst [vmem:[%s231 + $0x5c] sm:$0xf] %v3191
      %3256 = vst [vmem:[%s231 + $0x60] sm:$0xf] %v3192
      %3257 = vst [vmem:[%s231 + $0x64] sm:$0xf] %v3193
      %3258 = vst [vmem:[%s231 + $0x68] sm:$0xf] %v3194
      %3259 = vst [vmem:[%s231 + $0x6c] sm:$0xf] %v3195
      %3260 = vst [vmem:[%s231 + $0x70] sm:$0xf] %v3196
      %3261 = vst [vmem:[%s231 + $0x74] sm:$0xf] %v3197
      %3262 = vst [vmem:[%s231 + $0x78] sm:$0xf] %v3198
      %3263 = vst [vmem:[%s231 + $0x7c] sm:$0xf] %v3199
      %v3264 = vadd.f32 %v3072, %v3073
      %v3265 = vadd.f32 %v3264, %v3074
      %v3266 = vadd.f32 %v3265, %v3075
      %v3267 = vadd.f32 %v3266, %v3076
      %v3268 = vadd.f32 %v3267, %v3077
      %v3269 = vadd.f32 %v3268, %v3078
      %v3270 = vadd.f32 %v3269, %v3079
      %v3271 = vadd.f32 %v3270, %v3080
      %v3272 = vadd.f32 %v3271, %v3081
      %v3273 = vadd.f32 %v3272, %v3082
      %v3274 = vadd.f32 %v3273, %v3083
      %v3275 = vadd.f32 %v3274, %v3084
      %v3276 = vadd.f32 %v3275, %v3085
      %v3277 = vadd.f32 %v3276, %v3086
      %v3278 = vadd.f32 %v3277, %v3087
      %v3279 = vadd.f32 %v3278, %v3088
      %v3280 = vadd.f32 %v3279, %v3089
      %v3281 = vadd.f32 %v3280, %v3090
      %v3282 = vadd.f32 %v3281, %v3091
      %v3283 = vadd.f32 %v3282, %v3092
      %v3284 = vadd.f32 %v3283, %v3093
      %v3285 = vadd.f32 %v3284, %v3094
      %v3286 = vadd.f32 %v3285, %v3095
      %v3287 = vadd.f32 %v3286, %v3096
      %v3288 = vadd.f32 %v3287, %v3097
      %v3289 = vadd.f32 %v3288, %v3098
      %v3290 = vadd.f32 %v3289, %v3099
      %v3291 = vadd.f32 %v3290, %v3100
      %v3292 = vadd.f32 %v3291, %v3101
      %v3293 = vadd.f32 %v3292, %v3102
      %v3294 = vadd.f32 %v3293, %v3103
      %v3295 = vrot.slane %v3294, 4
      %v3296 = vadd.f32 %v3294, %v3295
      %v3297 = vrot.slane %v3296, 2
      %v3298 = vadd.f32 %v3296, %v3297
      %v3299 = vrot.slane %v3298, 1
      %v3300 = vadd.f32 %v3298, %v3299
      %v3301 = vmul.f32 %v3072, %v3072
      %v3302 = vmul.f32 %v3073, %v3073
      %v3303 = vmul.f32 %v3074, %v3074
      %v3304 = vmul.f32 %v3075, %v3075
      %v3305 = vmul.f32 %v3076, %v3076
      %v3306 = vmul.f32 %v3077, %v3077
      %v3307 = vmul.f32 %v3078, %v3078
      %v3308 = vmul.f32 %v3079, %v3079
      %v3309 = vmul.f32 %v3080, %v3080
      %v3310 = vmul.f32 %v3081, %v3081
      %v3311 = vmul.f32 %v3082, %v3082
      %v3312 = vmul.f32 %v3083, %v3083
      %v3313 = vmul.f32 %v3084, %v3084
      %v3314 = vmul.f32 %v3085, %v3085
      %v3315 = vmul.f32 %v3086, %v3086
      %v3316 = vmul.f32 %v3087, %v3087
      %v3317 = vmul.f32 %v3088, %v3088
      %v3318 = vmul.f32 %v3089, %v3089
      %v3319 = vmul.f32 %v3090, %v3090
      %v3320 = vmul.f32 %v3091, %v3091
      %v3321 = vmul.f32 %v3092, %v3092
      %v3322 = vmul.f32 %v3093, %v3093
      %v3323 = vmul.f32 %v3094, %v3094
      %v3324 = vmul.f32 %v3095, %v3095
      %v3325 = vmul.f32 %v3096, %v3096
      %v3326 = vmul.f32 %v3097, %v3097
      %v3327 = vmul.f32 %v3098, %v3098
      %v3328 = vmul.f32 %v3099, %v3099
      %v3329 = vmul.f32 %v3100, %v3100
      %v3330 = vmul.f32 %v3101, %v3101
      %v3331 = vmul.f32 %v3102, %v3102
      %v3332 = vmul.f32 %v3103, %v3103
      %v3333 = vadd.f32 %v3301, %v3302
      %v3334 = vadd.f32 %v3333, %v3303
      %v3335 = vadd.f32 %v3334, %v3304
      %v3336 = vadd.f32 %v3335, %v3305
      %v3337 = vadd.f32 %v3336, %v3306
      %v3338 = vadd.f32 %v3337, %v3307
      %v3339 = vadd.f32 %v3338, %v3308
      %v3340 = vadd.f32 %v3339, %v3309
      %v3341 = vadd.f32 %v3340, %v3310
      %v3342 = vadd.f32 %v3341, %v3311
      %v3343 = vadd.f32 %v3342, %v3312
      %v3344 = vadd.f32 %v3343, %v3313
      %v3345 = vadd.f32 %v3344, %v3314
      %v3346 = vadd.f32 %v3345, %v3315
      %v3347 = vadd.f32 %v3346, %v3316
      %v3348 = vadd.f32 %v3347, %v3317
      %v3349 = vadd.f32 %v3348, %v3318
      %v3350 = vadd.f32 %v3349, %v3319
      %v3351 = vadd.f32 %v3350, %v3320
      %v3352 = vadd.f32 %v3351, %v3321
      %v3353 = vadd.f32 %v3352, %v3322
      %v3354 = vadd.f32 %v3353, %v3323
      %v3355 = vadd.f32 %v3354, %v3324
      %v3356 = vadd.f32 %v3355, %v3325
      %v3357 = vadd.f32 %v3356, %v3326
      %v3358 = vadd.f32 %v3357, %v3327
      %v3359 = vadd.f32 %v3358, %v3328
      %v3360 = vadd.f32 %v3359, %v3329
      %v3361 = vadd.f32 %v3360, %v3330
      %v3362 = vadd.f32 %v3361, %v3331
      %v3363 = vadd.f32 %v3362, %v3332
      %v3364 = vrot.slane %v3363, 4
      %v3365 = vadd.f32 %v3363, %v3364
      %v3366 = vrot.slane %v3365, 2
      %v3367 = vadd.f32 %v3365, %v3366
      %v3368 = vrot.slane %v3367, 1
      %v3369 = vadd.f32 %v3367, %v3368
      %vm3370 = vcmask 1040384
      %v3371 = vsel %vm3370, %v3300, %v3369
      %3372 = vst [vmem:[%s235] sm:$0x3] %v3371
      %p3373 = scmp.lt.s32.totalorder %s17, 1
      %s3374 = scalar_select %p3373, %s17, 1
      %s3375 = smul.addr %s3374, 32
      %s3376 = smul.addr %s3375, 4
      %s3377 = scalar_lea.vmem %s4, %s3376
      %p3378 = scmp.lt.s32.totalorder %s17, 1
      %s3379 = scalar_select %p3378, %s17, 1
      %s3380 = smul.addr %s3379, 2
      %s3381 = scalar_lea.vmem %s5, %s3380
      // Predicated region
      $region37: #{model_forward.3} parent=35 // pred_check
        %p3382 = pneg %p124
      $region38: #{model_forward.3} parent=35 // pred_check_branch
        %3384 = sbr.rel (%p3382) target = $region40
      $region39: #{model_forward.3} parent=35 // pred_region
        _
      $region40: #{model_forward.3} parent=35 // pred_fallthru
        _
      // Predicated region
      $region41: #{model_forward.3} parent=35 // pred_check
        %p3385 = pneg %p150
      $region42: #{model_forward.3} parent=35 // pred_check_branch
        %3387 = sbr.rel (%p3385) target = $region44
      $region43: #{model_forward.3} parent=35 // pred_region
        _
      $region44: #{model_forward.3} parent=35 // pred_fallthru
        _
    $region36: #{model_forward.3} parent=5 // pred_fallthru
      _
    %p3388 = scmp.le.s32.totalorder 2, %s12
    // Predicated region
    $region45: #{model_forward.3} parent=5 // pred_check
      %p3389 = pneg %p3388
    $region46: #{model_forward.3} parent=5 // pred_check_branch
      %3391 = sbr.rel (%p3389) target = $region48
    $region47: #{model_forward.3} parent=5 // pred_region
      %s3392 = ssub.s32 %s12, 2
      // Predicated region
      $region49: #{model_forward.3} parent=47 // pred_check
        %p3393 = pneg %p130
      $region50: #{model_forward.3} parent=47 // pred_check_branch
        %3395 = sbr.rel (%p3393) target = $region52
      $region51: #{model_forward.3} parent=47 // pred_region
        %p3396 = scmp.lt.s32.totalorder %s18, 1
        %s3397 = scalar_select %p3396, %s18, 1
        %s3398 = smul.addr %s3397, 32
        %s3399 = smul.addr %s3398, 4
        %s3400 = scalar_lea.vmem %s4, %s3399
      $region52: #{model_forward.3} parent=47 // pred_fallthru
        _
      // Predicated region
      $region53: #{model_forward.3} parent=47 // pred_check
        %p3401 = pneg %p156
      $region54: #{model_forward.3} parent=47 // pred_check_branch
        %3403 = sbr.rel (%p3401) target = $region56
      $region55: #{model_forward.3} parent=47 // pred_region
        %p3404 = scmp.lt.s32.totalorder %s18, 1
        %s3405 = scalar_select %p3404, %s18, 1
        %s3406 = smul.addr %s3405, 2
        %s3407 = scalar_lea.vmem %s5, %s3406
      $region56: #{model_forward.3} parent=47 // pred_fallthru
        _
    $region48: #{model_forward.3} parent=5 // pred_fallthru
      _
  $region6: #{model_forward.3} parent=0 // loop_footer
    %s16 = sadd.s32 1, %s12
  $region7: #{model_forward.3} parent=0 // loop_footer_branch
    %11 = sbr.rel target = $region3
  $region8: #{model_forward.3} parent=0 // loop_exit
    _

// kernel: model_forward.5
$region0: #{model_forward.5}
  #allocation0 [shape = 'u32[]', space=smem, size = 0x4, offset = 0x4, fixed_abs, tag = 'smem constant byte address 0x4 - core index']
  #allocation1 [shape = 'u32[144,128]{1,0:T(1,128)}', space=vmem, size = 0x12000, scoped, tag = 'internal scratch']
  #allocation2 [shape = 'f32[18,18,16]{2,1,0:T(8,128)}', space=vmem, size = 0x36000, scoped, tag = 'scratch operand']
  %s0 = inlined_call_operand.vmem [shape: bf16[2,16,16,16], index: 0, kind: input, shape index: {}]
  %s1 = inlined_call_operand.vmem [shape: f32[1,16], index: 1, kind: input, shape index: {}]
  %s2 = inlined_call_operand.vmem [shape: f32[1,16], index: 2, kind: input, shape index: {}]
  %s3 = inlined_call_operand.vmem [shape: bf16[9,16,128], index: 3, kind: input, shape index: {}]
  %s4 = inlined_call_operand.vmem [shape: bf16[2,16,16,128], index: 4, kind: output, shape index: {0}]
  %s5 = inlined_call_operand.hbm [shape: f32[2,2,128], index: 5, kind: output, shape index: {1}]
  %6 = xla_tuple %s4, %s5
  %s7 = sld [smem:[#allocation0]]
  $region57: #{model_forward.5} parent=0
    _
  %s9 = ssub.s32 1, %s7
  %s10 = scalar_select 0, %s9, %s7
  $region1: #{model_forward.5} parent=0
    #allocation3 [shape = 'u8[2048]{0}', space=vmem, size = 0x800, scoped, tag = 'output window, operand 1']
    #allocation4 [shape = 's32[2]{0}', space=sflag, size = 0x8, scoped, tag = 'scoped memory for model_forward.5']
    %11 = vsyncpa [#allocation4], 0
    %s12 = scalar_lea.sflag [#allocation4], 1
    %13 = vsyncpa %s12, 0
    loop: start=0, step=1, limit=4
    $region2: #{model_forward.5} parent=1 // loop_pre_header
      _
    $region3: #{model_forward.5} parent=1 // loop_header
      %s15 = sphi 0, %s19
      %p16 = scmp.ge.s32.totalorder %s15, 4
      %s25 = sphi 0, %s27
      %s28 = sphi 0, %s25
      %s29 = sphi 0, %s28
      %s45 = sphi 0, %s29
      %s49 = sphi 0, %s49
      %s51 = sphi 0, %s49
      %s52 = sphi 0, %s51
      %s66 = sphi 0, %s52
      %s70 = sphi 0, %s70
      %s72 = sphi 0, %s70
      %s73 = sphi 0, %s72
      %s87 = sphi 0, %s73
      %s91 = sphi 0, %s91
      %s93 = sphi 0, %s91
      %s94 = sphi 0, %s93
      %s108 = sphi 0, %s94
      %s114 = sphi 0, %s116
      %s117 = sphi 0, %s114
      %s118 = sphi 0, %s117
      %s134 = sphi 0, %s118
      %s140 = sphi 0, %s142
      %s143 = sphi 0, %s140
      %s144 = sphi 0, %s143
      %s160 = sphi 0, %s144
    $region4: #{model_forward.5} parent=1 // loop_header_branch
      %18 = sbr.rel (%p16) target = $region8
    $region5: #{model_forward.5} parent=1 // loop_body
      %s20 = ssub.s32 %s15, 1
      %s21 = ssub.s32 %s15, 2
      %s22 = sadd.s32 %s15, 1
      %s23 = ssub.s32 %s15, %s22
      %p24 = scmp.eq.s32.totalorder %s23, 0
      %s26 = sadd.s32 %s25, 1
      %s27 = scalar_select %p24, %s25, %s26
      %p30 = pneg %p24
      %p31 = scmp.eq.s32.totalorder %s15, 1
      %p32 = por %p30, %p31
      %p33 = scmp.ne.s32.totalorder %s25, %s28
      %p34 = scmp.eq.s32.totalorder %s15, 0
      %p35 = por %p33, %p34
      %p36 = scmp.ne.s32.totalorder %s25, %s28
      %p37 = scmp.eq.s32.totalorder %s20, 1
      %p38 = por %p36, %p37
      %p39 = scmp.ne.s32.totalorder %s28, %s29
      %p40 = scmp.eq.s32.totalorder %s20, 0
      %p41 = por %p39, %p40
      %p42 = scmp.ne.s32.totalorder %s28, %s29
      %p43 = scmp.eq.s32.totalorder %s21, 1
      %p44 = por %p42, %p43
      %p46 = scmp.ne.s32.totalorder %s29, %s45
      %p47 = scmp.eq.s32.totalorder %s21, 0
      %p48 = por %p46, %p47
      %s50 = sadd.s32 %s49, 1
      %p53 = scmp.eq.s32.totalorder %s15, 1
      %p54 = scmp.ne.s32.totalorder %s49, %s51
      %p55 = scmp.eq.s32.totalorder %s15, 0
      %p56 = por %p54, %p55
      %p57 = scmp.ne.s32.totalorder %s49, %s51
      %p58 = scmp.eq.s32.totalorder %s20, 1
      %p59 = por %p57, %p58
      %p60 = scmp.ne.s32.totalorder %s51, %s52
      %p61 = scmp.eq.s32.totalorder %s20, 0
      %p62 = por %p60, %p61
      %p63 = scmp.ne.s32.totalorder %s51, %s52
      %p64 = scmp.eq.s32.totalorder %s21, 1
      %p65 = por %p63, %p64
      %p67 = scmp.ne.s32.totalorder %s52, %s66
      %p68 = scmp.eq.s32.totalorder %s21, 0
      %p69 = por %p67, %p68
      %s71 = sadd.s32 %s70, 1
      %p74 = scmp.eq.s32.totalorder %s15, 1
      %p75 = scmp.ne.s32.totalorder %s70, %s72
      %p76 = scmp.eq.s32.totalorder %s15, 0
      %p77 = por %p75, %p76
      %p78 = scmp.ne.s32.totalorder %s70, %s72
      %p79 = scmp.eq.s32.totalorder %s20, 1
      %p80 = por %p78, %p79
      %p81 = scmp.ne.s32.totalorder %s72, %s73
      %p82 = scmp.eq.s32.totalorder %s20, 0
      %p83 = por %p81, %p82
      %p84 = scmp.ne.s32.totalorder %s72, %s73
      %p85 = scmp.eq.s32.totalorder %s21, 1
      %p86 = por %p84, %p85
      %p88 = scmp.ne.s32.totalorder %s73, %s87
      %p89 = scmp.eq.s32.totalorder %s21, 0
      %p90 = por %p88, %p89
      %s92 = sadd.s32 %s91, 1
      %p95 = scmp.eq.s32.totalorder %s15, 1
      %p96 = scmp.ne.s32.totalorder %s91, %s93
      %p97 = scmp.eq.s32.totalorder %s15, 0
      %p98 = por %p96, %p97
      %p99 = scmp.ne.s32.totalorder %s91, %s93
      %p100 = scmp.eq.s32.totalorder %s20, 1
      %p101 = por %p99, %p100
      %p102 = scmp.ne.s32.totalorder %s93, %s94
      %p103 = scmp.eq.s32.totalorder %s20, 0
      %p104 = por %p102, %p103
      %p105 = scmp.ne.s32.totalorder %s93, %s94
      %p106 = scmp.eq.s32.totalorder %s21, 1
      %p107 = por %p105, %p106
      %p109 = scmp.ne.s32.totalorder %s94, %s108
      %p110 = scmp.eq.s32.totalorder %s21, 0
      %p111 = por %p109, %p110
      %s112 = ssub.s32 %s15, %s22
      %p113 = scmp.eq.s32.totalorder %s112, 0
      %s115 = sadd.s32 %s114, 1
      %s116 = scalar_select %p113, %s114, %s115
      %p119 = pneg %p113
      %p120 = scmp.eq.s32.totalorder %s15, 1
      %p121 = por %p119, %p120
      %p122 = scmp.ne.s32.totalorder %s114, %s117
      %p123 = scmp.eq.s32.totalorder %s15, 0
      %p124 = por %p122, %p123
      %p125 = scmp.ne.s32.totalorder %s114, %s117
      %p126 = scmp.eq.s32.totalorder %s20, 1
      %p127 = por %p125, %p126
      %p128 = scmp.ne.s32.totalorder %s117, %s118
      %p129 = scmp.eq.s32.totalorder %s20, 0
      %p130 = por %p128, %p129
      %p131 = scmp.ne.s32.totalorder %s117, %s118
      %p132 = scmp.eq.s32.totalorder %s21, 1
      %p133 = por %p131, %p132
      %p135 = scmp.ne.s32.totalorder %s118, %s134
      %p136 = scmp.eq.s32.totalorder %s21, 0
      %p137 = por %p135, %p136
      %s138 = ssub.s32 %s15, %s22
      %p139 = scmp.eq.s32.totalorder %s138, 0
      %s141 = sadd.s32 %s140, 1
      %s142 = scalar_select %p139, %s140, %s141
      %p145 = pneg %p139
      %p146 = scmp.eq.s32.totalorder %s15, 1
      %p147 = por %p145, %p146
      %p148 = scmp.ne.s32.totalorder %s140, %s143
      %p149 = scmp.eq.s32.totalorder %s15, 0
      %p150 = por %p148, %p149
      %p151 = scmp.ne.s32.totalorder %s140, %s143
      %p152 = scmp.eq.s32.totalorder %s20, 1
      %p153 = por %p151, %p152
      %p154 = scmp.ne.s32.totalorder %s143, %s144
      %p155 = scmp.eq.s32.totalorder %s20, 0
      %p156 = por %p154, %p155
      %p157 = scmp.ne.s32.totalorder %s143, %s144
      %p158 = scmp.eq.s32.totalorder %s21, 1
      %p159 = por %p157, %p158
      %p161 = scmp.ne.s32.totalorder %s144, %s160
      %p162 = scmp.eq.s32.totalorder %s21, 0
      %p163 = por %p161, %p162
      %p164 = scmp.le.s32.totalorder 1, %s15
      %p165 = scmp.lt.s32.totalorder %s15, 3
      %p166 = pnand %p164, %p165
      %p167 = pneg %p166
      // Predicated region
      $region9: #{model_forward.5} parent=5 // pred_check
        _
      $region10: #{model_forward.5} parent=5 // pred_check_branch
        %169 = sbr.rel (%p166) target = $region12
      $region11: #{model_forward.5} parent=5 // pred_region
        %s170 = ssub.s32 %s15, 1
        // Predicated region
        $region13: #{model_forward.5} parent=11 // pred_check
          %p171 = pneg %p62
        $region14: #{model_forward.5} parent=11 // pred_check_branch
          %173 = sbr.rel (%p171) target = $region16
        $region15: #{model_forward.5} parent=11 // pred_region
          _
        $region16: #{model_forward.5} parent=11 // pred_fallthru
          _
        // Predicated region
        $region17: #{model_forward.5} parent=11 // pred_check
          %p174 = pneg %p83
        $region18: #{model_forward.5} parent=11 // pred_check_branch
          %176 = sbr.rel (%p174) target = $region20
        $region19: #{model_forward.5} parent=11 // pred_region
          _
        $region20: #{model_forward.5} parent=11 // pred_fallthru
          _
        // Predicated region
        $region21: #{model_forward.5} parent=11 // pred_check
          %p177 = pneg %p104
        $region22: #{model_forward.5} parent=11 // pred_check_branch
          %179 = sbr.rel (%p177) target = $region24
        $region23: #{model_forward.5} parent=11 // pred_region
          _
        $region24: #{model_forward.5} parent=11 // pred_fallthru
          _
      $region12: #{model_forward.5} parent=5 // pred_fallthru
        _
      %p180 = scmp.lt.s32.totalorder %s15, 2
      // Predicated region
      $region25: #{model_forward.5} parent=5 // pred_check
        %p181 = pneg %p180
      $region26: #{model_forward.5} parent=5 // pred_check_branch
        %183 = sbr.rel (%p181) target = $region28
      $region27: #{model_forward.5} parent=5 // pred_region
        // Predicated region
        $region29: #{model_forward.5} parent=27 // pred_check
          %p184 = pneg %p35
        $region30: #{model_forward.5} parent=27 // pred_check_branch
          %186 = sbr.rel (%p184) target = $region32
        $region31: #{model_forward.5} parent=27 // pred_region
          %p187 = scmp.lt.s32.totalorder %s15, 1
          %s188 = scalar_select %p187, %s15, 1
          %s189 = smul.addr %s188, 32
          %s190 = smul.addr %s189, 4
          %s191 = scalar_lea.vmem %s0, %s190
        $region32: #{model_forward.5} parent=27 // pred_fallthru
          _
      $region28: #{model_forward.5} parent=5 // pred_fallthru
        _
      %p192 = scmp.le.s32.totalorder 1, %s15
      %p193 = scmp.lt.s32.totalorder %s15, 3
      %p194 = pnand %p192, %p193
      %p195 = pneg %p194
      // Predicated region
      $region33: #{model_forward.5} parent=5 // pred_check
        _
      $region34: #{model_forward.5} parent=5 // pred_check_branch
        %197 = sbr.rel (%p194) target = $region36
      $region35: #{model_forward.5} parent=5 // pred_region
        %s198 = ssub.s32 %s15, 1
        %p199 = scmp.lt.s32.totalorder %s20, 1
        %s200 = scalar_select %p199, %s20, 1
        %s201 = smul.addr %s200, 32
        %s202 = smul.addr %s201, 4
        %s203 = scalar_lea.vmem %s0, %s202
        %p204 = pneg %p41
        %p205 = pneg %p38
        %p206 = pneg %p62
        %p207 = pneg %p59
        %p208 = pneg %p83
        %p209 = pneg %p80
        %p210 = pneg %p104
        %p211 = pneg %p101
        %p212 = pneg %p130
        %p213 = pneg %p127
        %p214 = scmp.lt.s32.totalorder %s20, 1
        %s215 = scalar_select %p214, %s20, 1
        %s216 = smul.addr %s215, 32
        %s217 = smul.addr %s216, 4
        %s218 = scalar_lea.vmem %s4, %s217
        %p219 = pneg %p156
        %p220 = pneg %p153
        %s221 = sand.u32 %s143, 1
        %s222 = scalar_lea.sflag [#allocation4], %s221
        %s223 = sand.u32 %s143, 1
        %s224 = smul.addr %s223, 2
        %s225 = scalar_lea.vmem [#allocation3], %s224
        %p226 = scmp.lt.s32.totalorder %s20, 1
        %s227 = scalar_select %p226, %s20, 1
        %s228 = smul.addr %s227, 32
        %s229 = smul.addr %s228, 4
        %s230 = scalar_lea.vmem %s0, %s229
        %p231 = scmp.lt.s32.totalorder %s20, 1
        %s232 = scalar_select %p231, %s20, 1
        %s233 = smul.addr %s232, 32
        %s234 = smul.addr %s233, 4
        %s235 = scalar_lea.vmem %s4, %s234
        %vm237 = vcmask 130048
        %238 = vst.msk [vmem:[#allocation2] sm:$0xff] %vm237, 0.0
        %239 = vst.msk [vmem:[#allocation2 + $0x8] sm:$0xff] %vm237, 0.0
        %vm240 = vcmask 123904
        %241 = vst.msk [vmem:[#allocation2 + $0x10] sm:$0x3] %vm240, 0.0
        %s242 = scalar_lea.vmem [#allocation2], 408
        %243 = vst.msk [vmem:[%s242] sm:$0xff] %vm237, 0.0
        %244 = vst.msk [vmem:[%s242 + $0x8] sm:$0xff] %vm237, 0.0
        %245 = vst.msk [vmem:[%s242 + $0x10] sm:$0x3] %vm240, 0.0
        %s246 = scalar_lea.vmem [#allocation2], 24
        %vm247 = vcmask 122880
        %248 = vst.msk [vmem:[%s246] sm:$0x1] %vm247, 0.0
        %249 = vst.msk [vmem:[%s246 + $0x18] sm:$0x1] %vm247, 0.0
        %250 = vst.msk [vmem:[%s246 + $0x30] sm:$0x1] %vm247, 0.0
        %251 = vst.msk [vmem:[%s246 + $0x48] sm:$0x1] %vm247, 0.0
        %252 = vst.msk [vmem:[%s246 + $0x60] sm:$0x1] %vm247, 0.0
        %253 = vst.msk [vmem:[%s246 + $0x78] sm:$0x1] %vm247, 0.0
        %254 = vst.msk [vmem:[%s246 + $0x90] sm:$0x1] %vm247, 0.0
        %255 = vst.msk [vmem:[%s246 + $0xa8] sm:$0x1] %vm247, 0.0
        %256 = vst.msk [vmem:[%s246 + $0xc0] sm:$0x1] %vm247, 0.0
        %257 = vst.msk [vmem:[%s246 + $0xd8] sm:$0x1] %vm247, 0.0
        %258 = vst.msk [vmem:[%s246 + $0xf0] sm:$0x1] %vm247, 0.0
        %259 = vst.msk [vmem:[%s246 + $0x108] sm:$0x1] %vm247, 0.0
        %260 = vst.msk [vmem:[%s246 + $0x120] sm:$0x1] %vm247, 0.0
        %261 = vst.msk [vmem:[%s246 + $0x138] sm:$0x1] %vm247, 0.0
        %262 = vst.msk [vmem:[%s246 + $0x150] sm:$0x1] %vm247, 0.0
        %263 = vst.msk [vmem:[%s246 + $0x168] sm:$0x1] %vm247, 0.0
        %264 = vst.msk [vmem:[%s246 + $0x11] sm:$0x1] %vm247, 0.0
        %265 = vst.msk [vmem:[%s246 + $0x29] sm:$0x1] %vm247, 0.0
        %266 = vst.msk [vmem:[%s246 + $0x41] sm:$0x1] %vm247, 0.0
        %267 = vst.msk [vmem:[%s246 + $0x59] sm:$0x1] %vm247, 0.0
        %268 = vst.msk [vmem:[%s246 + $0x71] sm:$0x1] %vm247, 0.0
        %269 = vst.msk [vmem:[%s246 + $0x89] sm:$0x1] %vm247, 0.0
        %270 = vst.msk [vmem:[%s246 + $0xa1] sm:$0x1] %vm247, 0.0
        %271 = vst.msk [vmem:[%s246 + $0xb9] sm:$0x1] %vm247, 0.0
        %272 = vst.msk [vmem:[%s246 + $0xd1] sm:$0x1] %vm247, 0.0
        %273 = vst.msk [vmem:[%s246 + $0xe9] sm:$0x1] %vm247, 0.0
        %274 = vst.msk [vmem:[%s246 + $0x101] sm:$0x1] %vm247, 0.0
        %275 = vst.msk [vmem:[%s246 + $0x119] sm:$0x1] %vm247, 0.0
        %276 = vst.msk [vmem:[%s246 + $0x131] sm:$0x1] %vm247, 0.0
        %277 = vst.msk [vmem:[%s246 + $0x149] sm:$0x1] %vm247, 0.0
        %278 = vst.msk [vmem:[%s246 + $0x161] sm:$0x1] %vm247, 0.0
        %279 = vst.msk [vmem:[%s246 + $0x179] sm:$0x1] %vm247, 0.0
        %v280 = vld [vmem:[%s230] sm:$0xf]
        %v281 = vld [vmem:[%s230 + $0x4] sm:$0xf]
        %v282 = vld [vmem:[%s230 + $0x8] sm:$0xf]
        %v283 = vld [vmem:[%s230 + $0xc] sm:$0xf]
        %v284 = vld [vmem:[%s230 + $0x10] sm:$0xf]
        %v285 = vld [vmem:[%s230 + $0x14] sm:$0xf]
        %v286 = vld [vmem:[%s230 + $0x18] sm:$0xf]
        %v287 = vld [vmem:[%s230 + $0x1c] sm:$0xf]
        %v288 = vld [vmem:[%s230 + $0x20] sm:$0xf]
        %v289 = vld [vmem:[%s230 + $0x24] sm:$0xf]
        %v290 = vld [vmem:[%s230 + $0x28] sm:$0xf]
        %v291 = vld [vmem:[%s230 + $0x2c] sm:$0xf]
        %v292 = vld [vmem:[%s230 + $0x30] sm:$0xf]
        %v293 = vld [vmem:[%s230 + $0x34] sm:$0xf]
        %v294 = vld [vmem:[%s230 + $0x38] sm:$0xf]
        %v295 = vld [vmem:[%s230 + $0x3c] sm:$0xf]
        %v296 = vld [vmem:[%s230 + $0x40] sm:$0xf]
        %v297 = vld [vmem:[%s230 + $0x44] sm:$0xf]
        %v298 = vld [vmem:[%s230 + $0x48] sm:$0xf]
        %v299 = vld [vmem:[%s230 + $0x4c] sm:$0xf]
        %v300 = vld [vmem:[%s230 + $0x50] sm:$0xf]
        %v301 = vld [vmem:[%s230 + $0x54] sm:$0xf]
        %v302 = vld [vmem:[%s230 + $0x58] sm:$0xf]
        %v303 = vld [vmem:[%s230 + $0x5c] sm:$0xf]
        %v304 = vld [vmem:[%s230 + $0x60] sm:$0xf]
        %v305 = vld [vmem:[%s230 + $0x64] sm:$0xf]
        %v306 = vld [vmem:[%s230 + $0x68] sm:$0xf]
        %v307 = vld [vmem:[%s230 + $0x6c] sm:$0xf]
        %v308 = vld [vmem:[%s230 + $0x70] sm:$0xf]
        %v309 = vld [vmem:[%s230 + $0x74] sm:$0xf]
        %v310 = vld [vmem:[%s230 + $0x78] sm:$0xf]
        %v311 = vld [vmem:[%s230 + $0x7c] sm:$0xf]
        %v312 = vunpack.c.l.bf16 %v280
        %v313 = vunpack.c.l.bf16 %v281
        %v314 = vunpack.c.l.bf16 %v282
        %v315 = vunpack.c.l.bf16 %v283
        %v316 = vunpack.c.l.bf16 %v284
        %v317 = vunpack.c.l.bf16 %v285
        %v318 = vunpack.c.l.bf16 %v286
        %v319 = vunpack.c.l.bf16 %v287
        %v320 = vunpack.c.l.bf16 %v288
        %v321 = vunpack.c.l.bf16 %v289
        %v322 = vunpack.c.l.bf16 %v290
        %v323 = vunpack.c.l.bf16 %v291
        %v324 = vunpack.c.l.bf16 %v292
        %v325 = vunpack.c.l.bf16 %v293
        %v326 = vunpack.c.l.bf16 %v294
        %v327 = vunpack.c.l.bf16 %v295
        %v328 = vunpack.c.l.bf16 %v296
        %v329 = vunpack.c.l.bf16 %v297
        %v330 = vunpack.c.l.bf16 %v298
        %v331 = vunpack.c.l.bf16 %v299
        %v332 = vunpack.c.l.bf16 %v300
        %v333 = vunpack.c.l.bf16 %v301
        %v334 = vunpack.c.l.bf16 %v302
        %v335 = vunpack.c.l.bf16 %v303
        %v336 = vunpack.c.l.bf16 %v304
        %v337 = vunpack.c.l.bf16 %v305
        %v338 = vunpack.c.l.bf16 %v306
        %v339 = vunpack.c.l.bf16 %v307
        %v340 = vunpack.c.l.bf16 %v308
        %v341 = vunpack.c.l.bf16 %v309
        %v342 = vunpack.c.l.bf16 %v310
        %v343 = vunpack.c.l.bf16 %v311
        %v344 = vld [vmem:[%s1] sm:$0x1]
        %v345 = vld [vmem:[%s2] sm:$0x1]
        %v347 = vlaneseq
        %v348 = vshrl.u32 %v347, 7
        %v349 = vsub.s32 0, %v348
        %v350 = vrot.slane %v344, %v349
        %v352 = vmul.f32 %v312, %v350
        %v353 = vmul.f32 %v313, %v350
        %v354 = vmul.f32 %v314, %v350
        %v355 = vmul.f32 %v315, %v350
        %v356 = vmul.f32 %v316, %v350
        %v357 = vmul.f32 %v317, %v350
        %v358 = vmul.f32 %v318, %v350
        %v359 = vmul.f32 %v319, %v350
        %v360 = vmul.f32 %v320, %v350
        %v361 = vmul.f32 %v321, %v350
        %v362 = vmul.f32 %v322, %v350
        %v363 = vmul.f32 %v323, %v350
        %v364 = vmul.f32 %v324, %v350
        %v365 = vmul.f32 %v325, %v350
        %v366 = vmul.f32 %v326, %v350
        %v367 = vmul.f32 %v327, %v350
        %v368 = vmul.f32 %v328, %v350
        %v369 = vmul.f32 %v329, %v350
        %v370 = vmul.f32 %v330, %v350
        %v371 = vmul.f32 %v331, %v350
        %v372 = vmul.f32 %v332, %v350
        %v373 = vmul.f32 %v333, %v350
        %v374 = vmul.f32 %v334, %v350
        %v375 = vmul.f32 %v335, %v350
        %v376 = vmul.f32 %v336, %v350
        %v377 = vmul.f32 %v337, %v350
        %v378 = vmul.f32 %v338, %v350
        %v379 = vmul.f32 %v339, %v350
        %v380 = vmul.f32 %v340, %v350
        %v381 = vmul.f32 %v341, %v350
        %v382 = vmul.f32 %v342, %v350
        %v383 = vmul.f32 %v343, %v350
        %v385 = vlaneseq
        %v386 = vshrl.u32 %v385, 7
        %v387 = vsub.s32 0, %v386
        %v388 = vrot.slane %v345, %v387
        %v390 = vadd.f32 %v352, %v388
        %v391 = vadd.f32 %v353, %v388
        %v392 = vadd.f32 %v354, %v388
        %v393 = vadd.f32 %v355, %v388
        %v394 = vadd.f32 %v356, %v388
        %v395 = vadd.f32 %v357, %v388
        %v396 = vadd.f32 %v358, %v388
        %v397 = vadd.f32 %v359, %v388
        %v398 = vadd.f32 %v360, %v388
        %v399 = vadd.f32 %v361, %v388
        %v400 = vadd.f32 %v362, %v388
        %v401 = vadd.f32 %v363, %v388
        %v402 = vadd.f32 %v364, %v388
        %v403 = vadd.f32 %v365, %v388
        %v404 = vadd.f32 %v366, %v388
        %v405 = vadd.f32 %v367, %v388
        %v406 = vadd.f32 %v368, %v388
        %v407 = vadd.f32 %v369, %v388
        %v408 = vadd.f32 %v370, %v388
        %v409 = vadd.f32 %v371, %v388
        %v410 = vadd.f32 %v372, %v388
        %v411 = vadd.f32 %v373, %v388
        %v412 = vadd.f32 %v374, %v388
        %v413 = vadd.f32 %v375, %v388
        %v414 = vadd.f32 %v376, %v388
        %v415 = vadd.f32 %v377, %v388
        %v416 = vadd.f32 %v378, %v388
        %v417 = vadd.f32 %v379, %v388
        %v418 = vadd.f32 %v380, %v388
        %v419 = vadd.f32 %v381, %v388
        %v420 = vadd.f32 %v382, %v388
        %v421 = vadd.f32 %v383, %v388
        %v422 = vmax.f32 %v390, 0.0
        %v423 = vmax.f32 %v391, 0.0
        %v424 = vmax.f32 %v392, 0.0
        %v425 = vmax.f32 %v393, 0.0
        %v426 = vmax.f32 %v394, 0.0
        %v427 = vmax.f32 %v395, 0.0
        %v428 = vmax.f32 %v396, 0.0
        %v429 = vmax.f32 %v397, 0.0
        %v430 = vmax.f32 %v398, 0.0
        %v431 = vmax.f32 %v399, 0.0
        %v432 = vmax.f32 %v400, 0.0
        %v433 = vmax.f32 %v401, 0.0
        %v434 = vmax.f32 %v402, 0.0
        %v435 = vmax.f32 %v403, 0.0
        %v436 = vmax.f32 %v404, 0.0
        %v437 = vmax.f32 %v405, 0.0
        %v438 = vmax.f32 %v406, 0.0
        %v439 = vmax.f32 %v407, 0.0
        %v440 = vmax.f32 %v408, 0.0
        %v441 = vmax.f32 %v409, 0.0
        %v442 = vmax.f32 %v410, 0.0
        %v443 = vmax.f32 %v411, 0.0
        %v444 = vmax.f32 %v412, 0.0
        %v445 = vmax.f32 %v413, 0.0
        %v446 = vmax.f32 %v414, 0.0
        %v447 = vmax.f32 %v415, 0.0
        %v448 = vmax.f32 %v416, 0.0
        %v449 = vmax.f32 %v417, 0.0
        %v450 = vmax.f32 %v418, 0.0
        %v451 = vmax.f32 %v419, 0.0
        %v452 = vmax.f32 %v420, 0.0
        %v453 = vmax.f32 %v421, 0.0
        %454 = vst.msk [vmem:[%s246 + $0x1] sm:$0xff] %vm237, %v422
        %455 = vst.msk [vmem:[%s246 + $0x9] sm:$0xff] %vm237, %v423
        %456 = vst.msk [vmem:[%s246 + $0x19] sm:$0xff] %vm237, %v424
        %457 = vst.msk [vmem:[%s246 + $0x21] sm:$0xff] %vm237, %v425
        %458 = vst.msk [vmem:[%s246 + $0x31] sm:$0xff] %vm237, %v426
        %459 = vst.msk [vmem:[%s246 + $0x39] sm:$0xff] %vm237, %v427
        %460 = vst.msk [vmem:[%s246 + $0x49] sm:$0xff] %vm237, %v428
        %461 = vst.msk [vmem:[%s246 + $0x51] sm:$0xff] %vm237, %v429
        %462 = vst.msk [vmem:[%s246 + $0x61] sm:$0xff] %vm237, %v430
        %463 = vst.msk [vmem:[%s246 + $0x69] sm:$0xff] %vm237, %v431
        %464 = vst.msk [vmem:[%s246 + $0x79] sm:$0xff] %vm237, %v432
        %465 = vst.msk [vmem:[%s246 + $0x81] sm:$0xff] %vm237, %v433
        %466 = vst.msk [vmem:[%s246 + $0x91] sm:$0xff] %vm237, %v434
        %467 = vst.msk [vmem:[%s246 + $0x99] sm:$0xff] %vm237, %v435
        %468 = vst.msk [vmem:[%s246 + $0xa9] sm:$0xff] %vm237, %v436
        %469 = vst.msk [vmem:[%s246 + $0xb1] sm:$0xff] %vm237, %v437
        %470 = vst.msk [vmem:[%s246 + $0xc1] sm:$0xff] %vm237, %v438
        %471 = vst.msk [vmem:[%s246 + $0xc9] sm:$0xff] %vm237, %v439
        %472 = vst.msk [vmem:[%s246 + $0xd9] sm:$0xff] %vm237, %v440
        %473 = vst.msk [vmem:[%s246 + $0xe1] sm:$0xff] %vm237, %v441
        %474 = vst.msk [vmem:[%s246 + $0xf1] sm:$0xff] %vm237, %v442
        %475 = vst.msk [vmem:[%s246 + $0xf9] sm:$0xff] %vm237, %v443
        %476 = vst.msk [vmem:[%s246 + $0x109] sm:$0xff] %vm237, %v444
        %477 = vst.msk [vmem:[%s246 + $0x111] sm:$0xff] %vm237, %v445
        %478 = vst.msk [vmem:[%s246 + $0x121] sm:$0xff] %vm237, %v446
        %479 = vst.msk [vmem:[%s246 + $0x129] sm:$0xff] %vm237, %v447
        %480 = vst.msk [vmem:[%s246 + $0x139] sm:$0xff] %vm237, %v448
        %481 = vst.msk [vmem:[%s246 + $0x141] sm:$0xff] %vm237, %v449
        %482 = vst.msk [vmem:[%s246 + $0x151] sm:$0xff] %vm237, %v450
        %483 = vst.msk [vmem:[%s246 + $0x159] sm:$0xff] %vm237, %v451
        %484 = vst.msk [vmem:[%s246 + $0x169] sm:$0xff] %vm237, %v452
        %485 = vst.msk [vmem:[%s246 + $0x171] sm:$0xff] %vm237, %v453
        %v486 = vld [vmem:[#allocation2] sm:$0xff]
        %v487 = vld [vmem:[#allocation2 + $0x8] sm:$0xff]
        %v488 = vld [vmem:[#allocation2 + $0x18] sm:$0xff]
        %v489 = vld [vmem:[#allocation2 + $0x20] sm:$0xff]
        %v490 = vld [vmem:[#allocation2 + $0x30] sm:$0xff]
        %v491 = vld [vmem:[#allocation2 + $0x38] sm:$0xff]
        %v492 = vld [vmem:[#allocation2 + $0x48] sm:$0xff]
        %v493 = vld [vmem:[#allocation2 + $0x50] sm:$0xff]
        %v494 = vld [vmem:[#allocation2 + $0x60] sm:$0xff]
        %v495 = vld [vmem:[#allocation2 + $0x68] sm:$0xff]
        %v496 = vld [vmem:[#allocation2 + $0x78] sm:$0xff]
        %v497 = vld [vmem:[#allocation2 + $0x80] sm:$0xff]
        %v498 = vld [vmem:[#allocation2 + $0x90] sm:$0xff]
        %v499 = vld [vmem:[#allocation2 + $0x98] sm:$0xff]
        %v500 = vld [vmem:[#allocation2 + $0xa8] sm:$0xff]
        %v501 = vld [vmem:[#allocation2 + $0xb0] sm:$0xff]
        %v502 = vld [vmem:[#allocation2 + $0xc0] sm:$0xff]
        %v503 = vld [vmem:[#allocation2 + $0xc8] sm:$0xff]
        %v504 = vld [vmem:[#allocation2 + $0xd8] sm:$0xff]
        %v505 = vld [vmem:[#allocation2 + $0xe0] sm:$0xff]
        %v506 = vld [vmem:[#allocation2 + $0xf0] sm:$0xff]
        %v507 = vld [vmem:[#allocation2 + $0xf8] sm:$0xff]
        %v508 = vld [vmem:[#allocation2 + $0x108] sm:$0xff]
        %v509 = vld [vmem:[#allocation2 + $0x110] sm:$0xff]
        %v510 = vld [vmem:[#allocation2 + $0x120] sm:$0xff]
        %v511 = vld [vmem:[#allocation2 + $0x128] sm:$0xff]
        %v512 = vld [vmem:[#allocation2 + $0x138] sm:$0xff]
        %v513 = vld [vmem:[#allocation2 + $0x140] sm:$0xff]
        %v514 = vld [vmem:[#allocation2 + $0x150] sm:$0xff]
        %v515 = vld [vmem:[#allocation2 + $0x158] sm:$0xff]
        %v516 = vld [vmem:[#allocation2 + $0x168] sm:$0xff]
        %v517 = vld [vmem:[#allocation2 + $0x170] sm:$0xff]
        %v518 = vpack.c.bf16 %v487, %v486
        %v519 = vpack.c.bf16 %v489, %v488
        %v520 = vpack.c.bf16 %v491, %v490
        %v521 = vpack.c.bf16 %v493, %v492
        %v522 = vpack.c.bf16 %v495, %v494
        %v523 = vpack.c.bf16 %v497, %v496
        %v524 = vpack.c.bf16 %v499, %v498
        %v525 = vpack.c.bf16 %v501, %v500
        %v526 = vpack.c.bf16 %v503, %v502
        %v527 = vpack.c.bf16 %v505, %v504
        %v528 = vpack.c.bf16 %v507, %v506
        %v529 = vpack.c.bf16 %v509, %v508
        %v530 = vpack.c.bf16 %v511, %v510
        %v531 = vpack.c.bf16 %v513, %v512
        %v532 = vpack.c.bf16 %v515, %v514
        %v533 = vpack.c.bf16 %v517, %v516
        %v534 = vld [vmem:[%s3] sm:$0xf]
        %v535 = vld [vmem:[%s3 + $0x4] sm:$0xf]
        %v536 = vld [vmem:[#allocation2 + $0x1] sm:$0xff]
        %v537 = vld [vmem:[#allocation2 + $0x9] sm:$0xff]
        %v538 = vld [vmem:[#allocation2 + $0x19] sm:$0xff]
        %v539 = vld [vmem:[#allocation2 + $0x21] sm:$0xff]
        %v540 = vld [vmem:[#allocation2 + $0x31] sm:$0xff]
        %v541 = vld [vmem:[#allocation2 + $0x39] sm:$0xff]
        %v542 = vld [vmem:[#allocation2 + $0x49] sm:$0xff]
        %v543 = vld [vmem:[#allocation2 + $0x51] sm:$0xff]
        %v544 = vld [vmem:[#allocation2 + $0x61] sm:$0xff]
        %v545 = vld [vmem:[#allocation2 + $0x69] sm:$0xff]
        %v546 = vld [vmem:[#allocation2 + $0x79] sm:$0xff]
        %v547 = vld [vmem:[#allocation2 + $0x81] sm:$0xff]
        %v548 = vld [vmem:[#allocation2 + $0x91] sm:$0xff]
        %v549 = vld [vmem:[#allocation2 + $0x99] sm:$0xff]
        %v550 = vld [vmem:[#allocation2 + $0xa9] sm:$0xff]
        %v551 = vld [vmem:[#allocation2 + $0xb1] sm:$0xff]
        %v552 = vld [vmem:[#allocation2 + $0xc1] sm:$0xff]
        %v553 = vld [vmem:[#allocation2 + $0xc9] sm:$0xff]
        %v554 = vld [vmem:[#allocation2 + $0xd9] sm:$0xff]
        %v555 = vld [vmem:[#allocation2 + $0xe1] sm:$0xff]
        %v556 = vld [vmem:[#allocation2 + $0xf1] sm:$0xff]
        %v557 = vld [vmem:[#allocation2 + $0xf9] sm:$0xff]
        %v558 = vld [vmem:[#allocation2 + $0x109] sm:$0xff]
        %v559 = vld [vmem:[#allocation2 + $0x111] sm:$0xff]
        %v560 = vld [vmem:[#allocation2 + $0x121] sm:$0xff]
        %v561 = vld [vmem:[#allocation2 + $0x129] sm:$0xff]
        %v562 = vld [vmem:[#allocation2 + $0x139] sm:$0xff]
        %v563 = vld [vmem:[#allocation2 + $0x141] sm:$0xff]
        %v564 = vld [vmem:[#allocation2 + $0x151] sm:$0xff]
        %v565 = vld [vmem:[#allocation2 + $0x159] sm:$0xff]
        %v566 = vld [vmem:[#allocation2 + $0x169] sm:$0xff]
        %v567 = vld [vmem:[#allocation2 + $0x171] sm:$0xff]
        %v568 = vpack.c.bf16 %v537, %v536
        %v569 = vpack.c.bf16 %v539, %v538
        %v570 = vpack.c.bf16 %v541, %v540
        %v571 = vpack.c.bf16 %v543, %v542
        %v572 = vpack.c.bf16 %v545, %v544
        %v573 = vpack.c.bf16 %v547, %v546
        %v574 = vpack.c.bf16 %v549, %v548
        %v575 = vpack.c.bf16 %v551, %v550
        %v576 = vpack.c.bf16 %v553, %v552
        %v577 = vpack.c.bf16 %v555, %v554
        %v578 = vpack.c.bf16 %v557, %v556
        %v579 = vpack.c.bf16 %v559, %v558
        %v580 = vpack.c.bf16 %v561, %v560
        %v581 = vpack.c.bf16 %v563, %v562
        %v582 = vpack.c.bf16 %v565, %v564
        %v583 = vpack.c.bf16 %v567, %v566
        %s584 = scalar_lea.vmem %s3, 8
        %v585 = vld [vmem:[%s584] sm:$0xf]
        %v586 = vld [vmem:[%s584 + $0x4] sm:$0xf]
        %v589 = vunpack.c.l.b16 %v585
        %v590 = vunpack.c.l.b16 %v586
        %v591 = vpack.c.b16 %v590, %v589
        %v594 = vsel %vm237, %v568, 0
        %v597 = vsel %vm237, %v569, 0
        %v600 = vsel %vm237, %v570, 0
        %v603 = vsel %vm237, %v571, 0
        %v606 = vsel %vm237, %v572, 0
        %v609 = vsel %vm237, %v573, 0
        %v612 = vsel %vm237, %v574, 0
        %v615 = vsel %vm237, %v575, 0
        %v618 = vsel %vm237, %v576, 0
        %v621 = vsel %vm237, %v577, 0
        %v624 = vsel %vm237, %v578, 0
        %v627 = vsel %vm237, %v579, 0
        %v630 = vsel %vm237, %v580, 0
        %v633 = vsel %vm237, %v581, 0
        %v636 = vsel %vm237, %v582, 0
        %v639 = vsel %vm237, %v583, 0
        %641 = vmatprep.subr.bf16.mxu0 0
        %642 = vmatpush1.bf16.msra.mxu0 %v591
        %643 = vmatprep.subr.bf16.mxu0 0
        %644 = vmatpush1.bf16.msra.mxu0 0
        %645 = vmatprep.subr.bf16.mxu0 0
        %646 = vmatpush1.bf16.msra.mxu0 0
        %647 = vmatprep.subr.bf16.mxu0 0
        %648 = vmatpush1.bf16.msra.mxu0 0
        %649 = vmatprep.subr.bf16.mxu0 0
        %650 = vmatpush1.bf16.msra.mxu0 0
        %651 = vmatprep.subr.bf16.mxu0 0
        %652 = vmatpush1.bf16.msra.mxu0 0
        %653 = vmatprep.subr.bf16.mxu0 0
        %654 = vmatpush1.bf16.msra.mxu0 0
        %655 = vmatprep.subr.bf16.mxu0 0
        %656 = vmatpush1.bf16.msra.mxu0 0
        %657 = vmatprep.subr.bf16.mxu0 0
        %658 = vmatpush1.bf16.msra.mxu0 0
        %659 = vmatprep.subr.bf16.mxu0 0
        %660 = vmatpush1.bf16.msra.mxu0 0
        %661 = vmatprep.subr.bf16.mxu0 0
        %662 = vmatpush1.bf16.msra.mxu0 0
        %663 = vmatprep.subr.bf16.mxu0 0
        %664 = vmatpush1.bf16.msra.mxu0 0
        %665 = vmatprep.subr.bf16.mxu0 0
        %666 = vmatpush1.bf16.msra.mxu0 0
        %667 = vmatprep.subr.bf16.mxu0 0
        %668 = vmatpush1.bf16.msra.mxu0 0
        %669 = vmatprep.subr.bf16.mxu0 0
        %670 = vmatpush1.bf16.msra.mxu0 0
        %671 = vmatprep.subr.bf16.mxu0 0
        %672 = vmatpush1.bf16.msra.mxu0 0
        %673 = vmatprep.mubr.bf16.mxu0 0
        %674 = vmatmul.mubr.bf16.gmra.mrb[0].mxu0 %v594
        %v675 = vpop.f32.mrb[0].mxu0
        %v676 = vadd.f32 0.0, %v675
        %v677 = vpop.f32.mrb[0].mxu0
        %v678 = vpop.f32.mrb[0].mxu0
        %v679 = vadd.f32 0.0, %v678
        %v680 = vpop.f32.mrb[0].mxu0
        %681 = vmatprep.mubr.bf16.mxu0 0
        %682 = vmatmul.mubr.bf16.gmra.mrb[0].mxu0 %v597
        %v683 = vpop.f32.mrb[0].mxu0
        %v684 = vadd.f32 0.0, %v683
        %v685 = vpop.f32.mrb[0].mxu0
        %v686 = vpop.f32.mrb[0].mxu0
        %v687 = vadd.f32 0.0, %v686
        %v688 = vpop.f32.mrb[0].mxu0
        %689 = vmatprep.mubr.bf16.mxu0 0
        %690 = vmatmul.mubr.bf16.gmra.mrb[0].mxu0 %v600
        %v691 = vpop.f32.mrb[0].mxu0
        %v692 = vadd.f32 0.0, %v691
        %v693 = vpop.f32.mrb[0].mxu0
        %v694 = vpop.f32.mrb[0].mxu0
        %v695 = vadd.f32 0.0, %v694
        %v696 = vpop.f32.mrb[0].mxu0
        %697 = vmatprep.mubr.bf16.mxu0 0
        %698 = vmatmul.mubr.bf16.gmra.mrb[0].mxu0 %v603
        %v699 = vpop.f32.mrb[0].mxu0
        %v700 = vadd.f32 0.0, %v699
        %v701 = vpop.f32.mrb[0].mxu0
        %v702 = vpop.f32.mrb[0].mxu0
        %v703 = vadd.f32 0.0, %v702
        %v704 = vpop.f32.mrb[0].mxu0
        %705 = vmatprep.mubr.bf16.mxu0 0
        %706 = vmatmul.mubr.bf16.gmra.mrb[0].mxu0 %v606
        %v707 = vpop.f32.mrb[0].mxu0
        %v708 = vadd.f32 0.0, %v707
        %v709 = vpop.f32.mrb[0].mxu0
        %v710 = vpop.f32.mrb[0].mxu0
        %v711 = vadd.f32 0.0, %v710
        %v712 = vpop.f32.mrb[0].mxu0
        %713 = vmatprep.mubr.bf16.mxu0 0
        %714 = vmatmul.mubr.bf16.gmra.mrb[0].mxu0 %v609
        %v715 = vpop.f32.mrb[0].mxu0
        %v716 = vadd.f32 0.0, %v715
        %v717 = vpop.f32.mrb[0].mxu0
        %v718 = vpop.f32.mrb[0].mxu0
        %v719 = vadd.f32 0.0, %v718
        %v720 = vpop.f32.mrb[0].mxu0
        %721 = vmatprep.mubr.bf16.mxu0 0
        %722 = vmatmul.mubr.bf16.gmra.mrb[0].mxu0 %v612
        %v723 = vpop.f32.mrb[0].mxu0
        %v724 = vadd.f32 0.0, %v723
        %v725 = vpop.f32.mrb[0].mxu0
        %v726 = vpop.f32.mrb[0].mxu0
        %v727 = vadd.f32 0.0, %v726
        %v728 = vpop.f32.mrb[0].mxu0
        %729 = vmatprep.mubr.bf16.mxu0 0
        %730 = vmatmul.mubr.bf16.gmra.mrb[0].mxu0 %v615
        %v731 = vpop.f32.mrb[0].mxu0
        %v732 = vadd.f32 0.0, %v731
        %v733 = vpop.f32.mrb[0].mxu0
        %v734 = vpop.f32.mrb[0].mxu0
        %v735 = vadd.f32 0.0, %v734
        %v736 = vpop.f32.mrb[0].mxu0
        %737 = vmatprep.mubr.bf16.mxu0 0
        %738 = vmatmul.mubr.bf16.gmra.mrb[0].mxu0 %v618
        %v739 = vpop.f32.mrb[0].mxu0
        %v740 = vadd.f32 0.0, %v739
        %v741 = vpop.f32.mrb[0].mxu0
        %v742 = vpop.f32.mrb[0].mxu0
        %v743 = vadd.f32 0.0, %v742
        %v744 = vpop.f32.mrb[0].mxu0
        %745 = vmatprep.mubr.bf16.mxu0 0
        %746 = vmatmul.mubr.bf16.gmra.mrb[0].mxu0 %v621
        %v747 = vpop.f32.mrb[0].mxu0
        %v748 = vadd.f32 0.0, %v747
        %v749 = vpop.f32.mrb[0].mxu0
        %v750 = vpop.f32.mrb[0].mxu0
        %v751 = vadd.f32 0.0, %v750
        %v752 = vpop.f32.mrb[0].mxu0
        %753 = vmatprep.mubr.bf16.mxu0 0
        %754 = vmatmul.mubr.bf16.gmra.mrb[0].mxu0 %v624
        %v755 = vpop.f32.mrb[0].mxu0
        %v756 = vadd.f32 0.0, %v755
        %v757 = vpop.f32.mrb[0].mxu0
        %v758 = vpop.f32.mrb[0].mxu0
        %v759 = vadd.f32 0.0, %v758
        %v760 = vpop.f32.mrb[0].mxu0
        %761 = vmatprep.mubr.bf16.mxu0 0
        %762 = vmatmul.mubr.bf16.gmra.mrb[0].mxu0 %v627
        %v763 = vpop.f32.mrb[0].mxu0
        %v764 = vadd.f32 0.0, %v763
        %v765 = vpop.f32.mrb[0].mxu0
        %v766 = vpop.f32.mrb[0].mxu0
        %v767 = vadd.f32 0.0, %v766
        %v768 = vpop.f32.mrb[0].mxu0
        %769 = vmatprep.mubr.bf16.mxu0 0
        %770 = vmatmul.mubr.bf16.gmra.mrb[0].mxu0 %v630
        %v771 = vpop.f32.mrb[0].mxu0
        %v772 = vadd.f32 0.0, %v771
        %v773 = vpop.f32.mrb[0].mxu0
        %v774 = vpop.f32.mrb[0].mxu0
        %v775 = vadd.f32 0.0, %v774
        %v776 = vpop.f32.mrb[0].mxu0
        %777 = vmatprep.mubr.bf16.mxu0 0
        %778 = vmatmul.mubr.bf16.gmra.mrb[0].mxu0 %v633
        %v779 = vpop.f32.mrb[0].mxu0
        %v780 = vadd.f32 0.0, %v779
        %v781 = vpop.f32.mrb[0].mxu0
        %v782 = vpop.f32.mrb[0].mxu0
        %v783 = vadd.f32 0.0, %v782
        %v784 = vpop.f32.mrb[0].mxu0
        %785 = vmatprep.mubr.bf16.mxu0 0
        %786 = vmatmul.mubr.bf16.gmra.mrb[0].mxu0 %v636
        %v787 = vpop.f32.mrb[0].mxu0
        %v788 = vadd.f32 0.0, %v787
        %v789 = vpop.f32.mrb[0].mxu0
        %v790 = vpop.f32.mrb[0].mxu0
        %v791 = vadd.f32 0.0, %v790
        %v792 = vpop.f32.mrb[0].mxu0
        %793 = vmatprep.mubr.bf16.mxu0 0
        %794 = vmatmul.mubr.bf16.gmra.mrb[0].mxu0 %v639
        %v795 = vpop.f32.mrb[0].mxu0
        %v796 = vadd.f32 0.0, %v795
        %v797 = vpop.f32.mrb[0].mxu0
        %v798 = vpop.f32.mrb[0].mxu0
        %v799 = vadd.f32 0.0, %v798
        %v800 = vpop.f32.mrb[0].mxu0
        %801 = vdwg.mxu0
        %v804 = vunpack.c.l.b16 %v534
        %v805 = vunpack.c.l.b16 %v535
        %v806 = vpack.c.b16 %v805, %v804
        %v809 = vsel %vm237, %v518, 0
        %v812 = vsel %vm237, %v519, 0
        %v815 = vsel %vm237, %v520, 0
        %v818 = vsel %vm237, %v521, 0
        %v821 = vsel %vm237, %v522, 0
        %v824 = vsel %vm237, %v523, 0
        %v827 = vsel %vm237, %v524, 0
        %v830 = vsel %vm237, %v525, 0
        %v833 = vsel %vm237, %v526, 0
        %v836 = vsel %vm237, %v527, 0
        %v839 = vsel %vm237, %v528, 0
        %v842 = vsel %vm237, %v529, 0
        %v845 = vsel %vm237, %v530, 0
        %v848 = vsel %vm237, %v531, 0
        %v851 = vsel %vm237, %v532, 0
        %v854 = vsel %vm237, %v533, 0
        %856 = vmatprep.subr.bf16.mxu0 0
        %857 = vmatpush1.bf16.msra.mxu0 %v806
        %858 = vmatprep.subr.bf16.mxu0 0
        %859 = vmatpush1.bf16.msra.mxu0 0
        %860 = vmatprep.subr.bf16.mxu0 0
        %861 = vmatpush1.bf16.msra.mxu0 0
        %862 = vmatprep.subr.bf16.mxu0 0
        %863 = vmatpush1.bf16.msra.mxu0 0
        %864 = vmatprep.subr.bf16.mxu0 0
        %865 = vmatpush1.bf16.msra.mxu0 0
        %866 = vmatprep.subr.bf16.mxu0 0
        %867 = vmatpush1.bf16.msra.mxu0 0
        %868 = vmatprep.subr.bf16.mxu0 0
        %869 = vmatpush1.bf16.msra.mxu0 0
        %870 = vmatprep.subr.bf16.mxu0 0
        %871 = vmatpush1.bf16.msra.mxu0 0
        %872 = vmatprep.subr.bf16.mxu0 0
        %873 = vmatpush1.bf16.msra.mxu0 0
        %874 = vmatprep.subr.bf16.mxu0 0
        %875 = vmatpush1.bf16.msra.mxu0 0
        %876 = vmatprep.subr.bf16.mxu0 0
        %877 = vmatpush1.bf16.msra.mxu0 0
        %878 = vmatprep.subr.bf16.mxu0 0
        %879 = vmatpush1.bf16.msra.mxu0 0
        %880 = vmatprep.subr.bf16.mxu0 0
        %881 = vmatpush1.bf16.msra.mxu0 0
        %882 = vmatprep.subr.bf16.mxu0 0
        %883 = vmatpush1.bf16.msra.mxu0 0
        %884 = vmatprep.subr.bf16.mxu0 0
        %885 = vmatpush1.bf16.msra.mxu0 0
        %886 = vmatprep.subr.bf16.mxu0 0
        %887 = vmatpush1.bf16.msra.mxu0 0
        %888 = vmatprep.mubr.bf16.mxu0 0
        %889 = vmatmul.mubr.bf16.gmra.mrb[0].mxu0 %v809
        %v890 = vpop.f32.mrb[0].mxu0
        %v891 = vadd.f32 %v676, %v890
        %v892 = vpop.f32.mrb[0].mxu0
        %v893 = vpop.f32.mrb[0].mxu0
        %v894 = vadd.f32 %v679, %v893
        %v895 = vpop.f32.mrb[0].mxu0
        %896 = vmatprep.mubr.bf16.mxu0 0
        %897 = vmatmul.mubr.bf16.gmra.mrb[0].mxu0 %v812
        %v898 = vpop.f32.mrb[0].mxu0
        %v899 = vadd.f32 %v684, %v898
        %v900 = vpop.f32.mrb[0].mxu0
        %v901 = vpop.f32.mrb[0].mxu0
        %v902 = vadd.f32 %v687, %v901
        %v903 = vpop.f32.mrb[0].mxu0
        %904 = vmatprep.mubr.bf16.mxu0 0
        %905 = vmatmul.mubr.bf16.gmra.mrb[0].mxu0 %v815
        %v906 = vpop.f32.mrb[0].mxu0
        %v907 = vadd.f32 %v692, %v906
        %v908 = vpop.f32.mrb[0].mxu0
        %v909 = vpop.f32.mrb[0].mxu0
        %v910 = vadd.f32 %v695, %v909
        %v911 = vpop.f32.mrb[0].mxu0
        %912 = vmatprep.mubr.bf16.mxu0 0
        %913 = vmatmul.mubr.bf16.gmra.mrb[0].mxu0 %v818
        %v914 = vpop.f32.mrb[0].mxu0
        %v915 = vadd.f32 %v700, %v914
        %v916 = vpop.f32.mrb[0].mxu0
        %v917 = vpop.f32.mrb[0].mxu0
        %v918 = vadd.f32 %v703, %v917
        %v919 = vpop.f32.mrb[0].mxu0
        %920 = vmatprep.mubr.bf16.mxu0 0
        %921 = vmatmul.mubr.bf16.gmra.mrb[0].mxu0 %v821
        %v922 = vpop.f32.mrb[0].mxu0
        %v923 = vadd.f32 %v708, %v922
        %v924 = vpop.f32.mrb[0].mxu0
        %v925 = vpop.f32.mrb[0].mxu0
        %v926 = vadd.f32 %v711, %v925
        %v927 = vpop.f32.mrb[0].mxu0
        %928 = vmatprep.mubr.bf16.mxu0 0
        %929 = vmatmul.mubr.bf16.gmra.mrb[0].mxu0 %v824
        %v930 = vpop.f32.mrb[0].mxu0
        %v931 = vadd.f32 %v716, %v930
        %v932 = vpop.f32.mrb[0].mxu0
        %v933 = vpop.f32.mrb[0].mxu0
        %v934 = vadd.f32 %v719, %v933
        %v935 = vpop.f32.mrb[0].mxu0
        %936 = vmatprep.mubr.bf16.mxu0 0
        %937 = vmatmul.mubr.bf16.gmra.mrb[0].mxu0 %v827
        %v938 = vpop.f32.mrb[0].mxu0
        %v939 = vadd.f32 %v724, %v938
        %v940 = vpop.f32.mrb[0].mxu0
        %v941 = vpop.f32.mrb[0].mxu0
        %v942 = vadd.f32 %v727, %v941
        %v943 = vpop.f32.mrb[0].mxu0
        %944 = vmatprep.mubr.bf16.mxu0 0
        %945 = vmatmul.mubr.bf16.gmra.mrb[0].mxu0 %v830
        %v946 = vpop.f32.mrb[0].mxu0
        %v947 = vadd.f32 %v732, %v946
        %v948 = vpop.f32.mrb[0].mxu0
        %v949 = vpop.f32.mrb[0].mxu0
        %v950 = vadd.f32 %v735, %v949
        %v951 = vpop.f32.mrb[0].mxu0
        %952 = vmatprep.mubr.bf16.mxu0 0
        %953 = vmatmul.mubr.bf16.gmra.mrb[0].mxu0 %v833
        %v954 = vpop.f32.mrb[0].mxu0
        %v955 = vadd.f32 %v740, %v954
        %v956 = vpop.f32.mrb[0].mxu0
        %v957 = vpop.f32.mrb[0].mxu0
        %v958 = vadd.f32 %v743, %v957
        %v959 = vpop.f32.mrb[0].mxu0
        %960 = vmatprep.mubr.bf16.mxu0 0
        %961 = vmatmul.mubr.bf16.gmra.mrb[0].mxu0 %v836
        %v962 = vpop.f32.mrb[0].mxu0
        %v963 = vadd.f32 %v748, %v962
        %v964 = vpop.f32.mrb[0].mxu0
        %v965 = vpop.f32.mrb[0].mxu0
        %v966 = vadd.f32 %v751, %v965
        %v967 = vpop.f32.mrb[0].mxu0
        %968 = vmatprep.mubr.bf16.mxu0 0
        %969 = vmatmul.mubr.bf16.gmra.mrb[0].mxu0 %v839
        %v970 = vpop.f32.mrb[0].mxu0
        %v971 = vadd.f32 %v756, %v970
        %v972 = vpop.f32.mrb[0].mxu0
        %v973 = vpop.f32.mrb[0].mxu0
        %v974 = vadd.f32 %v759, %v973
        %v975 = vpop.f32.mrb[0].mxu0
        %976 = vmatprep.mubr.bf16.mxu0 0
        %977 = vmatmul.mubr.bf16.gmra.mrb[0].mxu0 %v842
        %v978 = vpop.f32.mrb[0].mxu0
        %v979 = vadd.f32 %v764, %v978
        %v980 = vpop.f32.mrb[0].mxu0
        %v981 = vpop.f32.mrb[0].mxu0
        %v982 = vadd.f32 %v767, %v981
        %v983 = vpop.f32.mrb[0].mxu0
        %984 = vmatprep.mubr.bf16.mxu0 0
        %985 = vmatmul.mubr.bf16.gmra.mrb[0].mxu0 %v845
        %v986 = vpop.f32.mrb[0].mxu0
        %v987 = vadd.f32 %v772, %v986
        %v988 = vpop.f32.mrb[0].mxu0
        %v989 = vpop.f32.mrb[0].mxu0
        %v990 = vadd.f32 %v775, %v989
        %v991 = vpop.f32.mrb[0].mxu0
        %992 = vmatprep.mubr.bf16.mxu0 0
        %993 = vmatmul.mubr.bf16.gmra.mrb[0].mxu0 %v848
        %v994 = vpop.f32.mrb[0].mxu0
        %v995 = vadd.f32 %v780, %v994
        %v996 = vpop.f32.mrb[0].mxu0
        %v997 = vpop.f32.mrb[0].mxu0
        %v998 = vadd.f32 %v783, %v997
        %v999 = vpop.f32.mrb[0].mxu0
        %1000 = vmatprep.mubr.bf16.mxu0 0
        %1001 = vmatmul.mubr.bf16.gmra.mrb[0].mxu0 %v851
        %v1002 = vpop.f32.mrb[0].mxu0
        %v1003 = vadd.f32 %v788, %v1002
        %v1004 = vpop.f32.mrb[0].mxu0
        %v1005 = vpop.f32.mrb[0].mxu0
        %v1006 = vadd.f32 %v791, %v1005
        %v1007 = vpop.f32.mrb[0].mxu0
        %1008 = vmatprep.mubr.bf16.mxu0 0
        %1009 = vmatmul.mubr.bf16.gmra.mrb[0].mxu0 %v854
        %v1010 = vpop.f32.mrb[0].mxu0
        %v1011 = vadd.f32 %v796, %v1010
        %v1012 = vpop.f32.mrb[0].mxu0
        %v1013 = vpop.f32.mrb[0].mxu0
        %v1014 = vadd.f32 %v799, %v1013
        %v1015 = vpop.f32.mrb[0].mxu0
        %1016 = vdwg.mxu0
        %v1017 = vld [vmem:[#allocation2 + $0x2] sm:$0xff]
        %v1018 = vld [vmem:[#allocation2 + $0xa] sm:$0xff]
        %v1019 = vld [vmem:[#allocation2 + $0x1a] sm:$0xff]
        %v1020 = vld [vmem:[#allocation2 + $0x22] sm:$0xff]
        %v1021 = vld [vmem:[#allocation2 + $0x32] sm:$0xff]
        %v1022 = vld [vmem:[#allocation2 + $0x3a] sm:$0xff]
        %v1023 = vld [vmem:[#allocation2 + $0x4a] sm:$0xff]
        %v1024 = vld [vmem:[#allocation2 + $0x52] sm:$0xff]
        %v1025 = vld [vmem:[#allocation2 + $0x62] sm:$0xff]
        %v1026 = vld [vmem:[#allocation2 + $0x6a] sm:$0xff]
        %v1027 = vld [vmem:[#allocation2 + $0x7a] sm:$0xff]
        %v1028 = vld [vmem:[#allocation2 + $0x82] sm:$0xff]
        %v1029 = vld [vmem:[#allocation2 + $0x92] sm:$0xff]
        %v1030 = vld [vmem:[#allocation2 + $0x9a] sm:$0xff]
        %v1031 = vld [vmem:[#allocation2 + $0xaa] sm:$0xff]
        %v1032 = vld [vmem:[#allocation2 + $0xb2] sm:$0xff]
        %v1033 = vld [vmem:[#allocation2 + $0xc2] sm:$0xff]
        %v1034 = vld [vmem:[#allocation2 + $0xca] sm:$0xff]
        %v1035 = vld [vmem:[#allocation2 + $0xda] sm:$0xff]
        %v1036 = vld [vmem:[#allocation2 + $0xe2] sm:$0xff]
        %v1037 = vld [vmem:[#allocation2 + $0xf2] sm:$0xff]
        %v1038 = vld [vmem:[#allocation2 + $0xfa] sm:$0xff]
        %v1039 = vld [vmem:[#allocation2 + $0x10a] sm:$0xff]
        %v1040 = vld [vmem:[#allocation2 + $0x112] sm:$0xff]
        %v1041 = vld [vmem:[#allocation2 + $0x122] sm:$0xff]
        %v1042 = vld [vmem:[#allocation2 + $0x12a] sm:$0xff]
        %v1043 = vld [vmem:[#allocation2 + $0x13a] sm:$0xff]
        %v1044 = vld [vmem:[#allocation2 + $0x142] sm:$0xff]
        %v1045 = vld [vmem:[#allocation2 + $0x152] sm:$0xff]
        %v1046 = vld [vmem:[#allocation2 + $0x15a] sm:$0xff]
        %v1047 = vld [vmem:[#allocation2 + $0x16a] sm:$0xff]
        %v1048 = vld [vmem:[#allocation2 + $0x172] sm:$0xff]
        %v1049 = vpack.c.bf16 %v1018, %v1017
        %v1050 = vpack.c.bf16 %v1020, %v1019
        %v1051 = vpack.c.bf16 %v1022, %v1021
        %v1052 = vpack.c.bf16 %v1024, %v1023
        %v1053 = vpack.c.bf16 %v1026, %v1025
        %v1054 = vpack.c.bf16 %v1028, %v1027
        %v1055 = vpack.c.bf16 %v1030, %v1029
        %v1056 = vpack.c.bf16 %v1032, %v1031
        %v1057 = vpack.c.bf16 %v1034, %v1033
        %v1058 = vpack.c.bf16 %v1036, %v1035
        %v1059 = vpack.c.bf16 %v1038, %v1037
        %v1060 = vpack.c.bf16 %v1040, %v1039
        %v1061 = vpack.c.bf16 %v1042, %v1041
        %v1062 = vpack.c.bf16 %v1044, %v1043
        %v1063 = vpack.c.bf16 %v1046, %v1045
        %v1064 = vpack.c.bf16 %v1048, %v1047
        %s1065 = scalar_lea.vmem %s3, 16
        %v1066 = vld [vmem:[%s1065] sm:$0xf]
        %v1067 = vld [vmem:[%s1065 + $0x4] sm:$0xf]
        %v1070 = vunpack.c.l.b16 %v1066
        %v1071 = vunpack.c.l.b16 %v1067
        %v1072 = vpack.c.b16 %v1071, %v1070
        %v1075 = vsel %vm237, %v1049, 0
        %v1078 = vsel %vm237, %v1050, 0
        %v1081 = vsel %vm237, %v1051, 0
        %v1084 = vsel %vm237, %v1052, 0
        %v1087 = vsel %vm237, %v1053, 0
        %v1090 = vsel %vm237, %v1054, 0
        %v1093 = vsel %vm237, %v1055, 0
        %v1096 = vsel %vm237, %v1056, 0
        %v1099 = vsel %vm237, %v1057, 0
        %v1102 = vsel %vm237, %v1058, 0
        %v1105 = vsel %vm237, %v1059, 0
        %v1108 = vsel %vm237, %v1060, 0
        %v1111 = vsel %vm237, %v1061, 0
        %v1114 = vsel %vm237, %v1062, 0
        %v1117 = vsel %vm237, %v1063, 0
        %v1120 = vsel %vm237, %v1064, 0
        %1122 = vmatprep.subr.bf16.mxu0 0
        %1123 = vmatpush1.bf16.msra.mxu0 %v1072
        %1124 = vmatprep.subr.bf16.mxu0 0
        %1125 = vmatpush1.bf16.msra.mxu0 0
        %1126 = vmatprep.subr.bf16.mxu0 0
        %1127 = vmatpush1.bf16.msra.mxu0 0
        %1128 = vmatprep.subr.bf16.mxu0 0
        %1129 = vmatpush1.bf16.msra.mxu0 0
        %1130 = vmatprep.subr.bf16.mxu0 0
        %1131 = vmatpush1.bf16.msra.mxu0 0
        %1132 = vmatprep.subr.bf16.mxu0 0
        %1133 = vmatpush1.bf16.msra.mxu0 0
        %1134 = vmatprep.subr.bf16.mxu0 0
        %1135 = vmatpush1.bf16.msra.mxu0 0
        %1136 = vmatprep.subr.bf16.mxu0 0
        %1137 = vmatpush1.bf16.msra.mxu0 0
        %1138 = vmatprep.subr.bf16.mxu0 0
        %1139 = vmatpush1.bf16.msra.mxu0 0
        %1140 = vmatprep.subr.bf16.mxu0 0
        %1141 = vmatpush1.bf16.msra.mxu0 0
        %1142 = vmatprep.subr.bf16.mxu0 0
        %1143 = vmatpush1.bf16.msra.mxu0 0
        %1144 = vmatprep.subr.bf16.mxu0 0
        %1145 = vmatpush1.bf16.msra.mxu0 0
        %1146 = vmatprep.subr.bf16.mxu0 0
        %1147 = vmatpush1.bf16.msra.mxu0 0
        %1148 = vmatprep.subr.bf16.mxu0 0
        %1149 = vmatpush1.bf16.msra.mxu0 0
        %1150 = vmatprep.subr.bf16.mxu0 0
        %1151 = vmatpush1.bf16.msra.mxu0 0
        %1152 = vmatprep.subr.bf16.mxu0 0
        %1153 = vmatpush1.bf16.msra.mxu0 0
        %1154 = vmatprep.mubr.bf16.mxu0 0
        %1155 = vmatmul.mubr.bf16.gmra.mrb[0].mxu0 %v1075
        %v1156 = vpop.f32.mrb[0].mxu0
        %v1157 = vadd.f32 0.0, %v1156
        %v1158 = vpop.f32.mrb[0].mxu0
        %v1159 = vpop.f32.mrb[0].mxu0
        %v1160 = vadd.f32 0.0, %v1159
        %v1161 = vpop.f32.mrb[0].mxu0
        %1162 = vmatprep.mubr.bf16.mxu0 0
        %1163 = vmatmul.mubr.bf16.gmra.mrb[0].mxu0 %v1078
        %v1164 = vpop.f32.mrb[0].mxu0
        %v1165 = vadd.f32 0.0, %v1164
        %v1166 = vpop.f32.mrb[0].mxu0
        %v1167 = vpop.f32.mrb[0].mxu0
        %v1168 = vadd.f32 0.0, %v1167
        %v1169 = vpop.f32.mrb[0].mxu0
        %1170 = vmatprep.mubr.bf16.mxu0 0
        %1171 = vmatmul.mubr.bf16.gmra.mrb[0].mxu0 %v1081
        %v1172 = vpop.f32.mrb[0].mxu0
        %v1173 = vadd.f32 0.0, %v1172
        %v1174 = vpop.f32.mrb[0].mxu0
        %v1175 = vpop.f32.mrb[0].mxu0
        %v1176 = vadd.f32 0.0, %v1175
        %v1177 = vpop.f32.mrb[0].mxu0
        %1178 = vmatprep.mubr.bf16.mxu0 0
        %1179 = vmatmul.mubr.bf16.gmra.mrb[0].mxu0 %v1084
        %v1180 = vpop.f32.mrb[0].mxu0
        %v1181 = vadd.f32 0.0, %v1180
        %v1182 = vpop.f32.mrb[0].mxu0
        %v1183 = vpop.f32.mrb[0].mxu0
        %v1184 = vadd.f32 0.0, %v1183
        %v1185 = vpop.f32.mrb[0].mxu0
        %1186 = vmatprep.mubr.bf16.mxu0 0
        %1187 = vmatmul.mubr.bf16.gmra.mrb[0].mxu0 %v1087
        %v1188 = vpop.f32.mrb[0].mxu0
        %v1189 = vadd.f32 0.0, %v1188
        %v1190 = vpop.f32.mrb[0].mxu0
        %v1191 = vpop.f32.mrb[0].mxu0
        %v1192 = vadd.f32 0.0, %v1191
        %v1193 = vpop.f32.mrb[0].mxu0
        %1194 = vmatprep.mubr.bf16.mxu0 0
        %1195 = vmatmul.mubr.bf16.gmra.mrb[0].mxu0 %v1090
        %v1196 = vpop.f32.mrb[0].mxu0
        %v1197 = vadd.f32 0.0, %v1196
        %v1198 = vpop.f32.mrb[0].mxu0
        %v1199 = vpop.f32.mrb[0].mxu0
        %v1200 = vadd.f32 0.0, %v1199
        %v1201 = vpop.f32.mrb[0].mxu0
        %1202 = vmatprep.mubr.bf16.mxu0 0
        %1203 = vmatmul.mubr.bf16.gmra.mrb[0].mxu0 %v1093
        %v1204 = vpop.f32.mrb[0].mxu0
        %v1205 = vadd.f32 0.0, %v1204
        %v1206 = vpop.f32.mrb[0].mxu0
        %v1207 = vpop.f32.mrb[0].mxu0
        %v1208 = vadd.f32 0.0, %v1207
        %v1209 = vpop.f32.mrb[0].mxu0
        %1210 = vmatprep.mubr.bf16.mxu0 0
        %1211 = vmatmul.mubr.bf16.gmra.mrb[0].mxu0 %v1096
        %v1212 = vpop.f32.mrb[0].mxu0
        %v1213 = vadd.f32 0.0, %v1212
        %v1214 = vpop.f32.mrb[0].mxu0
        %v1215 = vpop.f32.mrb[0].mxu0
        %v1216 = vadd.f32 0.0, %v1215
        %v1217 = vpop.f32.mrb[0].mxu0
        %1218 = vmatprep.mubr.bf16.mxu0 0
        %1219 = vmatmul.mubr.bf16.gmra.mrb[0].mxu0 %v1099
        %v1220 = vpop.f32.mrb[0].mxu0
        %v1221 = vadd.f32 0.0, %v1220
        %v1222 = vpop.f32.mrb[0].mxu0
        %v1223 = vpop.f32.mrb[0].mxu0
        %v1224 = vadd.f32 0.0, %v1223
        %v1225 = vpop.f32.mrb[0].mxu0
        %1226 = vmatprep.mubr.bf16.mxu0 0
        %1227 = vmatmul.mubr.bf16.gmra.mrb[0].mxu0 %v1102
        %v1228 = vpop.f32.mrb[0].mxu0
        %v1229 = vadd.f32 0.0, %v1228
        %v1230 = vpop.f32.mrb[0].mxu0
        %v1231 = vpop.f32.mrb[0].mxu0
        %v1232 = vadd.f32 0.0, %v1231
        %v1233 = vpop.f32.mrb[0].mxu0
        %1234 = vmatprep.mubr.bf16.mxu0 0
        %1235 = vmatmul.mubr.bf16.gmra.mrb[0].mxu0 %v1105
        %v1236 = vpop.f32.mrb[0].mxu0
        %v1237 = vadd.f32 0.0, %v1236
        %v1238 = vpop.f32.mrb[0].mxu0
        %v1239 = vpop.f32.mrb[0].mxu0
        %v1240 = vadd.f32 0.0, %v1239
        %v1241 = vpop.f32.mrb[0].mxu0
        %1242 = vmatprep.mubr.bf16.mxu0 0
        %1243 = vmatmul.mubr.bf16.gmra.mrb[0].mxu0 %v1108
        %v1244 = vpop.f32.mrb[0].mxu0
        %v1245 = vadd.f32 0.0, %v1244
        %v1246 = vpop.f32.mrb[0].mxu0
        %v1247 = vpop.f32.mrb[0].mxu0
        %v1248 = vadd.f32 0.0, %v1247
        %v1249 = vpop.f32.mrb[0].mxu0
        %1250 = vmatprep.mubr.bf16.mxu0 0
        %1251 = vmatmul.mubr.bf16.gmra.mrb[0].mxu0 %v1111
        %v1252 = vpop.f32.mrb[0].mxu0
        %v1253 = vadd.f32 0.0, %v1252
        %v1254 = vpop.f32.mrb[0].mxu0
        %v1255 = vpop.f32.mrb[0].mxu0
        %v1256 = vadd.f32 0.0, %v1255
        %v1257 = vpop.f32.mrb[0].mxu0
        %1258 = vmatprep.mubr.bf16.mxu0 0
        %1259 = vmatmul.mubr.bf16.gmra.mrb[0].mxu0 %v1114
        %v1260 = vpop.f32.mrb[0].mxu0
        %v1261 = vadd.f32 0.0, %v1260
        %v1262 = vpop.f32.mrb[0].mxu0
        %v1263 = vpop.f32.mrb[0].mxu0
        %v1264 = vadd.f32 0.0, %v1263
        %v1265 = vpop.f32.mrb[0].mxu0
        %1266 = vmatprep.mubr.bf16.mxu0 0
        %1267 = vmatmul.mubr.bf16.gmra.mrb[0].mxu0 %v1117
        %v1268 = vpop.f32.mrb[0].mxu0
        %v1269 = vadd.f32 0.0, %v1268
        %v1270 = vpop.f32.mrb[0].mxu0
        %v1271 = vpop.f32.mrb[0].mxu0
        %v1272 = vadd.f32 0.0, %v1271
        %v1273 = vpop.f32.mrb[0].mxu0
        %1274 = vmatprep.mubr.bf16.mxu0 0
        %1275 = vmatmul.mubr.bf16.gmra.mrb[0].mxu0 %v1120
        %v1276 = vpop.f32.mrb[0].mxu0
        %v1277 = vadd.f32 0.0, %v1276
        %v1278 = vpop.f32.mrb[0].mxu0
        %v1279 = vpop.f32.mrb[0].mxu0
        %v1280 = vadd.f32 0.0, %v1279
        %v1281 = vpop.f32.mrb[0].mxu0
        %1282 = vdwg.mxu0
        %v1283 = vadd.f32 %v891, %v1157
        %v1284 = vadd.f32 %v894, %v1160
        %v1285 = vadd.f32 %v899, %v1165
        %v1286 = vadd.f32 %v902, %v1168
        %v1287 = vadd.f32 %v907, %v1173
        %v1288 = vadd.f32 %v910, %v1176
        %v1289 = vadd.f32 %v915, %v1181
        %v1290 = vadd.f32 %v918, %v1184
        %v1291 = vadd.f32 %v923, %v1189
        %v1292 = vadd.f32 %v926, %v1192
        %v1293 = vadd.f32 %v931, %v1197
        %v1294 = vadd.f32 %v934, %v1200
        %v1295 = vadd.f32 %v939, %v1205
        %v1296 = vadd.f32 %v942, %v1208
        %v1297 = vadd.f32 %v947, %v1213
        %v1298 = vadd.f32 %v950, %v1216
        %v1299 = vadd.f32 %v955, %v1221
        %v1300 = vadd.f32 %v958, %v1224
        %v1301 = vadd.f32 %v963, %v1229
        %v1302 = vadd.f32 %v966, %v1232
        %v1303 = vadd.f32 %v971, %v1237
        %v1304 = vadd.f32 %v974, %v1240
        %v1305 = vadd.f32 %v979, %v1245
        %v1306 = vadd.f32 %v982, %v1248
        %v1307 = vadd.f32 %v987, %v1253
        %v1308 = vadd.f32 %v990, %v1256
        %v1309 = vadd.f32 %v995, %v1261
        %v1310 = vadd.f32 %v998, %v1264
        %v1311 = vadd.f32 %v1003, %v1269
        %v1312 = vadd.f32 %v1006, %v1272
        %v1313 = vadd.f32 %v1011, %v1277
        %v1314 = vadd.f32 %v1014, %v1280
        %v1315 = vld [vmem:[%s246] sm:$0xff]
        %v1316 = vld [vmem:[%s246 + $0x8] sm:$0xff]
        %v1317 = vld [vmem:[%s246 + $0x18] sm:$0xff]
        %v1318 = vld [vmem:[%s246 + $0x20] sm:$0xff]
        %v1319 = vld [vmem:[%s246 + $0x30] sm:$0xff]
        %v1320 = vld [vmem:[%s246 + $0x38] sm:$0xff]
        %v1321 = vld [vmem:[%s246 + $0x48] sm:$0xff]
        %v1322 = vld [vmem:[%s246 + $0x50] sm:$0xff]
        %v1323 = vld [vmem:[%s246 + $0x60] sm:$0xff]
        %v1324 = vld [vmem:[%s246 + $0x68] sm:$0xff]
        %v1325 = vld [vmem:[%s246 + $0x78] sm:$0xff]
        %v1326 = vld [vmem:[%s246 + $0x80] sm:$0xff]
        %v1327 = vld [vmem:[%s246 + $0x90] sm:$0xff]
        %v1328 = vld [vmem:[%s246 + $0x98] sm:$0xff]
        %v1329 = vld [vmem:[%s246 + $0xa8] sm:$0xff]
        %v1330 = vld [vmem:[%s246 + $0xb0] sm:$0xff]
        %v1331 = vld [vmem:[%s246 + $0xc0] sm:$0xff]
        %v1332 = vld [vmem:[%s246 + $0xc8] sm:$0xff]
        %v1333 = vld [vmem:[%s246 + $0xd8] sm:$0xff]
        %v1334 = vld [vmem:[%s246 + $0xe0] sm:$0xff]
        %v1335 = vld [vmem:[%s246 + $0xf0] sm:$0xff]
        %v1336 = vld [vmem:[%s246 + $0xf8] sm:$0xff]
        %v1337 = vld [vmem:[%s246 + $0x108] sm:$0xff]
        %v1338 = vld [vmem:[%s246 + $0x110] sm:$0xff]
        %v1339 = vld [vmem:[%s246 + $0x120] sm:$0xff]
        %v1340 = vld [vmem:[%s246 + $0x128] sm:$0xff]
        %v1341 = vld [vmem:[%s246 + $0x138] sm:$0xff]
        %v1342 = vld [vmem:[%s246 + $0x140] sm:$0xff]
        %v1343 = vld [vmem:[%s246 + $0x150] sm:$0xff]
        %v1344 = vld [vmem:[%s246 + $0x158] sm:$0xff]
        %v1345 = vld [vmem:[%s246 + $0x168] sm:$0xff]
        %v1346 = vld [vmem:[%s246 + $0x170] sm:$0xff]
        %v1347 = vpack.c.bf16 %v1316, %v1315
        %v1348 = vpack.c.bf16 %v1318, %v1317
        %v1349 = vpack.c.bf16 %v1320, %v1319
        %v1350 = vpack.c.bf16 %v1322, %v1321
        %v1351 = vpack.c.bf16 %v1324, %v1323
        %v1352 = vpack.c.bf16 %v1326, %v1325
        %v1353 = vpack.c.bf16 %v1328, %v1327
        %v1354 = vpack.c.bf16 %v1330, %v1329
        %v1355 = vpack.c.bf16 %v1332, %v1331
        %v1356 = vpack.c.bf16 %v1334, %v1333
        %v1357 = vpack.c.bf16 %v1336, %v1335
        %v1358 = vpack.c.bf16 %v1338, %v1337
        %v1359 = vpack.c.bf16 %v1340, %v1339
        %v1360 = vpack.c.bf16 %v1342, %v1341
        %v1361 = vpack.c.bf16 %v1344, %v1343
        %v1362 = vpack.c.bf16 %v1346, %v1345
        %s1363 = scalar_lea.vmem %s3, 24
        %v1364 = vld [vmem:[%s1363] sm:$0xf]
        %v1365 = vld [vmem:[%s1363 + $0x4] sm:$0xf]
        %v1368 = vunpack.c.l.b16 %v1364
        %v1369 = vunpack.c.l.b16 %v1365
        %v1370 = vpack.c.b16 %v1369, %v1368
        %v1373 = vsel %vm237, %v1347, 0
        %v1376 = vsel %vm237, %v1348, 0
        %v1379 = vsel %vm237, %v1349, 0
        %v1382 = vsel %vm237, %v1350, 0
        %v1385 = vsel %vm237, %v1351, 0
        %v1388 = vsel %vm237, %v1352, 0
        %v1391 = vsel %vm237, %v1353, 0
        %v1394 = vsel %vm237, %v1354, 0
        %v1397 = vsel %vm237, %v1355, 0
        %v1400 = vsel %vm237, %v1356, 0
        %v1403 = vsel %vm237, %v1357, 0
        %v1406 = vsel %vm237, %v1358, 0
        %v1409 = vsel %vm237, %v1359, 0
        %v1412 = vsel %vm237, %v1360, 0
        %v1415 = vsel %vm237, %v1361, 0
        %v1418 = vsel %vm237, %v1362, 0
        %1420 = vmatprep.subr.bf16.mxu0 0
        %1421 = vmatpush1.bf16.msra.mxu0 %v1370
        %1422 = vmatprep.subr.bf16.mxu0 0
        %1423 = vmatpush1.bf16.msra.mxu0 0
        %1424 = vmatprep.subr.bf16.mxu0 0
        %1425 = vmatpush1.bf16.msra.mxu0 0
        %1426 = vmatprep.subr.bf16.mxu0 0
        %1427 = vmatpush1.bf16.msra.mxu0 0
        %1428 = vmatprep.subr.bf16.mxu0 0
        %1429 = vmatpush1.bf16.msra.mxu0 0
        %1430 = vmatprep.subr.bf16.mxu0 0
        %1431 = vmatpush1.bf16.msra.mxu0 0
        %1432 = vmatprep.subr.bf16.mxu0 0
        %1433 = vmatpush1.bf16.msra.mxu0 0
        %1434 = vmatprep.subr.bf16.mxu0 0
        %1435 = vmatpush1.bf16.msra.mxu0 0
        %1436 = vmatprep.subr.bf16.mxu0 0
        %1437 = vmatpush1.bf16.msra.mxu0 0
        %1438 = vmatprep.subr.bf16.mxu0 0
        %1439 = vmatpush1.bf16.msra.mxu0 0
        %1440 = vmatprep.subr.bf16.mxu0 0
        %1441 = vmatpush1.bf16.msra.mxu0 0
        %1442 = vmatprep.subr.bf16.mxu0 0
        %1443 = vmatpush1.bf16.msra.mxu0 0
        %1444 = vmatprep.subr.bf16.mxu0 0
        %1445 = vmatpush1.bf16.msra.mxu0 0
        %1446 = vmatprep.subr.bf16.mxu0 0
        %1447 = vmatpush1.bf16.msra.mxu0 0
        %1448 = vmatprep.subr.bf16.mxu0 0
        %1449 = vmatpush1.bf16.msra.mxu0 0
        %1450 = vmatprep.subr.bf16.mxu0 0
        %1451 = vmatpush1.bf16.msra.mxu0 0
        %1452 = vmatprep.mubr.bf16.mxu0 0
        %1453 = vmatmul.mubr.bf16.gmra.mrb[0].mxu0 %v1373
        %v1454 = vpop.f32.mrb[0].mxu0
        %v1455 = vadd.f32 0.0, %v1454
        %v1456 = vpop.f32.mrb[0].mxu0
        %v1457 = vpop.f32.mrb[0].mxu0
        %v1458 = vadd.f32 0.0, %v1457
        %v1459 = vpop.f32.mrb[0].mxu0
        %1460 = vmatprep.mubr.bf16.mxu0 0
        %1461 = vmatmul.mubr.bf16.gmra.mrb[0].mxu0 %v1376
        %v1462 = vpop.f32.mrb[0].mxu0
        %v1463 = vadd.f32 0.0, %v1462
        %v1464 = vpop.f32.mrb[0].mxu0
        %v1465 = vpop.f32.mrb[0].mxu0
        %v1466 = vadd.f32 0.0, %v1465
        %v1467 = vpop.f32.mrb[0].mxu0
        %1468 = vmatprep.mubr.bf16.mxu0 0
        %1469 = vmatmul.mubr.bf16.gmra.mrb[0].mxu0 %v1379
        %v1470 = vpop.f32.mrb[0].mxu0
        %v1471 = vadd.f32 0.0, %v1470
        %v1472 = vpop.f32.mrb[0].mxu0
        %v1473 = vpop.f32.mrb[0].mxu0
        %v1474 = vadd.f32 0.0, %v1473
        %v1475 = vpop.f32.mrb[0].mxu0
        %1476 = vmatprep.mubr.bf16.mxu0 0
        %1477 = vmatmul.mubr.bf16.gmra.mrb[0].mxu0 %v1382
        %v1478 = vpop.f32.mrb[0].mxu0
        %v1479 = vadd.f32 0.0, %v1478
        %v1480 = vpop.f32.mrb[0].mxu0
        %v1481 = vpop.f32.mrb[0].mxu0
        %v1482 = vadd.f32 0.0, %v1481
        %v1483 = vpop.f32.mrb[0].mxu0
        %1484 = vmatprep.mubr.bf16.mxu0 0
        %1485 = vmatmul.mubr.bf16.gmra.mrb[0].mxu0 %v1385
        %v1486 = vpop.f32.mrb[0].mxu0
        %v1487 = vadd.f32 0.0, %v1486
        %v1488 = vpop.f32.mrb[0].mxu0
        %v1489 = vpop.f32.mrb[0].mxu0
        %v1490 = vadd.f32 0.0, %v1489
        %v1491 = vpop.f32.mrb[0].mxu0
        %1492 = vmatprep.mubr.bf16.mxu0 0
        %1493 = vmatmul.mubr.bf16.gmra.mrb[0].mxu0 %v1388
        %v1494 = vpop.f32.mrb[0].mxu0
        %v1495 = vadd.f32 0.0, %v1494
        %v1496 = vpop.f32.mrb[0].mxu0
        %v1497 = vpop.f32.mrb[0].mxu0
        %v1498 = vadd.f32 0.0, %v1497
        %v1499 = vpop.f32.mrb[0].mxu0
        %1500 = vmatprep.mubr.bf16.mxu0 0
        %1501 = vmatmul.mubr.bf16.gmra.mrb[0].mxu0 %v1391
        %v1502 = vpop.f32.mrb[0].mxu0
        %v1503 = vadd.f32 0.0, %v1502
        %v1504 = vpop.f32.mrb[0].mxu0
        %v1505 = vpop.f32.mrb[0].mxu0
        %v1506 = vadd.f32 0.0, %v1505
        %v1507 = vpop.f32.mrb[0].mxu0
        %1508 = vmatprep.mubr.bf16.mxu0 0
        %1509 = vmatmul.mubr.bf16.gmra.mrb[0].mxu0 %v1394
        %v1510 = vpop.f32.mrb[0].mxu0
        %v1511 = vadd.f32 0.0, %v1510
        %v1512 = vpop.f32.mrb[0].mxu0
        %v1513 = vpop.f32.mrb[0].mxu0
        %v1514 = vadd.f32 0.0, %v1513
        %v1515 = vpop.f32.mrb[0].mxu0
        %1516 = vmatprep.mubr.bf16.mxu0 0
        %1517 = vmatmul.mubr.bf16.gmra.mrb[0].mxu0 %v1397
        %v1518 = vpop.f32.mrb[0].mxu0
        %v1519 = vadd.f32 0.0, %v1518
        %v1520 = vpop.f32.mrb[0].mxu0
        %v1521 = vpop.f32.mrb[0].mxu0
        %v1522 = vadd.f32 0.0, %v1521
        %v1523 = vpop.f32.mrb[0].mxu0
        %1524 = vmatprep.mubr.bf16.mxu0 0
        %1525 = vmatmul.mubr.bf16.gmra.mrb[0].mxu0 %v1400
        %v1526 = vpop.f32.mrb[0].mxu0
        %v1527 = vadd.f32 0.0, %v1526
        %v1528 = vpop.f32.mrb[0].mxu0
        %v1529 = vpop.f32.mrb[0].mxu0
        %v1530 = vadd.f32 0.0, %v1529
        %v1531 = vpop.f32.mrb[0].mxu0
        %1532 = vmatprep.mubr.bf16.mxu0 0
        %1533 = vmatmul.mubr.bf16.gmra.mrb[0].mxu0 %v1403
        %v1534 = vpop.f32.mrb[0].mxu0
        %v1535 = vadd.f32 0.0, %v1534
        %v1536 = vpop.f32.mrb[0].mxu0
        %v1537 = vpop.f32.mrb[0].mxu0
        %v1538 = vadd.f32 0.0, %v1537
        %v1539 = vpop.f32.mrb[0].mxu0
        %1540 = vmatprep.mubr.bf16.mxu0 0
        %1541 = vmatmul.mubr.bf16.gmra.mrb[0].mxu0 %v1406
        %v1542 = vpop.f32.mrb[0].mxu0
        %v1543 = vadd.f32 0.0, %v1542
        %v1544 = vpop.f32.mrb[0].mxu0
        %v1545 = vpop.f32.mrb[0].mxu0
        %v1546 = vadd.f32 0.0, %v1545
        %v1547 = vpop.f32.mrb[0].mxu0
        %1548 = vmatprep.mubr.bf16.mxu0 0
        %1549 = vmatmul.mubr.bf16.gmra.mrb[0].mxu0 %v1409
        %v1550 = vpop.f32.mrb[0].mxu0
        %v1551 = vadd.f32 0.0, %v1550
        %v1552 = vpop.f32.mrb[0].mxu0
        %v1553 = vpop.f32.mrb[0].mxu0
        %v1554 = vadd.f32 0.0, %v1553
        %v1555 = vpop.f32.mrb[0].mxu0
        %1556 = vmatprep.mubr.bf16.mxu0 0
        %1557 = vmatmul.mubr.bf16.gmra.mrb[0].mxu0 %v1412
        %v1558 = vpop.f32.mrb[0].mxu0
        %v1559 = vadd.f32 0.0, %v1558
        %v1560 = vpop.f32.mrb[0].mxu0
        %v1561 = vpop.f32.mrb[0].mxu0
        %v1562 = vadd.f32 0.0, %v1561
        %v1563 = vpop.f32.mrb[0].mxu0
        %1564 = vmatprep.mubr.bf16.mxu0 0
        %1565 = vmatmul.mubr.bf16.gmra.mrb[0].mxu0 %v1415
        %v1566 = vpop.f32.mrb[0].mxu0
        %v1567 = vadd.f32 0.0, %v1566
        %v1568 = vpop.f32.mrb[0].mxu0
        %v1569 = vpop.f32.mrb[0].mxu0
        %v1570 = vadd.f32 0.0, %v1569
        %v1571 = vpop.f32.mrb[0].mxu0
        %1572 = vmatprep.mubr.bf16.mxu0 0
        %1573 = vmatmul.mubr.bf16.gmra.mrb[0].mxu0 %v1418
        %v1574 = vpop.f32.mrb[0].mxu0
        %v1575 = vadd.f32 0.0, %v1574
        %v1576 = vpop.f32.mrb[0].mxu0
        %v1577 = vpop.f32.mrb[0].mxu0
        %v1578 = vadd.f32 0.0, %v1577
        %v1579 = vpop.f32.mrb[0].mxu0
        %1580 = vdwg.mxu0
        %v1581 = vadd.f32 %v1283, %v1455
        %v1582 = vadd.f32 %v1284, %v1458
        %v1583 = vadd.f32 %v1285, %v1463
        %v1584 = vadd.f32 %v1286, %v1466
        %v1585 = vadd.f32 %v1287, %v1471
        %v1586 = vadd.f32 %v1288, %v1474
        %v1587 = vadd.f32 %v1289, %v1479
        %v1588 = vadd.f32 %v1290, %v1482
        %v1589 = vadd.f32 %v1291, %v1487
        %v1590 = vadd.f32 %v1292, %v1490
        %v1591 = vadd.f32 %v1293, %v1495
        %v1592 = vadd.f32 %v1294, %v1498
        %v1593 = vadd.f32 %v1295, %v1503
        %v1594 = vadd.f32 %v1296, %v1506
        %v1595 = vadd.f32 %v1297, %v1511
        %v1596 = vadd.f32 %v1298, %v1514
        %v1597 = vadd.f32 %v1299, %v1519
        %v1598 = vadd.f32 %v1300, %v1522
        %v1599 = vadd.f32 %v1301, %v1527
        %v1600 = vadd.f32 %v1302, %v1530
        %v1601 = vadd.f32 %v1303, %v1535
        %v1602 = vadd.f32 %v1304, %v1538
        %v1603 = vadd.f32 %v1305, %v1543
        %v1604 = vadd.f32 %v1306, %v1546
        %v1605 = vadd.f32 %v1307, %v1551
        %v1606 = vadd.f32 %v1308, %v1554
        %v1607 = vadd.f32 %v1309, %v1559
        %v1608 = vadd.f32 %v1310, %v1562
        %v1609 = vadd.f32 %v1311, %v1567
        %v1610 = vadd.f32 %v1312, %v1570
        %v1611 = vadd.f32 %v1313, %v1575
        %v1612 = vadd.f32 %v1314, %v1578
        %v1613 = vld [vmem:[%s246 + $0x1] sm:$0xff]
        %v1614 = vld [vmem:[%s246 + $0x9] sm:$0xff]
        %v1615 = vld [vmem:[%s246 + $0x19] sm:$0xff]
        %v1616 = vld [vmem:[%s246 + $0x21] sm:$0xff]
        %v1617 = vld [vmem:[%s246 + $0x31] sm:$0xff]
        %v1618 = vld [vmem:[%s246 + $0x39] sm:$0xff]
        %v1619 = vld [vmem:[%s246 + $0x49] sm:$0xff]
        %v1620 = vld [vmem:[%s246 + $0x51] sm:$0xff]
        %v1621 = vld [vmem:[%s246 + $0x61] sm:$0xff]
        %v1622 = vld [vmem:[%s246 + $0x69] sm:$0xff]
        %v1623 = vld [vmem:[%s246 + $0x79] sm:$0xff]
        %v1624 = vld [vmem:[%s246 + $0x81] sm:$0xff]
        %v1625 = vld [vmem:[%s246 + $0x91] sm:$0xff]
        %v1626 = vld [vmem:[%s246 + $0x99] sm:$0xff]
        %v1627 = vld [vmem:[%s246 + $0xa9] sm:$0xff]
        %v1628 = vld [vmem:[%s246 + $0xb1] sm:$0xff]
        %v1629 = vld [vmem:[%s246 + $0xc1] sm:$0xff]
        %v1630 = vld [vmem:[%s246 + $0xc9] sm:$0xff]
        %v1631 = vld [vmem:[%s246 + $0xd9] sm:$0xff]
        %v1632 = vld [vmem:[%s246 + $0xe1] sm:$0xff]
        %v1633 = vld [vmem:[%s246 + $0xf1] sm:$0xff]
        %v1634 = vld [vmem:[%s246 + $0xf9] sm:$0xff]
        %v1635 = vld [vmem:[%s246 + $0x109] sm:$0xff]
        %v1636 = vld [vmem:[%s246 + $0x111] sm:$0xff]
        %v1637 = vld [vmem:[%s246 + $0x121] sm:$0xff]
        %v1638 = vld [vmem:[%s246 + $0x129] sm:$0xff]
        %v1639 = vld [vmem:[%s246 + $0x139] sm:$0xff]
        %v1640 = vld [vmem:[%s246 + $0x141] sm:$0xff]
        %v1641 = vld [vmem:[%s246 + $0x151] sm:$0xff]
        %v1642 = vld [vmem:[%s246 + $0x159] sm:$0xff]
        %v1643 = vld [vmem:[%s246 + $0x169] sm:$0xff]
        %v1644 = vld [vmem:[%s246 + $0x171] sm:$0xff]
        %v1645 = vpack.c.bf16 %v1614, %v1613
        %v1646 = vpack.c.bf16 %v1616, %v1615
        %v1647 = vpack.c.bf16 %v1618, %v1617
        %v1648 = vpack.c.bf16 %v1620, %v1619
        %v1649 = vpack.c.bf16 %v1622, %v1621
        %v1650 = vpack.c.bf16 %v1624, %v1623
        %v1651 = vpack.c.bf16 %v1626, %v1625
        %v1652 = vpack.c.bf16 %v1628, %v1627
        %v1653 = vpack.c.bf16 %v1630, %v1629
        %v1654 = vpack.c.bf16 %v1632, %v1631
        %v1655 = vpack.c.bf16 %v1634, %v1633
        %v1656 = vpack.c.bf16 %v1636, %v1635
        %v1657 = vpack.c.bf16 %v1638, %v1637
        %v1658 = vpack.c.bf16 %v1640, %v1639
        %v1659 = vpack.c.bf16 %v1642, %v1641
        %v1660 = vpack.c.bf16 %v1644, %v1643
        %s1661 = scalar_lea.vmem %s3, 32
        %v1662 = vld [vmem:[%s1661] sm:$0xf]
        %v1663 = vld [vmem:[%s1661 + $0x4] sm:$0xf]
        %v1666 = vunpack.c.l.b16 %v1662
        %v1667 = vunpack.c.l.b16 %v1663
        %v1668 = vpack.c.b16 %v1667, %v1666
        %v1671 = vsel %vm237, %v1645, 0
        %v1674 = vsel %vm237, %v1646, 0
        %v1677 = vsel %vm237, %v1647, 0
        %v1680 = vsel %vm237, %v1648, 0
        %v1683 = vsel %vm237, %v1649, 0
        %v1686 = vsel %vm237, %v1650, 0
        %v1689 = vsel %vm237, %v1651, 0
        %v1692 = vsel %vm237, %v1652, 0
        %v1695 = vsel %vm237, %v1653, 0
        %v1698 = vsel %vm237, %v1654, 0
        %v1701 = vsel %vm237, %v1655, 0
        %v1704 = vsel %vm237, %v1656, 0
        %v1707 = vsel %vm237, %v1657, 0
        %v1710 = vsel %vm237, %v1658, 0
        %v1713 = vsel %vm237, %v1659, 0
        %v1716 = vsel %vm237, %v1660, 0
        %1718 = vmatprep.subr.bf16.mxu0 0
        %1719 = vmatpush1.bf16.msra.mxu0 %v1668
        %1720 = vmatprep.subr.bf16.mxu0 0
        %1721 = vmatpush1.bf16.msra.mxu0 0
        %1722 = vmatprep.subr.bf16.mxu0 0
        %1723 = vmatpush1.bf16.msra.mxu0 0
        %1724 = vmatprep.subr.bf16.mxu0 0
        %1725 = vmatpush1.bf16.msra.mxu0 0
        %1726 = vmatprep.subr.bf16.mxu0 0
        %1727 = vmatpush1.bf16.msra.mxu0 0
        %1728 = vmatprep.subr.bf16.mxu0 0
        %1729 = vmatpush1.bf16.msra.mxu0 0
        %1730 = vmatprep.subr.bf16.mxu0 0
        %1731 = vmatpush1.bf16.msra.mxu0 0
        %1732 = vmatprep.subr.bf16.mxu0 0
        %1733 = vmatpush1.bf16.msra.mxu0 0
        %1734 = vmatprep.subr.bf16.mxu0 0
        %1735 = vmatpush1.bf16.msra.mxu0 0
        %1736 = vmatprep.subr.bf16.mxu0 0
        %1737 = vmatpush1.bf16.msra.mxu0 0
        %1738 = vmatprep.subr.bf16.mxu0 0
        %1739 = vmatpush1.bf16.msra.mxu0 0
        %1740 = vmatprep.subr.bf16.mxu0 0
        %1741 = vmatpush1.bf16.msra.mxu0 0
        %1742 = vmatprep.subr.bf16.mxu0 0
        %1743 = vmatpush1.bf16.msra.mxu0 0
        %1744 = vmatprep.subr.bf16.mxu0 0
        %1745 = vmatpush1.bf16.msra.mxu0 0
        %1746 = vmatprep.subr.bf16.mxu0 0
        %1747 = vmatpush1.bf16.msra.mxu0 0
        %1748 = vmatprep.subr.bf16.mxu0 0
        %1749 = vmatpush1.bf16.msra.mxu0 0
        %1750 = vmatprep.mubr.bf16.mxu0 0
        %1751 = vmatmul.mubr.bf16.gmra.mrb[0].mxu0 %v1671
        %v1752 = vpop.f32.mrb[0].mxu0
        %v1753 = vadd.f32 0.0, %v1752
        %v1754 = vpop.f32.mrb[0].mxu0
        %v1755 = vpop.f32.mrb[0].mxu0
        %v1756 = vadd.f32 0.0, %v1755
        %v1757 = vpop.f32.mrb[0].mxu0
        %1758 = vmatprep.mubr.bf16.mxu0 0
        %1759 = vmatmul.mubr.bf16.gmra.mrb[0].mxu0 %v1674
        %v1760 = vpop.f32.mrb[0].mxu0
        %v1761 = vadd.f32 0.0, %v1760
        %v1762 = vpop.f32.mrb[0].mxu0
        %v1763 = vpop.f32.mrb[0].mxu0
        %v1764 = vadd.f32 0.0, %v1763
        %v1765 = vpop.f32.mrb[0].mxu0
        %1766 = vmatprep.mubr.bf16.mxu0 0
        %1767 = vmatmul.mubr.bf16.gmra.mrb[0].mxu0 %v1677
        %v1768 = vpop.f32.mrb[0].mxu0
        %v1769 = vadd.f32 0.0, %v1768
        %v1770 = vpop.f32.mrb[0].mxu0
        %v1771 = vpop.f32.mrb[0].mxu0
        %v1772 = vadd.f32 0.0, %v1771
        %v1773 = vpop.f32.mrb[0].mxu0
        %1774 = vmatprep.mubr.bf16.mxu0 0
        %1775 = vmatmul.mubr.bf16.gmra.mrb[0].mxu0 %v1680
        %v1776 = vpop.f32.mrb[0].mxu0
        %v1777 = vadd.f32 0.0, %v1776
        %v1778 = vpop.f32.mrb[0].mxu0
        %v1779 = vpop.f32.mrb[0].mxu0
        %v1780 = vadd.f32 0.0, %v1779
        %v1781 = vpop.f32.mrb[0].mxu0
        %1782 = vmatprep.mubr.bf16.mxu0 0
        %1783 = vmatmul.mubr.bf16.gmra.mrb[0].mxu0 %v1683
        %v1784 = vpop.f32.mrb[0].mxu0
        %v1785 = vadd.f32 0.0, %v1784
        %v1786 = vpop.f32.mrb[0].mxu0
        %v1787 = vpop.f32.mrb[0].mxu0
        %v1788 = vadd.f32 0.0, %v1787
        %v1789 = vpop.f32.mrb[0].mxu0
        %1790 = vmatprep.mubr.bf16.mxu0 0
        %1791 = vmatmul.mubr.bf16.gmra.mrb[0].mxu0 %v1686
        %v1792 = vpop.f32.mrb[0].mxu0
        %v1793 = vadd.f32 0.0, %v1792
        %v1794 = vpop.f32.mrb[0].mxu0
        %v1795 = vpop.f32.mrb[0].mxu0
        %v1796 = vadd.f32 0.0, %v1795
        %v1797 = vpop.f32.mrb[0].mxu0
        %1798 = vmatprep.mubr.bf16.mxu0 0
        %1799 = vmatmul.mubr.bf16.gmra.mrb[0].mxu0 %v1689
        %v1800 = vpop.f32.mrb[0].mxu0
        %v1801 = vadd.f32 0.0, %v1800
        %v1802 = vpop.f32.mrb[0].mxu0
        %v1803 = vpop.f32.mrb[0].mxu0
        %v1804 = vadd.f32 0.0, %v1803
        %v1805 = vpop.f32.mrb[0].mxu0
        %1806 = vmatprep.mubr.bf16.mxu0 0
        %1807 = vmatmul.mubr.bf16.gmra.mrb[0].mxu0 %v1692
        %v1808 = vpop.f32.mrb[0].mxu0
        %v1809 = vadd.f32 0.0, %v1808
        %v1810 = vpop.f32.mrb[0].mxu0
        %v1811 = vpop.f32.mrb[0].mxu0
        %v1812 = vadd.f32 0.0, %v1811
        %v1813 = vpop.f32.mrb[0].mxu0
        %1814 = vmatprep.mubr.bf16.mxu0 0
        %1815 = vmatmul.mubr.bf16.gmra.mrb[0].mxu0 %v1695
        %v1816 = vpop.f32.mrb[0].mxu0
        %v1817 = vadd.f32 0.0, %v1816
        %v1818 = vpop.f32.mrb[0].mxu0
        %v1819 = vpop.f32.mrb[0].mxu0
        %v1820 = vadd.f32 0.0, %v1819
        %v1821 = vpop.f32.mrb[0].mxu0
        %1822 = vmatprep.mubr.bf16.mxu0 0
        %1823 = vmatmul.mubr.bf16.gmra.mrb[0].mxu0 %v1698
        %v1824 = vpop.f32.mrb[0].mxu0
        %v1825 = vadd.f32 0.0, %v1824
        %v1826 = vpop.f32.mrb[0].mxu0
        %v1827 = vpop.f32.mrb[0].mxu0
        %v1828 = vadd.f32 0.0, %v1827
        %v1829 = vpop.f32.mrb[0].mxu0
        %1830 = vmatprep.mubr.bf16.mxu0 0
        %1831 = vmatmul.mubr.bf16.gmra.mrb[0].mxu0 %v1701
        %v1832 = vpop.f32.mrb[0].mxu0
        %v1833 = vadd.f32 0.0, %v1832
        %v1834 = vpop.f32.mrb[0].mxu0
        %v1835 = vpop.f32.mrb[0].mxu0
        %v1836 = vadd.f32 0.0, %v1835
        %v1837 = vpop.f32.mrb[0].mxu0
        %1838 = vmatprep.mubr.bf16.mxu0 0
        %1839 = vmatmul.mubr.bf16.gmra.mrb[0].mxu0 %v1704
        %v1840 = vpop.f32.mrb[0].mxu0
        %v1841 = vadd.f32 0.0, %v1840
        %v1842 = vpop.f32.mrb[0].mxu0
        %v1843 = vpop.f32.mrb[0].mxu0
        %v1844 = vadd.f32 0.0, %v1843
        %v1845 = vpop.f32.mrb[0].mxu0
        %1846 = vmatprep.mubr.bf16.mxu0 0
        %1847 = vmatmul.mubr.bf16.gmra.mrb[0].mxu0 %v1707
        %v1848 = vpop.f32.mrb[0].mxu0
        %v1849 = vadd.f32 0.0, %v1848
        %v1850 = vpop.f32.mrb[0].mxu0
        %v1851 = vpop.f32.mrb[0].mxu0
        %v1852 = vadd.f32 0.0, %v1851
        %v1853 = vpop.f32.mrb[0].mxu0
        %1854 = vmatprep.mubr.bf16.mxu0 0
        %1855 = vmatmul.mubr.bf16.gmra.mrb[0].mxu0 %v1710
        %v1856 = vpop.f32.mrb[0].mxu0
        %v1857 = vadd.f32 0.0, %v1856
        %v1858 = vpop.f32.mrb[0].mxu0
        %v1859 = vpop.f32.mrb[0].mxu0
        %v1860 = vadd.f32 0.0, %v1859
        %v1861 = vpop.f32.mrb[0].mxu0
        %1862 = vmatprep.mubr.bf16.mxu0 0
        %1863 = vmatmul.mubr.bf16.gmra.mrb[0].mxu0 %v1713
        %v1864 = vpop.f32.mrb[0].mxu0
        %v1865 = vadd.f32 0.0, %v1864
        %v1866 = vpop.f32.mrb[0].mxu0
        %v1867 = vpop.f32.mrb[0].mxu0
        %v1868 = vadd.f32 0.0, %v1867
        %v1869 = vpop.f32.mrb[0].mxu0
        %1870 = vmatprep.mubr.bf16.mxu0 0
        %1871 = vmatmul.mubr.bf16.gmra.mrb[0].mxu0 %v1716
        %v1872 = vpop.f32.mrb[0].mxu0
        %v1873 = vadd.f32 0.0, %v1872
        %v1874 = vpop.f32.mrb[0].mxu0
        %v1875 = vpop.f32.mrb[0].mxu0
        %v1876 = vadd.f32 0.0, %v1875
        %v1877 = vpop.f32.mrb[0].mxu0
        %1878 = vdwg.mxu0
        %v1879 = vadd.f32 %v1581, %v1753
        %v1880 = vadd.f32 %v1582, %v1756
        %v1881 = vadd.f32 %v1583, %v1761
        %v1882 = vadd.f32 %v1584, %v1764
        %v1883 = vadd.f32 %v1585, %v1769
        %v1884 = vadd.f32 %v1586, %v1772
        %v1885 = vadd.f32 %v1587, %v1777
        %v1886 = vadd.f32 %v1588, %v1780
        %v1887 = vadd.f32 %v1589, %v1785
        %v1888 = vadd.f32 %v1590, %v1788
        %v1889 = vadd.f32 %v1591, %v1793
        %v1890 = vadd.f32 %v1592, %v1796
        %v1891 = vadd.f32 %v1593, %v1801
        %v1892 = vadd.f32 %v1594, %v1804
        %v1893 = vadd.f32 %v1595, %v1809
        %v1894 = vadd.f32 %v1596, %v1812
        %v1895 = vadd.f32 %v1597, %v1817
        %v1896 = vadd.f32 %v1598, %v1820
        %v1897 = vadd.f32 %v1599, %v1825
        %v1898 = vadd.f32 %v1600, %v1828
        %v1899 = vadd.f32 %v1601, %v1833
        %v1900 = vadd.f32 %v1602, %v1836
        %v1901 = vadd.f32 %v1603, %v1841
        %v1902 = vadd.f32 %v1604, %v1844
        %v1903 = vadd.f32 %v1605, %v1849
        %v1904 = vadd.f32 %v1606, %v1852
        %v1905 = vadd.f32 %v1607, %v1857
        %v1906 = vadd.f32 %v1608, %v1860
        %v1907 = vadd.f32 %v1609, %v1865
        %v1908 = vadd.f32 %v1610, %v1868
        %v1909 = vadd.f32 %v1611, %v1873
        %v1910 = vadd.f32 %v1612, %v1876
        %v1911 = vld [vmem:[%s246 + $0x2] sm:$0xff]
        %v1912 = vld [vmem:[%s246 + $0xa] sm:$0xff]
        %v1913 = vld [vmem:[%s246 + $0x1a] sm:$0xff]
        %v1914 = vld [vmem:[%s246 + $0x22] sm:$0xff]
        %v1915 = vld [vmem:[%s246 + $0x32] sm:$0xff]
        %v1916 = vld [vmem:[%s246 + $0x3a] sm:$0xff]
        %v1917 = vld [vmem:[%s246 + $0x4a] sm:$0xff]
        %v1918 = vld [vmem:[%s246 + $0x52] sm:$0xff]
        %v1919 = vld [vmem:[%s246 + $0x62] sm:$0xff]
        %v1920 = vld [vmem:[%s246 + $0x6a] sm:$0xff]
        %v1921 = vld [vmem:[%s246 + $0x7a] sm:$0xff]
        %v1922 = vld [vmem:[%s246 + $0x82] sm:$0xff]
        %v1923 = vld [vmem:[%s246 + $0x92] sm:$0xff]
        %v1924 = vld [vmem:[%s246 + $0x9a] sm:$0xff]
        %v1925 = vld [vmem:[%s246 + $0xaa] sm:$0xff]
        %v1926 = vld [vmem:[%s246 + $0xb2] sm:$0xff]
        %v1927 = vld [vmem:[%s246 + $0xc2] sm:$0xff]
        %v1928 = vld [vmem:[%s246 + $0xca] sm:$0xff]
        %v1929 = vld [vmem:[%s246 + $0xda] sm:$0xff]
        %v1930 = vld [vmem:[%s246 + $0xe2] sm:$0xff]
        %v1931 = vld [vmem:[%s246 + $0xf2] sm:$0xff]
        %v1932 = vld [vmem:[%s246 + $0xfa] sm:$0xff]
        %v1933 = vld [vmem:[%s246 + $0x10a] sm:$0xff]
        %v1934 = vld [vmem:[%s246 + $0x112] sm:$0xff]
        %v1935 = vld [vmem:[%s246 + $0x122] sm:$0xff]
        %v1936 = vld [vmem:[%s246 + $0x12a] sm:$0xff]
        %v1937 = vld [vmem:[%s246 + $0x13a] sm:$0xff]
        %v1938 = vld [vmem:[%s246 + $0x142] sm:$0xff]
        %v1939 = vld [vmem:[%s246 + $0x152] sm:$0xff]
        %v1940 = vld [vmem:[%s246 + $0x15a] sm:$0xff]
        %v1941 = vld [vmem:[%s246 + $0x16a] sm:$0xff]
        %v1942 = vld [vmem:[%s246 + $0x172] sm:$0xff]
        %v1943 = vpack.c.bf16 %v1912, %v1911
        %v1944 = vpack.c.bf16 %v1914, %v1913
        %v1945 = vpack.c.bf16 %v1916, %v1915
        %v1946 = vpack.c.bf16 %v1918, %v1917
        %v1947 = vpack.c.bf16 %v1920, %v1919
        %v1948 = vpack.c.bf16 %v1922, %v1921
        %v1949 = vpack.c.bf16 %v1924, %v1923
        %v1950 = vpack.c.bf16 %v1926, %v1925
        %v1951 = vpack.c.bf16 %v1928, %v1927
        %v1952 = vpack.c.bf16 %v1930, %v1929
        %v1953 = vpack.c.bf16 %v1932, %v1931
        %v1954 = vpack.c.bf16 %v1934, %v1933
        %v1955 = vpack.c.bf16 %v1936, %v1935
        %v1956 = vpack.c.bf16 %v1938, %v1937
        %v1957 = vpack.c.bf16 %v1940, %v1939
        %v1958 = vpack.c.bf16 %v1942, %v1941
        %s1959 = scalar_lea.vmem %s3, 40
        %v1960 = vld [vmem:[%s1959] sm:$0xf]
        %v1961 = vld [vmem:[%s1959 + $0x4] sm:$0xf]
        %v1964 = vunpack.c.l.b16 %v1960
        %v1965 = vunpack.c.l.b16 %v1961
        %v1966 = vpack.c.b16 %v1965, %v1964
        %v1969 = vsel %vm237, %v1943, 0
        %v1972 = vsel %vm237, %v1944, 0
        %v1975 = vsel %vm237, %v1945, 0
        %v1978 = vsel %vm237, %v1946, 0
        %v1981 = vsel %vm237, %v1947, 0
        %v1984 = vsel %vm237, %v1948, 0
        %v1987 = vsel %vm237, %v1949, 0
        %v1990 = vsel %vm237, %v1950, 0
        %v1993 = vsel %vm237, %v1951, 0
        %v1996 = vsel %vm237, %v1952, 0
        %v1999 = vsel %vm237, %v1953, 0
        %v2002 = vsel %vm237, %v1954, 0
        %v2005 = vsel %vm237, %v1955, 0
        %v2008 = vsel %vm237, %v1956, 0
        %v2011 = vsel %vm237, %v1957, 0
        %v2014 = vsel %vm237, %v1958, 0
        %2016 = vmatprep.subr.bf16.mxu0 0
        %2017 = vmatpush1.bf16.msra.mxu0 %v1966
        %2018 = vmatprep.subr.bf16.mxu0 0
        %2019 = vmatpush1.bf16.msra.mxu0 0
        %2020 = vmatprep.subr.bf16.mxu0 0
        %2021 = vmatpush1.bf16.msra.mxu0 0
        %2022 = vmatprep.subr.bf16.mxu0 0
        %2023 = vmatpush1.bf16.msra.mxu0 0
        %2024 = vmatprep.subr.bf16.mxu0 0
        %2025 = vmatpush1.bf16.msra.mxu0 0
        %2026 = vmatprep.subr.bf16.mxu0 0
        %2027 = vmatpush1.bf16.msra.mxu0 0
        %2028 = vmatprep.subr.bf16.mxu0 0
        %2029 = vmatpush1.bf16.msra.mxu0 0
        %2030 = vmatprep.subr.bf16.mxu0 0
        %2031 = vmatpush1.bf16.msra.mxu0 0
        %2032 = vmatprep.subr.bf16.mxu0 0
        %2033 = vmatpush1.bf16.msra.mxu0 0
        %2034 = vmatprep.subr.bf16.mxu0 0
        %2035 = vmatpush1.bf16.msra.mxu0 0
        %2036 = vmatprep.subr.bf16.mxu0 0
        %2037 = vmatpush1.bf16.msra.mxu0 0
        %2038 = vmatprep.subr.bf16.mxu0 0
        %2039 = vmatpush1.bf16.msra.mxu0 0
        %2040 = vmatprep.subr.bf16.mxu0 0
        %2041 = vmatpush1.bf16.msra.mxu0 0
        %2042 = vmatprep.subr.bf16.mxu0 0
        %2043 = vmatpush1.bf16.msra.mxu0 0
        %2044 = vmatprep.subr.bf16.mxu0 0
        %2045 = vmatpush1.bf16.msra.mxu0 0
        %2046 = vmatprep.subr.bf16.mxu0 0
        %2047 = vmatpush1.bf16.msra.mxu0 0
        %2048 = vmatprep.mubr.bf16.mxu0 0
        %2049 = vmatmul.mubr.bf16.gmra.mrb[0].mxu0 %v1969
        %v2050 = vpop.f32.mrb[0].mxu0
        %v2051 = vadd.f32 0.0, %v2050
        %v2052 = vpop.f32.mrb[0].mxu0
        %v2053 = vpop.f32.mrb[0].mxu0
        %v2054 = vadd.f32 0.0, %v2053
        %v2055 = vpop.f32.mrb[0].mxu0
        %2056 = vmatprep.mubr.bf16.mxu0 0
        %2057 = vmatmul.mubr.bf16.gmra.mrb[0].mxu0 %v1972
        %v2058 = vpop.f32.mrb[0].mxu0
        %v2059 = vadd.f32 0.0, %v2058
        %v2060 = vpop.f32.mrb[0].mxu0
        %v2061 = vpop.f32.mrb[0].mxu0
        %v2062 = vadd.f32 0.0, %v2061
        %v2063 = vpop.f32.mrb[0].mxu0
        %2064 = vmatprep.mubr.bf16.mxu0 0
        %2065 = vmatmul.mubr.bf16.gmra.mrb[0].mxu0 %v1975
        %v2066 = vpop.f32.mrb[0].mxu0
        %v2067 = vadd.f32 0.0, %v2066
        %v2068 = vpop.f32.mrb[0].mxu0
        %v2069 = vpop.f32.mrb[0].mxu0
        %v2070 = vadd.f32 0.0, %v2069
        %v2071 = vpop.f32.mrb[0].mxu0
        %2072 = vmatprep.mubr.bf16.mxu0 0
        %2073 = vmatmul.mubr.bf16.gmra.mrb[0].mxu0 %v1978
        %v2074 = vpop.f32.mrb[0].mxu0
        %v2075 = vadd.f32 0.0, %v2074
        %v2076 = vpop.f32.mrb[0].mxu0
        %v2077 = vpop.f32.mrb[0].mxu0
        %v2078 = vadd.f32 0.0, %v2077
        %v2079 = vpop.f32.mrb[0].mxu0
        %2080 = vmatprep.mubr.bf16.mxu0 0
        %2081 = vmatmul.mubr.bf16.gmra.mrb[0].mxu0 %v1981
        %v2082 = vpop.f32.mrb[0].mxu0
        %v2083 = vadd.f32 0.0, %v2082
        %v2084 = vpop.f32.mrb[0].mxu0
        %v2085 = vpop.f32.mrb[0].mxu0
        %v2086 = vadd.f32 0.0, %v2085
        %v2087 = vpop.f32.mrb[0].mxu0
        %2088 = vmatprep.mubr.bf16.mxu0 0
        %2089 = vmatmul.mubr.bf16.gmra.mrb[0].mxu0 %v1984
        %v2090 = vpop.f32.mrb[0].mxu0
        %v2091 = vadd.f32 0.0, %v2090
        %v2092 = vpop.f32.mrb[0].mxu0
        %v2093 = vpop.f32.mrb[0].mxu0
        %v2094 = vadd.f32 0.0, %v2093
        %v2095 = vpop.f32.mrb[0].mxu0
        %2096 = vmatprep.mubr.bf16.mxu0 0
        %2097 = vmatmul.mubr.bf16.gmra.mrb[0].mxu0 %v1987
        %v2098 = vpop.f32.mrb[0].mxu0
        %v2099 = vadd.f32 0.0, %v2098
        %v2100 = vpop.f32.mrb[0].mxu0
        %v2101 = vpop.f32.mrb[0].mxu0
        %v2102 = vadd.f32 0.0, %v2101
        %v2103 = vpop.f32.mrb[0].mxu0
        %2104 = vmatprep.mubr.bf16.mxu0 0
        %2105 = vmatmul.mubr.bf16.gmra.mrb[0].mxu0 %v1990
        %v2106 = vpop.f32.mrb[0].mxu0
        %v2107 = vadd.f32 0.0, %v2106
        %v2108 = vpop.f32.mrb[0].mxu0
        %v2109 = vpop.f32.mrb[0].mxu0
        %v2110 = vadd.f32 0.0, %v2109
        %v2111 = vpop.f32.mrb[0].mxu0
        %2112 = vmatprep.mubr.bf16.mxu0 0
        %2113 = vmatmul.mubr.bf16.gmra.mrb[0].mxu0 %v1993
        %v2114 = vpop.f32.mrb[0].mxu0
        %v2115 = vadd.f32 0.0, %v2114
        %v2116 = vpop.f32.mrb[0].mxu0
        %v2117 = vpop.f32.mrb[0].mxu0
        %v2118 = vadd.f32 0.0, %v2117
        %v2119 = vpop.f32.mrb[0].mxu0
        %2120 = vmatprep.mubr.bf16.mxu0 0
        %2121 = vmatmul.mubr.bf16.gmra.mrb[0].mxu0 %v1996
        %v2122 = vpop.f32.mrb[0].mxu0
        %v2123 = vadd.f32 0.0, %v2122
        %v2124 = vpop.f32.mrb[0].mxu0
        %v2125 = vpop.f32.mrb[0].mxu0
        %v2126 = vadd.f32 0.0, %v2125
        %v2127 = vpop.f32.mrb[0].mxu0
        %2128 = vmatprep.mubr.bf16.mxu0 0
        %2129 = vmatmul.mubr.bf16.gmra.mrb[0].mxu0 %v1999
        %v2130 = vpop.f32.mrb[0].mxu0
        %v2131 = vadd.f32 0.0, %v2130
        %v2132 = vpop.f32.mrb[0].mxu0
        %v2133 = vpop.f32.mrb[0].mxu0
        %v2134 = vadd.f32 0.0, %v2133
        %v2135 = vpop.f32.mrb[0].mxu0
        %2136 = vmatprep.mubr.bf16.mxu0 0
        %2137 = vmatmul.mubr.bf16.gmra.mrb[0].mxu0 %v2002
        %v2138 = vpop.f32.mrb[0].mxu0
        %v2139 = vadd.f32 0.0, %v2138
        %v2140 = vpop.f32.mrb[0].mxu0
        %v2141 = vpop.f32.mrb[0].mxu0
        %v2142 = vadd.f32 0.0, %v2141
        %v2143 = vpop.f32.mrb[0].mxu0
        %2144 = vmatprep.mubr.bf16.mxu0 0
        %2145 = vmatmul.mubr.bf16.gmra.mrb[0].mxu0 %v2005
        %v2146 = vpop.f32.mrb[0].mxu0
        %v2147 = vadd.f32 0.0, %v2146
        %v2148 = vpop.f32.mrb[0].mxu0
        %v2149 = vpop.f32.mrb[0].mxu0
        %v2150 = vadd.f32 0.0, %v2149
        %v2151 = vpop.f32.mrb[0].mxu0
        %2152 = vmatprep.mubr.bf16.mxu0 0
        %2153 = vmatmul.mubr.bf16.gmra.mrb[0].mxu0 %v2008
        %v2154 = vpop.f32.mrb[0].mxu0
        %v2155 = vadd.f32 0.0, %v2154
        %v2156 = vpop.f32.mrb[0].mxu0
        %v2157 = vpop.f32.mrb[0].mxu0
        %v2158 = vadd.f32 0.0, %v2157
        %v2159 = vpop.f32.mrb[0].mxu0
        %2160 = vmatprep.mubr.bf16.mxu0 0
        %2161 = vmatmul.mubr.bf16.gmra.mrb[0].mxu0 %v2011
        %v2162 = vpop.f32.mrb[0].mxu0
        %v2163 = vadd.f32 0.0, %v2162
        %v2164 = vpop.f32.mrb[0].mxu0
        %v2165 = vpop.f32.mrb[0].mxu0
        %v2166 = vadd.f32 0.0, %v2165
        %v2167 = vpop.f32.mrb[0].mxu0
        %2168 = vmatprep.mubr.bf16.mxu0 0
        %2169 = vmatmul.mubr.bf16.gmra.mrb[0].mxu0 %v2014
        %v2170 = vpop.f32.mrb[0].mxu0
        %v2171 = vadd.f32 0.0, %v2170
        %v2172 = vpop.f32.mrb[0].mxu0
        %v2173 = vpop.f32.mrb[0].mxu0
        %v2174 = vadd.f32 0.0, %v2173
        %v2175 = vpop.f32.mrb[0].mxu0
        %2176 = vdwg.mxu0
        %v2177 = vadd.f32 %v1879, %v2051
        %v2178 = vadd.f32 %v1880, %v2054
        %v2179 = vadd.f32 %v1881, %v2059
        %v2180 = vadd.f32 %v1882, %v2062
        %v2181 = vadd.f32 %v1883, %v2067
        %v2182 = vadd.f32 %v1884, %v2070
        %v2183 = vadd.f32 %v1885, %v2075
        %v2184 = vadd.f32 %v1886, %v2078
        %v2185 = vadd.f32 %v1887, %v2083
        %v2186 = vadd.f32 %v1888, %v2086
        %v2187 = vadd.f32 %v1889, %v2091
        %v2188 = vadd.f32 %v1890, %v2094
        %v2189 = vadd.f32 %v1891, %v2099
        %v2190 = vadd.f32 %v1892, %v2102
        %v2191 = vadd.f32 %v1893, %v2107
        %v2192 = vadd.f32 %v1894, %v2110
        %v2193 = vadd.f32 %v1895, %v2115
        %v2194 = vadd.f32 %v1896, %v2118
        %v2195 = vadd.f32 %v1897, %v2123
        %v2196 = vadd.f32 %v1898, %v2126
        %v2197 = vadd.f32 %v1899, %v2131
        %v2198 = vadd.f32 %v1900, %v2134
        %v2199 = vadd.f32 %v1901, %v2139
        %v2200 = vadd.f32 %v1902, %v2142
        %v2201 = vadd.f32 %v1903, %v2147
        %v2202 = vadd.f32 %v1904, %v2150
        %v2203 = vadd.f32 %v1905, %v2155
        %v2204 = vadd.f32 %v1906, %v2158
        %v2205 = vadd.f32 %v1907, %v2163
        %v2206 = vadd.f32 %v1908, %v2166
        %v2207 = vadd.f32 %v1909, %v2171
        %v2208 = vadd.f32 %v1910, %v2174
        %s2209 = scalar_lea.vmem [#allocation2], 48
        %v2210 = vld [vmem:[%s2209] sm:$0xff]
        %v2211 = vld [vmem:[%s2209 + $0x8] sm:$0xff]
        %v2212 = vld [vmem:[%s2209 + $0x18] sm:$0xff]
        %v2213 = vld [vmem:[%s2209 + $0x20] sm:$0xff]
        %v2214 = vld [vmem:[%s2209 + $0x30] sm:$0xff]
        %v2215 = vld [vmem:[%s2209 + $0x38] sm:$0xff]
        %v2216 = vld [vmem:[%s2209 + $0x48] sm:$0xff]
        %v2217 = vld [vmem:[%s2209 + $0x50] sm:$0xff]
        %v2218 = vld [vmem:[%s2209 + $0x60] sm:$0xff]
        %v2219 = vld [vmem:[%s2209 + $0x68] sm:$0xff]
        %v2220 = vld [vmem:[%s2209 + $0x78] sm:$0xff]
        %v2221 = vld [vmem:[%s2209 + $0x80] sm:$0xff]
        %v2222 = vld [vmem:[%s2209 + $0x90] sm:$0xff]
        %v2223 = vld [vmem:[%s2209 + $0x98] sm:$0xff]
        %v2224 = vld [vmem:[%s2209 + $0xa8] sm:$0xff]
        %v2225 = vld [vmem:[%s2209 + $0xb0] sm:$0xff]
        %v2226 = vld [vmem:[%s2209 + $0xc0] sm:$0xff]
        %v2227 = vld [vmem:[%s2209 + $0xc8] sm:$0xff]
        %v2228 = vld [vmem:[%s2209 + $0xd8] sm:$0xff]
        %v2229 = vld [vmem:[%s2209 + $0xe0] sm:$0xff]
        %v2230 = vld [vmem:[%s2209 + $0xf0] sm:$0xff]
        %v2231 = vld [vmem:[%s2209 + $0xf8] sm:$0xff]
        %v2232 = vld [vmem:[%s2209 + $0x108] sm:$0xff]
        %v2233 = vld [vmem:[%s2209 + $0x110] sm:$0xff]
        %v2234 = vld [vmem:[%s2209 + $0x120] sm:$0xff]
        %v2235 = vld [vmem:[%s2209 + $0x128] sm:$0xff]
        %v2236 = vld [vmem:[%s2209 + $0x138] sm:$0xff]
        %v2237 = vld [vmem:[%s2209 + $0x140] sm:$0xff]
        %v2238 = vld [vmem:[%s2209 + $0x150] sm:$0xff]
        %v2239 = vld [vmem:[%s2209 + $0x158] sm:$0xff]
        %v2240 = vld [vmem:[%s2209 + $0x168] sm:$0xff]
        %v2241 = vld [vmem:[%s2209 + $0x170] sm:$0xff]
        %v2242 = vpack.c.bf16 %v2211, %v2210
        %v2243 = vpack.c.bf16 %v2213, %v2212
        %v2244 = vpack.c.bf16 %v2215, %v2214
        %v2245 = vpack.c.bf16 %v2217, %v2216
        %v2246 = vpack.c.bf16 %v2219, %v2218
        %v2247 = vpack.c.bf16 %v2221, %v2220
        %v2248 = vpack.c.bf16 %v2223, %v2222
        %v2249 = vpack.c.bf16 %v2225, %v2224
        %v2250 = vpack.c.bf16 %v2227, %v2226
        %v2251 = vpack.c.bf16 %v2229, %v2228
        %v2252 = vpack.c.bf16 %v2231, %v2230
        %v2253 = vpack.c.bf16 %v2233, %v2232
        %v2254 = vpack.c.bf16 %v2235, %v2234
        %v2255 = vpack.c.bf16 %v2237, %v2236
        %v2256 = vpack.c.bf16 %v2239, %v2238
        %v2257 = vpack.c.bf16 %v2241, %v2240
        %s2258 = scalar_lea.vmem %s3, 48
        %v2259 = vld [vmem:[%s2258] sm:$0xf]
        %v2260 = vld [vmem:[%s2258 + $0x4] sm:$0xf]
        %v2263 = vunpack.c.l.b16 %v2259
        %v2264 = vunpack.c.l.b16 %v2260
        %v2265 = vpack.c.b16 %v2264, %v2263
        %v2268 = vsel %vm237, %v2242, 0
        %v2271 = vsel %vm237, %v2243, 0
        %v2274 = vsel %vm237, %v2244, 0
        %v2277 = vsel %vm237, %v2245, 0
        %v2280 = vsel %vm237, %v2246, 0
        %v2283 = vsel %vm237, %v2247, 0
        %v2286 = vsel %vm237, %v2248, 0
        %v2289 = vsel %vm237, %v2249, 0
        %v2292 = vsel %vm237, %v2250, 0
        %v2295 = vsel %vm237, %v2251, 0
        %v2298 = vsel %vm237, %v2252, 0
        %v2301 = vsel %vm237, %v2253, 0
        %v2304 = vsel %vm237, %v2254, 0
        %v2307 = vsel %vm237, %v2255, 0
        %v2310 = vsel %vm237, %v2256, 0
        %v2313 = vsel %vm237, %v2257, 0
        %2315 = vmatprep.subr.bf16.mxu0 0
        %2316 = vmatpush1.bf16.msra.mxu0 %v2265
        %2317 = vmatprep.subr.bf16.mxu0 0
        %2318 = vmatpush1.bf16.msra.mxu0 0
        %2319 = vmatprep.subr.bf16.mxu0 0
        %2320 = vmatpush1.bf16.msra.mxu0 0
        %2321 = vmatprep.subr.bf16.mxu0 0
        %2322 = vmatpush1.bf16.msra.mxu0 0
        %2323 = vmatprep.subr.bf16.mxu0 0
        %2324 = vmatpush1.bf16.msra.mxu0 0
        %2325 = vmatprep.subr.bf16.mxu0 0
        %2326 = vmatpush1.bf16.msra.mxu0 0
        %2327 = vmatprep.subr.bf16.mxu0 0
        %2328 = vmatpush1.bf16.msra.mxu0 0
        %2329 = vmatprep.subr.bf16.mxu0 0
        %2330 = vmatpush1.bf16.msra.mxu0 0
        %2331 = vmatprep.subr.bf16.mxu0 0
        %2332 = vmatpush1.bf16.msra.mxu0 0
        %2333 = vmatprep.subr.bf16.mxu0 0
        %2334 = vmatpush1.bf16.msra.mxu0 0
        %2335 = vmatprep.subr.bf16.mxu0 0
        %2336 = vmatpush1.bf16.msra.mxu0 0
        %2337 = vmatprep.subr.bf16.mxu0 0
        %2338 = vmatpush1.bf16.msra.mxu0 0
        %2339 = vmatprep.subr.bf16.mxu0 0
        %2340 = vmatpush1.bf16.msra.mxu0 0
        %2341 = vmatprep.subr.bf16.mxu0 0
        %2342 = vmatpush1.bf16.msra.mxu0 0
        %2343 = vmatprep.subr.bf16.mxu0 0
        %2344 = vmatpush1.bf16.msra.mxu0 0
        %2345 = vmatprep.subr.bf16.mxu0 0
        %2346 = vmatpush1.bf16.msra.mxu0 0
        %2347 = vmatprep.mubr.bf16.mxu0 0
        %2348 = vmatmul.mubr.bf16.gmra.mrb[0].mxu0 %v2268
        %v2349 = vpop.f32.mrb[0].mxu0
        %v2350 = vadd.f32 0.0, %v2349
        %v2351 = vpop.f32.mrb[0].mxu0
        %v2352 = vpop.f32.mrb[0].mxu0
        %v2353 = vadd.f32 0.0, %v2352
        %v2354 = vpop.f32.mrb[0].mxu0
        %2355 = vmatprep.mubr.bf16.mxu0 0
        %2356 = vmatmul.mubr.bf16.gmra.mrb[0].mxu0 %v2271
        %v2357 = vpop.f32.mrb[0].mxu0
        %v2358 = vadd.f32 0.0, %v2357
        %v2359 = vpop.f32.mrb[0].mxu0
        %v2360 = vpop.f32.mrb[0].mxu0
        %v2361 = vadd.f32 0.0, %v2360
        %v2362 = vpop.f32.mrb[0].mxu0
        %2363 = vmatprep.mubr.bf16.mxu0 0
        %2364 = vmatmul.mubr.bf16.gmra.mrb[0].mxu0 %v2274
        %v2365 = vpop.f32.mrb[0].mxu0
        %v2366 = vadd.f32 0.0, %v2365
        %v2367 = vpop.f32.mrb[0].mxu0
        %v2368 = vpop.f32.mrb[0].mxu0
        %v2369 = vadd.f32 0.0, %v2368
        %v2370 = vpop.f32.mrb[0].mxu0
        %2371 = vmatprep.mubr.bf16.mxu0 0
        %2372 = vmatmul.mubr.bf16.gmra.mrb[0].mxu0 %v2277
        %v2373 = vpop.f32.mrb[0].mxu0
        %v2374 = vadd.f32 0.0, %v2373
        %v2375 = vpop.f32.mrb[0].mxu0
        %v2376 = vpop.f32.mrb[0].mxu0
        %v2377 = vadd.f32 0.0, %v2376
        %v2378 = vpop.f32.mrb[0].mxu0
        %2379 = vmatprep.mubr.bf16.mxu0 0
        %2380 = vmatmul.mubr.bf16.gmra.mrb[0].mxu0 %v2280
        %v2381 = vpop.f32.mrb[0].mxu0
        %v2382 = vadd.f32 0.0, %v2381
        %v2383 = vpop.f32.mrb[0].mxu0
        %v2384 = vpop.f32.mrb[0].mxu0
        %v2385 = vadd.f32 0.0, %v2384
        %v2386 = vpop.f32.mrb[0].mxu0
        %2387 = vmatprep.mubr.bf16.mxu0 0
        %2388 = vmatmul.mubr.bf16.gmra.mrb[0].mxu0 %v2283
        %v2389 = vpop.f32.mrb[0].mxu0
        %v2390 = vadd.f32 0.0, %v2389
        %v2391 = vpop.f32.mrb[0].mxu0
        %v2392 = vpop.f32.mrb[0].mxu0
        %v2393 = vadd.f32 0.0, %v2392
        %v2394 = vpop.f32.mrb[0].mxu0
        %2395 = vmatprep.mubr.bf16.mxu0 0
        %2396 = vmatmul.mubr.bf16.gmra.mrb[0].mxu0 %v2286
        %v2397 = vpop.f32.mrb[0].mxu0
        %v2398 = vadd.f32 0.0, %v2397
        %v2399 = vpop.f32.mrb[0].mxu0
        %v2400 = vpop.f32.mrb[0].mxu0
        %v2401 = vadd.f32 0.0, %v2400
        %v2402 = vpop.f32.mrb[0].mxu0
        %2403 = vmatprep.mubr.bf16.mxu0 0
        %2404 = vmatmul.mubr.bf16.gmra.mrb[0].mxu0 %v2289
        %v2405 = vpop.f32.mrb[0].mxu0
        %v2406 = vadd.f32 0.0, %v2405
        %v2407 = vpop.f32.mrb[0].mxu0
        %v2408 = vpop.f32.mrb[0].mxu0
        %v2409 = vadd.f32 0.0, %v2408
        %v2410 = vpop.f32.mrb[0].mxu0
        %2411 = vmatprep.mubr.bf16.mxu0 0
        %2412 = vmatmul.mubr.bf16.gmra.mrb[0].mxu0 %v2292
        %v2413 = vpop.f32.mrb[0].mxu0
        %v2414 = vadd.f32 0.0, %v2413
        %v2415 = vpop.f32.mrb[0].mxu0
        %v2416 = vpop.f32.mrb[0].mxu0
        %v2417 = vadd.f32 0.0, %v2416
        %v2418 = vpop.f32.mrb[0].mxu0
        %2419 = vmatprep.mubr.bf16.mxu0 0
        %2420 = vmatmul.mubr.bf16.gmra.mrb[0].mxu0 %v2295
        %v2421 = vpop.f32.mrb[0].mxu0
        %v2422 = vadd.f32 0.0, %v2421
        %v2423 = vpop.f32.mrb[0].mxu0
        %v2424 = vpop.f32.mrb[0].mxu0
        %v2425 = vadd.f32 0.0, %v2424
        %v2426 = vpop.f32.mrb[0].mxu0
        %2427 = vmatprep.mubr.bf16.mxu0 0
        %2428 = vmatmul.mubr.bf16.gmra.mrb[0].mxu0 %v2298
        %v2429 = vpop.f32.mrb[0].mxu0
        %v2430 = vadd.f32 0.0, %v2429
        %v2431 = vpop.f32.mrb[0].mxu0
        %v2432 = vpop.f32.mrb[0].mxu0
        %v2433 = vadd.f32 0.0, %v2432
        %v2434 = vpop.f32.mrb[0].mxu0
        %2435 = vmatprep.mubr.bf16.mxu0 0
        %2436 = vmatmul.mubr.bf16.gmra.mrb[0].mxu0 %v2301
        %v2437 = vpop.f32.mrb[0].mxu0
        %v2438 = vadd.f32 0.0, %v2437
        %v2439 = vpop.f32.mrb[0].mxu0
        %v2440 = vpop.f32.mrb[0].mxu0
        %v2441 = vadd.f32 0.0, %v2440
        %v2442 = vpop.f32.mrb[0].mxu0
        %2443 = vmatprep.mubr.bf16.mxu0 0
        %2444 = vmatmul.mubr.bf16.gmra.mrb[0].mxu0 %v2304
        %v2445 = vpop.f32.mrb[0].mxu0
        %v2446 = vadd.f32 0.0, %v2445
        %v2447 = vpop.f32.mrb[0].mxu0
        %v2448 = vpop.f32.mrb[0].mxu0
        %v2449 = vadd.f32 0.0, %v2448
        %v2450 = vpop.f32.mrb[0].mxu0
        %2451 = vmatprep.mubr.bf16.mxu0 0
        %2452 = vmatmul.mubr.bf16.gmra.mrb[0].mxu0 %v2307
        %v2453 = vpop.f32.mrb[0].mxu0
        %v2454 = vadd.f32 0.0, %v2453
        %v2455 = vpop.f32.mrb[0].mxu0
        %v2456 = vpop.f32.mrb[0].mxu0
        %v2457 = vadd.f32 0.0, %v2456
        %v2458 = vpop.f32.mrb[0].mxu0
        %2459 = vmatprep.mubr.bf16.mxu0 0
        %2460 = vmatmul.mubr.bf16.gmra.mrb[0].mxu0 %v2310
        %v2461 = vpop.f32.mrb[0].mxu0
        %v2462 = vadd.f32 0.0, %v2461
        %v2463 = vpop.f32.mrb[0].mxu0
        %v2464 = vpop.f32.mrb[0].mxu0
        %v2465 = vadd.f32 0.0, %v2464
        %v2466 = vpop.f32.mrb[0].mxu0
        %2467 = vmatprep.mubr.bf16.mxu0 0
        %2468 = vmatmul.mubr.bf16.gmra.mrb[0].mxu0 %v2313
        %v2469 = vpop.f32.mrb[0].mxu0
        %v2470 = vadd.f32 0.0, %v2469
        %v2471 = vpop.f32.mrb[0].mxu0
        %v2472 = vpop.f32.mrb[0].mxu0
        %v2473 = vadd.f32 0.0, %v2472
        %v2474 = vpop.f32.mrb[0].mxu0
        %2475 = vdwg.mxu0
        %v2476 = vadd.f32 %v2177, %v2350
        %v2477 = vadd.f32 %v2178, %v2353
        %v2478 = vadd.f32 %v2179, %v2358
        %v2479 = vadd.f32 %v2180, %v2361
        %v2480 = vadd.f32 %v2181, %v2366
        %v2481 = vadd.f32 %v2182, %v2369
        %v2482 = vadd.f32 %v2183, %v2374
        %v2483 = vadd.f32 %v2184, %v2377
        %v2484 = vadd.f32 %v2185, %v2382
        %v2485 = vadd.f32 %v2186, %v2385
        %v2486 = vadd.f32 %v2187, %v2390
        %v2487 = vadd.f32 %v2188, %v2393
        %v2488 = vadd.f32 %v2189, %v2398
        %v2489 = vadd.f32 %v2190, %v2401
        %v2490 = vadd.f32 %v2191, %v2406
        %v2491 = vadd.f32 %v2192, %v2409
        %v2492 = vadd.f32 %v2193, %v2414
        %v2493 = vadd.f32 %v2194, %v2417
        %v2494 = vadd.f32 %v2195, %v2422
        %v2495 = vadd.f32 %v2196, %v2425
        %v2496 = vadd.f32 %v2197, %v2430
        %v2497 = vadd.f32 %v2198, %v2433
        %v2498 = vadd.f32 %v2199, %v2438
        %v2499 = vadd.f32 %v2200, %v2441
        %v2500 = vadd.f32 %v2201, %v2446
        %v2501 = vadd.f32 %v2202, %v2449
        %v2502 = vadd.f32 %v2203, %v2454
        %v2503 = vadd.f32 %v2204, %v2457
        %v2504 = vadd.f32 %v2205, %v2462
        %v2505 = vadd.f32 %v2206, %v2465
        %v2506 = vadd.f32 %v2207, %v2470
        %v2507 = vadd.f32 %v2208, %v2473
        %v2508 = vld [vmem:[%s2209 + $0x1] sm:$0xff]
        %v2509 = vld [vmem:[%s2209 + $0x9] sm:$0xff]
        %v2510 = vld [vmem:[%s2209 + $0x19] sm:$0xff]
        %v2511 = vld [vmem:[%s2209 + $0x21] sm:$0xff]
        %v2512 = vld [vmem:[%s2209 + $0x31] sm:$0xff]
        %v2513 = vld [vmem:[%s2209 + $0x39] sm:$0xff]
        %v2514 = vld [vmem:[%s2209 + $0x49] sm:$0xff]
        %v2515 = vld [vmem:[%s2209 + $0x51] sm:$0xff]
        %v2516 = vld [vmem:[%s2209 + $0x61] sm:$0xff]
        %v2517 = vld [vmem:[%s2209 + $0x69] sm:$0xff]
        %v2518 = vld [vmem:[%s2209 + $0x79] sm:$0xff]
        %v2519 = vld [vmem:[%s2209 + $0x81] sm:$0xff]
        %v2520 = vld [vmem:[%s2209 + $0x91] sm:$0xff]
        %v2521 = vld [vmem:[%s2209 + $0x99] sm:$0xff]
        %v2522 = vld [vmem:[%s2209 + $0xa9] sm:$0xff]
        %v2523 = vld [vmem:[%s2209 + $0xb1] sm:$0xff]
        %v2524 = vld [vmem:[%s2209 + $0xc1] sm:$0xff]
        %v2525 = vld [vmem:[%s2209 + $0xc9] sm:$0xff]
        %v2526 = vld [vmem:[%s2209 + $0xd9] sm:$0xff]
        %v2527 = vld [vmem:[%s2209 + $0xe1] sm:$0xff]
        %v2528 = vld [vmem:[%s2209 + $0xf1] sm:$0xff]
        %v2529 = vld [vmem:[%s2209 + $0xf9] sm:$0xff]
        %v2530 = vld [vmem:[%s2209 + $0x109] sm:$0xff]
        %v2531 = vld [vmem:[%s2209 + $0x111] sm:$0xff]
        %v2532 = vld [vmem:[%s2209 + $0x121] sm:$0xff]
        %v2533 = vld [vmem:[%s2209 + $0x129] sm:$0xff]
        %v2534 = vld [vmem:[%s2209 + $0x139] sm:$0xff]
        %v2535 = vld [vmem:[%s2209 + $0x141] sm:$0xff]
        %v2536 = vld [vmem:[%s2209 + $0x151] sm:$0xff]
        %v2537 = vld [vmem:[%s2209 + $0x159] sm:$0xff]
        %v2538 = vld [vmem:[%s2209 + $0x169] sm:$0xff]
        %v2539 = vld [vmem:[%s2209 + $0x171] sm:$0xff]
        %v2540 = vpack.c.bf16 %v2509, %v2508
        %v2541 = vpack.c.bf16 %v2511, %v2510
        %v2542 = vpack.c.bf16 %v2513, %v2512
        %v2543 = vpack.c.bf16 %v2515, %v2514
        %v2544 = vpack.c.bf16 %v2517, %v2516
        %v2545 = vpack.c.bf16 %v2519, %v2518
        %v2546 = vpack.c.bf16 %v2521, %v2520
        %v2547 = vpack.c.bf16 %v2523, %v2522
        %v2548 = vpack.c.bf16 %v2525, %v2524
        %v2549 = vpack.c.bf16 %v2527, %v2526
        %v2550 = vpack.c.bf16 %v2529, %v2528
        %v2551 = vpack.c.bf16 %v2531, %v2530
        %v2552 = vpack.c.bf16 %v2533, %v2532
        %v2553 = vpack.c.bf16 %v2535, %v2534
        %v2554 = vpack.c.bf16 %v2537, %v2536
        %v2555 = vpack.c.bf16 %v2539, %v2538
        %s2556 = scalar_lea.vmem %s3, 56
        %v2557 = vld [vmem:[%s2556] sm:$0xf]
        %v2558 = vld [vmem:[%s2556 + $0x4] sm:$0xf]
        %v2561 = vunpack.c.l.b16 %v2557
        %v2562 = vunpack.c.l.b16 %v2558
        %v2563 = vpack.c.b16 %v2562, %v2561
        %v2566 = vsel %vm237, %v2540, 0
        %v2569 = vsel %vm237, %v2541, 0
        %v2572 = vsel %vm237, %v2542, 0
        %v2575 = vsel %vm237, %v2543, 0
        %v2578 = vsel %vm237, %v2544, 0
        %v2581 = vsel %vm237, %v2545, 0
        %v2584 = vsel %vm237, %v2546, 0
        %v2587 = vsel %vm237, %v2547, 0
        %v2590 = vsel %vm237, %v2548, 0
        %v2593 = vsel %vm237, %v2549, 0
        %v2596 = vsel %vm237, %v2550, 0
        %v2599 = vsel %vm237, %v2551, 0
        %v2602 = vsel %vm237, %v2552, 0
        %v2605 = vsel %vm237, %v2553, 0
        %v2608 = vsel %vm237, %v2554, 0
        %v2611 = vsel %vm237, %v2555, 0
        %2613 = vmatprep.subr.bf16.mxu0 0
        %2614 = vmatpush1.bf16.msra.mxu0 %v2563
        %2615 = vmatprep.subr.bf16.mxu0 0
        %2616 = vmatpush1.bf16.msra.mxu0 0
        %2617 = vmatprep.subr.bf16.mxu0 0
        %2618 = vmatpush1.bf16.msra.mxu0 0
        %2619 = vmatprep.subr.bf16.mxu0 0
        %2620 = vmatpush1.bf16.msra.mxu0 0
        %2621 = vmatprep.subr.bf16.mxu0 0
        %2622 = vmatpush1.bf16.msra.mxu0 0
        %2623 = vmatprep.subr.bf16.mxu0 0
        %2624 = vmatpush1.bf16.msra.mxu0 0
        %2625 = vmatprep.subr.bf16.mxu0 0
        %2626 = vmatpush1.bf16.msra.mxu0 0
        %2627 = vmatprep.subr.bf16.mxu0 0
        %2628 = vmatpush1.bf16.msra.mxu0 0
        %2629 = vmatprep.subr.bf16.mxu0 0
        %2630 = vmatpush1.bf16.msra.mxu0 0
        %2631 = vmatprep.subr.bf16.mxu0 0
        %2632 = vmatpush1.bf16.msra.mxu0 0
        %2633 = vmatprep.subr.bf16.mxu0 0
        %2634 = vmatpush1.bf16.msra.mxu0 0
        %2635 = vmatprep.subr.bf16.mxu0 0
        %2636 = vmatpush1.bf16.msra.mxu0 0
        %2637 = vmatprep.subr.bf16.mxu0 0
        %2638 = vmatpush1.bf16.msra.mxu0 0
        %2639 = vmatprep.subr.bf16.mxu0 0
        %2640 = vmatpush1.bf16.msra.mxu0 0
        %2641 = vmatprep.subr.bf16.mxu0 0
        %2642 = vmatpush1.bf16.msra.mxu0 0
        %2643 = vmatprep.subr.bf16.mxu0 0
        %2644 = vmatpush1.bf16.msra.mxu0 0
        %2645 = vmatprep.mubr.bf16.mxu0 0
        %2646 = vmatmul.mubr.bf16.gmra.mrb[0].mxu0 %v2566
        %v2647 = vpop.f32.mrb[0].mxu0
        %v2648 = vadd.f32 0.0, %v2647
        %v2649 = vpop.f32.mrb[0].mxu0
        %v2650 = vpop.f32.mrb[0].mxu0
        %v2651 = vadd.f32 0.0, %v2650
        %v2652 = vpop.f32.mrb[0].mxu0
        %2653 = vmatprep.mubr.bf16.mxu0 0
        %2654 = vmatmul.mubr.bf16.gmra.mrb[0].mxu0 %v2569
        %v2655 = vpop.f32.mrb[0].mxu0
        %v2656 = vadd.f32 0.0, %v2655
        %v2657 = vpop.f32.mrb[0].mxu0
        %v2658 = vpop.f32.mrb[0].mxu0
        %v2659 = vadd.f32 0.0, %v2658
        %v2660 = vpop.f32.mrb[0].mxu0
        %2661 = vmatprep.mubr.bf16.mxu0 0
        %2662 = vmatmul.mubr.bf16.gmra.mrb[0].mxu0 %v2572
        %v2663 = vpop.f32.mrb[0].mxu0
        %v2664 = vadd.f32 0.0, %v2663
        %v2665 = vpop.f32.mrb[0].mxu0
        %v2666 = vpop.f32.mrb[0].mxu0
        %v2667 = vadd.f32 0.0, %v2666
        %v2668 = vpop.f32.mrb[0].mxu0
        %2669 = vmatprep.mubr.bf16.mxu0 0
        %2670 = vmatmul.mubr.bf16.gmra.mrb[0].mxu0 %v2575
        %v2671 = vpop.f32.mrb[0].mxu0
        %v2672 = vadd.f32 0.0, %v2671
        %v2673 = vpop.f32.mrb[0].mxu0
        %v2674 = vpop.f32.mrb[0].mxu0
        %v2675 = vadd.f32 0.0, %v2674
        %v2676 = vpop.f32.mrb[0].mxu0
        %2677 = vmatprep.mubr.bf16.mxu0 0
        %2678 = vmatmul.mubr.bf16.gmra.mrb[0].mxu0 %v2578
        %v2679 = vpop.f32.mrb[0].mxu0
        %v2680 = vadd.f32 0.0, %v2679
        %v2681 = vpop.f32.mrb[0].mxu0
        %v2682 = vpop.f32.mrb[0].mxu0
        %v2683 = vadd.f32 0.0, %v2682
        %v2684 = vpop.f32.mrb[0].mxu0
        %2685 = vmatprep.mubr.bf16.mxu0 0
        %2686 = vmatmul.mubr.bf16.gmra.mrb[0].mxu0 %v2581
        %v2687 = vpop.f32.mrb[0].mxu0
        %v2688 = vadd.f32 0.0, %v2687
        %v2689 = vpop.f32.mrb[0].mxu0
        %v2690 = vpop.f32.mrb[0].mxu0
        %v2691 = vadd.f32 0.0, %v2690
        %v2692 = vpop.f32.mrb[0].mxu0
        %2693 = vmatprep.mubr.bf16.mxu0 0
        %2694 = vmatmul.mubr.bf16.gmra.mrb[0].mxu0 %v2584
        %v2695 = vpop.f32.mrb[0].mxu0
        %v2696 = vadd.f32 0.0, %v2695
        %v2697 = vpop.f32.mrb[0].mxu0
        %v2698 = vpop.f32.mrb[0].mxu0
        %v2699 = vadd.f32 0.0, %v2698
        %v2700 = vpop.f32.mrb[0].mxu0
        %2701 = vmatprep.mubr.bf16.mxu0 0
        %2702 = vmatmul.mubr.bf16.gmra.mrb[0].mxu0 %v2587
        %v2703 = vpop.f32.mrb[0].mxu0
        %v2704 = vadd.f32 0.0, %v2703
        %v2705 = vpop.f32.mrb[0].mxu0
        %v2706 = vpop.f32.mrb[0].mxu0
        %v2707 = vadd.f32 0.0, %v2706
        %v2708 = vpop.f32.mrb[0].mxu0
        %2709 = vmatprep.mubr.bf16.mxu0 0
        %2710 = vmatmul.mubr.bf16.gmra.mrb[0].mxu0 %v2590
        %v2711 = vpop.f32.mrb[0].mxu0
        %v2712 = vadd.f32 0.0, %v2711
        %v2713 = vpop.f32.mrb[0].mxu0
        %v2714 = vpop.f32.mrb[0].mxu0
        %v2715 = vadd.f32 0.0, %v2714
        %v2716 = vpop.f32.mrb[0].mxu0
        %2717 = vmatprep.mubr.bf16.mxu0 0
        %2718 = vmatmul.mubr.bf16.gmra.mrb[0].mxu0 %v2593
        %v2719 = vpop.f32.mrb[0].mxu0
        %v2720 = vadd.f32 0.0, %v2719
        %v2721 = vpop.f32.mrb[0].mxu0
        %v2722 = vpop.f32.mrb[0].mxu0
        %v2723 = vadd.f32 0.0, %v2722
        %v2724 = vpop.f32.mrb[0].mxu0
        %2725 = vmatprep.mubr.bf16.mxu0 0
        %2726 = vmatmul.mubr.bf16.gmra.mrb[0].mxu0 %v2596
        %v2727 = vpop.f32.mrb[0].mxu0
        %v2728 = vadd.f32 0.0, %v2727
        %v2729 = vpop.f32.mrb[0].mxu0
        %v2730 = vpop.f32.mrb[0].mxu0
        %v2731 = vadd.f32 0.0, %v2730
        %v2732 = vpop.f32.mrb[0].mxu0
        %2733 = vmatprep.mubr.bf16.mxu0 0
        %2734 = vmatmul.mubr.bf16.gmra.mrb[0].mxu0 %v2599
        %v2735 = vpop.f32.mrb[0].mxu0
        %v2736 = vadd.f32 0.0, %v2735
        %v2737 = vpop.f32.mrb[0].mxu0
        %v2738 = vpop.f32.mrb[0].mxu0
        %v2739 = vadd.f32 0.0, %v2738
        %v2740 = vpop.f32.mrb[0].mxu0
        %2741 = vmatprep.mubr.bf16.mxu0 0
        %2742 = vmatmul.mubr.bf16.gmra.mrb[0].mxu0 %v2602
        %v2743 = vpop.f32.mrb[0].mxu0
        %v2744 = vadd.f32 0.0, %v2743
        %v2745 = vpop.f32.mrb[0].mxu0
        %v2746 = vpop.f32.mrb[0].mxu0
        %v2747 = vadd.f32 0.0, %v2746
        %v2748 = vpop.f32.mrb[0].mxu0
        %2749 = vmatprep.mubr.bf16.mxu0 0
        %2750 = vmatmul.mubr.bf16.gmra.mrb[0].mxu0 %v2605
        %v2751 = vpop.f32.mrb[0].mxu0
        %v2752 = vadd.f32 0.0, %v2751
        %v2753 = vpop.f32.mrb[0].mxu0
        %v2754 = vpop.f32.mrb[0].mxu0
        %v2755 = vadd.f32 0.0, %v2754
        %v2756 = vpop.f32.mrb[0].mxu0
        %2757 = vmatprep.mubr.bf16.mxu0 0
        %2758 = vmatmul.mubr.bf16.gmra.mrb[0].mxu0 %v2608
        %v2759 = vpop.f32.mrb[0].mxu0
        %v2760 = vadd.f32 0.0, %v2759
        %v2761 = vpop.f32.mrb[0].mxu0
        %v2762 = vpop.f32.mrb[0].mxu0
        %v2763 = vadd.f32 0.0, %v2762
        %v2764 = vpop.f32.mrb[0].mxu0
        %2765 = vmatprep.mubr.bf16.mxu0 0
        %2766 = vmatmul.mubr.bf16.gmra.mrb[0].mxu0 %v2611
        %v2767 = vpop.f32.mrb[0].mxu0
        %v2768 = vadd.f32 0.0, %v2767
        %v2769 = vpop.f32.mrb[0].mxu0
        %v2770 = vpop.f32.mrb[0].mxu0
        %v2771 = vadd.f32 0.0, %v2770
        %v2772 = vpop.f32.mrb[0].mxu0
        %2773 = vdwg.mxu0
        %v2774 = vadd.f32 %v2476, %v2648
        %v2775 = vadd.f32 %v2477, %v2651
        %v2776 = vadd.f32 %v2478, %v2656
        %v2777 = vadd.f32 %v2479, %v2659
        %v2778 = vadd.f32 %v2480, %v2664
        %v2779 = vadd.f32 %v2481, %v2667
        %v2780 = vadd.f32 %v2482, %v2672
        %v2781 = vadd.f32 %v2483, %v2675
        %v2782 = vadd.f32 %v2484, %v2680
        %v2783 = vadd.f32 %v2485, %v2683
        %v2784 = vadd.f32 %v2486, %v2688
        %v2785 = vadd.f32 %v2487, %v2691
        %v2786 = vadd.f32 %v2488, %v2696
        %v2787 = vadd.f32 %v2489, %v2699
        %v2788 = vadd.f32 %v2490, %v2704
        %v2789 = vadd.f32 %v2491, %v2707
        %v2790 = vadd.f32 %v2492, %v2712
        %v2791 = vadd.f32 %v2493, %v2715
        %v2792 = vadd.f32 %v2494, %v2720
        %v2793 = vadd.f32 %v2495, %v2723
        %v2794 = vadd.f32 %v2496, %v2728
        %v2795 = vadd.f32 %v2497, %v2731
        %v2796 = vadd.f32 %v2498, %v2736
        %v2797 = vadd.f32 %v2499, %v2739
        %v2798 = vadd.f32 %v2500, %v2744
        %v2799 = vadd.f32 %v2501, %v2747
        %v2800 = vadd.f32 %v2502, %v2752
        %v2801 = vadd.f32 %v2503, %v2755
        %v2802 = vadd.f32 %v2504, %v2760
        %v2803 = vadd.f32 %v2505, %v2763
        %v2804 = vadd.f32 %v2506, %v2768
        %v2805 = vadd.f32 %v2507, %v2771
        %v2806 = vld [vmem:[%s2209 + $0x2] sm:$0xff]
        %v2807 = vld [vmem:[%s2209 + $0xa] sm:$0xff]
        %v2808 = vld [vmem:[%s2209 + $0x1a] sm:$0xff]
        %v2809 = vld [vmem:[%s2209 + $0x22] sm:$0xff]
        %v2810 = vld [vmem:[%s2209 + $0x32] sm:$0xff]
        %v2811 = vld [vmem:[%s2209 + $0x3a] sm:$0xff]
        %v2812 = vld [vmem:[%s2209 + $0x4a] sm:$0xff]
        %v2813 = vld [vmem:[%s2209 + $0x52] sm:$0xff]
        %v2814 = vld [vmem:[%s2209 + $0x62] sm:$0xff]
        %v2815 = vld [vmem:[%s2209 + $0x6a] sm:$0xff]
        %v2816 = vld [vmem:[%s2209 + $0x7a] sm:$0xff]
        %v2817 = vld [vmem:[%s2209 + $0x82] sm:$0xff]
        %v2818 = vld [vmem:[%s2209 + $0x92] sm:$0xff]
        %v2819 = vld [vmem:[%s2209 + $0x9a] sm:$0xff]
        %v2820 = vld [vmem:[%s2209 + $0xaa] sm:$0xff]
        %v2821 = vld [vmem:[%s2209 + $0xb2] sm:$0xff]
        %v2822 = vld [vmem:[%s2209 + $0xc2] sm:$0xff]
        %v2823 = vld [vmem:[%s2209 + $0xca] sm:$0xff]
        %v2824 = vld [vmem:[%s2209 + $0xda] sm:$0xff]
        %v2825 = vld [vmem:[%s2209 + $0xe2] sm:$0xff]
        %v2826 = vld [vmem:[%s2209 + $0xf2] sm:$0xff]
        %v2827 = vld [vmem:[%s2209 + $0xfa] sm:$0xff]
        %v2828 = vld [vmem:[%s2209 + $0x10a] sm:$0xff]
        %v2829 = vld [vmem:[%s2209 + $0x112] sm:$0xff]
        %v2830 = vld [vmem:[%s2209 + $0x122] sm:$0xff]
        %v2831 = vld [vmem:[%s2209 + $0x12a] sm:$0xff]
        %v2832 = vld [vmem:[%s2209 + $0x13a] sm:$0xff]
        %v2833 = vld [vmem:[%s2209 + $0x142] sm:$0xff]
        %v2834 = vld [vmem:[%s2209 + $0x152] sm:$0xff]
        %v2835 = vld [vmem:[%s2209 + $0x15a] sm:$0xff]
        %v2836 = vld [vmem:[%s2209 + $0x16a] sm:$0xff]
        %v2837 = vld [vmem:[%s2209 + $0x172] sm:$0xff]
        %v2838 = vpack.c.bf16 %v2807, %v2806
        %v2839 = vpack.c.bf16 %v2809, %v2808
        %v2840 = vpack.c.bf16 %v2811, %v2810
        %v2841 = vpack.c.bf16 %v2813, %v2812
        %v2842 = vpack.c.bf16 %v2815, %v2814
        %v2843 = vpack.c.bf16 %v2817, %v2816
        %v2844 = vpack.c.bf16 %v2819, %v2818
        %v2845 = vpack.c.bf16 %v2821, %v2820
        %v2846 = vpack.c.bf16 %v2823, %v2822
        %v2847 = vpack.c.bf16 %v2825, %v2824
        %v2848 = vpack.c.bf16 %v2827, %v2826
        %v2849 = vpack.c.bf16 %v2829, %v2828
        %v2850 = vpack.c.bf16 %v2831, %v2830
        %v2851 = vpack.c.bf16 %v2833, %v2832
        %v2852 = vpack.c.bf16 %v2835, %v2834
        %v2853 = vpack.c.bf16 %v2837, %v2836
        %s2854 = scalar_lea.vmem %s3, 64
        %v2855 = vld [vmem:[%s2854] sm:$0xf]
        %v2856 = vld [vmem:[%s2854 + $0x4] sm:$0xf]
        %v2859 = vunpack.c.l.b16 %v2855
        %v2860 = vunpack.c.l.b16 %v2856
        %v2861 = vpack.c.b16 %v2860, %v2859
        %v2864 = vsel %vm237, %v2838, 0
        %v2867 = vsel %vm237, %v2839, 0
        %v2870 = vsel %vm237, %v2840, 0
        %v2873 = vsel %vm237, %v2841, 0
        %v2876 = vsel %vm237, %v2842, 0
        %v2879 = vsel %vm237, %v2843, 0
        %v2882 = vsel %vm237, %v2844, 0
        %v2885 = vsel %vm237, %v2845, 0
        %v2888 = vsel %vm237, %v2846, 0
        %v2891 = vsel %vm237, %v2847, 0
        %v2894 = vsel %vm237, %v2848, 0
        %v2897 = vsel %vm237, %v2849, 0
        %v2900 = vsel %vm237, %v2850, 0
        %v2903 = vsel %vm237, %v2851, 0
        %v2906 = vsel %vm237, %v2852, 0
        %v2909 = vsel %vm237, %v2853, 0
        %2911 = vmatprep.subr.bf16.mxu0 0
        %2912 = vmatpush1.bf16.msra.mxu0 %v2861
        %2913 = vmatprep.subr.bf16.mxu0 0
        %2914 = vmatpush1.bf16.msra.mxu0 0
        %2915 = vmatprep.subr.bf16.mxu0 0
        %2916 = vmatpush1.bf16.msra.mxu0 0
        %2917 = vmatprep.subr.bf16.mxu0 0
        %2918 = vmatpush1.bf16.msra.mxu0 0
        %2919 = vmatprep.subr.bf16.mxu0 0
        %2920 = vmatpush1.bf16.msra.mxu0 0
        %2921 = vmatprep.subr.bf16.mxu0 0
        %2922 = vmatpush1.bf16.msra.mxu0 0
        %2923 = vmatprep.subr.bf16.mxu0 0
        %2924 = vmatpush1.bf16.msra.mxu0 0
        %2925 = vmatprep.subr.bf16.mxu0 0
        %2926 = vmatpush1.bf16.msra.mxu0 0
        %2927 = vmatprep.subr.bf16.mxu0 0
        %2928 = vmatpush1.bf16.msra.mxu0 0
        %2929 = vmatprep.subr.bf16.mxu0 0
        %2930 = vmatpush1.bf16.msra.mxu0 0
        %2931 = vmatprep.subr.bf16.mxu0 0
        %2932 = vmatpush1.bf16.msra.mxu0 0
        %2933 = vmatprep.subr.bf16.mxu0 0
        %2934 = vmatpush1.bf16.msra.mxu0 0
        %2935 = vmatprep.subr.bf16.mxu0 0
        %2936 = vmatpush1.bf16.msra.mxu0 0
        %2937 = vmatprep.subr.bf16.mxu0 0
        %2938 = vmatpush1.bf16.msra.mxu0 0
        %2939 = vmatprep.subr.bf16.mxu0 0
        %2940 = vmatpush1.bf16.msra.mxu0 0
        %2941 = vmatprep.subr.bf16.mxu0 0
        %2942 = vmatpush1.bf16.msra.mxu0 0
        %2943 = vmatprep.mubr.bf16.mxu0 0
        %2944 = vmatmul.mubr.bf16.gmra.mrb[0].mxu0 %v2864
        %v2945 = vpop.f32.mrb[0].mxu0
        %v2946 = vadd.f32 0.0, %v2945
        %v2947 = vpop.f32.mrb[0].mxu0
        %v2948 = vpop.f32.mrb[0].mxu0
        %v2949 = vadd.f32 0.0, %v2948
        %v2950 = vpop.f32.mrb[0].mxu0
        %2951 = vmatprep.mubr.bf16.mxu0 0
        %2952 = vmatmul.mubr.bf16.gmra.mrb[0].mxu0 %v2867
        %v2953 = vpop.f32.mrb[0].mxu0
        %v2954 = vadd.f32 0.0, %v2953
        %v2955 = vpop.f32.mrb[0].mxu0
        %v2956 = vpop.f32.mrb[0].mxu0
        %v2957 = vadd.f32 0.0, %v2956
        %v2958 = vpop.f32.mrb[0].mxu0
        %2959 = vmatprep.mubr.bf16.mxu0 0
        %2960 = vmatmul.mubr.bf16.gmra.mrb[0].mxu0 %v2870
        %v2961 = vpop.f32.mrb[0].mxu0
        %v2962 = vadd.f32 0.0, %v2961
        %v2963 = vpop.f32.mrb[0].mxu0
        %v2964 = vpop.f32.mrb[0].mxu0
        %v2965 = vadd.f32 0.0, %v2964
        %v2966 = vpop.f32.mrb[0].mxu0
        %2967 = vmatprep.mubr.bf16.mxu0 0
        %2968 = vmatmul.mubr.bf16.gmra.mrb[0].mxu0 %v2873
        %v2969 = vpop.f32.mrb[0].mxu0
        %v2970 = vadd.f32 0.0, %v2969
        %v2971 = vpop.f32.mrb[0].mxu0
        %v2972 = vpop.f32.mrb[0].mxu0
        %v2973 = vadd.f32 0.0, %v2972
        %v2974 = vpop.f32.mrb[0].mxu0
        %2975 = vmatprep.mubr.bf16.mxu0 0
        %2976 = vmatmul.mubr.bf16.gmra.mrb[0].mxu0 %v2876
        %v2977 = vpop.f32.mrb[0].mxu0
        %v2978 = vadd.f32 0.0, %v2977
        %v2979 = vpop.f32.mrb[0].mxu0
        %v2980 = vpop.f32.mrb[0].mxu0
        %v2981 = vadd.f32 0.0, %v2980
        %v2982 = vpop.f32.mrb[0].mxu0
        %2983 = vmatprep.mubr.bf16.mxu0 0
        %2984 = vmatmul.mubr.bf16.gmra.mrb[0].mxu0 %v2879
        %v2985 = vpop.f32.mrb[0].mxu0
        %v2986 = vadd.f32 0.0, %v2985
        %v2987 = vpop.f32.mrb[0].mxu0
        %v2988 = vpop.f32.mrb[0].mxu0
        %v2989 = vadd.f32 0.0, %v2988
        %v2990 = vpop.f32.mrb[0].mxu0
        %2991 = vmatprep.mubr.bf16.mxu0 0
        %2992 = vmatmul.mubr.bf16.gmra.mrb[0].mxu0 %v2882
        %v2993 = vpop.f32.mrb[0].mxu0
        %v2994 = vadd.f32 0.0, %v2993
        %v2995 = vpop.f32.mrb[0].mxu0
        %v2996 = vpop.f32.mrb[0].mxu0
        %v2997 = vadd.f32 0.0, %v2996
        %v2998 = vpop.f32.mrb[0].mxu0
        %2999 = vmatprep.mubr.bf16.mxu0 0
        %3000 = vmatmul.mubr.bf16.gmra.mrb[0].mxu0 %v2885
        %v3001 = vpop.f32.mrb[0].mxu0
        %v3002 = vadd.f32 0.0, %v3001
        %v3003 = vpop.f32.mrb[0].mxu0
        %v3004 = vpop.f32.mrb[0].mxu0
        %v3005 = vadd.f32 0.0, %v3004
        %v3006 = vpop.f32.mrb[0].mxu0
        %3007 = vmatprep.mubr.bf16.mxu0 0
        %3008 = vmatmul.mubr.bf16.gmra.mrb[0].mxu0 %v2888
        %v3009 = vpop.f32.mrb[0].mxu0
        %v3010 = vadd.f32 0.0, %v3009
        %v3011 = vpop.f32.mrb[0].mxu0
        %v3012 = vpop.f32.mrb[0].mxu0
        %v3013 = vadd.f32 0.0, %v3012
        %v3014 = vpop.f32.mrb[0].mxu0
        %3015 = vmatprep.mubr.bf16.mxu0 0
        %3016 = vmatmul.mubr.bf16.gmra.mrb[0].mxu0 %v2891
        %v3017 = vpop.f32.mrb[0].mxu0
        %v3018 = vadd.f32 0.0, %v3017
        %v3019 = vpop.f32.mrb[0].mxu0
        %v3020 = vpop.f32.mrb[0].mxu0
        %v3021 = vadd.f32 0.0, %v3020
        %v3022 = vpop.f32.mrb[0].mxu0
        %3023 = vmatprep.mubr.bf16.mxu0 0
        %3024 = vmatmul.mubr.bf16.gmra.mrb[0].mxu0 %v2894
        %v3025 = vpop.f32.mrb[0].mxu0
        %v3026 = vadd.f32 0.0, %v3025
        %v3027 = vpop.f32.mrb[0].mxu0
        %v3028 = vpop.f32.mrb[0].mxu0
        %v3029 = vadd.f32 0.0, %v3028
        %v3030 = vpop.f32.mrb[0].mxu0
        %3031 = vmatprep.mubr.bf16.mxu0 0
        %3032 = vmatmul.mubr.bf16.gmra.mrb[0].mxu0 %v2897
        %v3033 = vpop.f32.mrb[0].mxu0
        %v3034 = vadd.f32 0.0, %v3033
        %v3035 = vpop.f32.mrb[0].mxu0
        %v3036 = vpop.f32.mrb[0].mxu0
        %v3037 = vadd.f32 0.0, %v3036
        %v3038 = vpop.f32.mrb[0].mxu0
        %3039 = vmatprep.mubr.bf16.mxu0 0
        %3040 = vmatmul.mubr.bf16.gmra.mrb[0].mxu0 %v2900
        %v3041 = vpop.f32.mrb[0].mxu0
        %v3042 = vadd.f32 0.0, %v3041
        %v3043 = vpop.f32.mrb[0].mxu0
        %v3044 = vpop.f32.mrb[0].mxu0
        %v3045 = vadd.f32 0.0, %v3044
        %v3046 = vpop.f32.mrb[0].mxu0
        %3047 = vmatprep.mubr.bf16.mxu0 0
        %3048 = vmatmul.mubr.bf16.gmra.mrb[0].mxu0 %v2903
        %v3049 = vpop.f32.mrb[0].mxu0
        %v3050 = vadd.f32 0.0, %v3049
        %v3051 = vpop.f32.mrb[0].mxu0
        %v3052 = vpop.f32.mrb[0].mxu0
        %v3053 = vadd.f32 0.0, %v3052
        %v3054 = vpop.f32.mrb[0].mxu0
        %3055 = vmatprep.mubr.bf16.mxu0 0
        %3056 = vmatmul.mubr.bf16.gmra.mrb[0].mxu0 %v2906
        %v3057 = vpop.f32.mrb[0].mxu0
        %v3058 = vadd.f32 0.0, %v3057
        %v3059 = vpop.f32.mrb[0].mxu0
        %v3060 = vpop.f32.mrb[0].mxu0
        %v3061 = vadd.f32 0.0, %v3060
        %v3062 = vpop.f32.mrb[0].mxu0
        %3063 = vmatprep.mubr.bf16.mxu0 0
        %3064 = vmatmul.mubr.bf16.gmra.mrb[0].mxu0 %v2909
        %v3065 = vpop.f32.mrb[0].mxu0
        %v3066 = vadd.f32 0.0, %v3065
        %v3067 = vpop.f32.mrb[0].mxu0
        %v3068 = vpop.f32.mrb[0].mxu0
        %v3069 = vadd.f32 0.0, %v3068
        %v3070 = vpop.f32.mrb[0].mxu0
        %3071 = vdwg.mxu0
        %v3072 = vadd.f32 %v2774, %v2946
        %v3073 = vadd.f32 %v2775, %v2949
        %v3074 = vadd.f32 %v2776, %v2954
        %v3075 = vadd.f32 %v2777, %v2957
        %v3076 = vadd.f32 %v2778, %v2962
        %v3077 = vadd.f32 %v2779, %v2965
        %v3078 = vadd.f32 %v2780, %v2970
        %v3079 = vadd.f32 %v2781, %v2973
        %v3080 = vadd.f32 %v2782, %v2978
        %v3081 = vadd.f32 %v2783, %v2981
        %v3082 = vadd.f32 %v2784, %v2986
        %v3083 = vadd.f32 %v2785, %v2989
        %v3084 = vadd.f32 %v2786, %v2994
        %v3085 = vadd.f32 %v2787, %v2997
        %v3086 = vadd.f32 %v2788, %v3002
        %v3087 = vadd.f32 %v2789, %v3005
        %v3088 = vadd.f32 %v2790, %v3010
        %v3089 = vadd.f32 %v2791, %v3013
        %v3090 = vadd.f32 %v2792, %v3018
        %v3091 = vadd.f32 %v2793, %v3021
        %v3092 = vadd.f32 %v2794, %v3026
        %v3093 = vadd.f32 %v2795, %v3029
        %v3094 = vadd.f32 %v2796, %v3034
        %v3095 = vadd.f32 %v2797, %v3037
        %v3096 = vadd.f32 %v2798, %v3042
        %v3097 = vadd.f32 %v2799, %v3045
        %v3098 = vadd.f32 %v2800, %v3050
        %v3099 = vadd.f32 %v2801, %v3053
        %v3100 = vadd.f32 %v2802, %v3058
        %v3101 = vadd.f32 %v2803, %v3061
        %v3102 = vadd.f32 %v2804, %v3066
        %v3103 = vadd.f32 %v2805, %v3069
        %v3104 = vpack.c.bf16 %v3073, %v3072
        %v3105 = vpack.c.bf16 %v3075, %v3074
        %v3106 = vpack.c.bf16 %v3077, %v3076
        %v3107 = vpack.c.bf16 %v3079, %v3078
        %v3108 = vpack.c.bf16 %v3081, %v3080
        %v3109 = vpack.c.bf16 %v3083, %v3082
        %v3110 = vpack.c.bf16 %v3085, %v3084
        %v3111 = vpack.c.bf16 %v3087, %v3086
        %v3112 = vpack.c.bf16 %v3089, %v3088
        %v3113 = vpack.c.bf16 %v3091, %v3090
        %v3114 = vpack.c.bf16 %v3093, %v3092
        %v3115 = vpack.c.bf16 %v3095, %v3094
        %v3116 = vpack.c.bf16 %v3097, %v3096
        %v3117 = vpack.c.bf16 %v3099, %v3098
        %v3118 = vpack.c.bf16 %v3101, %v3100
        %v3119 = vpack.c.bf16 %v3103, %v3102
        %v3136 = vunpack.c.l.b16 %v3104
        %v3137 = vunpack.c.h.b16 %v3104
        %v3138 = vunpack.c.l.b16 %v3105
        %v3139 = vunpack.c.h.b16 %v3105
        %v3140 = vunpack.c.l.b16 %v3106
        %v3141 = vunpack.c.h.b16 %v3106
        %v3142 = vunpack.c.l.b16 %v3107
        %v3143 = vunpack.c.h.b16 %v3107
        %v3144 = vunpack.c.l.b16 %v3108
        %v3145 = vunpack.c.h.b16 %v3108
        %v3146 = vunpack.c.l.b16 %v3109
        %v3147 = vunpack.c.h.b16 %v3109
        %v3148 = vunpack.c.l.b16 %v3110
        %v3149 = vunpack.c.h.b16 %v3110
        %v3150 = vunpack.c.l.b16 %v3111
        %v3151 = vunpack.c.h.b16 %v3111
        %v3152 = vunpack.c.l.b16 %v3112
        %v3153 = vunpack.c.h.b16 %v3112
        %v3154 = vunpack.c.l.b16 %v3113
        %v3155 = vunpack.c.h.b16 %v3113
        %v3156 = vunpack.c.l.b16 %v3114
        %v3157 = vunpack.c.h.b16 %v3114
        %v3158 = vunpack.c.l.b16 %v3115
        %v3159 = vunpack.c.h.b16 %v3115
        %v3160 = vunpack.c.l.b16 %v3116
        %v3161 = vunpack.c.h.b16 %v3116
        %v3162 = vunpack.c.l.b16 %v3117
        %v3163 = vunpack.c.h.b16 %v3117
        %v3164 = vunpack.c.l.b16 %v3118
        %v3165 = vunpack.c.h.b16 %v3118
        %v3166 = vunpack.c.l.b16 %v3119
        %v3167 = vunpack.c.h.b16 %v3119
        %v3168 = vpack.c.b16 %v3136, %v3136
        %v3169 = vpack.c.b16 %v3137, %v3137
        %v3170 = vpack.c.b16 %v3138, %v3138
        %v3171 = vpack.c.b16 %v3139, %v3139
        %v3172 = vpack.c.b16 %v3140, %v3140
        %v3173 = vpack.c.b16 %v3141, %v3141
        %v3174 = vpack.c.b16 %v3142, %v3142
        %v3175 = vpack.c.b16 %v3143, %v3143
        %v3176 = vpack.c.b16 %v3144, %v3144
        %v3177 = vpack.c.b16 %v3145, %v3145
        %v3178 = vpack.c.b16 %v3146, %v3146
        %v3179 = vpack.c.b16 %v3147, %v3147
        %v3180 = vpack.c.b16 %v3148, %v3148
        %v3181 = vpack.c.b16 %v3149, %v3149
        %v3182 = vpack.c.b16 %v3150, %v3150
        %v3183 = vpack.c.b16 %v3151, %v3151
        %v3184 = vpack.c.b16 %v3152, %v3152
        %v3185 = vpack.c.b16 %v3153, %v3153
        %v3186 = vpack.c.b16 %v3154, %v3154
        %v3187 = vpack.c.b16 %v3155, %v3155
        %v3188 = vpack.c.b16 %v3156, %v3156
        %v3189 = vpack.c.b16 %v3157, %v3157
        %v3190 = vpack.c.b16 %v3158, %v3158
        %v3191 = vpack.c.b16 %v3159, %v3159
        %v3192 = vpack.c.b16 %v3160, %v3160
        %v3193 = vpack.c.b16 %v3161, %v3161
        %v3194 = vpack.c.b16 %v3162, %v3162
        %v3195 = vpack.c.b16 %v3163, %v3163
        %v3196 = vpack.c.b16 %v3164, %v3164
        %v3197 = vpack.c.b16 %v3165, %v3165
        %v3198 = vpack.c.b16 %v3166, %v3166
        %v3199 = vpack.c.b16 %v3167, %v3167
        %3232 = vst [vmem:[%s235] sm:$0xf] %v3168
        %3233 = vst [vmem:[%s235 + $0x4] sm:$0xf] %v3169
        %3234 = vst [vmem:[%s235 + $0x8] sm:$0xf] %v3170
        %3235 = vst [vmem:[%s235 + $0xc] sm:$0xf] %v3171
        %3236 = vst [vmem:[%s235 + $0x10] sm:$0xf] %v3172
        %3237 = vst [vmem:[%s235 + $0x14] sm:$0xf] %v3173
        %3238 = vst [vmem:[%s235 + $0x18] sm:$0xf] %v3174
        %3239 = vst [vmem:[%s235 + $0x1c] sm:$0xf] %v3175
        %3240 = vst [vmem:[%s235 + $0x20] sm:$0xf] %v3176
        %3241 = vst [vmem:[%s235 + $0x24] sm:$0xf] %v3177
        %3242 = vst [vmem:[%s235 + $0x28] sm:$0xf] %v3178
        %3243 = vst [vmem:[%s235 + $0x2c] sm:$0xf] %v3179
        %3244 = vst [vmem:[%s235 + $0x30] sm:$0xf] %v3180
        %3245 = vst [vmem:[%s235 + $0x34] sm:$0xf] %v3181
        %3246 = vst [vmem:[%s235 + $0x38] sm:$0xf] %v3182
        %3247 = vst [vmem:[%s235 + $0x3c] sm:$0xf] %v3183
        %3248 = vst [vmem:[%s235 + $0x40] sm:$0xf] %v3184
        %3249 = vst [vmem:[%s235 + $0x44] sm:$0xf] %v3185
        %3250 = vst [vmem:[%s235 + $0x48] sm:$0xf] %v3186
        %3251 = vst [vmem:[%s235 + $0x4c] sm:$0xf] %v3187
        %3252 = vst [vmem:[%s235 + $0x50] sm:$0xf] %v3188
        %3253 = vst [vmem:[%s235 + $0x54] sm:$0xf] %v3189
        %3254 = vst [vmem:[%s235 + $0x58] sm:$0xf] %v3190
        %3255 = vst [vmem:[%s235 + $0x5c] sm:$0xf] %v3191
        %3256 = vst [vmem:[%s235 + $0x60] sm:$0xf] %v3192
        %3257 = vst [vmem:[%s235 + $0x64] sm:$0xf] %v3193
        %3258 = vst [vmem:[%s235 + $0x68] sm:$0xf] %v3194
        %3259 = vst [vmem:[%s235 + $0x6c] sm:$0xf] %v3195
        %3260 = vst [vmem:[%s235 + $0x70] sm:$0xf] %v3196
        %3261 = vst [vmem:[%s235 + $0x74] sm:$0xf] %v3197
        %3262 = vst [vmem:[%s235 + $0x78] sm:$0xf] %v3198
        %3263 = vst [vmem:[%s235 + $0x7c] sm:$0xf] %v3199
        %v3264 = vadd.f32 %v3072, %v3073
        %v3265 = vadd.f32 %v3264, %v3074
        %v3266 = vadd.f32 %v3265, %v3075
        %v3267 = vadd.f32 %v3266, %v3076
        %v3268 = vadd.f32 %v3267, %v3077
        %v3269 = vadd.f32 %v3268, %v3078
        %v3270 = vadd.f32 %v3269, %v3079
        %v3271 = vadd.f32 %v3270, %v3080
        %v3272 = vadd.f32 %v3271, %v3081
        %v3273 = vadd.f32 %v3272, %v3082
        %v3274 = vadd.f32 %v3273, %v3083
        %v3275 = vadd.f32 %v3274, %v3084
        %v3276 = vadd.f32 %v3275, %v3085
        %v3277 = vadd.f32 %v3276, %v3086
        %v3278 = vadd.f32 %v3277, %v3087
        %v3279 = vadd.f32 %v3278, %v3088
        %v3280 = vadd.f32 %v3279, %v3089
        %v3281 = vadd.f32 %v3280, %v3090
        %v3282 = vadd.f32 %v3281, %v3091
        %v3283 = vadd.f32 %v3282, %v3092
        %v3284 = vadd.f32 %v3283, %v3093
        %v3285 = vadd.f32 %v3284, %v3094
        %v3286 = vadd.f32 %v3285, %v3095
        %v3287 = vadd.f32 %v3286, %v3096
        %v3288 = vadd.f32 %v3287, %v3097
        %v3289 = vadd.f32 %v3288, %v3098
        %v3290 = vadd.f32 %v3289, %v3099
        %v3291 = vadd.f32 %v3290, %v3100
        %v3292 = vadd.f32 %v3291, %v3101
        %v3293 = vadd.f32 %v3292, %v3102
        %v3294 = vadd.f32 %v3293, %v3103
        %v3295 = vrot.slane %v3294, 4
        %v3296 = vadd.f32 %v3294, %v3295
        %v3297 = vrot.slane %v3296, 2
        %v3298 = vadd.f32 %v3296, %v3297
        %v3299 = vrot.slane %v3298, 1
        %v3300 = vadd.f32 %v3298, %v3299
        %v3301 = vmul.f32 %v3072, %v3072
        %v3302 = vmul.f32 %v3073, %v3073
        %v3303 = vmul.f32 %v3074, %v3074
        %v3304 = vmul.f32 %v3075, %v3075
        %v3305 = vmul.f32 %v3076, %v3076
        %v3306 = vmul.f32 %v3077, %v3077
        %v3307 = vmul.f32 %v3078, %v3078
        %v3308 = vmul.f32 %v3079, %v3079
        %v3309 = vmul.f32 %v3080, %v3080
        %v3310 = vmul.f32 %v3081, %v3081
        %v3311 = vmul.f32 %v3082, %v3082
        %v3312 = vmul.f32 %v3083, %v3083
        %v3313 = vmul.f32 %v3084, %v3084
        %v3314 = vmul.f32 %v3085, %v3085
        %v3315 = vmul.f32 %v3086, %v3086
        %v3316 = vmul.f32 %v3087, %v3087
        %v3317 = vmul.f32 %v3088, %v3088
        %v3318 = vmul.f32 %v3089, %v3089
        %v3319 = vmul.f32 %v3090, %v3090
        %v3320 = vmul.f32 %v3091, %v3091
        %v3321 = vmul.f32 %v3092, %v3092
        %v3322 = vmul.f32 %v3093, %v3093
        %v3323 = vmul.f32 %v3094, %v3094
        %v3324 = vmul.f32 %v3095, %v3095
        %v3325 = vmul.f32 %v3096, %v3096
        %v3326 = vmul.f32 %v3097, %v3097
        %v3327 = vmul.f32 %v3098, %v3098
        %v3328 = vmul.f32 %v3099, %v3099
        %v3329 = vmul.f32 %v3100, %v3100
        %v3330 = vmul.f32 %v3101, %v3101
        %v3331 = vmul.f32 %v3102, %v3102
        %v3332 = vmul.f32 %v3103, %v3103
        %v3333 = vadd.f32 %v3301, %v3302
        %v3334 = vadd.f32 %v3333, %v3303
        %v3335 = vadd.f32 %v3334, %v3304
        %v3336 = vadd.f32 %v3335, %v3305
        %v3337 = vadd.f32 %v3336, %v3306
        %v3338 = vadd.f32 %v3337, %v3307
        %v3339 = vadd.f32 %v3338, %v3308
        %v3340 = vadd.f32 %v3339, %v3309
        %v3341 = vadd.f32 %v3340, %v3310
        %v3342 = vadd.f32 %v3341, %v3311
        %v3343 = vadd.f32 %v3342, %v3312
        %v3344 = vadd.f32 %v3343, %v3313
        %v3345 = vadd.f32 %v3344, %v3314
        %v3346 = vadd.f32 %v3345, %v3315
        %v3347 = vadd.f32 %v3346, %v3316
        %v3348 = vadd.f32 %v3347, %v3317
        %v3349 = vadd.f32 %v3348, %v3318
        %v3350 = vadd.f32 %v3349, %v3319
        %v3351 = vadd.f32 %v3350, %v3320
        %v3352 = vadd.f32 %v3351, %v3321
        %v3353 = vadd.f32 %v3352, %v3322
        %v3354 = vadd.f32 %v3353, %v3323
        %v3355 = vadd.f32 %v3354, %v3324
        %v3356 = vadd.f32 %v3355, %v3325
        %v3357 = vadd.f32 %v3356, %v3326
        %v3358 = vadd.f32 %v3357, %v3327
        %v3359 = vadd.f32 %v3358, %v3328
        %v3360 = vadd.f32 %v3359, %v3329
        %v3361 = vadd.f32 %v3360, %v3330
        %v3362 = vadd.f32 %v3361, %v3331
        %v3363 = vadd.f32 %v3362, %v3332
        %v3364 = vrot.slane %v3363, 4
        %v3365 = vadd.f32 %v3363, %v3364
        %v3366 = vrot.slane %v3365, 2
        %v3367 = vadd.f32 %v3365, %v3366
        %v3368 = vrot.slane %v3367, 1
        %v3369 = vadd.f32 %v3367, %v3368
        %vm3370 = vcmask 1040384
        %v3371 = vsel %vm3370, %v3300, %v3369
        %3372 = vst [vmem:[%s225] sm:$0x3] %v3371
        %p3373 = scmp.lt.s32.totalorder %s20, 1
        %s3374 = scalar_select %p3373, %s20, 1
        %s3375 = smul.addr %s3374, 32
        %s3376 = smul.addr %s3375, 4
        %s3377 = scalar_lea.vmem %s4, %s3376
        %s3378 = sand.u32 %s143, 1
        %s3379 = scalar_lea.sflag [#allocation4], %s3378
        %s3380 = sand.u32 %s143, 1
        %s3381 = smul.addr %s3380, 2
        %s3382 = scalar_lea.vmem [#allocation3], %s3381
        // Predicated region
        $region37: #{model_forward.5} parent=35 // pred_check
          %p3383 = pneg %p127
        $region38: #{model_forward.5} parent=35 // pred_check_branch
          %3385 = sbr.rel (%p3383) target = $region40
        $region39: #{model_forward.5} parent=35 // pred_region
          _
        $region40: #{model_forward.5} parent=35 // pred_fallthru
          _
        // Predicated region
        $region41: #{model_forward.5} parent=35 // pred_check
          %p3386 = pneg %p153
        $region42: #{model_forward.5} parent=35 // pred_check_branch
          %3388 = sbr.rel (%p3386) target = $region44
        $region43: #{model_forward.5} parent=35 // pred_region
          %s3390 = ssub.s32 32, 32
          %3391 = vsyncadd %s3379, %s3390
          %s3392 = smul.addr %s20, 32
          %s3393 = scalar_lea.hbm %s5, %s3392
          %s3395 = sshll.u32 %s3382, 4
          %s3396 = int_to_ptr.vmem [resolvable:$true] %s3395
          %3398 = dma.vmem_to_hbm [thread:$0]  %s3396, 32, %s3393, %s3379
        $region44: #{model_forward.5} parent=35 // pred_fallthru
          _
      $region36: #{model_forward.5} parent=5 // pred_fallthru
        _
      %p3399 = scmp.le.s32.totalorder 2, %s15
      // Predicated region
      $region45: #{model_forward.5} parent=5 // pred_check
        %p3400 = pneg %p3399
      $region46: #{model_forward.5} parent=5 // pred_check_branch
        %3402 = sbr.rel (%p3400) target = $region48
      $region47: #{model_forward.5} parent=5 // pred_region
        %s3403 = ssub.s32 %s15, 2
        // Predicated region
        $region49: #{model_forward.5} parent=47 // pred_check
          %p3404 = pneg %p133
        $region50: #{model_forward.5} parent=47 // pred_check_branch
          %3406 = sbr.rel (%p3404) target = $region52
        $region51: #{model_forward.5} parent=47 // pred_region
          %p3407 = scmp.lt.s32.totalorder %s21, 1
          %s3408 = scalar_select %p3407, %s21, 1
          %s3409 = smul.addr %s3408, 32
          %s3410 = smul.addr %s3409, 4
          %s3411 = scalar_lea.vmem %s4, %s3410
        $region52: #{model_forward.5} parent=47 // pred_fallthru
          _
        // Predicated region
        $region53: #{model_forward.5} parent=47 // pred_check
          %p3412 = pneg %p159
        $region54: #{model_forward.5} parent=47 // pred_check_branch
          %3414 = sbr.rel (%p3412) target = $region56
        $region55: #{model_forward.5} parent=47 // pred_region
          %s3415 = sand.u32 %s144, 1
          %s3416 = scalar_lea.sflag [#allocation4], %s3415
          %s3417 = sand.u32 %s144, 1
          %s3418 = smul.addr %s3417, 2
          %s3419 = scalar_lea.vmem [#allocation3], %s3418
          %3420 = dma.done %s3416, 32
        $region56: #{model_forward.5} parent=47 // pred_fallthru
          _
      $region48: #{model_forward.5} parent=5 // pred_fallthru
        _
    $region6: #{model_forward.5} parent=1 // loop_footer
      %s19 = sadd.s32 1, %s15
    $region7: #{model_forward.5} parent=1 // loop_footer_branch
      %14 = sbr.rel target = $region3
    $region8: #{model_forward.5} parent=1 // loop_exit
      _
    %3421 = vsyncpa [#allocation4], 1
    %s3422 = scalar_lea.sflag [#allocation4], 1
    %3423 = vsyncpa %s3422, 1

</llo_original>
